<compile_context>
chip_gen: v7x
topology: tpu7x:2x2x1
jax: 0.10.0
libtpu: 0.0.40
codegen_flags: <defaults>
</compile_context>

<pallas_src>
import math
import functools

import jax
import jax.numpy as jnp
from jax import lax
from jax.experimental import pallas as pl
from jax.experimental.pallas import tpu as pltpu


def _round_up(x, m):
    return ((x + m - 1) // m) * m


# ----------------------------------------------------------------------------
# Pallas kernel: blocked GEMM with fused activation epilogue.
#   lhs : (Mp, Kp)  bf16   im2col patches, K = Cin*KH*KW folded into contraction
#   rhs : (Kp, Np)  bf16   weight, Cout zero-padded to lane-dense Np (x128)
#   [bias: (1, Np)  f32]   only when has_bias
#   out : (Mp, Np)  out_dtype (bf16 for intermediate layers)
# grid = (Mp//tm, Np//tn, Kp//tk); the K axis is the reduction (last, arbitrary).
# ----------------------------------------------------------------------------
def _gemm_act_kernel(*refs, act, has_bias):
    if has_bias:
        lhs_ref, rhs_ref, b_ref, o_ref, acc_ref = refs
    else:
        lhs_ref, rhs_ref, o_ref, acc_ref = refs

    k = pl.program_id(2)

    @pl.when(k == 0)
    def _():
        acc_ref[...] = jnp.zeros_like(acc_ref)

    acc_ref[...] += jnp.dot(lhs_ref[...], rhs_ref[...],
                            preferred_element_type=jnp.float32)

    @pl.when(k == pl.num_programs(2) - 1)
    def _():
        y = acc_ref[...]
        if has_bias:
            y = y + b_ref[...]
        if act == "leaky":
            y = jnp.where(y >= 0.0, y, 0.2 * y)
        elif act == "sigmoid":
            y = jax.nn.sigmoid(y)
        o_ref[...] = y.astype(o_ref.dtype)


def conv2d_fused(x, w, b=None, *, stride=1, pad=1, act="none",
                 out_dtype=jnp.float32):
    """x: NHWC (f32/bf16), w: (KH, KW, Cin, Cout) f32.

    Cross-correlation with symmetric padding == nn.Conv2d. The KxK conv is one
    GEMM: im2col patches (M, K) x (K, Cout), bias + LeakyReLU(0.2)/sigmoid
    fused into the Pallas epilogue.
    """
    B, H, W, Cin = x.shape
    KH, KW, _, Cout = w.shape
    K = KH * KW * Cin
    Ho = (H + 2 * pad - KH) // stride + 1
    Wo = (W + 2 * pad - KW) // stride + 1
    M = B * Ho * Wo

    # Single im2col materialization, already bf16 (MXU operand dtype). The
    # patches' channel dim is ordered (Cin, KH, KW) (channel slowest).
    # TODO(synk): a halo'd input BlockSpec over output-row tiles would avoid
    # materializing the K-fold patches tensor in HBM entirely.
    patches = lax.conv_general_dilated_patches(
        x.astype(jnp.bfloat16),
        filter_shape=(KH, KW),
        window_strides=(stride, stride),
        padding=((pad, pad), (pad, pad)),
        dimension_numbers=("NHWC", "HWIO", "NHWC"))
    lhs = patches.reshape(M, K)

    # Tile sizes: lane-dense N, 256-wide where Cout allows (v6e/v7x MXU is
    # 2x256x256); tm a multiple of 16 (bf16 sublane packing); deep tk.
    Np = _round_up(Cout, 128)
    tn = 256 if Np % 256 == 0 else 128
    tm = 256 if M >= 256 else _round_up(M, 16)
    Mp = _round_up(M, tm)
    if K <= 1024:
        tk = _round_up(K, 128)
    elif K % 1024 == 0:
        tk = 1024
    elif K % 512 == 0:
        tk = 512
    else:
        tk = 256
    Kp = _round_up(K, tk)

    lhs = jnp.pad(lhs, ((0, Mp - M), (0, Kp - K)))
    rhs = jnp.transpose(w, (2, 0, 1, 3)).reshape(K, Cout)     # (Cin,KH,KW) major
    rhs = jnp.pad(rhs, ((0, Kp - K), (0, Np - Cout))).astype(jnp.bfloat16)

    has_bias = b is not None
    in_specs = [
        pl.BlockSpec((tm, tk), lambda i, j, k: (i, k)),
        pl.BlockSpec((tk, tn), lambda i, j, k: (k, j)),
    ]
    operands = [lhs, rhs]
    if has_bias:
        b_p = jnp.pad(b.astype(jnp.float32), (0, Np - Cout)).reshape(1, Np)
        in_specs.append(pl.BlockSpec((1, tn), lambda i, j, k: (0, j)))
        operands.append(b_p)

    out = pl.pallas_call(
        functools.partial(_gemm_act_kernel, act=act, has_bias=has_bias),
        out_shape=jax.ShapeDtypeStruct((Mp, Np), out_dtype),
        grid_spec=pltpu.PrefetchScalarGridSpec(
            num_scalar_prefetch=0,
            grid=(Mp // tm, Np // tn, Kp // tk),
            in_specs=in_specs,
            out_specs=pl.BlockSpec((tm, tn), lambda i, j, k: (i, j)),
            scratch_shapes=[pltpu.VMEM((tm, tn), jnp.float32)]),
        compiler_params=pltpu.CompilerParams(
            dimension_semantics=("parallel", "parallel", "arbitrary")),
    )(*operands)

    return out[:M, :Cout].reshape(B, Ho, Wo, Cout)


# ----------------------------------------------------------------------------
# Spectral normalization (forward-time weight transform like
# torch.nn.utils.spectral_norm: 1 power iteration on weight.view(Cout, -1)).
# Tiny weight-side op -> plain JAX.
# TODO(synk): the persistent `u` buffer is not updated by this functional forward.
# ----------------------------------------------------------------------------
def spectral_normalize(w, u, n_iter=1, eps=1e-12):
    KH, KW, Cin, Cout = w.shape
    wm = jnp.transpose(w, (3, 2, 0, 1)).reshape(Cout, Cin * KH * KW)

    def body(_, uv):
        u, _ = uv
        v = wm.T @ u
        v = v / jnp.maximum(jnp.linalg.norm(v), eps)
        u_new = wm @ v
        u_new = u_new / jnp.maximum(jnp.linalg.norm(u_new), eps)
        return (u_new, v)

    u, v = lax.fori_loop(0, n_iter, body,
                         (u, jnp.zeros((Cin * KH * KW,), w.dtype)))
    sigma = jnp.dot(u, wm @ v)
    return w / sigma


# ----------------------------------------------------------------------------
# Discriminator forward (use_spectral_norm=True => all convs bias-free).
# Returns (outputs, [conv1..conv5]) like the PyTorch module: conv1..conv4 are
# post-LeakyReLU, conv5 is pre-sigmoid.
# ----------------------------------------------------------------------------
def discriminator_forward(params, x_nchw, *, use_sigmoid=True):
    x = jnp.transpose(x_nchw, (0, 2, 3, 1))                      # NCHW -> NHWC

    def sn_w(name):
        p = params[name]
        return spectral_normalize(p['w'], p['u'])

    c1 = conv2d_fused(x,  sn_w('conv1'), None, stride=2, pad=1, act="leaky",
                      out_dtype=jnp.bfloat16)
    c2 = conv2d_fused(c1, sn_w('conv2'), None, stride=2, pad=1, act="leaky",
                      out_dtype=jnp.bfloat16)
    c3 = conv2d_fused(c2, sn_w('conv3'), None, stride=2, pad=1, act="leaky",
                      out_dtype=jnp.bfloat16)
    c4 = conv2d_fused(c3, sn_w('conv4'), None, stride=1, pad=1, act="leaky",
                      out_dtype=jnp.bfloat16)
    c5 = conv2d_fused(c4, sn_w('conv5'), None, stride=1, pad=1, act="none",
                      out_dtype=jnp.float32)

    # conv5 feature is pre-sigmoid, so sigmoid is applied on the tiny final map
    # outside the kernel.
    out = jax.nn.sigmoid(c5) if use_sigmoid else c5

    # TODO(synk): for tiny inputs like the test shape, layers 2-5 could be fused
    # into a single pallas_call with activations kept resident in VMEM.
    to_nchw = lambda t: jnp.transpose(t, (0, 3, 1, 2)).astype(jnp.float32)
    return to_nchw(out), [to_nchw(c1), to_nchw(c2), to_nchw(c3),
                          to_nchw(c4), to_nchw(c5)]


# ----------------------------------------------------------------------------
# Plain-JAX f32 reference (lax.conv) for a loose numerical sanity check.
# ----------------------------------------------------------------------------
def _reference_forward(params, x_nchw, use_sigmoid=True):
    x = jnp.transpose(x_nchw, (0, 2, 3, 1)).astype(jnp.float32)
    strides = [2, 2, 2, 1, 1]
    feats = []
    for idx, s in zip(range(1, 6), strides):
        p = params[f'conv{idx}']
        w = spectral_normalize(p['w'], p['u'])
        x = lax.conv_general_dilated(
            x, w, window_strides=(s, s), padding=((1, 1), (1, 1)),
            dimension_numbers=("NHWC", "HWIO", "NHWC"))
        if idx < 5:
            x = jnp.where(x >= 0.0, x, 0.2 * x)
        feats.append(x)
    out = jax.nn.sigmoid(feats[-1]) if use_sigmoid else feats[-1]
    to_nchw = lambda t: jnp.transpose(t, (0, 3, 1, 2))
    return to_nchw(out), [to_nchw(f) for f in feats]


# ----------------------------------------------------------------------------
# Deterministic synthetic parameter init (matches module shapes; spectral-norm
# u vectors are persistent buffers like in PyTorch).
# ----------------------------------------------------------------------------
def init_discriminator(key, in_channels):
    defs = [(in_channels, 64), (64, 128), (128, 256), (256, 512), (512, 1)]
    params = {}
    for idx, (cin, cout) in enumerate(defs, start=1):
        kw, ku = jax.random.split(jax.random.fold_in(key, idx))
        w = jax.random.normal(kw, (4, 4, cin, cout), jnp.float32) \
            / math.sqrt(cin * 16)
        u = jax.random.normal(ku, (cout,), jnp.float32)
        u = u / (jnp.linalg.norm(u) + 1e-12)
        params[f'conv{idx}'] = {'w': w, 'u': u}
    return params


# ----------------------------------------------------------------------------
if __name__ == "__main__":
    key = jax.random.PRNGKey(0)
    kp, kx = jax.random.split(key)

    in_channels = 3
    B, H, W = 2, 32, 32        # smallest spatial size giving a valid 2x2 conv5 map

    params = init_discriminator(kp, in_channels)
    x = jax.random.normal(kx, (B, in_channels, H, W), jnp.float32)

    fwd = jax.jit(functools.partial(discriminator_forward, use_sigmoid=True))
    out, feats = jax.block_until_ready(fwd(params, x))

    assert out.shape == (B, 1, 2, 2), out.shape
    assert feats[0].shape == (B, 64, 16, 16), feats[0].shape
    assert feats[1].shape == (B, 128, 8, 8), feats[1].shape
    assert feats[2].shape == (B, 256, 4, 4), feats[2].shape
    assert feats[3].shape == (B, 512, 3, 3), feats[3].shape
    assert feats[4].shape == (B, 1, 2, 2), feats[4].shape

    # Loose sanity check against the f32 lax.conv reference (the kernel path
    # runs bf16 operands with f32 accumulation -> small numeric differences).
    ref_out, ref_feats = _reference_forward(params, x, use_sigmoid=True)
    err_out = float(jnp.max(jnp.abs(out - ref_out)))
    err_c1 = float(jnp.max(jnp.abs(feats[0] - ref_feats[0])))
    assert err_out < 5e-2, err_out
    assert err_c1 < 5e-2, err_c1

    print("KERNEL_OK")
</pallas_src>

<mosaic_0001>
module attributes {stable_mosaic.version = 11 : i64} {
  func.func @_gemm_act_kernel(%arg0: i32, %arg1: i32, %arg2: i32, %arg3: memref<256x128xbf16, #tpu.memory_space<vmem>>, %arg4: memref<128x128xbf16, #tpu.memory_space<vmem>>, %arg5: memref<256x128xbf16, #tpu.memory_space<vmem>>, %arg6: memref<256x128xf32, #tpu.memory_space<vmem>>) attributes {dimension_semantics = [#tpu.dimension_semantics<parallel>, #tpu.dimension_semantics<parallel>, #tpu.dimension_semantics<arbitrary>], iteration_bounds = array<i64: 2, 1, 1>, scalar_prefetch = 0 : i64, scratch_operands = 1 : i64, tpu.core_type = #tpu.core_type<tc>, window_params = [{transform_indices = @transform_0, window_bounds = array<i64: 256, 128>}, {transform_indices = @transform_1, window_bounds = array<i64: 128, 128>}, {transform_indices = @transform_2, window_bounds = array<i64: 256, 128>}]} {
    %c0_i32 = arith.constant 0 : i32
    %0 = arith.cmpi eq, %arg2, %c0_i32 : i32
    %1 = arith.extui %0 : i1 to i32
    %c0_i32_0 = arith.constant 0 : i32
    %2 = arith.cmpi ne, %1, %c0_i32_0 : i32
    scf.if %2 {
      %cst_10 = arith.constant 0.000000e+00 : f32
      %12 = vector.broadcast %cst_10 : f32 to vector<256x128xf32>
      %c0_11 = arith.constant 0 : index
      %c0_12 = arith.constant 0 : index
      %13 = vector.load %arg6[%c0_11, %c0_12] : memref<256x128xf32, #tpu.memory_space<vmem>>, vector<256x128xf32>
      tpu.vector_store %arg6[%c0_11, %c0_12], %12 {strides = array<i32>} : memref<256x128xf32, #tpu.memory_space<vmem>>, vector<256x128xf32>,
    } else {
    }
    %c0 = arith.constant 0 : index
    %c0_1 = arith.constant 0 : index
    %3 = vector.load %arg6[%c0, %c0_1] : memref<256x128xf32, #tpu.memory_space<vmem>>, vector<256x128xf32>
    %c0_2 = arith.constant 0 : index
    %c0_3 = arith.constant 0 : index
    %4 = vector.load %arg3[%c0_2, %c0_3] : memref<256x128xbf16, #tpu.memory_space<vmem>>, vector<256x128xbf16>
    %c0_4 = arith.constant 0 : index
    %c0_5 = arith.constant 0 : index
    %5 = vector.load %arg4[%c0_4, %c0_5] : memref<128x128xbf16, #tpu.memory_space<vmem>>, vector<128x128xbf16>
    %cst = arith.constant dense<0.000000e+00> : vector<256x128xf32>
    %6 = tpu.matmul %4, %5, %cst {dimension_numbers = #tpu.dot_dimension_numbers<[1], [0], [0], [1], [0, 0, 1, 1], [], []>} : vector<256x128xbf16>, vector<128x128xbf16>, vector<256x128xf32> -> vector<256x128xf32>
    %7 = arith.addf %3, %6 : vector<256x128xf32>
    %c0_6 = arith.constant 0 : index
    %c0_7 = arith.constant 0 : index
    %8 = vector.load %arg6[%c0_6, %c0_7] : memref<256x128xf32, #tpu.memory_space<vmem>>, vector<256x128xf32>
    tpu.vector_store %arg6[%c0_6, %c0_7], %7 {strides = array<i32>} : memref<256x128xf32, #tpu.memory_space<vmem>>, vector<256x128xf32>,
    %c0_i32_8 = arith.constant 0 : i32
    %9 = arith.cmpi eq, %arg2, %c0_i32_8 : i32
    %10 = arith.extui %9 : i1 to i32
    %c0_i32_9 = arith.constant 0 : i32
    %11 = arith.cmpi ne, %10, %c0_i32_9 : i32
    scf.if %11 {
      %c0_10 = arith.constant 0 : index
      %c0_11 = arith.constant 0 : index
      %12 = vector.load %arg6[%c0_10, %c0_11] : memref<256x128xf32, #tpu.memory_space<vmem>>, vector<256x128xf32>
      %cst_12 = arith.constant 0.000000e+00 : f32
      %13 = vector.broadcast %cst_12 : f32 to vector<256x128xf32>
      %14 = arith.cmpf oge, %12, %13 : vector<256x128xf32>
      %cst_13 = arith.constant 2.000000e-01 : f32
      %15 = vector.broadcast %cst_13 : f32 to vector<256x128xf32>
      %16 = arith.mulf %15, %12 : vector<256x128xf32>
      %17 = arith.select %14, %12, %16 : vector<256x128xi1>, vector<256x128xf32>
      %18 = arith.truncf %17 : vector<256x128xf32> to vector<256x128xbf16>
      %c0_14 = arith.constant 0 : index
      %c0_15 = arith.constant 0 : index
      %19 = vector.load %arg5[%c0_14, %c0_15] : memref<256x128xbf16, #tpu.memory_space<vmem>>, vector<256x128xbf16>
      tpu.vector_store %arg5[%c0_14, %c0_15], %18 {strides = array<i32>} : memref<256x128xbf16, #tpu.memory_space<vmem>>, vector<256x128xbf16>,
    } else {
    }
    return
  }
  func.func @transform_0(%arg0: i32, %arg1: i32, %arg2: i32) -> (i32, i32) {
    %c0_i32 = arith.constant 0 : i32
    return %arg0, %arg2 : i32, i32
  }
  func.func @transform_1(%arg0: i32, %arg1: i32, %arg2: i32) -> (i32, i32) {
    %c0_i32 = arith.constant 0 : i32
    return %arg2, %arg1 : i32, i32
  }
  func.func @transform_2(%arg0: i32, %arg1: i32, %arg2: i32) -> (i32, i32) {
    %c0_i32 = arith.constant 0 : i32
    return %arg0, %arg1 : i32, i32
  }
}

module attributes {stable_mosaic.version = 11 : i64} {
  func.func @_gemm_act_kernel(%arg0: i32, %arg1: i32, %arg2: i32, %arg3: memref<128x1024xbf16, #tpu.memory_space<vmem>>, %arg4: memref<1024x128xbf16, #tpu.memory_space<vmem>>, %arg5: memref<128x128xbf16, #tpu.memory_space<vmem>>, %arg6: memref<128x128xf32, #tpu.memory_space<vmem>>) attributes {dimension_semantics = [#tpu.dimension_semantics<parallel>, #tpu.dimension_semantics<parallel>, #tpu.dimension_semantics<arbitrary>], iteration_bounds = array<i64: 1, 1, 1>, scalar_prefetch = 0 : i64, scratch_operands = 1 : i64, tpu.core_type = #tpu.core_type<tc>, window_params = [{transform_indices = @transform_0, window_bounds = array<i64: 128, 1024>}, {transform_indices = @transform_1, window_bounds = array<i64: 1024, 128>}, {transform_indices = @transform_2, window_bounds = array<i64: 128, 128>}]} {
    %c0_i32 = arith.constant 0 : i32
    %0 = arith.cmpi eq, %arg2, %c0_i32 : i32
    %1 = arith.extui %0 : i1 to i32
    %c0_i32_0 = arith.constant 0 : i32
    %2 = arith.cmpi ne, %1, %c0_i32_0 : i32
    scf.if %2 {
      %cst_10 = arith.constant 0.000000e+00 : f32
      %12 = vector.broadcast %cst_10 : f32 to vector<128x128xf32>
      %c0_11 = arith.constant 0 : index
      %c0_12 = arith.constant 0 : index
      %13 = vector.load %arg6[%c0_11, %c0_12] : memref<128x128xf32, #tpu.memory_space<vmem>>, vector<128x128xf32>
      tpu.vector_store %arg6[%c0_11, %c0_12], %12 {strides = array<i32>} : memref<128x128xf32, #tpu.memory_space<vmem>>, vector<128x128xf32>,
    } else {
    }
    %c0 = arith.constant 0 : index
    %c0_1 = arith.constant 0 : index
    %3 = vector.load %arg6[%c0, %c0_1] : memref<128x128xf32, #tpu.memory_space<vmem>>, vector<128x128xf32>
    %c0_2 = arith.constant 0 : index
    %c0_3 = arith.constant 0 : index
    %4 = vector.load %arg3[%c0_2, %c0_3] : memref<128x1024xbf16, #tpu.memory_space<vmem>>, vector<128x1024xbf16>
    %c0_4 = arith.constant 0 : index
    %c0_5 = arith.constant 0 : index
    %5 = vector.load %arg4[%c0_4, %c0_5] : memref<1024x128xbf16, #tpu.memory_space<vmem>>, vector<1024x128xbf16>
    %cst = arith.constant dense<0.000000e+00> : vector<128x128xf32>
    %6 = tpu.matmul %4, %5, %cst {dimension_numbers = #tpu.dot_dimension_numbers<[1], [0], [0], [1], [0, 0, 1, 1], [], []>} : vector<128x1024xbf16>, vector<1024x128xbf16>, vector<128x128xf32> -> vector<128x128xf32>
    %7 = arith.addf %3, %6 : vector<128x128xf32>
    %c0_6 = arith.constant 0 : index
    %c0_7 = arith.constant 0 : index
    %8 = vector.load %arg6[%c0_6, %c0_7] : memref<128x128xf32, #tpu.memory_space<vmem>>, vector<128x128xf32>
    tpu.vector_store %arg6[%c0_6, %c0_7], %7 {strides = array<i32>} : memref<128x128xf32, #tpu.memory_space<vmem>>, vector<128x128xf32>,
    %c0_i32_8 = arith.constant 0 : i32
    %9 = arith.cmpi eq, %arg2, %c0_i32_8 : i32
    %10 = arith.extui %9 : i1 to i32
    %c0_i32_9 = arith.constant 0 : i32
    %11 = arith.cmpi ne, %10, %c0_i32_9 : i32
    scf.if %11 {
      %c0_10 = arith.constant 0 : index
      %c0_11 = arith.constant 0 : index
      %12 = vector.load %arg6[%c0_10, %c0_11] : memref<128x128xf32, #tpu.memory_space<vmem>>, vector<128x128xf32>
      %cst_12 = arith.constant 0.000000e+00 : f32
      %13 = vector.broadcast %cst_12 : f32 to vector<128x128xf32>
      %14 = arith.cmpf oge, %12, %13 : vector<128x128xf32>
      %cst_13 = arith.constant 2.000000e-01 : f32
      %15 = vector.broadcast %cst_13 : f32 to vector<128x128xf32>
      %16 = arith.mulf %15, %12 : vector<128x128xf32>
      %17 = arith.select %14, %12, %16 : vector<128x128xi1>, vector<128x128xf32>
      %18 = arith.truncf %17 : vector<128x128xf32> to vector<128x128xbf16>
      %c0_14 = arith.constant 0 : index
      %c0_15 = arith.constant 0 : index
      %19 = vector.load %arg5[%c0_14, %c0_15] : memref<128x128xbf16, #tpu.memory_space<vmem>>, vector<128x128xbf16>
      tpu.vector_store %arg5[%c0_14, %c0_15], %18 {strides = array<i32>} : memref<128x128xbf16, #tpu.memory_space<vmem>>, vector<128x128xbf16>,
    } else {
    }
    return
  }
  func.func @transform_0(%arg0: i32, %arg1: i32, %arg2: i32) -> (i32, i32) {
    %c0_i32 = arith.constant 0 : i32
    return %arg0, %arg2 : i32, i32
  }
  func.func @transform_1(%arg0: i32, %arg1: i32, %arg2: i32) -> (i32, i32) {
    %c0_i32 = arith.constant 0 : i32
    return %arg2, %arg1 : i32, i32
  }
  func.func @transform_2(%arg0: i32, %arg1: i32, %arg2: i32) -> (i32, i32) {
    %c0_i32 = arith.constant 0 : i32
    return %arg0, %arg1 : i32, i32
  }
}

module attributes {stable_mosaic.version = 11 : i64} {
  func.func @_gemm_act_kernel(%arg0: i32, %arg1: i32, %arg2: i32, %arg3: memref<32x1024xbf16, #tpu.memory_space<vmem>>, %arg4: memref<1024x256xbf16, #tpu.memory_space<vmem>>, %arg5: memref<32x256xbf16, #tpu.memory_space<vmem>>, %arg6: memref<32x256xf32, #tpu.memory_space<vmem>>) attributes {dimension_semantics = [#tpu.dimension_semantics<parallel>, #tpu.dimension_semantics<parallel>, #tpu.dimension_semantics<arbitrary>], iteration_bounds = array<i64: 1, 1, 2>, scalar_prefetch = 0 : i64, scratch_operands = 1 : i64, tpu.core_type = #tpu.core_type<tc>, window_params = [{transform_indices = @transform_0, window_bounds = array<i64: 32, 1024>}, {transform_indices = @transform_1, window_bounds = array<i64: 1024, 256>}, {transform_indices = @transform_2, window_bounds = array<i64: 32, 256>}]} {
    %c0_i32 = arith.constant 0 : i32
    %0 = arith.cmpi eq, %arg2, %c0_i32 : i32
    %1 = arith.extui %0 : i1 to i32
    %c0_i32_0 = arith.constant 0 : i32
    %2 = arith.cmpi ne, %1, %c0_i32_0 : i32
    scf.if %2 {
      %cst_9 = arith.constant 0.000000e+00 : f32
      %12 = vector.broadcast %cst_9 : f32 to vector<32x256xf32>
      %c0_10 = arith.constant 0 : index
      %c0_11 = arith.constant 0 : index
      %13 = vector.load %arg6[%c0_10, %c0_11] : memref<32x256xf32, #tpu.memory_space<vmem>>, vector<32x256xf32>
      tpu.vector_store %arg6[%c0_10, %c0_11], %12 {strides = array<i32>} : memref<32x256xf32, #tpu.memory_space<vmem>>, vector<32x256xf32>,
    } else {
    }
    %c0 = arith.constant 0 : index
    %c0_1 = arith.constant 0 : index
    %3 = vector.load %arg6[%c0, %c0_1] : memref<32x256xf32, #tpu.memory_space<vmem>>, vector<32x256xf32>
    %c0_2 = arith.constant 0 : index
    %c0_3 = arith.constant 0 : index
    %4 = vector.load %arg3[%c0_2, %c0_3] : memref<32x1024xbf16, #tpu.memory_space<vmem>>, vector<32x1024xbf16>
    %c0_4 = arith.constant 0 : index
    %c0_5 = arith.constant 0 : index
    %5 = vector.load %arg4[%c0_4, %c0_5] : memref<1024x256xbf16, #tpu.memory_space<vmem>>, vector<1024x256xbf16>
    %cst = arith.constant dense<0.000000e+00> : vector<32x256xf32>
    %6 = tpu.matmul %4, %5, %cst {dimension_numbers = #tpu.dot_dimension_numbers<[1], [0], [0], [1], [0, 0, 1, 1], [], []>} : vector<32x1024xbf16>, vector<1024x256xbf16>, vector<32x256xf32> -> vector<32x256xf32>
    %7 = arith.addf %3, %6 : vector<32x256xf32>
    %c0_6 = arith.constant 0 : index
    %c0_7 = arith.constant 0 : index
    %8 = vector.load %arg6[%c0_6, %c0_7] : memref<32x256xf32, #tpu.memory_space<vmem>>, vector<32x256xf32>
    tpu.vector_store %arg6[%c0_6, %c0_7], %7 {strides = array<i32>} : memref<32x256xf32, #tpu.memory_space<vmem>>, vector<32x256xf32>,
    %c1_i32 = arith.constant 1 : i32
    %9 = arith.cmpi eq, %arg2, %c1_i32 : i32
    %10 = arith.extui %9 : i1 to i32
    %c0_i32_8 = arith.constant 0 : i32
    %11 = arith.cmpi ne, %10, %c0_i32_8 : i32
    scf.if %11 {
      %c0_9 = arith.constant 0 : index
      %c0_10 = arith.constant 0 : index
      %12 = vector.load %arg6[%c0_9, %c0_10] : memref<32x256xf32, #tpu.memory_space<vmem>>, vector<32x256xf32>
      %cst_11 = arith.constant 0.000000e+00 : f32
      %13 = vector.broadcast %cst_11 : f32 to vector<32x256xf32>
      %14 = arith.cmpf oge, %12, %13 : vector<32x256xf32>
      %cst_12 = arith.constant 2.000000e-01 : f32
      %15 = vector.broadcast %cst_12 : f32 to vector<32x256xf32>
      %16 = arith.mulf %15, %12 : vector<32x256xf32>
      %17 = arith.select %14, %12, %16 : vector<32x256xi1>, vector<32x256xf32>
      %18 = arith.truncf %17 : vector<32x256xf32> to vector<32x256xbf16>
      %c0_13 = arith.constant 0 : index
      %c0_14 = arith.constant 0 : index
      %19 = vector.load %arg5[%c0_13, %c0_14] : memref<32x256xbf16, #tpu.memory_space<vmem>>, vector<32x256xbf16>
      tpu.vector_store %arg5[%c0_13, %c0_14], %18 {strides = array<i32>} : memref<32x256xbf16, #tpu.memory_space<vmem>>, vector<32x256xbf16>,
    } else {
    }
    return
  }
  func.func @transform_0(%arg0: i32, %arg1: i32, %arg2: i32) -> (i32, i32) {
    %c0_i32 = arith.constant 0 : i32
    return %arg0, %arg2 : i32, i32
  }
  func.func @transform_1(%arg0: i32, %arg1: i32, %arg2: i32) -> (i32, i32) {
    %c0_i32 = arith.constant 0 : i32
    return %arg2, %arg1 : i32, i32
  }
  func.func @transform_2(%arg0: i32, %arg1: i32, %arg2: i32) -> (i32, i32) {
    %c0_i32 = arith.constant 0 : i32
    return %arg0, %arg1 : i32, i32
  }
}

module attributes {stable_mosaic.version = 11 : i64} {
  func.func @_gemm_act_kernel(%arg0: i32, %arg1: i32, %arg2: i32, %arg3: memref<32x1024xbf16, #tpu.memory_space<vmem>>, %arg4: memref<1024x256xbf16, #tpu.memory_space<vmem>>, %arg5: memref<32x256xbf16, #tpu.memory_space<vmem>>, %arg6: memref<32x256xf32, #tpu.memory_space<vmem>>) attributes {dimension_semantics = [#tpu.dimension_semantics<parallel>, #tpu.dimension_semantics<parallel>, #tpu.dimension_semantics<arbitrary>], iteration_bounds = array<i64: 1, 2, 4>, scalar_prefetch = 0 : i64, scratch_operands = 1 : i64, tpu.core_type = #tpu.core_type<tc>, window_params = [{transform_indices = @transform_0, window_bounds = array<i64: 32, 1024>}, {transform_indices = @transform_1, window_bounds = array<i64: 1024, 256>}, {transform_indices = @transform_2, window_bounds = array<i64: 32, 256>}]} {
    %c0_i32 = arith.constant 0 : i32
    %0 = arith.cmpi eq, %arg2, %c0_i32 : i32
    %1 = arith.extui %0 : i1 to i32
    %c0_i32_0 = arith.constant 0 : i32
    %2 = arith.cmpi ne, %1, %c0_i32_0 : i32
    scf.if %2 {
      %cst_9 = arith.constant 0.000000e+00 : f32
      %12 = vector.broadcast %cst_9 : f32 to vector<32x256xf32>
      %c0_10 = arith.constant 0 : index
      %c0_11 = arith.constant 0 : index
      %13 = vector.load %arg6[%c0_10, %c0_11] : memref<32x256xf32, #tpu.memory_space<vmem>>, vector<32x256xf32>
      tpu.vector_store %arg6[%c0_10, %c0_11], %12 {strides = array<i32>} : memref<32x256xf32, #tpu.memory_space<vmem>>, vector<32x256xf32>,
    } else {
    }
    %c0 = arith.constant 0 : index
    %c0_1 = arith.constant 0 : index
    %3 = vector.load %arg6[%c0, %c0_1] : memref<32x256xf32, #tpu.memory_space<vmem>>, vector<32x256xf32>
    %c0_2 = arith.constant 0 : index
    %c0_3 = arith.constant 0 : index
    %4 = vector.load %arg3[%c0_2, %c0_3] : memref<32x1024xbf16, #tpu.memory_space<vmem>>, vector<32x1024xbf16>
    %c0_4 = arith.constant 0 : index
    %c0_5 = arith.constant 0 : index
    %5 = vector.load %arg4[%c0_4, %c0_5] : memref<1024x256xbf16, #tpu.memory_space<vmem>>, vector<1024x256xbf16>
    %cst = arith.constant dense<0.000000e+00> : vector<32x256xf32>
    %6 = tpu.matmul %4, %5, %cst {dimension_numbers = #tpu.dot_dimension_numbers<[1], [0], [0], [1], [0, 0, 1, 1], [], []>} : vector<32x1024xbf16>, vector<1024x256xbf16>, vector<32x256xf32> -> vector<32x256xf32>
    %7 = arith.addf %3, %6 : vector<32x256xf32>
    %c0_6 = arith.constant 0 : index
    %c0_7 = arith.constant 0 : index
    %8 = vector.load %arg6[%c0_6, %c0_7] : memref<32x256xf32, #tpu.memory_space<vmem>>, vector<32x256xf32>
    tpu.vector_store %arg6[%c0_6, %c0_7], %7 {strides = array<i32>} : memref<32x256xf32, #tpu.memory_space<vmem>>, vector<32x256xf32>,
    %c3_i32 = arith.constant 3 : i32
    %9 = arith.cmpi eq, %arg2, %c3_i32 : i32
    %10 = arith.extui %9 : i1 to i32
    %c0_i32_8 = arith.constant 0 : i32
    %11 = arith.cmpi ne, %10, %c0_i32_8 : i32
    scf.if %11 {
      %c0_9 = arith.constant 0 : index
      %c0_10 = arith.constant 0 : index
      %12 = vector.load %arg6[%c0_9, %c0_10] : memref<32x256xf32, #tpu.memory_space<vmem>>, vector<32x256xf32>
      %cst_11 = arith.constant 0.000000e+00 : f32
      %13 = vector.broadcast %cst_11 : f32 to vector<32x256xf32>
      %14 = arith.cmpf oge, %12, %13 : vector<32x256xf32>
      %cst_12 = arith.constant 2.000000e-01 : f32
      %15 = vector.broadcast %cst_12 : f32 to vector<32x256xf32>
      %16 = arith.mulf %15, %12 : vector<32x256xf32>
      %17 = arith.select %14, %12, %16 : vector<32x256xi1>, vector<32x256xf32>
      %18 = arith.truncf %17 : vector<32x256xf32> to vector<32x256xbf16>
      %c0_13 = arith.constant 0 : index
      %c0_14 = arith.constant 0 : index
      %19 = vector.load %arg5[%c0_13, %c0_14] : memref<32x256xbf16, #tpu.memory_space<vmem>>, vector<32x256xbf16>
      tpu.vector_store %arg5[%c0_13, %c0_14], %18 {strides = array<i32>} : memref<32x256xbf16, #tpu.memory_space<vmem>>, vector<32x256xbf16>,
    } else {
    }
    return
  }
  func.func @transform_0(%arg0: i32, %arg1: i32, %arg2: i32) -> (i32, i32) {
    %c0_i32 = arith.constant 0 : i32
    return %arg0, %arg2 : i32, i32
  }
  func.func @transform_1(%arg0: i32, %arg1: i32, %arg2: i32) -> (i32, i32) {
    %c0_i32 = arith.constant 0 : i32
    return %arg2, %arg1 : i32, i32
  }
  func.func @transform_2(%arg0: i32, %arg1: i32, %arg2: i32) -> (i32, i32) {
    %c0_i32 = arith.constant 0 : i32
    return %arg0, %arg1 : i32, i32
  }
}

module attributes {stable_mosaic.version = 11 : i64} {
  func.func @_gemm_act_kernel(%arg0: i32, %arg1: i32, %arg2: i32, %arg3: memref<16x1024xbf16, #tpu.memory_space<vmem>>, %arg4: memref<1024x128xbf16, #tpu.memory_space<vmem>>, %arg5: memref<16x128xf32, #tpu.memory_space<vmem>>, %arg6: memref<16x128xf32, #tpu.memory_space<vmem>>) attributes {dimension_semantics = [#tpu.dimension_semantics<parallel>, #tpu.dimension_semantics<parallel>, #tpu.dimension_semantics<arbitrary>], iteration_bounds = array<i64: 1, 1, 8>, scalar_prefetch = 0 : i64, scratch_operands = 1 : i64, tpu.core_type = #tpu.core_type<tc>, window_params = [{transform_indices = @transform_0, window_bounds = array<i64: 16, 1024>}, {transform_indices = @transform_1, window_bounds = array<i64: 1024, 128>}, {transform_indices = @transform_2, window_bounds = array<i64: 16, 128>}]} {
    %c0_i32 = arith.constant 0 : i32
    %0 = arith.cmpi eq, %arg2, %c0_i32 : i32
    %1 = arith.extui %0 : i1 to i32
    %c0_i32_0 = arith.constant 0 : i32
    %2 = arith.cmpi ne, %1, %c0_i32_0 : i32
    scf.if %2 {
      %cst_9 = arith.constant 0.000000e+00 : f32
      %12 = vector.broadcast %cst_9 : f32 to vector<16x128xf32>
      %c0_10 = arith.constant 0 : index
      %c0_11 = arith.constant 0 : index
      %13 = vector.load %arg6[%c0_10, %c0_11] : memref<16x128xf32, #tpu.memory_space<vmem>>, vector<16x128xf32>
      tpu.vector_store %arg6[%c0_10, %c0_11], %12 {strides = array<i32>} : memref<16x128xf32, #tpu.memory_space<vmem>>, vector<16x128xf32>,
    } else {
    }
    %c0 = arith.constant 0 : index
    %c0_1 = arith.constant 0 : index
    %3 = vector.load %arg6[%c0, %c0_1] : memref<16x128xf32, #tpu.memory_space<vmem>>, vector<16x128xf32>
    %c0_2 = arith.constant 0 : index
    %c0_3 = arith.constant 0 : index
    %4 = vector.load %arg3[%c0_2, %c0_3] : memref<16x1024xbf16, #tpu.memory_space<vmem>>, vector<16x1024xbf16>
    %c0_4 = arith.constant 0 : index
    %c0_5 = arith.constant 0 : index
    %5 = vector.load %arg4[%c0_4, %c0_5] : memref<1024x128xbf16, #tpu.memory_space<vmem>>, vector<1024x128xbf16>
    %cst = arith.constant dense<0.000000e+00> : vector<16x128xf32>
    %6 = tpu.matmul %4, %5, %cst {dimension_numbers = #tpu.dot_dimension_numbers<[1], [0], [0], [1], [0, 0, 1, 1], [], []>} : vector<16x1024xbf16>, vector<1024x128xbf16>, vector<16x128xf32> -> vector<16x128xf32>
    %7 = arith.addf %3, %6 : vector<16x128xf32>
    %c0_6 = arith.constant 0 : index
    %c0_7 = arith.constant 0 : index
    %8 = vector.load %arg6[%c0_6, %c0_7] : memref<16x128xf32, #tpu.memory_space<vmem>>, vector<16x128xf32>
    tpu.vector_store %arg6[%c0_6, %c0_7], %7 {strides = array<i32>} : memref<16x128xf32, #tpu.memory_space<vmem>>, vector<16x128xf32>,
    %c7_i32 = arith.constant 7 : i32
    %9 = arith.cmpi eq, %arg2, %c7_i32 : i32
    %10 = arith.extui %9 : i1 to i32
    %c0_i32_8 = arith.constant 0 : i32
    %11 = arith.cmpi ne, %10, %c0_i32_8 : i32
    scf.if %11 {
      %c0_9 = arith.constant 0 : index
      %c0_10 = arith.constant 0 : index
      %12 = vector.load %arg6[%c0_9, %c0_10] : memref<16x128xf32, #tpu.memory_space<vmem>>, vector<16x128xf32>
      %c0_11 = arith.constant 0 : index
      %c0_12 = arith.constant 0 : index
      %13 = vector.load %arg5[%c0_11, %c0_12] : memref<16x128xf32, #tpu.memory_space<vmem>>, vector<16x128xf32>
      tpu.vector_store %arg5[%c0_11, %c0_12], %12 {strides = array<i32>} : memref<16x128xf32, #tpu.memory_space<vmem>>, vector<16x128xf32>,
    } else {
    }
    return
  }
  func.func @transform_0(%arg0: i32, %arg1: i32, %arg2: i32) -> (i32, i32) {
    %c0_i32 = arith.constant 0 : i32
    return %arg0, %arg2 : i32, i32
  }
  func.func @transform_1(%arg0: i32, %arg1: i32, %arg2: i32) -> (i32, i32) {
    %c0_i32 = arith.constant 0 : i32
    return %arg2, %arg1 : i32, i32
  }
  func.func @transform_2(%arg0: i32, %arg1: i32, %arg2: i32) -> (i32, i32) {
    %c0_i32 = arith.constant 0 : i32
    return %arg0, %arg1 : i32, i32
  }
}

</mosaic_0001>

<llo_original>
// kernel: discriminator_forward.5
$region0: #{discriminator_forward.5}
  #allocation0 [shape = 'u32[]', space=smem, size = 0x4, offset = 0x4, fixed_abs, tag = 'smem constant byte address 0x4 - core index']
  #allocation1 [shape = 'u32[144,128]{1,0:T(1,128)}', space=vmem, size = 0x12000, scoped, tag = 'internal scratch']
  #allocation2 [shape = 'f32[256,128]{1,0:T(8,128)}', space=vmem, size = 0x20000, scoped, tag = 'scratch operand']
  %s0 = inlined_call_operand.vmem [shape: bf16[512,128], index: 0, kind: input, shape index: {}]
  %s1 = inlined_call_operand.vmem [shape: bf16[128,128], index: 1, kind: input, shape index: {}]
  %s2 = inlined_call_operand.vmem [shape: bf16[512,128], index: 2, kind: output, shape index: {}]
  %s3 = sld [smem:[#allocation0]]
  $region49: #{discriminator_forward.5} parent=0
    _
  %s5 = ssub.s32 1, %s3
  %s6 = scalar_select 0, %s5, %s3
  loop: start=0, step=1, limit=4
  $region2: #{discriminator_forward.5} parent=0 // loop_pre_header
    _
  $region3: #{discriminator_forward.5} parent=0 // loop_header
    %s8 = sphi 0, %s12
    %p9 = scmp.ge.s32.totalorder %s8, 4
    %s15 = sphi 0, %s34
    %s16 = sphi 0, %s30
    %s17 = sphi 0, %s26
    %s18 = sphi 0, %s15
    %s19 = sphi 0, %s16
    %s20 = sphi 0, %s17
    %s21 = sphi 0, %s18
    %s22 = sphi 0, %s19
    %s23 = sphi 0, %s20
    %s39 = sphi 0, %s41
    %s42 = sphi 0, %s39
    %s43 = sphi 0, %s42
    %s59 = sphi 0, %s43
    %s67 = sphi 0, %s69
    %s70 = sphi 0, %s67
    %s71 = sphi 0, %s70
    %s87 = sphi 0, %s71
    %s95 = sphi 0, %s97
    %s98 = sphi 0, %s95
    %s99 = sphi 0, %s98
    %s115 = sphi 0, %s99
  $region4: #{discriminator_forward.5} parent=0 // loop_header_branch
    %11 = sbr.rel (%p9) target = $region8
  $region5: #{discriminator_forward.5} parent=0 // loop_body
    %s13 = ssub.s32 %s8, 1
    %s14 = ssub.s32 %s8, 2
    %s24 = sadd.s32 1, %s17
    %p25 = scmp.ge.s32.totalorder %s24, 1
    %s26 = scalar_select %p25, 0, %s24
    %s27 = sadd.s32 1, %s16
    %s28 = scalar_select %p25, %s27, %s16
    %p29 = scmp.ge.s32.totalorder %s28, 1
    %s30 = scalar_select %p29, 0, %s28
    %s31 = sadd.s32 1, %s15
    %s32 = scalar_select %p29, %s31, %s15
    %p33 = scmp.ge.s32.totalorder %s32, 2
    %s34 = scalar_select %p33, 0, %s32
    %s35 = ssub.s32 %s15, %s34
    %s36 = ssub.s32 %s17, %s26
    %s37 = sor.u32 %s35, %s36
    %p38 = scmp.eq.s32.totalorder %s37, 0
    %s40 = sadd.s32 %s39, 1
    %s41 = scalar_select %p38, %s39, %s40
    %p44 = pneg %p38
    %p45 = scmp.eq.s32.totalorder %s8, 1
    %p46 = por %p44, %p45
    %p47 = scmp.ne.s32.totalorder %s39, %s42
    %p48 = scmp.eq.s32.totalorder %s8, 0
    %p49 = por %p47, %p48
    %p50 = scmp.ne.s32.totalorder %s39, %s42
    %p51 = scmp.eq.s32.totalorder %s13, 1
    %p52 = por %p50, %p51
    %p53 = scmp.ne.s32.totalorder %s42, %s43
    %p54 = scmp.eq.s32.totalorder %s13, 0
    %p55 = por %p53, %p54
    %p56 = scmp.ne.s32.totalorder %s42, %s43
    %p57 = scmp.eq.s32.totalorder %s14, 1
    %p58 = por %p56, %p57
    %p60 = scmp.ne.s32.totalorder %s43, %s59
    %p61 = scmp.eq.s32.totalorder %s14, 0
    %p62 = por %p60, %p61
    %s63 = ssub.s32 %s17, %s26
    %s64 = ssub.s32 %s16, %s30
    %s65 = sor.u32 %s63, %s64
    %p66 = scmp.eq.s32.totalorder %s65, 0
    %s68 = sadd.s32 %s67, 1
    %s69 = scalar_select %p66, %s67, %s68
    %p72 = pneg %p66
    %p73 = scmp.eq.s32.totalorder %s8, 1
    %p74 = por %p72, %p73
    %p75 = scmp.ne.s32.totalorder %s67, %s70
    %p76 = scmp.eq.s32.totalorder %s8, 0
    %p77 = por %p75, %p76
    %p78 = scmp.ne.s32.totalorder %s67, %s70
    %p79 = scmp.eq.s32.totalorder %s13, 1
    %p80 = por %p78, %p79
    %p81 = scmp.ne.s32.totalorder %s70, %s71
    %p82 = scmp.eq.s32.totalorder %s13, 0
    %p83 = por %p81, %p82
    %p84 = scmp.ne.s32.totalorder %s70, %s71
    %p85 = scmp.eq.s32.totalorder %s14, 1
    %p86 = por %p84, %p85
    %p88 = scmp.ne.s32.totalorder %s71, %s87
    %p89 = scmp.eq.s32.totalorder %s14, 0
    %p90 = por %p88, %p89
    %s91 = ssub.s32 %s15, %s34
    %s92 = ssub.s32 %s16, %s30
    %s93 = sor.u32 %s91, %s92
    %p94 = scmp.eq.s32.totalorder %s93, 0
    %s96 = sadd.s32 %s95, 1
    %s97 = scalar_select %p94, %s95, %s96
    %p100 = pneg %p94
    %p101 = scmp.eq.s32.totalorder %s8, 1
    %p102 = por %p100, %p101
    %p103 = scmp.ne.s32.totalorder %s95, %s98
    %p104 = scmp.eq.s32.totalorder %s8, 0
    %p105 = por %p103, %p104
    %p106 = scmp.ne.s32.totalorder %s95, %s98
    %p107 = scmp.eq.s32.totalorder %s13, 1
    %p108 = por %p106, %p107
    %p109 = scmp.ne.s32.totalorder %s98, %s99
    %p110 = scmp.eq.s32.totalorder %s13, 0
    %p111 = por %p109, %p110
    %p112 = scmp.ne.s32.totalorder %s98, %s99
    %p113 = scmp.eq.s32.totalorder %s14, 1
    %p114 = por %p112, %p113
    %p116 = scmp.ne.s32.totalorder %s99, %s115
    %p117 = scmp.eq.s32.totalorder %s14, 0
    %p118 = por %p116, %p117
    %p119 = scmp.le.s32.totalorder 1, %s8
    %p120 = scmp.lt.s32.totalorder %s8, 3
    %p121 = pnand %p119, %p120
    %p122 = pneg %p121
    // Predicated region
    $region9: #{discriminator_forward.5} parent=5 // pred_check
      _
    $region10: #{discriminator_forward.5} parent=5 // pred_check_branch
      %124 = sbr.rel (%p121) target = $region12
    $region11: #{discriminator_forward.5} parent=5 // pred_region
      %s125 = ssub.s32 %s8, 1
      // Predicated region
      $region13: #{discriminator_forward.5} parent=11 // pred_check
        %p126 = pneg %p83
      $region14: #{discriminator_forward.5} parent=11 // pred_check_branch
        %128 = sbr.rel (%p126) target = $region16
      $region15: #{discriminator_forward.5} parent=11 // pred_region
        %s129 = smul.u32 16, %s20
        %p130 = scmp.lt.s32.totalorder %s129, 15
        %s131 = scalar_select %p130, %s129, 15
        %p132 = scmp.lt.s32.totalorder %s19, 0
        %s133 = scalar_select %p132, %s19, 0
        %s134 = sadd.s32 %s133, %s131
        %s135 = smul.addr %s134, 4
        %s136 = scalar_lea.vmem %s1, %s135
        %s137 = smul.u32 16, %s20
      $region16: #{discriminator_forward.5} parent=11 // pred_fallthru
        _
    $region12: #{discriminator_forward.5} parent=5 // pred_fallthru
      _
    %p138 = scmp.lt.s32.totalorder %s8, 2
    // Predicated region
    $region17: #{discriminator_forward.5} parent=5 // pred_check
      %p139 = pneg %p138
    $region18: #{discriminator_forward.5} parent=5 // pred_check_branch
      %141 = sbr.rel (%p139) target = $region20
    $region19: #{discriminator_forward.5} parent=5 // pred_region
      // Predicated region
      $region21: #{discriminator_forward.5} parent=19 // pred_check
        %p142 = pneg %p49
      $region22: #{discriminator_forward.5} parent=19 // pred_check_branch
        %144 = sbr.rel (%p142) target = $region24
      $region23: #{discriminator_forward.5} parent=19 // pred_region
        %s145 = smul.u32 32, %s15
        %p146 = scmp.lt.s32.totalorder %s145, 63
        %s147 = scalar_select %p146, %s145, 63
        %p148 = scmp.lt.s32.totalorder %s17, 0
        %s149 = scalar_select %p148, %s17, 0
        %s150 = sadd.s32 %s149, %s147
        %s151 = smul.addr %s150, 4
        %s152 = scalar_lea.vmem %s0, %s151
        %s153 = smul.u32 32, %s15
      $region24: #{discriminator_forward.5} parent=19 // pred_fallthru
        _
    $region20: #{discriminator_forward.5} parent=5 // pred_fallthru
      _
    %p154 = scmp.le.s32.totalorder 1, %s8
    %p155 = scmp.lt.s32.totalorder %s8, 3
    %p156 = pnand %p154, %p155
    %p157 = pneg %p156
    // Predicated region
    $region25: #{discriminator_forward.5} parent=5 // pred_check
      _
    $region26: #{discriminator_forward.5} parent=5 // pred_check_branch
      %159 = sbr.rel (%p156) target = $region28
    $region27: #{discriminator_forward.5} parent=5 // pred_region
      %s160 = ssub.s32 %s8, 1
      %s161 = smul.u32 32, %s18
      %p162 = scmp.lt.s32.totalorder %s161, 63
      %s163 = scalar_select %p162, %s161, 63
      %p164 = scmp.lt.s32.totalorder %s20, 0
      %s165 = scalar_select %p164, %s20, 0
      %s166 = sadd.s32 %s165, %s163
      %s167 = smul.addr %s166, 4
      %s168 = scalar_lea.vmem %s0, %s167
      %p169 = pneg %p55
      %p170 = pneg %p52
      %s171 = smul.u32 16, %s20
      %p172 = scmp.lt.s32.totalorder %s171, 15
      %s173 = scalar_select %p172, %s171, 15
      %p174 = scmp.lt.s32.totalorder %s19, 0
      %s175 = scalar_select %p174, %s19, 0
      %s176 = sadd.s32 %s175, %s173
      %s177 = smul.addr %s176, 4
      %s178 = scalar_lea.vmem %s1, %s177
      %p179 = pneg %p83
      %p180 = pneg %p80
      %p181 = pneg %p111
      %p182 = pneg %p108
      %s183 = smul.u32 32, %s18
      %p184 = scmp.lt.s32.totalorder %s183, 63
      %s185 = scalar_select %p184, %s183, 63
      %p186 = scmp.lt.s32.totalorder %s19, 0
      %s187 = scalar_select %p186, %s19, 0
      %s188 = sadd.s32 %s187, %s185
      %s189 = smul.addr %s188, 4
      %s190 = scalar_lea.vmem %s2, %s189
      %s191 = smul.u32 32, %s18
      %p192 = scmp.lt.s32.totalorder %s191, 63
      %s193 = scalar_select %p192, %s191, 63
      %p194 = scmp.lt.s32.totalorder %s20, 0
      %s195 = scalar_select %p194, %s20, 0
      %s196 = sadd.s32 %s195, %s193
      %s197 = smul.addr %s196, 4
      %s198 = scalar_lea.vmem %s0, %s197
      %s199 = smul.u32 32, %s18
      %s200 = smul.u32 16, %s20
      %p201 = scmp.lt.s32.totalorder %s200, 15
      %s202 = scalar_select %p201, %s200, 15
      %p203 = scmp.lt.s32.totalorder %s19, 0
      %s204 = scalar_select %p203, %s19, 0
      %s205 = sadd.s32 %s204, %s202
      %s206 = smul.addr %s205, 4
      %s207 = scalar_lea.vmem %s1, %s206
      %s208 = smul.u32 16, %s20
      %s209 = smul.u32 32, %s18
      %p210 = scmp.lt.s32.totalorder %s209, 63
      %s211 = scalar_select %p210, %s209, 63
      %p212 = scmp.lt.s32.totalorder %s19, 0
      %s213 = scalar_select %p212, %s19, 0
      %s214 = sadd.s32 %s213, %s211
      %s215 = smul.addr %s214, 4
      %s216 = scalar_lea.vmem %s2, %s215
      %s217 = smul.u32 32, %s18
      %p219 = scmp.eq.s32.totalorder %s20, 0
      // Predicated region
      $region29: #{discriminator_forward.5} parent=27 // pred_check
        %p220 = pneg %p219
      $region30: #{discriminator_forward.5} parent=27 // pred_check_branch
        %222 = sbr.rel (%p220) target = $region32
      $region31: #{discriminator_forward.5} parent=27 // pred_region
        %223 = vst [vmem:[#allocation2] sm:$0xff] 0.0
        %224 = vst [vmem:[#allocation2 + $0x8] sm:$0xff] 0.0
        %225 = vst [vmem:[#allocation2 + $0x10] sm:$0xff] 0.0
        %226 = vst [vmem:[#allocation2 + $0x18] sm:$0xff] 0.0
        %227 = vst [vmem:[#allocation2 + $0x20] sm:$0xff] 0.0
        %228 = vst [vmem:[#allocation2 + $0x28] sm:$0xff] 0.0
        %229 = vst [vmem:[#allocation2 + $0x30] sm:$0xff] 0.0
        %230 = vst [vmem:[#allocation2 + $0x38] sm:$0xff] 0.0
        %231 = vst [vmem:[#allocation2 + $0x40] sm:$0xff] 0.0
        %232 = vst [vmem:[#allocation2 + $0x48] sm:$0xff] 0.0
        %233 = vst [vmem:[#allocation2 + $0x50] sm:$0xff] 0.0
        %234 = vst [vmem:[#allocation2 + $0x58] sm:$0xff] 0.0
        %235 = vst [vmem:[#allocation2 + $0x60] sm:$0xff] 0.0
        %236 = vst [vmem:[#allocation2 + $0x68] sm:$0xff] 0.0
        %237 = vst [vmem:[#allocation2 + $0x70] sm:$0xff] 0.0
        %238 = vst [vmem:[#allocation2 + $0x78] sm:$0xff] 0.0
        %239 = vst [vmem:[#allocation2 + $0x80] sm:$0xff] 0.0
        %240 = vst [vmem:[#allocation2 + $0x88] sm:$0xff] 0.0
        %241 = vst [vmem:[#allocation2 + $0x90] sm:$0xff] 0.0
        %242 = vst [vmem:[#allocation2 + $0x98] sm:$0xff] 0.0
        %243 = vst [vmem:[#allocation2 + $0xa0] sm:$0xff] 0.0
        %244 = vst [vmem:[#allocation2 + $0xa8] sm:$0xff] 0.0
        %245 = vst [vmem:[#allocation2 + $0xb0] sm:$0xff] 0.0
        %246 = vst [vmem:[#allocation2 + $0xb8] sm:$0xff] 0.0
        %247 = vst [vmem:[#allocation2 + $0xc0] sm:$0xff] 0.0
        %248 = vst [vmem:[#allocation2 + $0xc8] sm:$0xff] 0.0
        %249 = vst [vmem:[#allocation2 + $0xd0] sm:$0xff] 0.0
        %250 = vst [vmem:[#allocation2 + $0xd8] sm:$0xff] 0.0
        %251 = vst [vmem:[#allocation2 + $0xe0] sm:$0xff] 0.0
        %252 = vst [vmem:[#allocation2 + $0xe8] sm:$0xff] 0.0
        %253 = vst [vmem:[#allocation2 + $0xf0] sm:$0xff] 0.0
        %254 = vst [vmem:[#allocation2 + $0xf8] sm:$0xff] 0.0
      $region32: #{discriminator_forward.5} parent=27 // pred_fallthru
        _
      %v255 = vld [vmem:[#allocation2] sm:$0xff]
      %v256 = vld [vmem:[#allocation2 + $0x8] sm:$0xff]
      %v257 = vld [vmem:[#allocation2 + $0x10] sm:$0xff]
      %v258 = vld [vmem:[#allocation2 + $0x18] sm:$0xff]
      %v259 = vld [vmem:[#allocation2 + $0x20] sm:$0xff]
      %v260 = vld [vmem:[#allocation2 + $0x28] sm:$0xff]
      %v261 = vld [vmem:[#allocation2 + $0x30] sm:$0xff]
      %v262 = vld [vmem:[#allocation2 + $0x38] sm:$0xff]
      %v263 = vld [vmem:[#allocation2 + $0x40] sm:$0xff]
      %v264 = vld [vmem:[#allocation2 + $0x48] sm:$0xff]
      %v265 = vld [vmem:[#allocation2 + $0x50] sm:$0xff]
      %v266 = vld [vmem:[#allocation2 + $0x58] sm:$0xff]
      %v267 = vld [vmem:[#allocation2 + $0x60] sm:$0xff]
      %v268 = vld [vmem:[#allocation2 + $0x68] sm:$0xff]
      %v269 = vld [vmem:[#allocation2 + $0x70] sm:$0xff]
      %v270 = vld [vmem:[#allocation2 + $0x78] sm:$0xff]
      %v271 = vld [vmem:[#allocation2 + $0x80] sm:$0xff]
      %v272 = vld [vmem:[#allocation2 + $0x88] sm:$0xff]
      %v273 = vld [vmem:[#allocation2 + $0x90] sm:$0xff]
      %v274 = vld [vmem:[#allocation2 + $0x98] sm:$0xff]
      %v275 = vld [vmem:[#allocation2 + $0xa0] sm:$0xff]
      %v276 = vld [vmem:[#allocation2 + $0xa8] sm:$0xff]
      %v277 = vld [vmem:[#allocation2 + $0xb0] sm:$0xff]
      %v278 = vld [vmem:[#allocation2 + $0xb8] sm:$0xff]
      %v279 = vld [vmem:[#allocation2 + $0xc0] sm:$0xff]
      %v280 = vld [vmem:[#allocation2 + $0xc8] sm:$0xff]
      %v281 = vld [vmem:[#allocation2 + $0xd0] sm:$0xff]
      %v282 = vld [vmem:[#allocation2 + $0xd8] sm:$0xff]
      %v283 = vld [vmem:[#allocation2 + $0xe0] sm:$0xff]
      %v284 = vld [vmem:[#allocation2 + $0xe8] sm:$0xff]
      %v285 = vld [vmem:[#allocation2 + $0xf0] sm:$0xff]
      %v286 = vld [vmem:[#allocation2 + $0xf8] sm:$0xff]
      %v287 = vld [vmem:[%s198] sm:$0xf]
      %v288 = vld [vmem:[%s198 + $0x4] sm:$0xf]
      %v289 = vld [vmem:[%s198 + $0x8] sm:$0xf]
      %v290 = vld [vmem:[%s198 + $0xc] sm:$0xf]
      %v291 = vld [vmem:[%s198 + $0x10] sm:$0xf]
      %v292 = vld [vmem:[%s198 + $0x14] sm:$0xf]
      %v293 = vld [vmem:[%s198 + $0x18] sm:$0xf]
      %v294 = vld [vmem:[%s198 + $0x1c] sm:$0xf]
      %v295 = vld [vmem:[%s198 + $0x20] sm:$0xf]
      %v296 = vld [vmem:[%s198 + $0x24] sm:$0xf]
      %v297 = vld [vmem:[%s198 + $0x28] sm:$0xf]
      %v298 = vld [vmem:[%s198 + $0x2c] sm:$0xf]
      %v299 = vld [vmem:[%s198 + $0x30] sm:$0xf]
      %v300 = vld [vmem:[%s198 + $0x34] sm:$0xf]
      %v301 = vld [vmem:[%s198 + $0x38] sm:$0xf]
      %v302 = vld [vmem:[%s198 + $0x3c] sm:$0xf]
      %v303 = vld [vmem:[%s198 + $0x40] sm:$0xf]
      %v304 = vld [vmem:[%s198 + $0x44] sm:$0xf]
      %v305 = vld [vmem:[%s198 + $0x48] sm:$0xf]
      %v306 = vld [vmem:[%s198 + $0x4c] sm:$0xf]
      %v307 = vld [vmem:[%s198 + $0x50] sm:$0xf]
      %v308 = vld [vmem:[%s198 + $0x54] sm:$0xf]
      %v309 = vld [vmem:[%s198 + $0x58] sm:$0xf]
      %v310 = vld [vmem:[%s198 + $0x5c] sm:$0xf]
      %v311 = vld [vmem:[%s198 + $0x60] sm:$0xf]
      %v312 = vld [vmem:[%s198 + $0x64] sm:$0xf]
      %v313 = vld [vmem:[%s198 + $0x68] sm:$0xf]
      %v314 = vld [vmem:[%s198 + $0x6c] sm:$0xf]
      %v315 = vld [vmem:[%s198 + $0x70] sm:$0xf]
      %v316 = vld [vmem:[%s198 + $0x74] sm:$0xf]
      %v317 = vld [vmem:[%s198 + $0x78] sm:$0xf]
      %v318 = vld [vmem:[%s198 + $0x7c] sm:$0xf]
      %v319 = vld [vmem:[%s207] sm:$0xf]
      %v320 = vld [vmem:[%s207 + $0x4] sm:$0xf]
      %v321 = vld [vmem:[%s207 + $0x8] sm:$0xf]
      %v322 = vld [vmem:[%s207 + $0xc] sm:$0xf]
      %v323 = vld [vmem:[%s207 + $0x10] sm:$0xf]
      %v324 = vld [vmem:[%s207 + $0x14] sm:$0xf]
      %v325 = vld [vmem:[%s207 + $0x18] sm:$0xf]
      %v326 = vld [vmem:[%s207 + $0x1c] sm:$0xf]
      %v327 = vld [vmem:[%s207 + $0x20] sm:$0xf]
      %v328 = vld [vmem:[%s207 + $0x24] sm:$0xf]
      %v329 = vld [vmem:[%s207 + $0x28] sm:$0xf]
      %v330 = vld [vmem:[%s207 + $0x2c] sm:$0xf]
      %v331 = vld [vmem:[%s207 + $0x30] sm:$0xf]
      %v332 = vld [vmem:[%s207 + $0x34] sm:$0xf]
      %v333 = vld [vmem:[%s207 + $0x38] sm:$0xf]
      %v334 = vld [vmem:[%s207 + $0x3c] sm:$0xf]
      %v367 = vunpack.c.l.b16 %v287
      %v368 = vunpack.c.l.b16 %v288
      %v369 = vunpack.c.l.b16 %v289
      %v370 = vunpack.c.l.b16 %v290
      %v371 = vunpack.c.l.b16 %v291
      %v372 = vunpack.c.l.b16 %v292
      %v373 = vunpack.c.l.b16 %v293
      %v374 = vunpack.c.l.b16 %v294
      %v375 = vunpack.c.l.b16 %v295
      %v376 = vunpack.c.l.b16 %v296
      %v377 = vunpack.c.l.b16 %v297
      %v378 = vunpack.c.l.b16 %v298
      %v379 = vunpack.c.l.b16 %v299
      %v380 = vunpack.c.l.b16 %v300
      %v381 = vunpack.c.l.b16 %v301
      %v382 = vunpack.c.l.b16 %v302
      %v383 = vunpack.c.l.b16 %v303
      %v384 = vunpack.c.l.b16 %v304
      %v385 = vunpack.c.l.b16 %v305
      %v386 = vunpack.c.l.b16 %v306
      %v387 = vunpack.c.l.b16 %v307
      %v388 = vunpack.c.l.b16 %v308
      %v389 = vunpack.c.l.b16 %v309
      %v390 = vunpack.c.l.b16 %v310
      %v391 = vunpack.c.l.b16 %v311
      %v392 = vunpack.c.l.b16 %v312
      %v393 = vunpack.c.l.b16 %v313
      %v394 = vunpack.c.l.b16 %v314
      %v395 = vunpack.c.l.b16 %v315
      %v396 = vunpack.c.l.b16 %v316
      %v397 = vunpack.c.l.b16 %v317
      %v398 = vunpack.c.l.b16 %v318
      %v399 = vpack.c.b16 %v368, %v367
      %v400 = vpack.c.b16 %v370, %v369
      %v401 = vpack.c.b16 %v372, %v371
      %v402 = vpack.c.b16 %v374, %v373
      %v403 = vpack.c.b16 %v376, %v375
      %v404 = vpack.c.b16 %v378, %v377
      %v405 = vpack.c.b16 %v380, %v379
      %v406 = vpack.c.b16 %v382, %v381
      %v407 = vpack.c.b16 %v384, %v383
      %v408 = vpack.c.b16 %v386, %v385
      %v409 = vpack.c.b16 %v388, %v387
      %v410 = vpack.c.b16 %v390, %v389
      %v411 = vpack.c.b16 %v392, %v391
      %v412 = vpack.c.b16 %v394, %v393
      %v413 = vpack.c.b16 %v396, %v395
      %v414 = vpack.c.b16 %v398, %v397
      %v447 = vunpack.c.l.b16 %v319
      %v448 = vunpack.c.l.b16 %v320
      %v449 = vunpack.c.l.b16 %v321
      %v450 = vunpack.c.l.b16 %v322
      %v451 = vunpack.c.l.b16 %v323
      %v452 = vunpack.c.l.b16 %v324
      %v453 = vunpack.c.l.b16 %v325
      %v454 = vunpack.c.l.b16 %v326
      %v455 = vunpack.c.l.b16 %v327
      %v456 = vunpack.c.l.b16 %v328
      %v457 = vunpack.c.l.b16 %v329
      %v458 = vunpack.c.l.b16 %v330
      %v459 = vunpack.c.l.b16 %v331
      %v460 = vunpack.c.l.b16 %v332
      %v461 = vunpack.c.l.b16 %v333
      %v462 = vunpack.c.l.b16 %v334
      %v463 = vpack.c.b16 %v448, %v447
      %v464 = vpack.c.b16 %v450, %v449
      %v465 = vpack.c.b16 %v452, %v451
      %v466 = vpack.c.b16 %v454, %v453
      %v467 = vpack.c.b16 %v456, %v455
      %v468 = vpack.c.b16 %v458, %v457
      %v469 = vpack.c.b16 %v460, %v459
      %v470 = vpack.c.b16 %v462, %v461
      %479 = vmatprep.subr.bf16.mxu0 0
      %480 = vmatpush1.bf16.msra.mxu0 %v463
      %481 = vmatprep.subr.bf16.mxu0 0
      %482 = vmatpush1.bf16.msra.mxu0 %v464
      %483 = vmatprep.subr.bf16.mxu0 0
      %484 = vmatpush1.bf16.msra.mxu0 %v465
      %485 = vmatprep.subr.bf16.mxu0 0
      %486 = vmatpush1.bf16.msra.mxu0 %v466
      %487 = vmatprep.subr.bf16.mxu0 0
      %488 = vmatpush1.bf16.msra.mxu0 %v467
      %489 = vmatprep.subr.bf16.mxu0 0
      %490 = vmatpush1.bf16.msra.mxu0 %v468
      %491 = vmatprep.subr.bf16.mxu0 0
      %492 = vmatpush1.bf16.msra.mxu0 %v469
      %493 = vmatprep.subr.bf16.mxu0 0
      %494 = vmatpush1.bf16.msra.mxu0 %v470
      %495 = vmatprep.subr.bf16.mxu0 0
      %496 = vmatpush1.bf16.msra.mxu0 0
      %497 = vmatprep.subr.bf16.mxu0 0
      %498 = vmatpush1.bf16.msra.mxu0 0
      %499 = vmatprep.subr.bf16.mxu0 0
      %500 = vmatpush1.bf16.msra.mxu0 0
      %501 = vmatprep.subr.bf16.mxu0 0
      %502 = vmatpush1.bf16.msra.mxu0 0
      %503 = vmatprep.subr.bf16.mxu0 0
      %504 = vmatpush1.bf16.msra.mxu0 0
      %505 = vmatprep.subr.bf16.mxu0 0
      %506 = vmatpush1.bf16.msra.mxu0 0
      %507 = vmatprep.subr.bf16.mxu0 0
      %508 = vmatpush1.bf16.msra.mxu0 0
      %509 = vmatprep.subr.bf16.mxu0 0
      %510 = vmatpush1.bf16.msra.mxu0 0
      %511 = vmatprep.mubr.bf16.mxu0 0
      %512 = vmatmul.mubr.bf16.gmra.mrb[0].mxu0 %v399
      %v513 = vpop.f32.mrb[0].mxu0
      %v514 = vadd.f32 0.0, %v513
      %v515 = vpop.f32.mrb[0].mxu0
      %v516 = vpop.f32.mrb[0].mxu0
      %v517 = vadd.f32 0.0, %v516
      %v518 = vpop.f32.mrb[0].mxu0
      %519 = vmatprep.mubr.bf16.mxu0 0
      %520 = vmatmul.mubr.bf16.gmra.mrb[0].mxu0 %v400
      %v521 = vpop.f32.mrb[0].mxu0
      %v522 = vadd.f32 0.0, %v521
      %v523 = vpop.f32.mrb[0].mxu0
      %v524 = vpop.f32.mrb[0].mxu0
      %v525 = vadd.f32 0.0, %v524
      %v526 = vpop.f32.mrb[0].mxu0
      %527 = vmatprep.mubr.bf16.mxu0 0
      %528 = vmatmul.mubr.bf16.gmra.mrb[0].mxu0 %v401
      %v529 = vpop.f32.mrb[0].mxu0
      %v530 = vadd.f32 0.0, %v529
      %v531 = vpop.f32.mrb[0].mxu0
      %v532 = vpop.f32.mrb[0].mxu0
      %v533 = vadd.f32 0.0, %v532
      %v534 = vpop.f32.mrb[0].mxu0
      %535 = vmatprep.mubr.bf16.mxu0 0
      %536 = vmatmul.mubr.bf16.gmra.mrb[0].mxu0 %v402
      %v537 = vpop.f32.mrb[0].mxu0
      %v538 = vadd.f32 0.0, %v537
      %v539 = vpop.f32.mrb[0].mxu0
      %v540 = vpop.f32.mrb[0].mxu0
      %v541 = vadd.f32 0.0, %v540
      %v542 = vpop.f32.mrb[0].mxu0
      %543 = vmatprep.mubr.bf16.mxu0 0
      %544 = vmatmul.mubr.bf16.gmra.mrb[0].mxu0 %v403
      %v545 = vpop.f32.mrb[0].mxu0
      %v546 = vadd.f32 0.0, %v545
      %v547 = vpop.f32.mrb[0].mxu0
      %v548 = vpop.f32.mrb[0].mxu0
      %v549 = vadd.f32 0.0, %v548
      %v550 = vpop.f32.mrb[0].mxu0
      %551 = vmatprep.mubr.bf16.mxu0 0
      %552 = vmatmul.mubr.bf16.gmra.mrb[0].mxu0 %v404
      %v553 = vpop.f32.mrb[0].mxu0
      %v554 = vadd.f32 0.0, %v553
      %v555 = vpop.f32.mrb[0].mxu0
      %v556 = vpop.f32.mrb[0].mxu0
      %v557 = vadd.f32 0.0, %v556
      %v558 = vpop.f32.mrb[0].mxu0
      %559 = vmatprep.mubr.bf16.mxu0 0
      %560 = vmatmul.mubr.bf16.gmra.mrb[0].mxu0 %v405
      %v561 = vpop.f32.mrb[0].mxu0
      %v562 = vadd.f32 0.0, %v561
      %v563 = vpop.f32.mrb[0].mxu0
      %v564 = vpop.f32.mrb[0].mxu0
      %v565 = vadd.f32 0.0, %v564
      %v566 = vpop.f32.mrb[0].mxu0
      %567 = vmatprep.mubr.bf16.mxu0 0
      %568 = vmatmul.mubr.bf16.gmra.mrb[0].mxu0 %v406
      %v569 = vpop.f32.mrb[0].mxu0
      %v570 = vadd.f32 0.0, %v569
      %v571 = vpop.f32.mrb[0].mxu0
      %v572 = vpop.f32.mrb[0].mxu0
      %v573 = vadd.f32 0.0, %v572
      %v574 = vpop.f32.mrb[0].mxu0
      %575 = vmatprep.mubr.bf16.mxu0 0
      %576 = vmatmul.mubr.bf16.gmra.mrb[0].mxu0 %v407
      %v577 = vpop.f32.mrb[0].mxu0
      %v578 = vadd.f32 0.0, %v577
      %v579 = vpop.f32.mrb[0].mxu0
      %v580 = vpop.f32.mrb[0].mxu0
      %v581 = vadd.f32 0.0, %v580
      %v582 = vpop.f32.mrb[0].mxu0
      %583 = vmatprep.mubr.bf16.mxu0 0
      %584 = vmatmul.mubr.bf16.gmra.mrb[0].mxu0 %v408
      %v585 = vpop.f32.mrb[0].mxu0
      %v586 = vadd.f32 0.0, %v585
      %v587 = vpop.f32.mrb[0].mxu0
      %v588 = vpop.f32.mrb[0].mxu0
      %v589 = vadd.f32 0.0, %v588
      %v590 = vpop.f32.mrb[0].mxu0
      %591 = vmatprep.mubr.bf16.mxu0 0
      %592 = vmatmul.mubr.bf16.gmra.mrb[0].mxu0 %v409
      %v593 = vpop.f32.mrb[0].mxu0
      %v594 = vadd.f32 0.0, %v593
      %v595 = vpop.f32.mrb[0].mxu0
      %v596 = vpop.f32.mrb[0].mxu0
      %v597 = vadd.f32 0.0, %v596
      %v598 = vpop.f32.mrb[0].mxu0
      %599 = vmatprep.mubr.bf16.mxu0 0
      %600 = vmatmul.mubr.bf16.gmra.mrb[0].mxu0 %v410
      %v601 = vpop.f32.mrb[0].mxu0
      %v602 = vadd.f32 0.0, %v601
      %v603 = vpop.f32.mrb[0].mxu0
      %v604 = vpop.f32.mrb[0].mxu0
      %v605 = vadd.f32 0.0, %v604
      %v606 = vpop.f32.mrb[0].mxu0
      %607 = vmatprep.mubr.bf16.mxu0 0
      %608 = vmatmul.mubr.bf16.gmra.mrb[0].mxu0 %v411
      %v609 = vpop.f32.mrb[0].mxu0
      %v610 = vadd.f32 0.0, %v609
      %v611 = vpop.f32.mrb[0].mxu0
      %v612 = vpop.f32.mrb[0].mxu0
      %v613 = vadd.f32 0.0, %v612
      %v614 = vpop.f32.mrb[0].mxu0
      %615 = vmatprep.mubr.bf16.mxu0 0
      %616 = vmatmul.mubr.bf16.gmra.mrb[0].mxu0 %v412
      %v617 = vpop.f32.mrb[0].mxu0
      %v618 = vadd.f32 0.0, %v617
      %v619 = vpop.f32.mrb[0].mxu0
      %v620 = vpop.f32.mrb[0].mxu0
      %v621 = vadd.f32 0.0, %v620
      %v622 = vpop.f32.mrb[0].mxu0
      %623 = vmatprep.mubr.bf16.mxu0 0
      %624 = vmatmul.mubr.bf16.gmra.mrb[0].mxu0 %v413
      %v625 = vpop.f32.mrb[0].mxu0
      %v626 = vadd.f32 0.0, %v625
      %v627 = vpop.f32.mrb[0].mxu0
      %v628 = vpop.f32.mrb[0].mxu0
      %v629 = vadd.f32 0.0, %v628
      %v630 = vpop.f32.mrb[0].mxu0
      %631 = vmatprep.mubr.bf16.mxu0 0
      %632 = vmatmul.mubr.bf16.gmra.mrb[0].mxu0 %v414
      %v633 = vpop.f32.mrb[0].mxu0
      %v634 = vadd.f32 0.0, %v633
      %v635 = vpop.f32.mrb[0].mxu0
      %v636 = vpop.f32.mrb[0].mxu0
      %v637 = vadd.f32 0.0, %v636
      %v638 = vpop.f32.mrb[0].mxu0
      %639 = vdwg.mxu0
      %v640 = vadd.f32 %v255, %v514
      %v641 = vadd.f32 %v256, %v517
      %v642 = vadd.f32 %v257, %v522
      %v643 = vadd.f32 %v258, %v525
      %v644 = vadd.f32 %v259, %v530
      %v645 = vadd.f32 %v260, %v533
      %v646 = vadd.f32 %v261, %v538
      %v647 = vadd.f32 %v262, %v541
      %v648 = vadd.f32 %v263, %v546
      %v649 = vadd.f32 %v264, %v549
      %v650 = vadd.f32 %v265, %v554
      %v651 = vadd.f32 %v266, %v557
      %v652 = vadd.f32 %v267, %v562
      %v653 = vadd.f32 %v268, %v565
      %v654 = vadd.f32 %v269, %v570
      %v655 = vadd.f32 %v270, %v573
      %v656 = vadd.f32 %v271, %v578
      %v657 = vadd.f32 %v272, %v581
      %v658 = vadd.f32 %v273, %v586
      %v659 = vadd.f32 %v274, %v589
      %v660 = vadd.f32 %v275, %v594
      %v661 = vadd.f32 %v276, %v597
      %v662 = vadd.f32 %v277, %v602
      %v663 = vadd.f32 %v278, %v605
      %v664 = vadd.f32 %v279, %v610
      %v665 = vadd.f32 %v280, %v613
      %v666 = vadd.f32 %v281, %v618
      %v667 = vadd.f32 %v282, %v621
      %v668 = vadd.f32 %v283, %v626
      %v669 = vadd.f32 %v284, %v629
      %v670 = vadd.f32 %v285, %v634
      %v671 = vadd.f32 %v286, %v637
      %672 = vst [vmem:[#allocation2] sm:$0xff] %v640
      %673 = vst [vmem:[#allocation2 + $0x8] sm:$0xff] %v641
      %674 = vst [vmem:[#allocation2 + $0x10] sm:$0xff] %v642
      %675 = vst [vmem:[#allocation2 + $0x18] sm:$0xff] %v643
      %676 = vst [vmem:[#allocation2 + $0x20] sm:$0xff] %v644
      %677 = vst [vmem:[#allocation2 + $0x28] sm:$0xff] %v645
      %678 = vst [vmem:[#allocation2 + $0x30] sm:$0xff] %v646
      %679 = vst [vmem:[#allocation2 + $0x38] sm:$0xff] %v647
      %680 = vst [vmem:[#allocation2 + $0x40] sm:$0xff] %v648
      %681 = vst [vmem:[#allocation2 + $0x48] sm:$0xff] %v649
      %682 = vst [vmem:[#allocation2 + $0x50] sm:$0xff] %v650
      %683 = vst [vmem:[#allocation2 + $0x58] sm:$0xff] %v651
      %684 = vst [vmem:[#allocation2 + $0x60] sm:$0xff] %v652
      %685 = vst [vmem:[#allocation2 + $0x68] sm:$0xff] %v653
      %686 = vst [vmem:[#allocation2 + $0x70] sm:$0xff] %v654
      %687 = vst [vmem:[#allocation2 + $0x78] sm:$0xff] %v655
      %688 = vst [vmem:[#allocation2 + $0x80] sm:$0xff] %v656
      %689 = vst [vmem:[#allocation2 + $0x88] sm:$0xff] %v657
      %690 = vst [vmem:[#allocation2 + $0x90] sm:$0xff] %v658
      %691 = vst [vmem:[#allocation2 + $0x98] sm:$0xff] %v659
      %692 = vst [vmem:[#allocation2 + $0xa0] sm:$0xff] %v660
      %693 = vst [vmem:[#allocation2 + $0xa8] sm:$0xff] %v661
      %694 = vst [vmem:[#allocation2 + $0xb0] sm:$0xff] %v662
      %695 = vst [vmem:[#allocation2 + $0xb8] sm:$0xff] %v663
      %696 = vst [vmem:[#allocation2 + $0xc0] sm:$0xff] %v664
      %697 = vst [vmem:[#allocation2 + $0xc8] sm:$0xff] %v665
      %698 = vst [vmem:[#allocation2 + $0xd0] sm:$0xff] %v666
      %699 = vst [vmem:[#allocation2 + $0xd8] sm:$0xff] %v667
      %700 = vst [vmem:[#allocation2 + $0xe0] sm:$0xff] %v668
      %701 = vst [vmem:[#allocation2 + $0xe8] sm:$0xff] %v669
      %702 = vst [vmem:[#allocation2 + $0xf0] sm:$0xff] %v670
      %703 = vst [vmem:[#allocation2 + $0xf8] sm:$0xff] %v671
      // Predicated region
      $region33: #{discriminator_forward.5} parent=27 // pred_check
        %p704 = pneg %p219
      $region34: #{discriminator_forward.5} parent=27 // pred_check_branch
        %706 = sbr.rel (%p704) target = $region36
      $region35: #{discriminator_forward.5} parent=27 // pred_region
        %v707 = vld [vmem:[#allocation2] sm:$0xff]
        %v708 = vld [vmem:[#allocation2 + $0x8] sm:$0xff]
        %v709 = vld [vmem:[#allocation2 + $0x10] sm:$0xff]
        %v710 = vld [vmem:[#allocation2 + $0x18] sm:$0xff]
        %v711 = vld [vmem:[#allocation2 + $0x20] sm:$0xff]
        %v712 = vld [vmem:[#allocation2 + $0x28] sm:$0xff]
        %v713 = vld [vmem:[#allocation2 + $0x30] sm:$0xff]
        %v714 = vld [vmem:[#allocation2 + $0x38] sm:$0xff]
        %v715 = vld [vmem:[#allocation2 + $0x40] sm:$0xff]
        %v716 = vld [vmem:[#allocation2 + $0x48] sm:$0xff]
        %v717 = vld [vmem:[#allocation2 + $0x50] sm:$0xff]
        %v718 = vld [vmem:[#allocation2 + $0x58] sm:$0xff]
        %v719 = vld [vmem:[#allocation2 + $0x60] sm:$0xff]
        %v720 = vld [vmem:[#allocation2 + $0x68] sm:$0xff]
        %v721 = vld [vmem:[#allocation2 + $0x70] sm:$0xff]
        %v722 = vld [vmem:[#allocation2 + $0x78] sm:$0xff]
        %v723 = vld [vmem:[#allocation2 + $0x80] sm:$0xff]
        %v724 = vld [vmem:[#allocation2 + $0x88] sm:$0xff]
        %v725 = vld [vmem:[#allocation2 + $0x90] sm:$0xff]
        %v726 = vld [vmem:[#allocation2 + $0x98] sm:$0xff]
        %v727 = vld [vmem:[#allocation2 + $0xa0] sm:$0xff]
        %v728 = vld [vmem:[#allocation2 + $0xa8] sm:$0xff]
        %v729 = vld [vmem:[#allocation2 + $0xb0] sm:$0xff]
        %v730 = vld [vmem:[#allocation2 + $0xb8] sm:$0xff]
        %v731 = vld [vmem:[#allocation2 + $0xc0] sm:$0xff]
        %v732 = vld [vmem:[#allocation2 + $0xc8] sm:$0xff]
        %v733 = vld [vmem:[#allocation2 + $0xd0] sm:$0xff]
        %v734 = vld [vmem:[#allocation2 + $0xd8] sm:$0xff]
        %v735 = vld [vmem:[#allocation2 + $0xe0] sm:$0xff]
        %v736 = vld [vmem:[#allocation2 + $0xe8] sm:$0xff]
        %v737 = vld [vmem:[#allocation2 + $0xf0] sm:$0xff]
        %v738 = vld [vmem:[#allocation2 + $0xf8] sm:$0xff]
        %vm739 = vcmp.ge.f32.partialorder %v707, 0.0
        %vm740 = vcmp.ge.f32.partialorder %v708, 0.0
        %vm741 = vcmp.ge.f32.partialorder %v709, 0.0
        %vm742 = vcmp.ge.f32.partialorder %v710, 0.0
        %vm743 = vcmp.ge.f32.partialorder %v711, 0.0
        %vm744 = vcmp.ge.f32.partialorder %v712, 0.0
        %vm745 = vcmp.ge.f32.partialorder %v713, 0.0
        %vm746 = vcmp.ge.f32.partialorder %v714, 0.0
        %vm747 = vcmp.ge.f32.partialorder %v715, 0.0
        %vm748 = vcmp.ge.f32.partialorder %v716, 0.0
        %vm749 = vcmp.ge.f32.partialorder %v717, 0.0
        %vm750 = vcmp.ge.f32.partialorder %v718, 0.0
        %vm751 = vcmp.ge.f32.partialorder %v719, 0.0
        %vm752 = vcmp.ge.f32.partialorder %v720, 0.0
        %vm753 = vcmp.ge.f32.partialorder %v721, 0.0
        %vm754 = vcmp.ge.f32.partialorder %v722, 0.0
        %vm755 = vcmp.ge.f32.partialorder %v723, 0.0
        %vm756 = vcmp.ge.f32.partialorder %v724, 0.0
        %vm757 = vcmp.ge.f32.partialorder %v725, 0.0
        %vm758 = vcmp.ge.f32.partialorder %v726, 0.0
        %vm759 = vcmp.ge.f32.partialorder %v727, 0.0
        %vm760 = vcmp.ge.f32.partialorder %v728, 0.0
        %vm761 = vcmp.ge.f32.partialorder %v729, 0.0
        %vm762 = vcmp.ge.f32.partialorder %v730, 0.0
        %vm763 = vcmp.ge.f32.partialorder %v731, 0.0
        %vm764 = vcmp.ge.f32.partialorder %v732, 0.0
        %vm765 = vcmp.ge.f32.partialorder %v733, 0.0
        %vm766 = vcmp.ge.f32.partialorder %v734, 0.0
        %vm767 = vcmp.ge.f32.partialorder %v735, 0.0
        %vm768 = vcmp.ge.f32.partialorder %v736, 0.0
        %vm769 = vcmp.ge.f32.partialorder %v737, 0.0
        %vm770 = vcmp.ge.f32.partialorder %v738, 0.0
        %v771 = vmul.f32 %v707, 0.2
        %v772 = vmul.f32 %v708, 0.2
        %v773 = vmul.f32 %v709, 0.2
        %v774 = vmul.f32 %v710, 0.2
        %v775 = vmul.f32 %v711, 0.2
        %v776 = vmul.f32 %v712, 0.2
        %v777 = vmul.f32 %v713, 0.2
        %v778 = vmul.f32 %v714, 0.2
        %v779 = vmul.f32 %v715, 0.2
        %v780 = vmul.f32 %v716, 0.2
        %v781 = vmul.f32 %v717, 0.2
        %v782 = vmul.f32 %v718, 0.2
        %v783 = vmul.f32 %v719, 0.2
        %v784 = vmul.f32 %v720, 0.2
        %v785 = vmul.f32 %v721, 0.2
        %v786 = vmul.f32 %v722, 0.2
        %v787 = vmul.f32 %v723, 0.2
        %v788 = vmul.f32 %v724, 0.2
        %v789 = vmul.f32 %v725, 0.2
        %v790 = vmul.f32 %v726, 0.2
        %v791 = vmul.f32 %v727, 0.2
        %v792 = vmul.f32 %v728, 0.2
        %v793 = vmul.f32 %v729, 0.2
        %v794 = vmul.f32 %v730, 0.2
        %v795 = vmul.f32 %v731, 0.2
        %v796 = vmul.f32 %v732, 0.2
        %v797 = vmul.f32 %v733, 0.2
        %v798 = vmul.f32 %v734, 0.2
        %v799 = vmul.f32 %v735, 0.2
        %v800 = vmul.f32 %v736, 0.2
        %v801 = vmul.f32 %v737, 0.2
        %v802 = vmul.f32 %v738, 0.2
        %v803 = vsel %vm739, %v707, %v771
        %v804 = vsel %vm740, %v708, %v772
        %v805 = vsel %vm741, %v709, %v773
        %v806 = vsel %vm742, %v710, %v774
        %v807 = vsel %vm743, %v711, %v775
        %v808 = vsel %vm744, %v712, %v776
        %v809 = vsel %vm745, %v713, %v777
        %v810 = vsel %vm746, %v714, %v778
        %v811 = vsel %vm747, %v715, %v779
        %v812 = vsel %vm748, %v716, %v780
        %v813 = vsel %vm749, %v717, %v781
        %v814 = vsel %vm750, %v718, %v782
        %v815 = vsel %vm751, %v719, %v783
        %v816 = vsel %vm752, %v720, %v784
        %v817 = vsel %vm753, %v721, %v785
        %v818 = vsel %vm754, %v722, %v786
        %v819 = vsel %vm755, %v723, %v787
        %v820 = vsel %vm756, %v724, %v788
        %v821 = vsel %vm757, %v725, %v789
        %v822 = vsel %vm758, %v726, %v790
        %v823 = vsel %vm759, %v727, %v791
        %v824 = vsel %vm760, %v728, %v792
        %v825 = vsel %vm761, %v729, %v793
        %v826 = vsel %vm762, %v730, %v794
        %v827 = vsel %vm763, %v731, %v795
        %v828 = vsel %vm764, %v732, %v796
        %v829 = vsel %vm765, %v733, %v797
        %v830 = vsel %vm766, %v734, %v798
        %v831 = vsel %vm767, %v735, %v799
        %v832 = vsel %vm768, %v736, %v800
        %v833 = vsel %vm769, %v737, %v801
        %v834 = vsel %vm770, %v738, %v802
        %v835 = vpack.c.bf16 %v804, %v803
        %v836 = vpack.c.bf16 %v806, %v805
        %v837 = vpack.c.bf16 %v808, %v807
        %v838 = vpack.c.bf16 %v810, %v809
        %v839 = vpack.c.bf16 %v812, %v811
        %v840 = vpack.c.bf16 %v814, %v813
        %v841 = vpack.c.bf16 %v816, %v815
        %v842 = vpack.c.bf16 %v818, %v817
        %v843 = vpack.c.bf16 %v820, %v819
        %v844 = vpack.c.bf16 %v822, %v821
        %v845 = vpack.c.bf16 %v824, %v823
        %v846 = vpack.c.bf16 %v826, %v825
        %v847 = vpack.c.bf16 %v828, %v827
        %v848 = vpack.c.bf16 %v830, %v829
        %v849 = vpack.c.bf16 %v832, %v831
        %v850 = vpack.c.bf16 %v834, %v833
        %v867 = vunpack.c.l.b16 %v835
        %v868 = vunpack.c.h.b16 %v835
        %v869 = vunpack.c.l.b16 %v836
        %v870 = vunpack.c.h.b16 %v836
        %v871 = vunpack.c.l.b16 %v837
        %v872 = vunpack.c.h.b16 %v837
        %v873 = vunpack.c.l.b16 %v838
        %v874 = vunpack.c.h.b16 %v838
        %v875 = vunpack.c.l.b16 %v839
        %v876 = vunpack.c.h.b16 %v839
        %v877 = vunpack.c.l.b16 %v840
        %v878 = vunpack.c.h.b16 %v840
        %v879 = vunpack.c.l.b16 %v841
        %v880 = vunpack.c.h.b16 %v841
        %v881 = vunpack.c.l.b16 %v842
        %v882 = vunpack.c.h.b16 %v842
        %v883 = vunpack.c.l.b16 %v843
        %v884 = vunpack.c.h.b16 %v843
        %v885 = vunpack.c.l.b16 %v844
        %v886 = vunpack.c.h.b16 %v844
        %v887 = vunpack.c.l.b16 %v845
        %v888 = vunpack.c.h.b16 %v845
        %v889 = vunpack.c.l.b16 %v846
        %v890 = vunpack.c.h.b16 %v846
        %v891 = vunpack.c.l.b16 %v847
        %v892 = vunpack.c.h.b16 %v847
        %v893 = vunpack.c.l.b16 %v848
        %v894 = vunpack.c.h.b16 %v848
        %v895 = vunpack.c.l.b16 %v849
        %v896 = vunpack.c.h.b16 %v849
        %v897 = vunpack.c.l.b16 %v850
        %v898 = vunpack.c.h.b16 %v850
        %v899 = vpack.c.b16 %v867, %v867
        %v900 = vpack.c.b16 %v868, %v868
        %v901 = vpack.c.b16 %v869, %v869
        %v902 = vpack.c.b16 %v870, %v870
        %v903 = vpack.c.b16 %v871, %v871
        %v904 = vpack.c.b16 %v872, %v872
        %v905 = vpack.c.b16 %v873, %v873
        %v906 = vpack.c.b16 %v874, %v874
        %v907 = vpack.c.b16 %v875, %v875
        %v908 = vpack.c.b16 %v876, %v876
        %v909 = vpack.c.b16 %v877, %v877
        %v910 = vpack.c.b16 %v878, %v878
        %v911 = vpack.c.b16 %v879, %v879
        %v912 = vpack.c.b16 %v880, %v880
        %v913 = vpack.c.b16 %v881, %v881
        %v914 = vpack.c.b16 %v882, %v882
        %v915 = vpack.c.b16 %v883, %v883
        %v916 = vpack.c.b16 %v884, %v884
        %v917 = vpack.c.b16 %v885, %v885
        %v918 = vpack.c.b16 %v886, %v886
        %v919 = vpack.c.b16 %v887, %v887
        %v920 = vpack.c.b16 %v888, %v888
        %v921 = vpack.c.b16 %v889, %v889
        %v922 = vpack.c.b16 %v890, %v890
        %v923 = vpack.c.b16 %v891, %v891
        %v924 = vpack.c.b16 %v892, %v892
        %v925 = vpack.c.b16 %v893, %v893
        %v926 = vpack.c.b16 %v894, %v894
        %v927 = vpack.c.b16 %v895, %v895
        %v928 = vpack.c.b16 %v896, %v896
        %v929 = vpack.c.b16 %v897, %v897
        %v930 = vpack.c.b16 %v898, %v898
        %963 = vst [vmem:[%s216] sm:$0xf] %v899
        %964 = vst [vmem:[%s216 + $0x4] sm:$0xf] %v900
        %965 = vst [vmem:[%s216 + $0x8] sm:$0xf] %v901
        %966 = vst [vmem:[%s216 + $0xc] sm:$0xf] %v902
        %967 = vst [vmem:[%s216 + $0x10] sm:$0xf] %v903
        %968 = vst [vmem:[%s216 + $0x14] sm:$0xf] %v904
        %969 = vst [vmem:[%s216 + $0x18] sm:$0xf] %v905
        %970 = vst [vmem:[%s216 + $0x1c] sm:$0xf] %v906
        %971 = vst [vmem:[%s216 + $0x20] sm:$0xf] %v907
        %972 = vst [vmem:[%s216 + $0x24] sm:$0xf] %v908
        %973 = vst [vmem:[%s216 + $0x28] sm:$0xf] %v909
        %974 = vst [vmem:[%s216 + $0x2c] sm:$0xf] %v910
        %975 = vst [vmem:[%s216 + $0x30] sm:$0xf] %v911
        %976 = vst [vmem:[%s216 + $0x34] sm:$0xf] %v912
        %977 = vst [vmem:[%s216 + $0x38] sm:$0xf] %v913
        %978 = vst [vmem:[%s216 + $0x3c] sm:$0xf] %v914
        %979 = vst [vmem:[%s216 + $0x40] sm:$0xf] %v915
        %980 = vst [vmem:[%s216 + $0x44] sm:$0xf] %v916
        %981 = vst [vmem:[%s216 + $0x48] sm:$0xf] %v917
        %982 = vst [vmem:[%s216 + $0x4c] sm:$0xf] %v918
        %983 = vst [vmem:[%s216 + $0x50] sm:$0xf] %v919
        %984 = vst [vmem:[%s216 + $0x54] sm:$0xf] %v920
        %985 = vst [vmem:[%s216 + $0x58] sm:$0xf] %v921
        %986 = vst [vmem:[%s216 + $0x5c] sm:$0xf] %v922
        %987 = vst [vmem:[%s216 + $0x60] sm:$0xf] %v923
        %988 = vst [vmem:[%s216 + $0x64] sm:$0xf] %v924
        %989 = vst [vmem:[%s216 + $0x68] sm:$0xf] %v925
        %990 = vst [vmem:[%s216 + $0x6c] sm:$0xf] %v926
        %991 = vst [vmem:[%s216 + $0x70] sm:$0xf] %v927
        %992 = vst [vmem:[%s216 + $0x74] sm:$0xf] %v928
        %993 = vst [vmem:[%s216 + $0x78] sm:$0xf] %v929
        %994 = vst [vmem:[%s216 + $0x7c] sm:$0xf] %v930
      $region36: #{discriminator_forward.5} parent=27 // pred_fallthru
        _
      %s995 = smul.u32 32, %s18
      %p996 = scmp.lt.s32.totalorder %s995, 63
      %s997 = scalar_select %p996, %s995, 63
      %p998 = scmp.lt.s32.totalorder %s19, 0
      %s999 = scalar_select %p998, %s19, 0
      %s1000 = sadd.s32 %s999, %s997
      %s1001 = smul.addr %s1000, 4
      %s1002 = scalar_lea.vmem %s2, %s1001
      // Predicated region
      $region37: #{discriminator_forward.5} parent=27 // pred_check
        %p1003 = pneg %p108
      $region38: #{discriminator_forward.5} parent=27 // pred_check_branch
        %1005 = sbr.rel (%p1003) target = $region40
      $region39: #{discriminator_forward.5} parent=27 // pred_region
        %s1006 = smul.u32 32, %s18
      $region40: #{discriminator_forward.5} parent=27 // pred_fallthru
        _
    $region28: #{discriminator_forward.5} parent=5 // pred_fallthru
      _
    %p1007 = scmp.le.s32.totalorder 2, %s8
    // Predicated region
    $region41: #{discriminator_forward.5} parent=5 // pred_check
      %p1008 = pneg %p1007
    $region42: #{discriminator_forward.5} parent=5 // pred_check_branch
      %1010 = sbr.rel (%p1008) target = $region44
    $region43: #{discriminator_forward.5} parent=5 // pred_region
      %s1011 = ssub.s32 %s8, 2
      // Predicated region
      $region45: #{discriminator_forward.5} parent=43 // pred_check
        %p1012 = pneg %p114
      $region46: #{discriminator_forward.5} parent=43 // pred_check_branch
        %1014 = sbr.rel (%p1012) target = $region48
      $region47: #{discriminator_forward.5} parent=43 // pred_region
        %s1015 = smul.u32 32, %s21
        %p1016 = scmp.lt.s32.totalorder %s1015, 63
        %s1017 = scalar_select %p1016, %s1015, 63
        %p1018 = scmp.lt.s32.totalorder %s22, 0
        %s1019 = scalar_select %p1018, %s22, 0
        %s1020 = sadd.s32 %s1019, %s1017
        %s1021 = smul.addr %s1020, 4
        %s1022 = scalar_lea.vmem %s2, %s1021
      $region48: #{discriminator_forward.5} parent=43 // pred_fallthru
        _
    $region44: #{discriminator_forward.5} parent=5 // pred_fallthru
      _
  $region6: #{discriminator_forward.5} parent=0 // loop_footer
    %s12 = sadd.s32 1, %s8
  $region7: #{discriminator_forward.5} parent=0 // loop_footer_branch
    %7 = sbr.rel target = $region3
  $region8: #{discriminator_forward.5} parent=0 // loop_exit
    _

// kernel: discriminator_forward.6
$region0: #{discriminator_forward.6}
  #allocation0 [shape = 'u32[]', space=smem, size = 0x4, offset = 0x4, fixed_abs, tag = 'smem constant byte address 0x4 - core index']
  #allocation1 [shape = 'u32[144,128]{1,0:T(1,128)}', space=vmem, size = 0x12000, scoped, tag = 'internal scratch']
  #allocation2 [shape = 'f32[128,128]{1,0:T(8,128)}', space=vmem, size = 0x10000, scoped, tag = 'scratch operand']
  %s0 = inlined_call_operand.vmem [shape: bf16[128,1024], index: 0, kind: input, shape index: {}]
  %s1 = inlined_call_operand.vmem [shape: bf16[1024,128], index: 1, kind: input, shape index: {}]
  %s2 = inlined_call_operand.vmem [shape: bf16[128,128], index: 2, kind: output, shape index: {}]
  %s3 = sld [smem:[#allocation0]]
  $region26: #{discriminator_forward.6} parent=0
    _
  %s5 = ssub.s32 1, %s3
  %s6 = scalar_select 0, %s5, %s3
  // Predicated region
  $region2: #{discriminator_forward.6} parent=0 // pred_check
    _
  $region3: #{discriminator_forward.6} parent=0 // pred_check_branch
    %8 = sbr.rel (0) target = $region5
  $region4: #{discriminator_forward.6} parent=0 // pred_region
    _
  $region5: #{discriminator_forward.6} parent=0 // pred_fallthru
    _
  // Predicated region
  $region6: #{discriminator_forward.6} parent=0 // pred_check
    _
  $region7: #{discriminator_forward.6} parent=0 // pred_check_branch
    %10 = sbr.rel (0) target = $region9
  $region8: #{discriminator_forward.6} parent=0 // pred_region
    _
  $region9: #{discriminator_forward.6} parent=0 // pred_fallthru
    _
  %p12 = scmp.eq.s32.totalorder 0, 0
  // Predicated region
  $region10: #{discriminator_forward.6} parent=0 // pred_check
    %p13 = pneg %p12
  $region11: #{discriminator_forward.6} parent=0 // pred_check_branch
    %15 = sbr.rel (%p13) target = $region13
  $region12: #{discriminator_forward.6} parent=0 // pred_region
    %16 = vst [vmem:[#allocation2] sm:$0xff] 0.0
    %17 = vst [vmem:[#allocation2 + $0x8] sm:$0xff] 0.0
    %18 = vst [vmem:[#allocation2 + $0x10] sm:$0xff] 0.0
    %19 = vst [vmem:[#allocation2 + $0x18] sm:$0xff] 0.0
    %20 = vst [vmem:[#allocation2 + $0x20] sm:$0xff] 0.0
    %21 = vst [vmem:[#allocation2 + $0x28] sm:$0xff] 0.0
    %22 = vst [vmem:[#allocation2 + $0x30] sm:$0xff] 0.0
    %23 = vst [vmem:[#allocation2 + $0x38] sm:$0xff] 0.0
    %24 = vst [vmem:[#allocation2 + $0x40] sm:$0xff] 0.0
    %25 = vst [vmem:[#allocation2 + $0x48] sm:$0xff] 0.0
    %26 = vst [vmem:[#allocation2 + $0x50] sm:$0xff] 0.0
    %27 = vst [vmem:[#allocation2 + $0x58] sm:$0xff] 0.0
    %28 = vst [vmem:[#allocation2 + $0x60] sm:$0xff] 0.0
    %29 = vst [vmem:[#allocation2 + $0x68] sm:$0xff] 0.0
    %30 = vst [vmem:[#allocation2 + $0x70] sm:$0xff] 0.0
    %31 = vst [vmem:[#allocation2 + $0x78] sm:$0xff] 0.0
  $region13: #{discriminator_forward.6} parent=0 // pred_fallthru
    _
  %v32 = vld [vmem:[#allocation2] sm:$0xff]
  %v33 = vld [vmem:[#allocation2 + $0x8] sm:$0xff]
  %v34 = vld [vmem:[#allocation2 + $0x10] sm:$0xff]
  %v35 = vld [vmem:[#allocation2 + $0x18] sm:$0xff]
  %v36 = vld [vmem:[#allocation2 + $0x20] sm:$0xff]
  %v37 = vld [vmem:[#allocation2 + $0x28] sm:$0xff]
  %v38 = vld [vmem:[#allocation2 + $0x30] sm:$0xff]
  %v39 = vld [vmem:[#allocation2 + $0x38] sm:$0xff]
  %v40 = vld [vmem:[#allocation2 + $0x40] sm:$0xff]
  %v41 = vld [vmem:[#allocation2 + $0x48] sm:$0xff]
  %v42 = vld [vmem:[#allocation2 + $0x50] sm:$0xff]
  %v43 = vld [vmem:[#allocation2 + $0x58] sm:$0xff]
  %v44 = vld [vmem:[#allocation2 + $0x60] sm:$0xff]
  %v45 = vld [vmem:[#allocation2 + $0x68] sm:$0xff]
  %v46 = vld [vmem:[#allocation2 + $0x70] sm:$0xff]
  %v47 = vld [vmem:[#allocation2 + $0x78] sm:$0xff]
  %v48 = vld [vmem:[%s0] sm:$0xff]
  %v49 = vld [vmem:[%s0 + $0x8] sm:$0xff]
  %v50 = vld [vmem:[%s0 + $0x10] sm:$0xff]
  %v51 = vld [vmem:[%s0 + $0x18] sm:$0xff]
  %v52 = vld [vmem:[%s0 + $0x20] sm:$0xff]
  %v53 = vld [vmem:[%s0 + $0x28] sm:$0xff]
  %v54 = vld [vmem:[%s0 + $0x30] sm:$0xff]
  %v55 = vld [vmem:[%s0 + $0x38] sm:$0xff]
  %v56 = vld [vmem:[%s0 + $0x40] sm:$0xff]
  %v57 = vld [vmem:[%s0 + $0x48] sm:$0xff]
  %v58 = vld [vmem:[%s0 + $0x50] sm:$0xff]
  %v59 = vld [vmem:[%s0 + $0x58] sm:$0xff]
  %v60 = vld [vmem:[%s0 + $0x60] sm:$0xff]
  %v61 = vld [vmem:[%s0 + $0x68] sm:$0xff]
  %v62 = vld [vmem:[%s0 + $0x70] sm:$0xff]
  %v63 = vld [vmem:[%s0 + $0x78] sm:$0xff]
  %v64 = vld [vmem:[%s0 + $0x80] sm:$0xff]
  %v65 = vld [vmem:[%s0 + $0x88] sm:$0xff]
  %v66 = vld [vmem:[%s0 + $0x90] sm:$0xff]
  %v67 = vld [vmem:[%s0 + $0x98] sm:$0xff]
  %v68 = vld [vmem:[%s0 + $0xa0] sm:$0xff]
  %v69 = vld [vmem:[%s0 + $0xa8] sm:$0xff]
  %v70 = vld [vmem:[%s0 + $0xb0] sm:$0xff]
  %v71 = vld [vmem:[%s0 + $0xb8] sm:$0xff]
  %v72 = vld [vmem:[%s0 + $0xc0] sm:$0xff]
  %v73 = vld [vmem:[%s0 + $0xc8] sm:$0xff]
  %v74 = vld [vmem:[%s0 + $0xd0] sm:$0xff]
  %v75 = vld [vmem:[%s0 + $0xd8] sm:$0xff]
  %v76 = vld [vmem:[%s0 + $0xe0] sm:$0xff]
  %v77 = vld [vmem:[%s0 + $0xe8] sm:$0xff]
  %v78 = vld [vmem:[%s0 + $0xf0] sm:$0xff]
  %v79 = vld [vmem:[%s0 + $0xf8] sm:$0xff]
  %v80 = vld [vmem:[%s0 + $0x100] sm:$0xff]
  %v81 = vld [vmem:[%s0 + $0x108] sm:$0xff]
  %v82 = vld [vmem:[%s0 + $0x110] sm:$0xff]
  %v83 = vld [vmem:[%s0 + $0x118] sm:$0xff]
  %v84 = vld [vmem:[%s0 + $0x120] sm:$0xff]
  %v85 = vld [vmem:[%s0 + $0x128] sm:$0xff]
  %v86 = vld [vmem:[%s0 + $0x130] sm:$0xff]
  %v87 = vld [vmem:[%s0 + $0x138] sm:$0xff]
  %v88 = vld [vmem:[%s0 + $0x140] sm:$0xff]
  %v89 = vld [vmem:[%s0 + $0x148] sm:$0xff]
  %v90 = vld [vmem:[%s0 + $0x150] sm:$0xff]
  %v91 = vld [vmem:[%s0 + $0x158] sm:$0xff]
  %v92 = vld [vmem:[%s0 + $0x160] sm:$0xff]
  %v93 = vld [vmem:[%s0 + $0x168] sm:$0xff]
  %v94 = vld [vmem:[%s0 + $0x170] sm:$0xff]
  %v95 = vld [vmem:[%s0 + $0x178] sm:$0xff]
  %v96 = vld [vmem:[%s0 + $0x180] sm:$0xff]
  %v97 = vld [vmem:[%s0 + $0x188] sm:$0xff]
  %v98 = vld [vmem:[%s0 + $0x190] sm:$0xff]
  %v99 = vld [vmem:[%s0 + $0x198] sm:$0xff]
  %v100 = vld [vmem:[%s0 + $0x1a0] sm:$0xff]
  %v101 = vld [vmem:[%s0 + $0x1a8] sm:$0xff]
  %v102 = vld [vmem:[%s0 + $0x1b0] sm:$0xff]
  %v103 = vld [vmem:[%s0 + $0x1b8] sm:$0xff]
  %v104 = vld [vmem:[%s0 + $0x1c0] sm:$0xff]
  %v105 = vld [vmem:[%s0 + $0x1c8] sm:$0xff]
  %v106 = vld [vmem:[%s0 + $0x1d0] sm:$0xff]
  %v107 = vld [vmem:[%s0 + $0x1d8] sm:$0xff]
  %v108 = vld [vmem:[%s0 + $0x1e0] sm:$0xff]
  %v109 = vld [vmem:[%s0 + $0x1e8] sm:$0xff]
  %v110 = vld [vmem:[%s0 + $0x1f0] sm:$0xff]
  %v111 = vld [vmem:[%s0 + $0x1f8] sm:$0xff]
  %v112 = vld [vmem:[%s1] sm:$0xf]
  %v113 = vld [vmem:[%s1 + $0x4] sm:$0xf]
  %v114 = vld [vmem:[%s1 + $0x8] sm:$0xf]
  %v115 = vld [vmem:[%s1 + $0xc] sm:$0xf]
  %v116 = vld [vmem:[%s1 + $0x10] sm:$0xf]
  %v117 = vld [vmem:[%s1 + $0x14] sm:$0xf]
  %v118 = vld [vmem:[%s1 + $0x18] sm:$0xf]
  %v119 = vld [vmem:[%s1 + $0x1c] sm:$0xf]
  %v120 = vld [vmem:[%s1 + $0x20] sm:$0xf]
  %v121 = vld [vmem:[%s1 + $0x24] sm:$0xf]
  %v122 = vld [vmem:[%s1 + $0x28] sm:$0xf]
  %v123 = vld [vmem:[%s1 + $0x2c] sm:$0xf]
  %v124 = vld [vmem:[%s1 + $0x30] sm:$0xf]
  %v125 = vld [vmem:[%s1 + $0x34] sm:$0xf]
  %v126 = vld [vmem:[%s1 + $0x38] sm:$0xf]
  %v127 = vld [vmem:[%s1 + $0x3c] sm:$0xf]
  %v128 = vld [vmem:[%s1 + $0x40] sm:$0xf]
  %v129 = vld [vmem:[%s1 + $0x44] sm:$0xf]
  %v130 = vld [vmem:[%s1 + $0x48] sm:$0xf]
  %v131 = vld [vmem:[%s1 + $0x4c] sm:$0xf]
  %v132 = vld [vmem:[%s1 + $0x50] sm:$0xf]
  %v133 = vld [vmem:[%s1 + $0x54] sm:$0xf]
  %v134 = vld [vmem:[%s1 + $0x58] sm:$0xf]
  %v135 = vld [vmem:[%s1 + $0x5c] sm:$0xf]
  %v136 = vld [vmem:[%s1 + $0x60] sm:$0xf]
  %v137 = vld [vmem:[%s1 + $0x64] sm:$0xf]
  %v138 = vld [vmem:[%s1 + $0x68] sm:$0xf]
  %v139 = vld [vmem:[%s1 + $0x6c] sm:$0xf]
  %v140 = vld [vmem:[%s1 + $0x70] sm:$0xf]
  %v141 = vld [vmem:[%s1 + $0x74] sm:$0xf]
  %v142 = vld [vmem:[%s1 + $0x78] sm:$0xf]
  %v143 = vld [vmem:[%s1 + $0x7c] sm:$0xf]
  %v144 = vld [vmem:[%s1 + $0x80] sm:$0xf]
  %v145 = vld [vmem:[%s1 + $0x84] sm:$0xf]
  %v146 = vld [vmem:[%s1 + $0x88] sm:$0xf]
  %v147 = vld [vmem:[%s1 + $0x8c] sm:$0xf]
  %v148 = vld [vmem:[%s1 + $0x90] sm:$0xf]
  %v149 = vld [vmem:[%s1 + $0x94] sm:$0xf]
  %v150 = vld [vmem:[%s1 + $0x98] sm:$0xf]
  %v151 = vld [vmem:[%s1 + $0x9c] sm:$0xf]
  %v152 = vld [vmem:[%s1 + $0xa0] sm:$0xf]
  %v153 = vld [vmem:[%s1 + $0xa4] sm:$0xf]
  %v154 = vld [vmem:[%s1 + $0xa8] sm:$0xf]
  %v155 = vld [vmem:[%s1 + $0xac] sm:$0xf]
  %v156 = vld [vmem:[%s1 + $0xb0] sm:$0xf]
  %v157 = vld [vmem:[%s1 + $0xb4] sm:$0xf]
  %v158 = vld [vmem:[%s1 + $0xb8] sm:$0xf]
  %v159 = vld [vmem:[%s1 + $0xbc] sm:$0xf]
  %v160 = vld [vmem:[%s1 + $0xc0] sm:$0xf]
  %v161 = vld [vmem:[%s1 + $0xc4] sm:$0xf]
  %v162 = vld [vmem:[%s1 + $0xc8] sm:$0xf]
  %v163 = vld [vmem:[%s1 + $0xcc] sm:$0xf]
  %v164 = vld [vmem:[%s1 + $0xd0] sm:$0xf]
  %v165 = vld [vmem:[%s1 + $0xd4] sm:$0xf]
  %v166 = vld [vmem:[%s1 + $0xd8] sm:$0xf]
  %v167 = vld [vmem:[%s1 + $0xdc] sm:$0xf]
  %v168 = vld [vmem:[%s1 + $0xe0] sm:$0xf]
  %v169 = vld [vmem:[%s1 + $0xe4] sm:$0xf]
  %v170 = vld [vmem:[%s1 + $0xe8] sm:$0xf]
  %v171 = vld [vmem:[%s1 + $0xec] sm:$0xf]
  %v172 = vld [vmem:[%s1 + $0xf0] sm:$0xf]
  %v173 = vld [vmem:[%s1 + $0xf4] sm:$0xf]
  %v174 = vld [vmem:[%s1 + $0xf8] sm:$0xf]
  %v175 = vld [vmem:[%s1 + $0xfc] sm:$0xf]
  %v176 = vld [vmem:[%s1 + $0x100] sm:$0xf]
  %v177 = vld [vmem:[%s1 + $0x104] sm:$0xf]
  %v178 = vld [vmem:[%s1 + $0x108] sm:$0xf]
  %v179 = vld [vmem:[%s1 + $0x10c] sm:$0xf]
  %v180 = vld [vmem:[%s1 + $0x110] sm:$0xf]
  %v181 = vld [vmem:[%s1 + $0x114] sm:$0xf]
  %v182 = vld [vmem:[%s1 + $0x118] sm:$0xf]
  %v183 = vld [vmem:[%s1 + $0x11c] sm:$0xf]
  %v184 = vld [vmem:[%s1 + $0x120] sm:$0xf]
  %v185 = vld [vmem:[%s1 + $0x124] sm:$0xf]
  %v186 = vld [vmem:[%s1 + $0x128] sm:$0xf]
  %v187 = vld [vmem:[%s1 + $0x12c] sm:$0xf]
  %v188 = vld [vmem:[%s1 + $0x130] sm:$0xf]
  %v189 = vld [vmem:[%s1 + $0x134] sm:$0xf]
  %v190 = vld [vmem:[%s1 + $0x138] sm:$0xf]
  %v191 = vld [vmem:[%s1 + $0x13c] sm:$0xf]
  %v192 = vld [vmem:[%s1 + $0x140] sm:$0xf]
  %v193 = vld [vmem:[%s1 + $0x144] sm:$0xf]
  %v194 = vld [vmem:[%s1 + $0x148] sm:$0xf]
  %v195 = vld [vmem:[%s1 + $0x14c] sm:$0xf]
  %v196 = vld [vmem:[%s1 + $0x150] sm:$0xf]
  %v197 = vld [vmem:[%s1 + $0x154] sm:$0xf]
  %v198 = vld [vmem:[%s1 + $0x158] sm:$0xf]
  %v199 = vld [vmem:[%s1 + $0x15c] sm:$0xf]
  %v200 = vld [vmem:[%s1 + $0x160] sm:$0xf]
  %v201 = vld [vmem:[%s1 + $0x164] sm:$0xf]
  %v202 = vld [vmem:[%s1 + $0x168] sm:$0xf]
  %v203 = vld [vmem:[%s1 + $0x16c] sm:$0xf]
  %v204 = vld [vmem:[%s1 + $0x170] sm:$0xf]
  %v205 = vld [vmem:[%s1 + $0x174] sm:$0xf]
  %v206 = vld [vmem:[%s1 + $0x178] sm:$0xf]
  %v207 = vld [vmem:[%s1 + $0x17c] sm:$0xf]
  %v208 = vld [vmem:[%s1 + $0x180] sm:$0xf]
  %v209 = vld [vmem:[%s1 + $0x184] sm:$0xf]
  %v210 = vld [vmem:[%s1 + $0x188] sm:$0xf]
  %v211 = vld [vmem:[%s1 + $0x18c] sm:$0xf]
  %v212 = vld [vmem:[%s1 + $0x190] sm:$0xf]
  %v213 = vld [vmem:[%s1 + $0x194] sm:$0xf]
  %v214 = vld [vmem:[%s1 + $0x198] sm:$0xf]
  %v215 = vld [vmem:[%s1 + $0x19c] sm:$0xf]
  %v216 = vld [vmem:[%s1 + $0x1a0] sm:$0xf]
  %v217 = vld [vmem:[%s1 + $0x1a4] sm:$0xf]
  %v218 = vld [vmem:[%s1 + $0x1a8] sm:$0xf]
  %v219 = vld [vmem:[%s1 + $0x1ac] sm:$0xf]
  %v220 = vld [vmem:[%s1 + $0x1b0] sm:$0xf]
  %v221 = vld [vmem:[%s1 + $0x1b4] sm:$0xf]
  %v222 = vld [vmem:[%s1 + $0x1b8] sm:$0xf]
  %v223 = vld [vmem:[%s1 + $0x1bc] sm:$0xf]
  %v224 = vld [vmem:[%s1 + $0x1c0] sm:$0xf]
  %v225 = vld [vmem:[%s1 + $0x1c4] sm:$0xf]
  %v226 = vld [vmem:[%s1 + $0x1c8] sm:$0xf]
  %v227 = vld [vmem:[%s1 + $0x1cc] sm:$0xf]
  %v228 = vld [vmem:[%s1 + $0x1d0] sm:$0xf]
  %v229 = vld [vmem:[%s1 + $0x1d4] sm:$0xf]
  %v230 = vld [vmem:[%s1 + $0x1d8] sm:$0xf]
  %v231 = vld [vmem:[%s1 + $0x1dc] sm:$0xf]
  %v232 = vld [vmem:[%s1 + $0x1e0] sm:$0xf]
  %v233 = vld [vmem:[%s1 + $0x1e4] sm:$0xf]
  %v234 = vld [vmem:[%s1 + $0x1e8] sm:$0xf]
  %v235 = vld [vmem:[%s1 + $0x1ec] sm:$0xf]
  %v236 = vld [vmem:[%s1 + $0x1f0] sm:$0xf]
  %v237 = vld [vmem:[%s1 + $0x1f4] sm:$0xf]
  %v238 = vld [vmem:[%s1 + $0x1f8] sm:$0xf]
  %v239 = vld [vmem:[%s1 + $0x1fc] sm:$0xf]
  %v304 = vunpack.c.l.b16 %v48
  %v305 = vunpack.c.h.b16 %v48
  %v306 = vunpack.c.l.b16 %v49
  %v307 = vunpack.c.h.b16 %v49
  %v308 = vunpack.c.l.b16 %v50
  %v309 = vunpack.c.h.b16 %v50
  %v310 = vunpack.c.l.b16 %v51
  %v311 = vunpack.c.h.b16 %v51
  %v312 = vunpack.c.l.b16 %v52
  %v313 = vunpack.c.h.b16 %v52
  %v314 = vunpack.c.l.b16 %v53
  %v315 = vunpack.c.h.b16 %v53
  %v316 = vunpack.c.l.b16 %v54
  %v317 = vunpack.c.h.b16 %v54
  %v318 = vunpack.c.l.b16 %v55
  %v319 = vunpack.c.h.b16 %v55
  %v320 = vunpack.c.l.b16 %v56
  %v321 = vunpack.c.h.b16 %v56
  %v322 = vunpack.c.l.b16 %v57
  %v323 = vunpack.c.h.b16 %v57
  %v324 = vunpack.c.l.b16 %v58
  %v325 = vunpack.c.h.b16 %v58
  %v326 = vunpack.c.l.b16 %v59
  %v327 = vunpack.c.h.b16 %v59
  %v328 = vunpack.c.l.b16 %v60
  %v329 = vunpack.c.h.b16 %v60
  %v330 = vunpack.c.l.b16 %v61
  %v331 = vunpack.c.h.b16 %v61
  %v332 = vunpack.c.l.b16 %v62
  %v333 = vunpack.c.h.b16 %v62
  %v334 = vunpack.c.l.b16 %v63
  %v335 = vunpack.c.h.b16 %v63
  %v336 = vunpack.c.l.b16 %v64
  %v337 = vunpack.c.h.b16 %v64
  %v338 = vunpack.c.l.b16 %v65
  %v339 = vunpack.c.h.b16 %v65
  %v340 = vunpack.c.l.b16 %v66
  %v341 = vunpack.c.h.b16 %v66
  %v342 = vunpack.c.l.b16 %v67
  %v343 = vunpack.c.h.b16 %v67
  %v344 = vunpack.c.l.b16 %v68
  %v345 = vunpack.c.h.b16 %v68
  %v346 = vunpack.c.l.b16 %v69
  %v347 = vunpack.c.h.b16 %v69
  %v348 = vunpack.c.l.b16 %v70
  %v349 = vunpack.c.h.b16 %v70
  %v350 = vunpack.c.l.b16 %v71
  %v351 = vunpack.c.h.b16 %v71
  %v352 = vunpack.c.l.b16 %v72
  %v353 = vunpack.c.h.b16 %v72
  %v354 = vunpack.c.l.b16 %v73
  %v355 = vunpack.c.h.b16 %v73
  %v356 = vunpack.c.l.b16 %v74
  %v357 = vunpack.c.h.b16 %v74
  %v358 = vunpack.c.l.b16 %v75
  %v359 = vunpack.c.h.b16 %v75
  %v360 = vunpack.c.l.b16 %v76
  %v361 = vunpack.c.h.b16 %v76
  %v362 = vunpack.c.l.b16 %v77
  %v363 = vunpack.c.h.b16 %v77
  %v364 = vunpack.c.l.b16 %v78
  %v365 = vunpack.c.h.b16 %v78
  %v366 = vunpack.c.l.b16 %v79
  %v367 = vunpack.c.h.b16 %v79
  %v368 = vunpack.c.l.b16 %v80
  %v369 = vunpack.c.h.b16 %v80
  %v370 = vunpack.c.l.b16 %v81
  %v371 = vunpack.c.h.b16 %v81
  %v372 = vunpack.c.l.b16 %v82
  %v373 = vunpack.c.h.b16 %v82
  %v374 = vunpack.c.l.b16 %v83
  %v375 = vunpack.c.h.b16 %v83
  %v376 = vunpack.c.l.b16 %v84
  %v377 = vunpack.c.h.b16 %v84
  %v378 = vunpack.c.l.b16 %v85
  %v379 = vunpack.c.h.b16 %v85
  %v380 = vunpack.c.l.b16 %v86
  %v381 = vunpack.c.h.b16 %v86
  %v382 = vunpack.c.l.b16 %v87
  %v383 = vunpack.c.h.b16 %v87
  %v384 = vunpack.c.l.b16 %v88
  %v385 = vunpack.c.h.b16 %v88
  %v386 = vunpack.c.l.b16 %v89
  %v387 = vunpack.c.h.b16 %v89
  %v388 = vunpack.c.l.b16 %v90
  %v389 = vunpack.c.h.b16 %v90
  %v390 = vunpack.c.l.b16 %v91
  %v391 = vunpack.c.h.b16 %v91
  %v392 = vunpack.c.l.b16 %v92
  %v393 = vunpack.c.h.b16 %v92
  %v394 = vunpack.c.l.b16 %v93
  %v395 = vunpack.c.h.b16 %v93
  %v396 = vunpack.c.l.b16 %v94
  %v397 = vunpack.c.h.b16 %v94
  %v398 = vunpack.c.l.b16 %v95
  %v399 = vunpack.c.h.b16 %v95
  %v400 = vunpack.c.l.b16 %v96
  %v401 = vunpack.c.h.b16 %v96
  %v402 = vunpack.c.l.b16 %v97
  %v403 = vunpack.c.h.b16 %v97
  %v404 = vunpack.c.l.b16 %v98
  %v405 = vunpack.c.h.b16 %v98
  %v406 = vunpack.c.l.b16 %v99
  %v407 = vunpack.c.h.b16 %v99
  %v408 = vunpack.c.l.b16 %v100
  %v409 = vunpack.c.h.b16 %v100
  %v410 = vunpack.c.l.b16 %v101
  %v411 = vunpack.c.h.b16 %v101
  %v412 = vunpack.c.l.b16 %v102
  %v413 = vunpack.c.h.b16 %v102
  %v414 = vunpack.c.l.b16 %v103
  %v415 = vunpack.c.h.b16 %v103
  %v416 = vunpack.c.l.b16 %v104
  %v417 = vunpack.c.h.b16 %v104
  %v418 = vunpack.c.l.b16 %v105
  %v419 = vunpack.c.h.b16 %v105
  %v420 = vunpack.c.l.b16 %v106
  %v421 = vunpack.c.h.b16 %v106
  %v422 = vunpack.c.l.b16 %v107
  %v423 = vunpack.c.h.b16 %v107
  %v424 = vunpack.c.l.b16 %v108
  %v425 = vunpack.c.h.b16 %v108
  %v426 = vunpack.c.l.b16 %v109
  %v427 = vunpack.c.h.b16 %v109
  %v428 = vunpack.c.l.b16 %v110
  %v429 = vunpack.c.h.b16 %v110
  %v430 = vunpack.c.l.b16 %v111
  %v431 = vunpack.c.h.b16 %v111
  %v432 = vpack.c.b16 %v312, %v304
  %v433 = vpack.c.b16 %v313, %v305
  %v434 = vpack.c.b16 %v314, %v306
  %v435 = vpack.c.b16 %v315, %v307
  %v436 = vpack.c.b16 %v316, %v308
  %v437 = vpack.c.b16 %v317, %v309
  %v438 = vpack.c.b16 %v318, %v310
  %v439 = vpack.c.b16 %v319, %v311
  %v440 = vpack.c.b16 %v328, %v320
  %v441 = vpack.c.b16 %v329, %v321
  %v442 = vpack.c.b16 %v330, %v322
  %v443 = vpack.c.b16 %v331, %v323
  %v444 = vpack.c.b16 %v332, %v324
  %v445 = vpack.c.b16 %v333, %v325
  %v446 = vpack.c.b16 %v334, %v326
  %v447 = vpack.c.b16 %v335, %v327
  %v448 = vpack.c.b16 %v344, %v336
  %v449 = vpack.c.b16 %v345, %v337
  %v450 = vpack.c.b16 %v346, %v338
  %v451 = vpack.c.b16 %v347, %v339
  %v452 = vpack.c.b16 %v348, %v340
  %v453 = vpack.c.b16 %v349, %v341
  %v454 = vpack.c.b16 %v350, %v342
  %v455 = vpack.c.b16 %v351, %v343
  %v456 = vpack.c.b16 %v360, %v352
  %v457 = vpack.c.b16 %v361, %v353
  %v458 = vpack.c.b16 %v362, %v354
  %v459 = vpack.c.b16 %v363, %v355
  %v460 = vpack.c.b16 %v364, %v356
  %v461 = vpack.c.b16 %v365, %v357
  %v462 = vpack.c.b16 %v366, %v358
  %v463 = vpack.c.b16 %v367, %v359
  %v464 = vpack.c.b16 %v376, %v368
  %v465 = vpack.c.b16 %v377, %v369
  %v466 = vpack.c.b16 %v378, %v370
  %v467 = vpack.c.b16 %v379, %v371
  %v468 = vpack.c.b16 %v380, %v372
  %v469 = vpack.c.b16 %v381, %v373
  %v470 = vpack.c.b16 %v382, %v374
  %v471 = vpack.c.b16 %v383, %v375
  %v472 = vpack.c.b16 %v392, %v384
  %v473 = vpack.c.b16 %v393, %v385
  %v474 = vpack.c.b16 %v394, %v386
  %v475 = vpack.c.b16 %v395, %v387
  %v476 = vpack.c.b16 %v396, %v388
  %v477 = vpack.c.b16 %v397, %v389
  %v478 = vpack.c.b16 %v398, %v390
  %v479 = vpack.c.b16 %v399, %v391
  %v480 = vpack.c.b16 %v408, %v400
  %v481 = vpack.c.b16 %v409, %v401
  %v482 = vpack.c.b16 %v410, %v402
  %v483 = vpack.c.b16 %v411, %v403
  %v484 = vpack.c.b16 %v412, %v404
  %v485 = vpack.c.b16 %v413, %v405
  %v486 = vpack.c.b16 %v414, %v406
  %v487 = vpack.c.b16 %v415, %v407
  %v488 = vpack.c.b16 %v424, %v416
  %v489 = vpack.c.b16 %v425, %v417
  %v490 = vpack.c.b16 %v426, %v418
  %v491 = vpack.c.b16 %v427, %v419
  %v492 = vpack.c.b16 %v428, %v420
  %v493 = vpack.c.b16 %v429, %v421
  %v494 = vpack.c.b16 %v430, %v422
  %v495 = vpack.c.b16 %v431, %v423
  %v688 = vunpack.c.l.b16 %v112
  %v689 = vunpack.c.l.b16 %v113
  %v690 = vunpack.c.l.b16 %v114
  %v691 = vunpack.c.l.b16 %v115
  %v692 = vunpack.c.l.b16 %v116
  %v693 = vunpack.c.l.b16 %v117
  %v694 = vunpack.c.l.b16 %v118
  %v695 = vunpack.c.l.b16 %v119
  %v696 = vunpack.c.l.b16 %v120
  %v697 = vunpack.c.l.b16 %v121
  %v698 = vunpack.c.l.b16 %v122
  %v699 = vunpack.c.l.b16 %v123
  %v700 = vunpack.c.l.b16 %v124
  %v701 = vunpack.c.l.b16 %v125
  %v702 = vunpack.c.l.b16 %v126
  %v703 = vunpack.c.l.b16 %v127
  %v704 = vunpack.c.l.b16 %v128
  %v705 = vunpack.c.l.b16 %v129
  %v706 = vunpack.c.l.b16 %v130
  %v707 = vunpack.c.l.b16 %v131
  %v708 = vunpack.c.l.b16 %v132
  %v709 = vunpack.c.l.b16 %v133
  %v710 = vunpack.c.l.b16 %v134
  %v711 = vunpack.c.l.b16 %v135
  %v712 = vunpack.c.l.b16 %v136
  %v713 = vunpack.c.l.b16 %v137
  %v714 = vunpack.c.l.b16 %v138
  %v715 = vunpack.c.l.b16 %v139
  %v716 = vunpack.c.l.b16 %v140
  %v717 = vunpack.c.l.b16 %v141
  %v718 = vunpack.c.l.b16 %v142
  %v719 = vunpack.c.l.b16 %v143
  %v720 = vunpack.c.l.b16 %v144
  %v721 = vunpack.c.l.b16 %v145
  %v722 = vunpack.c.l.b16 %v146
  %v723 = vunpack.c.l.b16 %v147
  %v724 = vunpack.c.l.b16 %v148
  %v725 = vunpack.c.l.b16 %v149
  %v726 = vunpack.c.l.b16 %v150
  %v727 = vunpack.c.l.b16 %v151
  %v728 = vunpack.c.l.b16 %v152
  %v729 = vunpack.c.l.b16 %v153
  %v730 = vunpack.c.l.b16 %v154
  %v731 = vunpack.c.l.b16 %v155
  %v732 = vunpack.c.l.b16 %v156
  %v733 = vunpack.c.l.b16 %v157
  %v734 = vunpack.c.l.b16 %v158
  %v735 = vunpack.c.l.b16 %v159
  %v736 = vunpack.c.l.b16 %v160
  %v737 = vunpack.c.l.b16 %v161
  %v738 = vunpack.c.l.b16 %v162
  %v739 = vunpack.c.l.b16 %v163
  %v740 = vunpack.c.l.b16 %v164
  %v741 = vunpack.c.l.b16 %v165
  %v742 = vunpack.c.l.b16 %v166
  %v743 = vunpack.c.l.b16 %v167
  %v744 = vunpack.c.l.b16 %v168
  %v745 = vunpack.c.l.b16 %v169
  %v746 = vunpack.c.l.b16 %v170
  %v747 = vunpack.c.l.b16 %v171
  %v748 = vunpack.c.l.b16 %v172
  %v749 = vunpack.c.l.b16 %v173
  %v750 = vunpack.c.l.b16 %v174
  %v751 = vunpack.c.l.b16 %v175
  %v752 = vunpack.c.l.b16 %v176
  %v753 = vunpack.c.l.b16 %v177
  %v754 = vunpack.c.l.b16 %v178
  %v755 = vunpack.c.l.b16 %v179
  %v756 = vunpack.c.l.b16 %v180
  %v757 = vunpack.c.l.b16 %v181
  %v758 = vunpack.c.l.b16 %v182
  %v759 = vunpack.c.l.b16 %v183
  %v760 = vunpack.c.l.b16 %v184
  %v761 = vunpack.c.l.b16 %v185
  %v762 = vunpack.c.l.b16 %v186
  %v763 = vunpack.c.l.b16 %v187
  %v764 = vunpack.c.l.b16 %v188
  %v765 = vunpack.c.l.b16 %v189
  %v766 = vunpack.c.l.b16 %v190
  %v767 = vunpack.c.l.b16 %v191
  %v768 = vunpack.c.l.b16 %v192
  %v769 = vunpack.c.l.b16 %v193
  %v770 = vunpack.c.l.b16 %v194
  %v771 = vunpack.c.l.b16 %v195
  %v772 = vunpack.c.l.b16 %v196
  %v773 = vunpack.c.l.b16 %v197
  %v774 = vunpack.c.l.b16 %v198
  %v775 = vunpack.c.l.b16 %v199
  %v776 = vunpack.c.l.b16 %v200
  %v777 = vunpack.c.l.b16 %v201
  %v778 = vunpack.c.l.b16 %v202
  %v779 = vunpack.c.l.b16 %v203
  %v780 = vunpack.c.l.b16 %v204
  %v781 = vunpack.c.l.b16 %v205
  %v782 = vunpack.c.l.b16 %v206
  %v783 = vunpack.c.l.b16 %v207
  %v784 = vunpack.c.l.b16 %v208
  %v785 = vunpack.c.l.b16 %v209
  %v786 = vunpack.c.l.b16 %v210
  %v787 = vunpack.c.l.b16 %v211
  %v788 = vunpack.c.l.b16 %v212
  %v789 = vunpack.c.l.b16 %v213
  %v790 = vunpack.c.l.b16 %v214
  %v791 = vunpack.c.l.b16 %v215
  %v792 = vunpack.c.l.b16 %v216
  %v793 = vunpack.c.l.b16 %v217
  %v794 = vunpack.c.l.b16 %v218
  %v795 = vunpack.c.l.b16 %v219
  %v796 = vunpack.c.l.b16 %v220
  %v797 = vunpack.c.l.b16 %v221
  %v798 = vunpack.c.l.b16 %v222
  %v799 = vunpack.c.l.b16 %v223
  %v800 = vunpack.c.l.b16 %v224
  %v801 = vunpack.c.l.b16 %v225
  %v802 = vunpack.c.l.b16 %v226
  %v803 = vunpack.c.l.b16 %v227
  %v804 = vunpack.c.l.b16 %v228
  %v805 = vunpack.c.l.b16 %v229
  %v806 = vunpack.c.l.b16 %v230
  %v807 = vunpack.c.l.b16 %v231
  %v808 = vunpack.c.l.b16 %v232
  %v809 = vunpack.c.l.b16 %v233
  %v810 = vunpack.c.l.b16 %v234
  %v811 = vunpack.c.l.b16 %v235
  %v812 = vunpack.c.l.b16 %v236
  %v813 = vunpack.c.l.b16 %v237
  %v814 = vunpack.c.l.b16 %v238
  %v815 = vunpack.c.l.b16 %v239
  %v816 = vpack.c.b16 %v689, %v688
  %v817 = vpack.c.b16 %v691, %v690
  %v818 = vpack.c.b16 %v693, %v692
  %v819 = vpack.c.b16 %v695, %v694
  %v820 = vpack.c.b16 %v697, %v696
  %v821 = vpack.c.b16 %v699, %v698
  %v822 = vpack.c.b16 %v701, %v700
  %v823 = vpack.c.b16 %v703, %v702
  %v824 = vpack.c.b16 %v705, %v704
  %v825 = vpack.c.b16 %v707, %v706
  %v826 = vpack.c.b16 %v709, %v708
  %v827 = vpack.c.b16 %v711, %v710
  %v828 = vpack.c.b16 %v713, %v712
  %v829 = vpack.c.b16 %v715, %v714
  %v830 = vpack.c.b16 %v717, %v716
  %v831 = vpack.c.b16 %v719, %v718
  %v832 = vpack.c.b16 %v721, %v720
  %v833 = vpack.c.b16 %v723, %v722
  %v834 = vpack.c.b16 %v725, %v724
  %v835 = vpack.c.b16 %v727, %v726
  %v836 = vpack.c.b16 %v729, %v728
  %v837 = vpack.c.b16 %v731, %v730
  %v838 = vpack.c.b16 %v733, %v732
  %v839 = vpack.c.b16 %v735, %v734
  %v840 = vpack.c.b16 %v737, %v736
  %v841 = vpack.c.b16 %v739, %v738
  %v842 = vpack.c.b16 %v741, %v740
  %v843 = vpack.c.b16 %v743, %v742
  %v844 = vpack.c.b16 %v745, %v744
  %v845 = vpack.c.b16 %v747, %v746
  %v846 = vpack.c.b16 %v749, %v748
  %v847 = vpack.c.b16 %v751, %v750
  %v848 = vpack.c.b16 %v753, %v752
  %v849 = vpack.c.b16 %v755, %v754
  %v850 = vpack.c.b16 %v757, %v756
  %v851 = vpack.c.b16 %v759, %v758
  %v852 = vpack.c.b16 %v761, %v760
  %v853 = vpack.c.b16 %v763, %v762
  %v854 = vpack.c.b16 %v765, %v764
  %v855 = vpack.c.b16 %v767, %v766
  %v856 = vpack.c.b16 %v769, %v768
  %v857 = vpack.c.b16 %v771, %v770
  %v858 = vpack.c.b16 %v773, %v772
  %v859 = vpack.c.b16 %v775, %v774
  %v860 = vpack.c.b16 %v777, %v776
  %v861 = vpack.c.b16 %v779, %v778
  %v862 = vpack.c.b16 %v781, %v780
  %v863 = vpack.c.b16 %v783, %v782
  %v864 = vpack.c.b16 %v785, %v784
  %v865 = vpack.c.b16 %v787, %v786
  %v866 = vpack.c.b16 %v789, %v788
  %v867 = vpack.c.b16 %v791, %v790
  %v868 = vpack.c.b16 %v793, %v792
  %v869 = vpack.c.b16 %v795, %v794
  %v870 = vpack.c.b16 %v797, %v796
  %v871 = vpack.c.b16 %v799, %v798
  %v872 = vpack.c.b16 %v801, %v800
  %v873 = vpack.c.b16 %v803, %v802
  %v874 = vpack.c.b16 %v805, %v804
  %v875 = vpack.c.b16 %v807, %v806
  %v876 = vpack.c.b16 %v809, %v808
  %v877 = vpack.c.b16 %v811, %v810
  %v878 = vpack.c.b16 %v813, %v812
  %v879 = vpack.c.b16 %v815, %v814
  %944 = vmatprep.subr.bf16.mxu0 0
  %945 = vmatpush1.bf16.msra.mxu0 %v816
  %946 = vmatprep.subr.bf16.mxu0 0
  %947 = vmatpush1.bf16.msra.mxu0 %v817
  %948 = vmatprep.subr.bf16.mxu0 0
  %949 = vmatpush1.bf16.msra.mxu0 %v818
  %950 = vmatprep.subr.bf16.mxu0 0
  %951 = vmatpush1.bf16.msra.mxu0 %v819
  %952 = vmatprep.subr.bf16.mxu0 0
  %953 = vmatpush1.bf16.msra.mxu0 %v820
  %954 = vmatprep.subr.bf16.mxu0 0
  %955 = vmatpush1.bf16.msra.mxu0 %v821
  %956 = vmatprep.subr.bf16.mxu0 0
  %957 = vmatpush1.bf16.msra.mxu0 %v822
  %958 = vmatprep.subr.bf16.mxu0 0
  %959 = vmatpush1.bf16.msra.mxu0 %v823
  %960 = vmatprep.subr.bf16.mxu0 0
  %961 = vmatpush1.bf16.msra.mxu0 %v824
  %962 = vmatprep.subr.bf16.mxu0 0
  %963 = vmatpush1.bf16.msra.mxu0 %v825
  %964 = vmatprep.subr.bf16.mxu0 0
  %965 = vmatpush1.bf16.msra.mxu0 %v826
  %966 = vmatprep.subr.bf16.mxu0 0
  %967 = vmatpush1.bf16.msra.mxu0 %v827
  %968 = vmatprep.subr.bf16.mxu0 0
  %969 = vmatpush1.bf16.msra.mxu0 %v828
  %970 = vmatprep.subr.bf16.mxu0 0
  %971 = vmatpush1.bf16.msra.mxu0 %v829
  %972 = vmatprep.subr.bf16.mxu0 0
  %973 = vmatpush1.bf16.msra.mxu0 %v830
  %974 = vmatprep.subr.bf16.mxu0 0
  %975 = vmatpush1.bf16.msra.mxu0 %v831
  %976 = vmatprep.mubr.bf16.mxu0 %v433
  %977 = vmatmul.mubr.bf16.gmra.mrb[0].mxu0 %v432
  %v978 = vpop.f32.mrb[0].mxu0
  %v979 = vadd.f32 0.0, %v978
  %v980 = vpop.f32.mrb[0].mxu0
  %v981 = vpop.f32.mrb[0].mxu0
  %v982 = vadd.f32 0.0, %v981
  %v983 = vpop.f32.mrb[0].mxu0
  %984 = vmatprep.mubr.bf16.mxu0 %v441
  %985 = vmatmul.mubr.bf16.gmra.mrb[0].mxu0 %v440
  %v986 = vpop.f32.mrb[0].mxu0
  %v987 = vadd.f32 0.0, %v986
  %v988 = vpop.f32.mrb[0].mxu0
  %v989 = vpop.f32.mrb[0].mxu0
  %v990 = vadd.f32 0.0, %v989
  %v991 = vpop.f32.mrb[0].mxu0
  %992 = vmatprep.mubr.bf16.mxu0 %v449
  %993 = vmatmul.mubr.bf16.gmra.mrb[0].mxu0 %v448
  %v994 = vpop.f32.mrb[0].mxu0
  %v995 = vadd.f32 0.0, %v994
  %v996 = vpop.f32.mrb[0].mxu0
  %v997 = vpop.f32.mrb[0].mxu0
  %v998 = vadd.f32 0.0, %v997
  %v999 = vpop.f32.mrb[0].mxu0
  %1000 = vmatprep.mubr.bf16.mxu0 %v457
  %1001 = vmatmul.mubr.bf16.gmra.mrb[0].mxu0 %v456
  %v1002 = vpop.f32.mrb[0].mxu0
  %v1003 = vadd.f32 0.0, %v1002
  %v1004 = vpop.f32.mrb[0].mxu0
  %v1005 = vpop.f32.mrb[0].mxu0
  %v1006 = vadd.f32 0.0, %v1005
  %v1007 = vpop.f32.mrb[0].mxu0
  %1008 = vmatprep.mubr.bf16.mxu0 %v465
  %1009 = vmatmul.mubr.bf16.gmra.mrb[0].mxu0 %v464
  %v1010 = vpop.f32.mrb[0].mxu0
  %v1011 = vadd.f32 0.0, %v1010
  %v1012 = vpop.f32.mrb[0].mxu0
  %v1013 = vpop.f32.mrb[0].mxu0
  %v1014 = vadd.f32 0.0, %v1013
  %v1015 = vpop.f32.mrb[0].mxu0
  %1016 = vmatprep.mubr.bf16.mxu0 %v473
  %1017 = vmatmul.mubr.bf16.gmra.mrb[0].mxu0 %v472
  %v1018 = vpop.f32.mrb[0].mxu0
  %v1019 = vadd.f32 0.0, %v1018
  %v1020 = vpop.f32.mrb[0].mxu0
  %v1021 = vpop.f32.mrb[0].mxu0
  %v1022 = vadd.f32 0.0, %v1021
  %v1023 = vpop.f32.mrb[0].mxu0
  %1024 = vmatprep.mubr.bf16.mxu0 %v481
  %1025 = vmatmul.mubr.bf16.gmra.mrb[0].mxu0 %v480
  %v1026 = vpop.f32.mrb[0].mxu0
  %v1027 = vadd.f32 0.0, %v1026
  %v1028 = vpop.f32.mrb[0].mxu0
  %v1029 = vpop.f32.mrb[0].mxu0
  %v1030 = vadd.f32 0.0, %v1029
  %v1031 = vpop.f32.mrb[0].mxu0
  %1032 = vmatprep.mubr.bf16.mxu0 %v489
  %1033 = vmatmul.mubr.bf16.gmra.mrb[0].mxu0 %v488
  %v1034 = vpop.f32.mrb[0].mxu0
  %v1035 = vadd.f32 0.0, %v1034
  %v1036 = vpop.f32.mrb[0].mxu0
  %v1037 = vpop.f32.mrb[0].mxu0
  %v1038 = vadd.f32 0.0, %v1037
  %v1039 = vpop.f32.mrb[0].mxu0
  %1040 = vdwg.mxu0
  %1041 = vmatprep.subr.bf16.mxu0 0
  %1042 = vmatpush1.bf16.msra.mxu0 %v832
  %1043 = vmatprep.subr.bf16.mxu0 0
  %1044 = vmatpush1.bf16.msra.mxu0 %v833
  %1045 = vmatprep.subr.bf16.mxu0 0
  %1046 = vmatpush1.bf16.msra.mxu0 %v834
  %1047 = vmatprep.subr.bf16.mxu0 0
  %1048 = vmatpush1.bf16.msra.mxu0 %v835
  %1049 = vmatprep.subr.bf16.mxu0 0
  %1050 = vmatpush1.bf16.msra.mxu0 %v836
  %1051 = vmatprep.subr.bf16.mxu0 0
  %1052 = vmatpush1.bf16.msra.mxu0 %v837
  %1053 = vmatprep.subr.bf16.mxu0 0
  %1054 = vmatpush1.bf16.msra.mxu0 %v838
  %1055 = vmatprep.subr.bf16.mxu0 0
  %1056 = vmatpush1.bf16.msra.mxu0 %v839
  %1057 = vmatprep.subr.bf16.mxu0 0
  %1058 = vmatpush1.bf16.msra.mxu0 %v840
  %1059 = vmatprep.subr.bf16.mxu0 0
  %1060 = vmatpush1.bf16.msra.mxu0 %v841
  %1061 = vmatprep.subr.bf16.mxu0 0
  %1062 = vmatpush1.bf16.msra.mxu0 %v842
  %1063 = vmatprep.subr.bf16.mxu0 0
  %1064 = vmatpush1.bf16.msra.mxu0 %v843
  %1065 = vmatprep.subr.bf16.mxu0 0
  %1066 = vmatpush1.bf16.msra.mxu0 %v844
  %1067 = vmatprep.subr.bf16.mxu0 0
  %1068 = vmatpush1.bf16.msra.mxu0 %v845
  %1069 = vmatprep.subr.bf16.mxu0 0
  %1070 = vmatpush1.bf16.msra.mxu0 %v846
  %1071 = vmatprep.subr.bf16.mxu0 0
  %1072 = vmatpush1.bf16.msra.mxu0 %v847
  %1073 = vmatprep.mubr.bf16.mxu0 %v435
  %1074 = vmatmul.mubr.bf16.gmra.mrb[0].mxu0 %v434
  %v1075 = vpop.f32.mrb[0].mxu0
  %v1076 = vadd.f32 %v979, %v1075
  %v1077 = vpop.f32.mrb[0].mxu0
  %v1078 = vpop.f32.mrb[0].mxu0
  %v1079 = vadd.f32 %v982, %v1078
  %v1080 = vpop.f32.mrb[0].mxu0
  %1081 = vmatprep.mubr.bf16.mxu0 %v443
  %1082 = vmatmul.mubr.bf16.gmra.mrb[0].mxu0 %v442
  %v1083 = vpop.f32.mrb[0].mxu0
  %v1084 = vadd.f32 %v987, %v1083
  %v1085 = vpop.f32.mrb[0].mxu0
  %v1086 = vpop.f32.mrb[0].mxu0
  %v1087 = vadd.f32 %v990, %v1086
  %v1088 = vpop.f32.mrb[0].mxu0
  %1089 = vmatprep.mubr.bf16.mxu0 %v451
  %1090 = vmatmul.mubr.bf16.gmra.mrb[0].mxu0 %v450
  %v1091 = vpop.f32.mrb[0].mxu0
  %v1092 = vadd.f32 %v995, %v1091
  %v1093 = vpop.f32.mrb[0].mxu0
  %v1094 = vpop.f32.mrb[0].mxu0
  %v1095 = vadd.f32 %v998, %v1094
  %v1096 = vpop.f32.mrb[0].mxu0
  %1097 = vmatprep.mubr.bf16.mxu0 %v459
  %1098 = vmatmul.mubr.bf16.gmra.mrb[0].mxu0 %v458
  %v1099 = vpop.f32.mrb[0].mxu0
  %v1100 = vadd.f32 %v1003, %v1099
  %v1101 = vpop.f32.mrb[0].mxu0
  %v1102 = vpop.f32.mrb[0].mxu0
  %v1103 = vadd.f32 %v1006, %v1102
  %v1104 = vpop.f32.mrb[0].mxu0
  %1105 = vmatprep.mubr.bf16.mxu0 %v467
  %1106 = vmatmul.mubr.bf16.gmra.mrb[0].mxu0 %v466
  %v1107 = vpop.f32.mrb[0].mxu0
  %v1108 = vadd.f32 %v1011, %v1107
  %v1109 = vpop.f32.mrb[0].mxu0
  %v1110 = vpop.f32.mrb[0].mxu0
  %v1111 = vadd.f32 %v1014, %v1110
  %v1112 = vpop.f32.mrb[0].mxu0
  %1113 = vmatprep.mubr.bf16.mxu0 %v475
  %1114 = vmatmul.mubr.bf16.gmra.mrb[0].mxu0 %v474
  %v1115 = vpop.f32.mrb[0].mxu0
  %v1116 = vadd.f32 %v1019, %v1115
  %v1117 = vpop.f32.mrb[0].mxu0
  %v1118 = vpop.f32.mrb[0].mxu0
  %v1119 = vadd.f32 %v1022, %v1118
  %v1120 = vpop.f32.mrb[0].mxu0
  %1121 = vmatprep.mubr.bf16.mxu0 %v483
  %1122 = vmatmul.mubr.bf16.gmra.mrb[0].mxu0 %v482
  %v1123 = vpop.f32.mrb[0].mxu0
  %v1124 = vadd.f32 %v1027, %v1123
  %v1125 = vpop.f32.mrb[0].mxu0
  %v1126 = vpop.f32.mrb[0].mxu0
  %v1127 = vadd.f32 %v1030, %v1126
  %v1128 = vpop.f32.mrb[0].mxu0
  %1129 = vmatprep.mubr.bf16.mxu0 %v491
  %1130 = vmatmul.mubr.bf16.gmra.mrb[0].mxu0 %v490
  %v1131 = vpop.f32.mrb[0].mxu0
  %v1132 = vadd.f32 %v1035, %v1131
  %v1133 = vpop.f32.mrb[0].mxu0
  %v1134 = vpop.f32.mrb[0].mxu0
  %v1135 = vadd.f32 %v1038, %v1134
  %v1136 = vpop.f32.mrb[0].mxu0
  %1137 = vdwg.mxu0
  %1138 = vmatprep.subr.bf16.mxu0 0
  %1139 = vmatpush1.bf16.msra.mxu0 %v848
  %1140 = vmatprep.subr.bf16.mxu0 0
  %1141 = vmatpush1.bf16.msra.mxu0 %v849
  %1142 = vmatprep.subr.bf16.mxu0 0
  %1143 = vmatpush1.bf16.msra.mxu0 %v850
  %1144 = vmatprep.subr.bf16.mxu0 0
  %1145 = vmatpush1.bf16.msra.mxu0 %v851
  %1146 = vmatprep.subr.bf16.mxu0 0
  %1147 = vmatpush1.bf16.msra.mxu0 %v852
  %1148 = vmatprep.subr.bf16.mxu0 0
  %1149 = vmatpush1.bf16.msra.mxu0 %v853
  %1150 = vmatprep.subr.bf16.mxu0 0
  %1151 = vmatpush1.bf16.msra.mxu0 %v854
  %1152 = vmatprep.subr.bf16.mxu0 0
  %1153 = vmatpush1.bf16.msra.mxu0 %v855
  %1154 = vmatprep.subr.bf16.mxu0 0
  %1155 = vmatpush1.bf16.msra.mxu0 %v856
  %1156 = vmatprep.subr.bf16.mxu0 0
  %1157 = vmatpush1.bf16.msra.mxu0 %v857
  %1158 = vmatprep.subr.bf16.mxu0 0
  %1159 = vmatpush1.bf16.msra.mxu0 %v858
  %1160 = vmatprep.subr.bf16.mxu0 0
  %1161 = vmatpush1.bf16.msra.mxu0 %v859
  %1162 = vmatprep.subr.bf16.mxu0 0
  %1163 = vmatpush1.bf16.msra.mxu0 %v860
  %1164 = vmatprep.subr.bf16.mxu0 0
  %1165 = vmatpush1.bf16.msra.mxu0 %v861
  %1166 = vmatprep.subr.bf16.mxu0 0
  %1167 = vmatpush1.bf16.msra.mxu0 %v862
  %1168 = vmatprep.subr.bf16.mxu0 0
  %1169 = vmatpush1.bf16.msra.mxu0 %v863
  %1170 = vmatprep.mubr.bf16.mxu0 %v437
  %1171 = vmatmul.mubr.bf16.gmra.mrb[0].mxu0 %v436
  %v1172 = vpop.f32.mrb[0].mxu0
  %v1173 = vadd.f32 %v1076, %v1172
  %v1174 = vpop.f32.mrb[0].mxu0
  %v1175 = vpop.f32.mrb[0].mxu0
  %v1176 = vadd.f32 %v1079, %v1175
  %v1177 = vpop.f32.mrb[0].mxu0
  %1178 = vmatprep.mubr.bf16.mxu0 %v445
  %1179 = vmatmul.mubr.bf16.gmra.mrb[0].mxu0 %v444
  %v1180 = vpop.f32.mrb[0].mxu0
  %v1181 = vadd.f32 %v1084, %v1180
  %v1182 = vpop.f32.mrb[0].mxu0
  %v1183 = vpop.f32.mrb[0].mxu0
  %v1184 = vadd.f32 %v1087, %v1183
  %v1185 = vpop.f32.mrb[0].mxu0
  %1186 = vmatprep.mubr.bf16.mxu0 %v453
  %1187 = vmatmul.mubr.bf16.gmra.mrb[0].mxu0 %v452
  %v1188 = vpop.f32.mrb[0].mxu0
  %v1189 = vadd.f32 %v1092, %v1188
  %v1190 = vpop.f32.mrb[0].mxu0
  %v1191 = vpop.f32.mrb[0].mxu0
  %v1192 = vadd.f32 %v1095, %v1191
  %v1193 = vpop.f32.mrb[0].mxu0
  %1194 = vmatprep.mubr.bf16.mxu0 %v461
  %1195 = vmatmul.mubr.bf16.gmra.mrb[0].mxu0 %v460
  %v1196 = vpop.f32.mrb[0].mxu0
  %v1197 = vadd.f32 %v1100, %v1196
  %v1198 = vpop.f32.mrb[0].mxu0
  %v1199 = vpop.f32.mrb[0].mxu0
  %v1200 = vadd.f32 %v1103, %v1199
  %v1201 = vpop.f32.mrb[0].mxu0
  %1202 = vmatprep.mubr.bf16.mxu0 %v469
  %1203 = vmatmul.mubr.bf16.gmra.mrb[0].mxu0 %v468
  %v1204 = vpop.f32.mrb[0].mxu0
  %v1205 = vadd.f32 %v1108, %v1204
  %v1206 = vpop.f32.mrb[0].mxu0
  %v1207 = vpop.f32.mrb[0].mxu0
  %v1208 = vadd.f32 %v1111, %v1207
  %v1209 = vpop.f32.mrb[0].mxu0
  %1210 = vmatprep.mubr.bf16.mxu0 %v477
  %1211 = vmatmul.mubr.bf16.gmra.mrb[0].mxu0 %v476
  %v1212 = vpop.f32.mrb[0].mxu0
  %v1213 = vadd.f32 %v1116, %v1212
  %v1214 = vpop.f32.mrb[0].mxu0
  %v1215 = vpop.f32.mrb[0].mxu0
  %v1216 = vadd.f32 %v1119, %v1215
  %v1217 = vpop.f32.mrb[0].mxu0
  %1218 = vmatprep.mubr.bf16.mxu0 %v485
  %1219 = vmatmul.mubr.bf16.gmra.mrb[0].mxu0 %v484
  %v1220 = vpop.f32.mrb[0].mxu0
  %v1221 = vadd.f32 %v1124, %v1220
  %v1222 = vpop.f32.mrb[0].mxu0
  %v1223 = vpop.f32.mrb[0].mxu0
  %v1224 = vadd.f32 %v1127, %v1223
  %v1225 = vpop.f32.mrb[0].mxu0
  %1226 = vmatprep.mubr.bf16.mxu0 %v493
  %1227 = vmatmul.mubr.bf16.gmra.mrb[0].mxu0 %v492
  %v1228 = vpop.f32.mrb[0].mxu0
  %v1229 = vadd.f32 %v1132, %v1228
  %v1230 = vpop.f32.mrb[0].mxu0
  %v1231 = vpop.f32.mrb[0].mxu0
  %v1232 = vadd.f32 %v1135, %v1231
  %v1233 = vpop.f32.mrb[0].mxu0
  %1234 = vdwg.mxu0
  %1235 = vmatprep.subr.bf16.mxu0 0
  %1236 = vmatpush1.bf16.msra.mxu0 %v864
  %1237 = vmatprep.subr.bf16.mxu0 0
  %1238 = vmatpush1.bf16.msra.mxu0 %v865
  %1239 = vmatprep.subr.bf16.mxu0 0
  %1240 = vmatpush1.bf16.msra.mxu0 %v866
  %1241 = vmatprep.subr.bf16.mxu0 0
  %1242 = vmatpush1.bf16.msra.mxu0 %v867
  %1243 = vmatprep.subr.bf16.mxu0 0
  %1244 = vmatpush1.bf16.msra.mxu0 %v868
  %1245 = vmatprep.subr.bf16.mxu0 0
  %1246 = vmatpush1.bf16.msra.mxu0 %v869
  %1247 = vmatprep.subr.bf16.mxu0 0
  %1248 = vmatpush1.bf16.msra.mxu0 %v870
  %1249 = vmatprep.subr.bf16.mxu0 0
  %1250 = vmatpush1.bf16.msra.mxu0 %v871
  %1251 = vmatprep.subr.bf16.mxu0 0
  %1252 = vmatpush1.bf16.msra.mxu0 %v872
  %1253 = vmatprep.subr.bf16.mxu0 0
  %1254 = vmatpush1.bf16.msra.mxu0 %v873
  %1255 = vmatprep.subr.bf16.mxu0 0
  %1256 = vmatpush1.bf16.msra.mxu0 %v874
  %1257 = vmatprep.subr.bf16.mxu0 0
  %1258 = vmatpush1.bf16.msra.mxu0 %v875
  %1259 = vmatprep.subr.bf16.mxu0 0
  %1260 = vmatpush1.bf16.msra.mxu0 %v876
  %1261 = vmatprep.subr.bf16.mxu0 0
  %1262 = vmatpush1.bf16.msra.mxu0 %v877
  %1263 = vmatprep.subr.bf16.mxu0 0
  %1264 = vmatpush1.bf16.msra.mxu0 %v878
  %1265 = vmatprep.subr.bf16.mxu0 0
  %1266 = vmatpush1.bf16.msra.mxu0 %v879
  %1267 = vmatprep.mubr.bf16.mxu0 %v439
  %1268 = vmatmul.mubr.bf16.gmra.mrb[0].mxu0 %v438
  %v1269 = vpop.f32.mrb[0].mxu0
  %v1270 = vadd.f32 %v1173, %v1269
  %v1271 = vpop.f32.mrb[0].mxu0
  %v1272 = vpop.f32.mrb[0].mxu0
  %v1273 = vadd.f32 %v1176, %v1272
  %v1274 = vpop.f32.mrb[0].mxu0
  %1275 = vmatprep.mubr.bf16.mxu0 %v447
  %1276 = vmatmul.mubr.bf16.gmra.mrb[0].mxu0 %v446
  %v1277 = vpop.f32.mrb[0].mxu0
  %v1278 = vadd.f32 %v1181, %v1277
  %v1279 = vpop.f32.mrb[0].mxu0
  %v1280 = vpop.f32.mrb[0].mxu0
  %v1281 = vadd.f32 %v1184, %v1280
  %v1282 = vpop.f32.mrb[0].mxu0
  %1283 = vmatprep.mubr.bf16.mxu0 %v455
  %1284 = vmatmul.mubr.bf16.gmra.mrb[0].mxu0 %v454
  %v1285 = vpop.f32.mrb[0].mxu0
  %v1286 = vadd.f32 %v1189, %v1285
  %v1287 = vpop.f32.mrb[0].mxu0
  %v1288 = vpop.f32.mrb[0].mxu0
  %v1289 = vadd.f32 %v1192, %v1288
  %v1290 = vpop.f32.mrb[0].mxu0
  %1291 = vmatprep.mubr.bf16.mxu0 %v463
  %1292 = vmatmul.mubr.bf16.gmra.mrb[0].mxu0 %v462
  %v1293 = vpop.f32.mrb[0].mxu0
  %v1294 = vadd.f32 %v1197, %v1293
  %v1295 = vpop.f32.mrb[0].mxu0
  %v1296 = vpop.f32.mrb[0].mxu0
  %v1297 = vadd.f32 %v1200, %v1296
  %v1298 = vpop.f32.mrb[0].mxu0
  %1299 = vmatprep.mubr.bf16.mxu0 %v471
  %1300 = vmatmul.mubr.bf16.gmra.mrb[0].mxu0 %v470
  %v1301 = vpop.f32.mrb[0].mxu0
  %v1302 = vadd.f32 %v1205, %v1301
  %v1303 = vpop.f32.mrb[0].mxu0
  %v1304 = vpop.f32.mrb[0].mxu0
  %v1305 = vadd.f32 %v1208, %v1304
  %v1306 = vpop.f32.mrb[0].mxu0
  %1307 = vmatprep.mubr.bf16.mxu0 %v479
  %1308 = vmatmul.mubr.bf16.gmra.mrb[0].mxu0 %v478
  %v1309 = vpop.f32.mrb[0].mxu0
  %v1310 = vadd.f32 %v1213, %v1309
  %v1311 = vpop.f32.mrb[0].mxu0
  %v1312 = vpop.f32.mrb[0].mxu0
  %v1313 = vadd.f32 %v1216, %v1312
  %v1314 = vpop.f32.mrb[0].mxu0
  %1315 = vmatprep.mubr.bf16.mxu0 %v487
  %1316 = vmatmul.mubr.bf16.gmra.mrb[0].mxu0 %v486
  %v1317 = vpop.f32.mrb[0].mxu0
  %v1318 = vadd.f32 %v1221, %v1317
  %v1319 = vpop.f32.mrb[0].mxu0
  %v1320 = vpop.f32.mrb[0].mxu0
  %v1321 = vadd.f32 %v1224, %v1320
  %v1322 = vpop.f32.mrb[0].mxu0
  %1323 = vmatprep.mubr.bf16.mxu0 %v495
  %1324 = vmatmul.mubr.bf16.gmra.mrb[0].mxu0 %v494
  %v1325 = vpop.f32.mrb[0].mxu0
  %v1326 = vadd.f32 %v1229, %v1325
  %v1327 = vpop.f32.mrb[0].mxu0
  %v1328 = vpop.f32.mrb[0].mxu0
  %v1329 = vadd.f32 %v1232, %v1328
  %v1330 = vpop.f32.mrb[0].mxu0
  %1331 = vdwg.mxu0
  %v1332 = vadd.f32 %v32, %v1270
  %v1333 = vadd.f32 %v33, %v1273
  %v1334 = vadd.f32 %v34, %v1278
  %v1335 = vadd.f32 %v35, %v1281
  %v1336 = vadd.f32 %v36, %v1286
  %v1337 = vadd.f32 %v37, %v1289
  %v1338 = vadd.f32 %v38, %v1294
  %v1339 = vadd.f32 %v39, %v1297
  %v1340 = vadd.f32 %v40, %v1302
  %v1341 = vadd.f32 %v41, %v1305
  %v1342 = vadd.f32 %v42, %v1310
  %v1343 = vadd.f32 %v43, %v1313
  %v1344 = vadd.f32 %v44, %v1318
  %v1345 = vadd.f32 %v45, %v1321
  %v1346 = vadd.f32 %v46, %v1326
  %v1347 = vadd.f32 %v47, %v1329
  %1348 = vst [vmem:[#allocation2] sm:$0xff] %v1332
  %1349 = vst [vmem:[#allocation2 + $0x8] sm:$0xff] %v1333
  %1350 = vst [vmem:[#allocation2 + $0x10] sm:$0xff] %v1334
  %1351 = vst [vmem:[#allocation2 + $0x18] sm:$0xff] %v1335
  %1352 = vst [vmem:[#allocation2 + $0x20] sm:$0xff] %v1336
  %1353 = vst [vmem:[#allocation2 + $0x28] sm:$0xff] %v1337
  %1354 = vst [vmem:[#allocation2 + $0x30] sm:$0xff] %v1338
  %1355 = vst [vmem:[#allocation2 + $0x38] sm:$0xff] %v1339
  %1356 = vst [vmem:[#allocation2 + $0x40] sm:$0xff] %v1340
  %1357 = vst [vmem:[#allocation2 + $0x48] sm:$0xff] %v1341
  %1358 = vst [vmem:[#allocation2 + $0x50] sm:$0xff] %v1342
  %1359 = vst [vmem:[#allocation2 + $0x58] sm:$0xff] %v1343
  %1360 = vst [vmem:[#allocation2 + $0x60] sm:$0xff] %v1344
  %1361 = vst [vmem:[#allocation2 + $0x68] sm:$0xff] %v1345
  %1362 = vst [vmem:[#allocation2 + $0x70] sm:$0xff] %v1346
  %1363 = vst [vmem:[#allocation2 + $0x78] sm:$0xff] %v1347
  // Predicated region
  $region14: #{discriminator_forward.6} parent=0 // pred_check
    %p1364 = pneg %p12
  $region15: #{discriminator_forward.6} parent=0 // pred_check_branch
    %1366 = sbr.rel (%p1364) target = $region17
  $region16: #{discriminator_forward.6} parent=0 // pred_region
    %v1367 = vld [vmem:[#allocation2] sm:$0xff]
    %v1368 = vld [vmem:[#allocation2 + $0x8] sm:$0xff]
    %v1369 = vld [vmem:[#allocation2 + $0x10] sm:$0xff]
    %v1370 = vld [vmem:[#allocation2 + $0x18] sm:$0xff]
    %v1371 = vld [vmem:[#allocation2 + $0x20] sm:$0xff]
    %v1372 = vld [vmem:[#allocation2 + $0x28] sm:$0xff]
    %v1373 = vld [vmem:[#allocation2 + $0x30] sm:$0xff]
    %v1374 = vld [vmem:[#allocation2 + $0x38] sm:$0xff]
    %v1375 = vld [vmem:[#allocation2 + $0x40] sm:$0xff]
    %v1376 = vld [vmem:[#allocation2 + $0x48] sm:$0xff]
    %v1377 = vld [vmem:[#allocation2 + $0x50] sm:$0xff]
    %v1378 = vld [vmem:[#allocation2 + $0x58] sm:$0xff]
    %v1379 = vld [vmem:[#allocation2 + $0x60] sm:$0xff]
    %v1380 = vld [vmem:[#allocation2 + $0x68] sm:$0xff]
    %v1381 = vld [vmem:[#allocation2 + $0x70] sm:$0xff]
    %v1382 = vld [vmem:[#allocation2 + $0x78] sm:$0xff]
    %vm1383 = vcmp.ge.f32.partialorder %v1367, 0.0
    %vm1384 = vcmp.ge.f32.partialorder %v1368, 0.0
    %vm1385 = vcmp.ge.f32.partialorder %v1369, 0.0
    %vm1386 = vcmp.ge.f32.partialorder %v1370, 0.0
    %vm1387 = vcmp.ge.f32.partialorder %v1371, 0.0
    %vm1388 = vcmp.ge.f32.partialorder %v1372, 0.0
    %vm1389 = vcmp.ge.f32.partialorder %v1373, 0.0
    %vm1390 = vcmp.ge.f32.partialorder %v1374, 0.0
    %vm1391 = vcmp.ge.f32.partialorder %v1375, 0.0
    %vm1392 = vcmp.ge.f32.partialorder %v1376, 0.0
    %vm1393 = vcmp.ge.f32.partialorder %v1377, 0.0
    %vm1394 = vcmp.ge.f32.partialorder %v1378, 0.0
    %vm1395 = vcmp.ge.f32.partialorder %v1379, 0.0
    %vm1396 = vcmp.ge.f32.partialorder %v1380, 0.0
    %vm1397 = vcmp.ge.f32.partialorder %v1381, 0.0
    %vm1398 = vcmp.ge.f32.partialorder %v1382, 0.0
    %v1399 = vmul.f32 %v1367, 0.2
    %v1400 = vmul.f32 %v1368, 0.2
    %v1401 = vmul.f32 %v1369, 0.2
    %v1402 = vmul.f32 %v1370, 0.2
    %v1403 = vmul.f32 %v1371, 0.2
    %v1404 = vmul.f32 %v1372, 0.2
    %v1405 = vmul.f32 %v1373, 0.2
    %v1406 = vmul.f32 %v1374, 0.2
    %v1407 = vmul.f32 %v1375, 0.2
    %v1408 = vmul.f32 %v1376, 0.2
    %v1409 = vmul.f32 %v1377, 0.2
    %v1410 = vmul.f32 %v1378, 0.2
    %v1411 = vmul.f32 %v1379, 0.2
    %v1412 = vmul.f32 %v1380, 0.2
    %v1413 = vmul.f32 %v1381, 0.2
    %v1414 = vmul.f32 %v1382, 0.2
    %v1415 = vsel %vm1383, %v1367, %v1399
    %v1416 = vsel %vm1384, %v1368, %v1400
    %v1417 = vsel %vm1385, %v1369, %v1401
    %v1418 = vsel %vm1386, %v1370, %v1402
    %v1419 = vsel %vm1387, %v1371, %v1403
    %v1420 = vsel %vm1388, %v1372, %v1404
    %v1421 = vsel %vm1389, %v1373, %v1405
    %v1422 = vsel %vm1390, %v1374, %v1406
    %v1423 = vsel %vm1391, %v1375, %v1407
    %v1424 = vsel %vm1392, %v1376, %v1408
    %v1425 = vsel %vm1393, %v1377, %v1409
    %v1426 = vsel %vm1394, %v1378, %v1410
    %v1427 = vsel %vm1395, %v1379, %v1411
    %v1428 = vsel %vm1396, %v1380, %v1412
    %v1429 = vsel %vm1397, %v1381, %v1413
    %v1430 = vsel %vm1398, %v1382, %v1414
    %v1431 = vpack.c.bf16 %v1416, %v1415
    %v1432 = vpack.c.bf16 %v1418, %v1417
    %v1433 = vpack.c.bf16 %v1420, %v1419
    %v1434 = vpack.c.bf16 %v1422, %v1421
    %v1435 = vpack.c.bf16 %v1424, %v1423
    %v1436 = vpack.c.bf16 %v1426, %v1425
    %v1437 = vpack.c.bf16 %v1428, %v1427
    %v1438 = vpack.c.bf16 %v1430, %v1429
    %v1447 = vunpack.c.l.b16 %v1431
    %v1448 = vunpack.c.h.b16 %v1431
    %v1449 = vunpack.c.l.b16 %v1432
    %v1450 = vunpack.c.h.b16 %v1432
    %v1451 = vunpack.c.l.b16 %v1433
    %v1452 = vunpack.c.h.b16 %v1433
    %v1453 = vunpack.c.l.b16 %v1434
    %v1454 = vunpack.c.h.b16 %v1434
    %v1455 = vunpack.c.l.b16 %v1435
    %v1456 = vunpack.c.h.b16 %v1435
    %v1457 = vunpack.c.l.b16 %v1436
    %v1458 = vunpack.c.h.b16 %v1436
    %v1459 = vunpack.c.l.b16 %v1437
    %v1460 = vunpack.c.h.b16 %v1437
    %v1461 = vunpack.c.l.b16 %v1438
    %v1462 = vunpack.c.h.b16 %v1438
    %v1463 = vpack.c.b16 %v1447, %v1447
    %v1464 = vpack.c.b16 %v1448, %v1448
    %v1465 = vpack.c.b16 %v1449, %v1449
    %v1466 = vpack.c.b16 %v1450, %v1450
    %v1467 = vpack.c.b16 %v1451, %v1451
    %v1468 = vpack.c.b16 %v1452, %v1452
    %v1469 = vpack.c.b16 %v1453, %v1453
    %v1470 = vpack.c.b16 %v1454, %v1454
    %v1471 = vpack.c.b16 %v1455, %v1455
    %v1472 = vpack.c.b16 %v1456, %v1456
    %v1473 = vpack.c.b16 %v1457, %v1457
    %v1474 = vpack.c.b16 %v1458, %v1458
    %v1475 = vpack.c.b16 %v1459, %v1459
    %v1476 = vpack.c.b16 %v1460, %v1460
    %v1477 = vpack.c.b16 %v1461, %v1461
    %v1478 = vpack.c.b16 %v1462, %v1462
    %1495 = vst [vmem:[%s2] sm:$0xf] %v1463
    %1496 = vst [vmem:[%s2 + $0x4] sm:$0xf] %v1464
    %1497 = vst [vmem:[%s2 + $0x8] sm:$0xf] %v1465
    %1498 = vst [vmem:[%s2 + $0xc] sm:$0xf] %v1466
    %1499 = vst [vmem:[%s2 + $0x10] sm:$0xf] %v1467
    %1500 = vst [vmem:[%s2 + $0x14] sm:$0xf] %v1468
    %1501 = vst [vmem:[%s2 + $0x18] sm:$0xf] %v1469
    %1502 = vst [vmem:[%s2 + $0x1c] sm:$0xf] %v1470
    %1503 = vst [vmem:[%s2 + $0x20] sm:$0xf] %v1471
    %1504 = vst [vmem:[%s2 + $0x24] sm:$0xf] %v1472
    %1505 = vst [vmem:[%s2 + $0x28] sm:$0xf] %v1473
    %1506 = vst [vmem:[%s2 + $0x2c] sm:$0xf] %v1474
    %1507 = vst [vmem:[%s2 + $0x30] sm:$0xf] %v1475
    %1508 = vst [vmem:[%s2 + $0x34] sm:$0xf] %v1476
    %1509 = vst [vmem:[%s2 + $0x38] sm:$0xf] %v1477
    %1510 = vst [vmem:[%s2 + $0x3c] sm:$0xf] %v1478
  $region17: #{discriminator_forward.6} parent=0 // pred_fallthru
    _
  // Predicated region
  $region18: #{discriminator_forward.6} parent=0 // pred_check
    _
  $region19: #{discriminator_forward.6} parent=0 // pred_check_branch
    %1512 = sbr.rel (0) target = $region21
  $region20: #{discriminator_forward.6} parent=0 // pred_region
    _
  $region21: #{discriminator_forward.6} parent=0 // pred_fallthru
    _
  // Predicated region
  $region22: #{discriminator_forward.6} parent=0 // pred_check
    _
  $region23: #{discriminator_forward.6} parent=0 // pred_check_branch
    %1514 = sbr.rel (0) target = $region25
  $region24: #{discriminator_forward.6} parent=0 // pred_region
    _
  $region25: #{discriminator_forward.6} parent=0 // pred_fallthru
    _

// kernel: discriminator_forward.7
$region0: #{discriminator_forward.7}
  #allocation0 [shape = 'u32[]', space=smem, size = 0x4, offset = 0x4, fixed_abs, tag = 'smem constant byte address 0x4 - core index']
  #allocation1 [shape = 'u32[144,128]{1,0:T(1,128)}', space=vmem, size = 0x12000, scoped, tag = 'internal scratch']
  #allocation2 [shape = 'f32[32,256]{1,0:T(8,128)}', space=vmem, size = 0x8000, scoped, tag = 'scratch operand']
  %s0 = inlined_call_operand.vmem [shape: bf16[32,2048], index: 0, kind: input, shape index: {}]
  %s1 = inlined_call_operand.vmem [shape: bf16[2048,256], index: 1, kind: input, shape index: {}]
  %s2 = inlined_call_operand.vmem [shape: bf16[32,256], index: 2, kind: output, shape index: {}]
  %s3 = sld [smem:[#allocation0]]
  $region72: #{discriminator_forward.7} parent=0
    _
  %s5 = ssub.s32 1, %s3
  %s6 = scalar_select 0, %s5, %s3
  $region1: #{discriminator_forward.7} parent=0
    #allocation3 [shape = 'u8[131072]{0}', space=vmem, size = 0x20000, scoped, tag = 'input window, operand 0']
    loop: start=0, step=1, limit=4
    $region2: #{discriminator_forward.7} parent=1 // loop_pre_header
      _
    $region3: #{discriminator_forward.7} parent=1 // loop_header
      %s8 = sphi 0, %s12
      %p9 = scmp.ge.s32.totalorder %s8, 4
      %s15 = sphi 0, %s34
      %s16 = sphi 0, %s30
      %s17 = sphi 0, %s26
      %s18 = sphi 0, %s15
      %s19 = sphi 0, %s16
      %s20 = sphi 0, %s17
      %s21 = sphi 0, %s18
      %s22 = sphi 0, %s19
      %s23 = sphi 0, %s20
      %s39 = sphi 0, %s41
      %s42 = sphi 0, %s39
      %s43 = sphi 0, %s42
      %s59 = sphi 0, %s43
      %s67 = sphi 0, %s69
      %s70 = sphi 0, %s67
      %s71 = sphi 0, %s70
      %s87 = sphi 0, %s71
      %s95 = sphi 0, %s97
      %s98 = sphi 0, %s95
      %s99 = sphi 0, %s98
      %s115 = sphi 0, %s99
    $region4: #{discriminator_forward.7} parent=1 // loop_header_branch
      %11 = sbr.rel (%p9) target = $region8
    $region5: #{discriminator_forward.7} parent=1 // loop_body
      %s13 = ssub.s32 %s8, 1
      %s14 = ssub.s32 %s8, 2
      %s24 = sadd.s32 1, %s17
      %p25 = scmp.ge.s32.totalorder %s24, 2
      %s26 = scalar_select %p25, 0, %s24
      %s27 = sadd.s32 1, %s16
      %s28 = scalar_select %p25, %s27, %s16
      %p29 = scmp.ge.s32.totalorder %s28, 1
      %s30 = scalar_select %p29, 0, %s28
      %s31 = sadd.s32 1, %s15
      %s32 = scalar_select %p29, %s31, %s15
      %p33 = scmp.ge.s32.totalorder %s32, 1
      %s34 = scalar_select %p33, 0, %s32
      %s35 = ssub.s32 %s15, %s34
      %s36 = ssub.s32 %s17, %s26
      %s37 = sor.u32 %s35, %s36
      %p38 = scmp.eq.s32.totalorder %s37, 0
      %s40 = sadd.s32 %s39, 1
      %s41 = scalar_select %p38, %s39, %s40
      %p44 = pneg %p38
      %p45 = scmp.eq.s32.totalorder %s8, 1
      %p46 = por %p44, %p45
      %p47 = scmp.ne.s32.totalorder %s39, %s42
      %p48 = scmp.eq.s32.totalorder %s8, 0
      %p49 = por %p47, %p48
      %p50 = scmp.ne.s32.totalorder %s39, %s42
      %p51 = scmp.eq.s32.totalorder %s13, 1
      %p52 = por %p50, %p51
      %p53 = scmp.ne.s32.totalorder %s42, %s43
      %p54 = scmp.eq.s32.totalorder %s13, 0
      %p55 = por %p53, %p54
      %p56 = scmp.ne.s32.totalorder %s42, %s43
      %p57 = scmp.eq.s32.totalorder %s14, 1
      %p58 = por %p56, %p57
      %p60 = scmp.ne.s32.totalorder %s43, %s59
      %p61 = scmp.eq.s32.totalorder %s14, 0
      %p62 = por %p60, %p61
      %s63 = ssub.s32 %s17, %s26
      %s64 = ssub.s32 %s16, %s30
      %s65 = sor.u32 %s63, %s64
      %p66 = scmp.eq.s32.totalorder %s65, 0
      %s68 = sadd.s32 %s67, 1
      %s69 = scalar_select %p66, %s67, %s68
      %p72 = pneg %p66
      %p73 = scmp.eq.s32.totalorder %s8, 1
      %p74 = por %p72, %p73
      %p75 = scmp.ne.s32.totalorder %s67, %s70
      %p76 = scmp.eq.s32.totalorder %s8, 0
      %p77 = por %p75, %p76
      %p78 = scmp.ne.s32.totalorder %s67, %s70
      %p79 = scmp.eq.s32.totalorder %s13, 1
      %p80 = por %p78, %p79
      %p81 = scmp.ne.s32.totalorder %s70, %s71
      %p82 = scmp.eq.s32.totalorder %s13, 0
      %p83 = por %p81, %p82
      %p84 = scmp.ne.s32.totalorder %s70, %s71
      %p85 = scmp.eq.s32.totalorder %s14, 1
      %p86 = por %p84, %p85
      %p88 = scmp.ne.s32.totalorder %s71, %s87
      %p89 = scmp.eq.s32.totalorder %s14, 0
      %p90 = por %p88, %p89
      %s91 = ssub.s32 %s15, %s34
      %s92 = ssub.s32 %s16, %s30
      %s93 = sor.u32 %s91, %s92
      %p94 = scmp.eq.s32.totalorder %s93, 0
      %s96 = sadd.s32 %s95, 1
      %s97 = scalar_select %p94, %s95, %s96
      %p100 = pneg %p94
      %p101 = scmp.eq.s32.totalorder %s8, 1
      %p102 = por %p100, %p101
      %p103 = scmp.ne.s32.totalorder %s95, %s98
      %p104 = scmp.eq.s32.totalorder %s8, 0
      %p105 = por %p103, %p104
      %p106 = scmp.ne.s32.totalorder %s95, %s98
      %p107 = scmp.eq.s32.totalorder %s13, 1
      %p108 = por %p106, %p107
      %p109 = scmp.ne.s32.totalorder %s98, %s99
      %p110 = scmp.eq.s32.totalorder %s13, 0
      %p111 = por %p109, %p110
      %p112 = scmp.ne.s32.totalorder %s98, %s99
      %p113 = scmp.eq.s32.totalorder %s14, 1
      %p114 = por %p112, %p113
      %p116 = scmp.ne.s32.totalorder %s99, %s115
      %p117 = scmp.eq.s32.totalorder %s14, 0
      %p118 = por %p116, %p117
      %p119 = scmp.le.s32.totalorder 1, %s8
      %p120 = scmp.lt.s32.totalorder %s8, 3
      %p121 = pnand %p119, %p120
      %p122 = pneg %p121
      // Predicated region
      $region9: #{discriminator_forward.7} parent=5 // pred_check
        _
      $region10: #{discriminator_forward.7} parent=5 // pred_check_branch
        %124 = sbr.rel (%p121) target = $region12
      $region11: #{discriminator_forward.7} parent=5 // pred_region
        %s125 = ssub.s32 %s8, 1
      $region12: #{discriminator_forward.7} parent=5 // pred_fallthru
        _
      %p126 = scmp.lt.s32.totalorder %s8, 2
      // Predicated region
      $region13: #{discriminator_forward.7} parent=5 // pred_check
        %p127 = pneg %p126
      $region14: #{discriminator_forward.7} parent=5 // pred_check_branch
        %129 = sbr.rel (%p127) target = $region16
      $region15: #{discriminator_forward.7} parent=5 // pred_region
        // Predicated region
        $region17: #{discriminator_forward.7} parent=15 // pred_check
          %p130 = pneg %p49
        $region18: #{discriminator_forward.7} parent=15 // pred_check_branch
          %132 = sbr.rel (%p130) target = $region20
        $region19: #{discriminator_forward.7} parent=15 // pred_region
          %s133 = sand.u32 %s39, 1
          %s134 = sand.u32 %s39, 1
          %s135 = smul.addr %s134, 128
          %s136 = scalar_lea.vmem [#allocation3], %s135
          %s137 = smul.u32 4, %s15
          %s138 = smul.u32 8, %s17
          %s139 = smul.addr %s137, 16
          %s140 = sadd.s32 %s138, %s139
          %s141 = smul.addr %s140, 4
          %s142 = scalar_lea.vmem %s0, %s141
          // Predicated region
          $region21: #{discriminator_forward.7} parent=19 // pred_check
            _
          $region22: #{discriminator_forward.7} parent=19 // pred_check_branch
            %144 = sbr.rel (0) target = $region24
          $region23: #{discriminator_forward.7} parent=19 // pred_region
            // Predicated region
            $region25: #{discriminator_forward.7} parent=23 // pred_check
              _
            $region26: #{discriminator_forward.7} parent=23 // pred_check_branch
              %146 = sbr.rel (0) target = $region28
            $region27: #{discriminator_forward.7} parent=23 // pred_region
              loop: start=0, step=1, limit=1
              $region29: #{discriminator_forward.7} parent=27 // loop_pre_header
                _
              $region30: #{discriminator_forward.7} parent=27 // loop_header
                %s148 = sphi 0, %s152
                %p149 = scmp.ge.s32.totalorder %s148, 1
                %s153 = sphi %s142, %s142
                %s154 = sphi %s136, %s136
              $region31: #{discriminator_forward.7} parent=27 // loop_header_branch
                %151 = sbr.rel (%p149) target = $region35
              $region32: #{discriminator_forward.7} parent=27 // loop_body
                %v155 = vld [vmem:[%s153] sm:$0xff]
                %156 = vst [vmem:[%s154] sm:$0xff] %v155
                %v157 = vld [vmem:[%s153 + $0x8] sm:$0xff]
                %158 = vst [vmem:[%s154 + $0x8] sm:$0xff] %v157
                %v159 = vld [vmem:[%s153 + $0x10] sm:$0xff]
                %160 = vst [vmem:[%s154 + $0x10] sm:$0xff] %v159
                %v161 = vld [vmem:[%s153 + $0x18] sm:$0xff]
                %162 = vst [vmem:[%s154 + $0x18] sm:$0xff] %v161
                %v163 = vld [vmem:[%s153 + $0x40] sm:$0xff]
                %164 = vst [vmem:[%s154 + $0x20] sm:$0xff] %v163
                %v165 = vld [vmem:[%s153 + $0x48] sm:$0xff]
                %166 = vst [vmem:[%s154 + $0x28] sm:$0xff] %v165
                %v167 = vld [vmem:[%s153 + $0x50] sm:$0xff]
                %168 = vst [vmem:[%s154 + $0x30] sm:$0xff] %v167
                %v169 = vld [vmem:[%s153 + $0x58] sm:$0xff]
                %170 = vst [vmem:[%s154 + $0x38] sm:$0xff] %v169
                %v171 = vld [vmem:[%s153 + $0x80] sm:$0xff]
                %172 = vst [vmem:[%s154 + $0x40] sm:$0xff] %v171
                %v173 = vld [vmem:[%s153 + $0x88] sm:$0xff]
                %174 = vst [vmem:[%s154 + $0x48] sm:$0xff] %v173
                %v175 = vld [vmem:[%s153 + $0x90] sm:$0xff]
                %176 = vst [vmem:[%s154 + $0x50] sm:$0xff] %v175
                %v177 = vld [vmem:[%s153 + $0x98] sm:$0xff]
                %178 = vst [vmem:[%s154 + $0x58] sm:$0xff] %v177
                %v179 = vld [vmem:[%s153 + $0xc0] sm:$0xff]
                %180 = vst [vmem:[%s154 + $0x60] sm:$0xff] %v179
                %v181 = vld [vmem:[%s153 + $0xc8] sm:$0xff]
                %182 = vst [vmem:[%s154 + $0x68] sm:$0xff] %v181
                %v183 = vld [vmem:[%s153 + $0xd0] sm:$0xff]
                %184 = vst [vmem:[%s154 + $0x70] sm:$0xff] %v183
                %v185 = vld [vmem:[%s153 + $0xd8] sm:$0xff]
                %186 = vst [vmem:[%s154 + $0x78] sm:$0xff] %v185
              $region33: #{discriminator_forward.7} parent=27 // loop_footer
                %s152 = sadd.s32 1, %s148
              $region34: #{discriminator_forward.7} parent=27 // loop_footer_branch
                %147 = sbr.rel target = $region30
              $region35: #{discriminator_forward.7} parent=27 // loop_exit
                _
            $region28: #{discriminator_forward.7} parent=23 // pred_fallthru
              _
            // Predicated region
            $region36: #{discriminator_forward.7} parent=23 // pred_check
              _
            $region37: #{discriminator_forward.7} parent=23 // pred_check_branch
              %188 = sbr.rel target = $region39
            $region38: #{discriminator_forward.7} parent=23 // pred_region
              _
            $region39: #{discriminator_forward.7} parent=23 // pred_fallthru
              _
          $region24: #{discriminator_forward.7} parent=19 // pred_fallthru
            _
          %189 = vnop
        $region20: #{discriminator_forward.7} parent=15 // pred_fallthru
          _
        // Predicated region
        $region40: #{discriminator_forward.7} parent=15 // pred_check
          %p190 = pneg %p77
        $region41: #{discriminator_forward.7} parent=15 // pred_check_branch
          %192 = sbr.rel (%p190) target = $region43
        $region42: #{discriminator_forward.7} parent=15 // pred_region
          %s193 = smul.u32 128, %s17
          %s194 = smul.u32 2, %s16
          %p195 = scmp.lt.s32.totalorder %s193, 255
          %s196 = scalar_select %p195, %s193, 255
          %p197 = scmp.lt.s32.totalorder %s194, 1
          %s198 = scalar_select %p197, %s194, 1
          %s199 = smul.addr %s196, 2
          %s200 = sadd.s32 %s198, %s199
          %s201 = smul.addr %s200, 4
          %s202 = scalar_lea.vmem %s1, %s201
          %s203 = smul.u32 128, %s17
          %s204 = smul.u32 2, %s16
        $region43: #{discriminator_forward.7} parent=15 // pred_fallthru
          _
      $region16: #{discriminator_forward.7} parent=5 // pred_fallthru
        _
      %p205 = scmp.le.s32.totalorder 1, %s8
      %p206 = scmp.lt.s32.totalorder %s8, 3
      %p207 = pnand %p205, %p206
      %p208 = pneg %p207
      // Predicated region
      $region44: #{discriminator_forward.7} parent=5 // pred_check
        _
      $region45: #{discriminator_forward.7} parent=5 // pred_check_branch
        %210 = sbr.rel (%p207) target = $region47
      $region46: #{discriminator_forward.7} parent=5 // pred_region
        %s211 = ssub.s32 %s8, 1
        %s212 = sand.u32 %s42, 1
        %s213 = sand.u32 %s42, 1
        %s214 = smul.addr %s213, 128
        %s215 = scalar_lea.vmem [#allocation3], %s214
        // Predicated region
        $region48: #{discriminator_forward.7} parent=46 // pred_check
          %p216 = pneg %p55
        $region49: #{discriminator_forward.7} parent=46 // pred_check_branch
          %218 = sbr.rel (%p216) target = $region51
        $region50: #{discriminator_forward.7} parent=46 // pred_region
          _
        $region51: #{discriminator_forward.7} parent=46 // pred_fallthru
          _
        %s219 = sand.u32 %s42, 1
        %s220 = sand.u32 %s42, 1
        %s221 = smul.addr %s220, 128
        %s222 = scalar_lea.vmem [#allocation3], %s221
        %p223 = pneg %p55
        %p224 = pneg %p52
        %s225 = smul.u32 128, %s20
        %s226 = smul.u32 2, %s19
        %p227 = scmp.lt.s32.totalorder %s225, 255
        %s228 = scalar_select %p227, %s225, 255
        %p229 = scmp.lt.s32.totalorder %s226, 1
        %s230 = scalar_select %p229, %s226, 1
        %s231 = smul.addr %s228, 2
        %s232 = sadd.s32 %s230, %s231
        %s233 = smul.addr %s232, 4
        %s234 = scalar_lea.vmem %s1, %s233
        %p235 = pneg %p83
        %p236 = pneg %p80
        %p237 = pneg %p111
        %p238 = pneg %p108
        %s239 = smul.u32 4, %s18
        %s240 = smul.u32 2, %s19
        %p241 = scmp.lt.s32.totalorder %s239, 3
        %s242 = scalar_select %p241, %s239, 3
        %p243 = scmp.lt.s32.totalorder %s240, 1
        %s244 = scalar_select %p243, %s240, 1
        %s245 = smul.addr %s242, 2
        %s246 = sadd.s32 %s244, %s245
        %s247 = smul.addr %s246, 4
        %s248 = scalar_lea.vmem %s2, %s247
        %s249 = smul.u32 4, %s18
        %s250 = smul.u32 8, %s20
        %s251 = smul.u32 128, %s20
        %s252 = smul.u32 2, %s19
        %p253 = scmp.lt.s32.totalorder %s251, 255
        %s254 = scalar_select %p253, %s251, 255
        %p255 = scmp.lt.s32.totalorder %s252, 1
        %s256 = scalar_select %p255, %s252, 1
        %s257 = smul.addr %s254, 2
        %s258 = sadd.s32 %s256, %s257
        %s259 = smul.addr %s258, 4
        %s260 = scalar_lea.vmem %s1, %s259
        %s261 = smul.u32 128, %s20
        %s262 = smul.u32 2, %s19
        %s263 = smul.u32 4, %s18
        %s264 = smul.u32 2, %s19
        %p265 = scmp.lt.s32.totalorder %s263, 3
        %s266 = scalar_select %p265, %s263, 3
        %p267 = scmp.lt.s32.totalorder %s264, 1
        %s268 = scalar_select %p267, %s264, 1
        %s269 = smul.addr %s266, 2
        %s270 = sadd.s32 %s268, %s269
        %s271 = smul.addr %s270, 4
        %s272 = scalar_lea.vmem %s2, %s271
        %s273 = smul.u32 4, %s18
        %s274 = smul.u32 2, %s19
        %p275 = scmp.eq.s32.totalorder %s20, 0
        // Predicated region
        $region52: #{discriminator_forward.7} parent=46 // pred_check
          %p276 = pneg %p275
        $region53: #{discriminator_forward.7} parent=46 // pred_check_branch
          %278 = sbr.rel (%p276) target = $region55
        $region54: #{discriminator_forward.7} parent=46 // pred_region
          %279 = vst [vmem:[#allocation2] sm:$0xff] 0.0
          %280 = vst [vmem:[#allocation2 + $0x8] sm:$0xff] 0.0
          %281 = vst [vmem:[#allocation2 + $0x10] sm:$0xff] 0.0
          %282 = vst [vmem:[#allocation2 + $0x18] sm:$0xff] 0.0
          %283 = vst [vmem:[#allocation2 + $0x20] sm:$0xff] 0.0
          %284 = vst [vmem:[#allocation2 + $0x28] sm:$0xff] 0.0
          %285 = vst [vmem:[#allocation2 + $0x30] sm:$0xff] 0.0
          %286 = vst [vmem:[#allocation2 + $0x38] sm:$0xff] 0.0
        $region55: #{discriminator_forward.7} parent=46 // pred_fallthru
          _
        %v287 = vld [vmem:[#allocation2] sm:$0xff]
        %v288 = vld [vmem:[#allocation2 + $0x8] sm:$0xff]
        %v289 = vld [vmem:[#allocation2 + $0x10] sm:$0xff]
        %v290 = vld [vmem:[#allocation2 + $0x18] sm:$0xff]
        %v291 = vld [vmem:[#allocation2 + $0x20] sm:$0xff]
        %v292 = vld [vmem:[#allocation2 + $0x28] sm:$0xff]
        %v293 = vld [vmem:[#allocation2 + $0x30] sm:$0xff]
        %v294 = vld [vmem:[#allocation2 + $0x38] sm:$0xff]
        %v295 = vld [vmem:[%s215] sm:$0xff]
        %v296 = vld [vmem:[%s215 + $0x8] sm:$0xff]
        %v297 = vld [vmem:[%s215 + $0x10] sm:$0xff]
        %v298 = vld [vmem:[%s215 + $0x18] sm:$0xff]
        %v299 = vld [vmem:[%s215 + $0x20] sm:$0xff]
        %v300 = vld [vmem:[%s215 + $0x28] sm:$0xff]
        %v301 = vld [vmem:[%s215 + $0x30] sm:$0xff]
        %v302 = vld [vmem:[%s215 + $0x38] sm:$0xff]
        %v303 = vld [vmem:[%s215 + $0x40] sm:$0xff]
        %v304 = vld [vmem:[%s215 + $0x48] sm:$0xff]
        %v305 = vld [vmem:[%s215 + $0x50] sm:$0xff]
        %v306 = vld [vmem:[%s215 + $0x58] sm:$0xff]
        %v307 = vld [vmem:[%s215 + $0x60] sm:$0xff]
        %v308 = vld [vmem:[%s215 + $0x68] sm:$0xff]
        %v309 = vld [vmem:[%s215 + $0x70] sm:$0xff]
        %v310 = vld [vmem:[%s215 + $0x78] sm:$0xff]
        %v311 = vld [vmem:[%s260] sm:$0xff]
        %v312 = vld [vmem:[%s260 + $0x8] sm:$0xff]
        %v313 = vld [vmem:[%s260 + $0x10] sm:$0xff]
        %v314 = vld [vmem:[%s260 + $0x18] sm:$0xff]
        %v315 = vld [vmem:[%s260 + $0x20] sm:$0xff]
        %v316 = vld [vmem:[%s260 + $0x28] sm:$0xff]
        %v317 = vld [vmem:[%s260 + $0x30] sm:$0xff]
        %v318 = vld [vmem:[%s260 + $0x38] sm:$0xff]
        %v319 = vld [vmem:[%s260 + $0x40] sm:$0xff]
        %v320 = vld [vmem:[%s260 + $0x48] sm:$0xff]
        %v321 = vld [vmem:[%s260 + $0x50] sm:$0xff]
        %v322 = vld [vmem:[%s260 + $0x58] sm:$0xff]
        %v323 = vld [vmem:[%s260 + $0x60] sm:$0xff]
        %v324 = vld [vmem:[%s260 + $0x68] sm:$0xff]
        %v325 = vld [vmem:[%s260 + $0x70] sm:$0xff]
        %v326 = vld [vmem:[%s260 + $0x78] sm:$0xff]
        %v327 = vld [vmem:[%s260 + $0x80] sm:$0xff]
        %v328 = vld [vmem:[%s260 + $0x88] sm:$0xff]
        %v329 = vld [vmem:[%s260 + $0x90] sm:$0xff]
        %v330 = vld [vmem:[%s260 + $0x98] sm:$0xff]
        %v331 = vld [vmem:[%s260 + $0xa0] sm:$0xff]
        %v332 = vld [vmem:[%s260 + $0xa8] sm:$0xff]
        %v333 = vld [vmem:[%s260 + $0xb0] sm:$0xff]
        %v334 = vld [vmem:[%s260 + $0xb8] sm:$0xff]
        %v335 = vld [vmem:[%s260 + $0xc0] sm:$0xff]
        %v336 = vld [vmem:[%s260 + $0xc8] sm:$0xff]
        %v337 = vld [vmem:[%s260 + $0xd0] sm:$0xff]
        %v338 = vld [vmem:[%s260 + $0xd8] sm:$0xff]
        %v339 = vld [vmem:[%s260 + $0xe0] sm:$0xff]
        %v340 = vld [vmem:[%s260 + $0xe8] sm:$0xff]
        %v341 = vld [vmem:[%s260 + $0xf0] sm:$0xff]
        %v342 = vld [vmem:[%s260 + $0xf8] sm:$0xff]
        %v343 = vld [vmem:[%s260 + $0x100] sm:$0xff]
        %v344 = vld [vmem:[%s260 + $0x108] sm:$0xff]
        %v345 = vld [vmem:[%s260 + $0x110] sm:$0xff]
        %v346 = vld [vmem:[%s260 + $0x118] sm:$0xff]
        %v347 = vld [vmem:[%s260 + $0x120] sm:$0xff]
        %v348 = vld [vmem:[%s260 + $0x128] sm:$0xff]
        %v349 = vld [vmem:[%s260 + $0x130] sm:$0xff]
        %v350 = vld [vmem:[%s260 + $0x138] sm:$0xff]
        %v351 = vld [vmem:[%s260 + $0x140] sm:$0xff]
        %v352 = vld [vmem:[%s260 + $0x148] sm:$0xff]
        %v353 = vld [vmem:[%s260 + $0x150] sm:$0xff]
        %v354 = vld [vmem:[%s260 + $0x158] sm:$0xff]
        %v355 = vld [vmem:[%s260 + $0x160] sm:$0xff]
        %v356 = vld [vmem:[%s260 + $0x168] sm:$0xff]
        %v357 = vld [vmem:[%s260 + $0x170] sm:$0xff]
        %v358 = vld [vmem:[%s260 + $0x178] sm:$0xff]
        %v359 = vld [vmem:[%s260 + $0x180] sm:$0xff]
        %v360 = vld [vmem:[%s260 + $0x188] sm:$0xff]
        %v361 = vld [vmem:[%s260 + $0x190] sm:$0xff]
        %v362 = vld [vmem:[%s260 + $0x198] sm:$0xff]
        %v363 = vld [vmem:[%s260 + $0x1a0] sm:$0xff]
        %v364 = vld [vmem:[%s260 + $0x1a8] sm:$0xff]
        %v365 = vld [vmem:[%s260 + $0x1b0] sm:$0xff]
        %v366 = vld [vmem:[%s260 + $0x1b8] sm:$0xff]
        %v367 = vld [vmem:[%s260 + $0x1c0] sm:$0xff]
        %v368 = vld [vmem:[%s260 + $0x1c8] sm:$0xff]
        %v369 = vld [vmem:[%s260 + $0x1d0] sm:$0xff]
        %v370 = vld [vmem:[%s260 + $0x1d8] sm:$0xff]
        %v371 = vld [vmem:[%s260 + $0x1e0] sm:$0xff]
        %v372 = vld [vmem:[%s260 + $0x1e8] sm:$0xff]
        %v373 = vld [vmem:[%s260 + $0x1f0] sm:$0xff]
        %v374 = vld [vmem:[%s260 + $0x1f8] sm:$0xff]
        %v375 = vld [vmem:[%s260 + $0x200] sm:$0xff]
        %v376 = vld [vmem:[%s260 + $0x208] sm:$0xff]
        %v377 = vld [vmem:[%s260 + $0x210] sm:$0xff]
        %v378 = vld [vmem:[%s260 + $0x218] sm:$0xff]
        %v379 = vld [vmem:[%s260 + $0x220] sm:$0xff]
        %v380 = vld [vmem:[%s260 + $0x228] sm:$0xff]
        %v381 = vld [vmem:[%s260 + $0x230] sm:$0xff]
        %v382 = vld [vmem:[%s260 + $0x238] sm:$0xff]
        %v383 = vld [vmem:[%s260 + $0x240] sm:$0xff]
        %v384 = vld [vmem:[%s260 + $0x248] sm:$0xff]
        %v385 = vld [vmem:[%s260 + $0x250] sm:$0xff]
        %v386 = vld [vmem:[%s260 + $0x258] sm:$0xff]
        %v387 = vld [vmem:[%s260 + $0x260] sm:$0xff]
        %v388 = vld [vmem:[%s260 + $0x268] sm:$0xff]
        %v389 = vld [vmem:[%s260 + $0x270] sm:$0xff]
        %v390 = vld [vmem:[%s260 + $0x278] sm:$0xff]
        %v391 = vld [vmem:[%s260 + $0x280] sm:$0xff]
        %v392 = vld [vmem:[%s260 + $0x288] sm:$0xff]
        %v393 = vld [vmem:[%s260 + $0x290] sm:$0xff]
        %v394 = vld [vmem:[%s260 + $0x298] sm:$0xff]
        %v395 = vld [vmem:[%s260 + $0x2a0] sm:$0xff]
        %v396 = vld [vmem:[%s260 + $0x2a8] sm:$0xff]
        %v397 = vld [vmem:[%s260 + $0x2b0] sm:$0xff]
        %v398 = vld [vmem:[%s260 + $0x2b8] sm:$0xff]
        %v399 = vld [vmem:[%s260 + $0x2c0] sm:$0xff]
        %v400 = vld [vmem:[%s260 + $0x2c8] sm:$0xff]
        %v401 = vld [vmem:[%s260 + $0x2d0] sm:$0xff]
        %v402 = vld [vmem:[%s260 + $0x2d8] sm:$0xff]
        %v403 = vld [vmem:[%s260 + $0x2e0] sm:$0xff]
        %v404 = vld [vmem:[%s260 + $0x2e8] sm:$0xff]
        %v405 = vld [vmem:[%s260 + $0x2f0] sm:$0xff]
        %v406 = vld [vmem:[%s260 + $0x2f8] sm:$0xff]
        %v407 = vld [vmem:[%s260 + $0x300] sm:$0xff]
        %v408 = vld [vmem:[%s260 + $0x308] sm:$0xff]
        %v409 = vld [vmem:[%s260 + $0x310] sm:$0xff]
        %v410 = vld [vmem:[%s260 + $0x318] sm:$0xff]
        %v411 = vld [vmem:[%s260 + $0x320] sm:$0xff]
        %v412 = vld [vmem:[%s260 + $0x328] sm:$0xff]
        %v413 = vld [vmem:[%s260 + $0x330] sm:$0xff]
        %v414 = vld [vmem:[%s260 + $0x338] sm:$0xff]
        %v415 = vld [vmem:[%s260 + $0x340] sm:$0xff]
        %v416 = vld [vmem:[%s260 + $0x348] sm:$0xff]
        %v417 = vld [vmem:[%s260 + $0x350] sm:$0xff]
        %v418 = vld [vmem:[%s260 + $0x358] sm:$0xff]
        %v419 = vld [vmem:[%s260 + $0x360] sm:$0xff]
        %v420 = vld [vmem:[%s260 + $0x368] sm:$0xff]
        %v421 = vld [vmem:[%s260 + $0x370] sm:$0xff]
        %v422 = vld [vmem:[%s260 + $0x378] sm:$0xff]
        %v423 = vld [vmem:[%s260 + $0x380] sm:$0xff]
        %v424 = vld [vmem:[%s260 + $0x388] sm:$0xff]
        %v425 = vld [vmem:[%s260 + $0x390] sm:$0xff]
        %v426 = vld [vmem:[%s260 + $0x398] sm:$0xff]
        %v427 = vld [vmem:[%s260 + $0x3a0] sm:$0xff]
        %v428 = vld [vmem:[%s260 + $0x3a8] sm:$0xff]
        %v429 = vld [vmem:[%s260 + $0x3b0] sm:$0xff]
        %v430 = vld [vmem:[%s260 + $0x3b8] sm:$0xff]
        %v431 = vld [vmem:[%s260 + $0x3c0] sm:$0xff]
        %v432 = vld [vmem:[%s260 + $0x3c8] sm:$0xff]
        %v433 = vld [vmem:[%s260 + $0x3d0] sm:$0xff]
        %v434 = vld [vmem:[%s260 + $0x3d8] sm:$0xff]
        %v435 = vld [vmem:[%s260 + $0x3e0] sm:$0xff]
        %v436 = vld [vmem:[%s260 + $0x3e8] sm:$0xff]
        %v437 = vld [vmem:[%s260 + $0x3f0] sm:$0xff]
        %v438 = vld [vmem:[%s260 + $0x3f8] sm:$0xff]
        %v455 = vunpack.c.l.b16 %v295
        %v456 = vunpack.c.h.b16 %v295
        %v457 = vunpack.c.l.b16 %v296
        %v458 = vunpack.c.h.b16 %v296
        %v459 = vunpack.c.l.b16 %v297
        %v460 = vunpack.c.h.b16 %v297
        %v461 = vunpack.c.l.b16 %v298
        %v462 = vunpack.c.h.b16 %v298
        %v463 = vunpack.c.l.b16 %v299
        %v464 = vunpack.c.h.b16 %v299
        %v465 = vunpack.c.l.b16 %v300
        %v466 = vunpack.c.h.b16 %v300
        %v467 = vunpack.c.l.b16 %v301
        %v468 = vunpack.c.h.b16 %v301
        %v469 = vunpack.c.l.b16 %v302
        %v470 = vunpack.c.h.b16 %v302
        %v471 = vunpack.c.l.b16 %v303
        %v472 = vunpack.c.h.b16 %v303
        %v473 = vunpack.c.l.b16 %v304
        %v474 = vunpack.c.h.b16 %v304
        %v475 = vunpack.c.l.b16 %v305
        %v476 = vunpack.c.h.b16 %v305
        %v477 = vunpack.c.l.b16 %v306
        %v478 = vunpack.c.h.b16 %v306
        %v479 = vunpack.c.l.b16 %v307
        %v480 = vunpack.c.h.b16 %v307
        %v481 = vunpack.c.l.b16 %v308
        %v482 = vunpack.c.h.b16 %v308
        %v483 = vunpack.c.l.b16 %v309
        %v484 = vunpack.c.h.b16 %v309
        %v485 = vunpack.c.l.b16 %v310
        %v486 = vunpack.c.h.b16 %v310
        %v487 = vpack.c.b16 %v463, %v455
        %v488 = vpack.c.b16 %v464, %v456
        %v489 = vpack.c.b16 %v465, %v457
        %v490 = vpack.c.b16 %v466, %v458
        %v491 = vpack.c.b16 %v467, %v459
        %v492 = vpack.c.b16 %v468, %v460
        %v493 = vpack.c.b16 %v469, %v461
        %v494 = vpack.c.b16 %v470, %v462
        %v495 = vpack.c.b16 %v479, %v471
        %v496 = vpack.c.b16 %v480, %v472
        %v497 = vpack.c.b16 %v481, %v473
        %v498 = vpack.c.b16 %v482, %v474
        %v499 = vpack.c.b16 %v483, %v475
        %v500 = vpack.c.b16 %v484, %v476
        %v501 = vpack.c.b16 %v485, %v477
        %v502 = vpack.c.b16 %v486, %v478
        %v647 = vunpack.c.l.b16 %v311
        %v648 = vunpack.c.h.b16 %v311
        %v649 = vunpack.c.l.b16 %v312
        %v650 = vunpack.c.h.b16 %v312
        %v651 = vunpack.c.l.b16 %v313
        %v652 = vunpack.c.h.b16 %v313
        %v653 = vunpack.c.l.b16 %v314
        %v654 = vunpack.c.h.b16 %v314
        %v655 = vunpack.c.l.b16 %v315
        %v656 = vunpack.c.h.b16 %v315
        %v657 = vunpack.c.l.b16 %v316
        %v658 = vunpack.c.h.b16 %v316
        %v659 = vunpack.c.l.b16 %v317
        %v660 = vunpack.c.h.b16 %v317
        %v661 = vunpack.c.l.b16 %v318
        %v662 = vunpack.c.h.b16 %v318
        %v663 = vunpack.c.l.b16 %v319
        %v664 = vunpack.c.h.b16 %v319
        %v665 = vunpack.c.l.b16 %v320
        %v666 = vunpack.c.h.b16 %v320
        %v667 = vunpack.c.l.b16 %v321
        %v668 = vunpack.c.h.b16 %v321
        %v669 = vunpack.c.l.b16 %v322
        %v670 = vunpack.c.h.b16 %v322
        %v671 = vunpack.c.l.b16 %v323
        %v672 = vunpack.c.h.b16 %v323
        %v673 = vunpack.c.l.b16 %v324
        %v674 = vunpack.c.h.b16 %v324
        %v675 = vunpack.c.l.b16 %v325
        %v676 = vunpack.c.h.b16 %v325
        %v677 = vunpack.c.l.b16 %v326
        %v678 = vunpack.c.h.b16 %v326
        %v679 = vunpack.c.l.b16 %v327
        %v680 = vunpack.c.h.b16 %v327
        %v681 = vunpack.c.l.b16 %v328
        %v682 = vunpack.c.h.b16 %v328
        %v683 = vunpack.c.l.b16 %v329
        %v684 = vunpack.c.h.b16 %v329
        %v685 = vunpack.c.l.b16 %v330
        %v686 = vunpack.c.h.b16 %v330
        %v687 = vunpack.c.l.b16 %v331
        %v688 = vunpack.c.h.b16 %v331
        %v689 = vunpack.c.l.b16 %v332
        %v690 = vunpack.c.h.b16 %v332
        %v691 = vunpack.c.l.b16 %v333
        %v692 = vunpack.c.h.b16 %v333
        %v693 = vunpack.c.l.b16 %v334
        %v694 = vunpack.c.h.b16 %v334
        %v695 = vunpack.c.l.b16 %v335
        %v696 = vunpack.c.h.b16 %v335
        %v697 = vunpack.c.l.b16 %v336
        %v698 = vunpack.c.h.b16 %v336
        %v699 = vunpack.c.l.b16 %v337
        %v700 = vunpack.c.h.b16 %v337
        %v701 = vunpack.c.l.b16 %v338
        %v702 = vunpack.c.h.b16 %v338
        %v703 = vunpack.c.l.b16 %v339
        %v704 = vunpack.c.h.b16 %v339
        %v705 = vunpack.c.l.b16 %v340
        %v706 = vunpack.c.h.b16 %v340
        %v707 = vunpack.c.l.b16 %v341
        %v708 = vunpack.c.h.b16 %v341
        %v709 = vunpack.c.l.b16 %v342
        %v710 = vunpack.c.h.b16 %v342
        %v711 = vunpack.c.l.b16 %v343
        %v712 = vunpack.c.h.b16 %v343
        %v713 = vunpack.c.l.b16 %v344
        %v714 = vunpack.c.h.b16 %v344
        %v715 = vunpack.c.l.b16 %v345
        %v716 = vunpack.c.h.b16 %v345
        %v717 = vunpack.c.l.b16 %v346
        %v718 = vunpack.c.h.b16 %v346
        %v719 = vunpack.c.l.b16 %v347
        %v720 = vunpack.c.h.b16 %v347
        %v721 = vunpack.c.l.b16 %v348
        %v722 = vunpack.c.h.b16 %v348
        %v723 = vunpack.c.l.b16 %v349
        %v724 = vunpack.c.h.b16 %v349
        %v725 = vunpack.c.l.b16 %v350
        %v726 = vunpack.c.h.b16 %v350
        %v727 = vunpack.c.l.b16 %v351
        %v728 = vunpack.c.h.b16 %v351
        %v729 = vunpack.c.l.b16 %v352
        %v730 = vunpack.c.h.b16 %v352
        %v731 = vunpack.c.l.b16 %v353
        %v732 = vunpack.c.h.b16 %v353
        %v733 = vunpack.c.l.b16 %v354
        %v734 = vunpack.c.h.b16 %v354
        %v735 = vunpack.c.l.b16 %v355
        %v736 = vunpack.c.h.b16 %v355
        %v737 = vunpack.c.l.b16 %v356
        %v738 = vunpack.c.h.b16 %v356
        %v739 = vunpack.c.l.b16 %v357
        %v740 = vunpack.c.h.b16 %v357
        %v741 = vunpack.c.l.b16 %v358
        %v742 = vunpack.c.h.b16 %v358
        %v743 = vunpack.c.l.b16 %v359
        %v744 = vunpack.c.h.b16 %v359
        %v745 = vunpack.c.l.b16 %v360
        %v746 = vunpack.c.h.b16 %v360
        %v747 = vunpack.c.l.b16 %v361
        %v748 = vunpack.c.h.b16 %v361
        %v749 = vunpack.c.l.b16 %v362
        %v750 = vunpack.c.h.b16 %v362
        %v751 = vunpack.c.l.b16 %v363
        %v752 = vunpack.c.h.b16 %v363
        %v753 = vunpack.c.l.b16 %v364
        %v754 = vunpack.c.h.b16 %v364
        %v755 = vunpack.c.l.b16 %v365
        %v756 = vunpack.c.h.b16 %v365
        %v757 = vunpack.c.l.b16 %v366
        %v758 = vunpack.c.h.b16 %v366
        %v759 = vunpack.c.l.b16 %v367
        %v760 = vunpack.c.h.b16 %v367
        %v761 = vunpack.c.l.b16 %v368
        %v762 = vunpack.c.h.b16 %v368
        %v763 = vunpack.c.l.b16 %v369
        %v764 = vunpack.c.h.b16 %v369
        %v765 = vunpack.c.l.b16 %v370
        %v766 = vunpack.c.h.b16 %v370
        %v767 = vunpack.c.l.b16 %v371
        %v768 = vunpack.c.h.b16 %v371
        %v769 = vunpack.c.l.b16 %v372
        %v770 = vunpack.c.h.b16 %v372
        %v771 = vunpack.c.l.b16 %v373
        %v772 = vunpack.c.h.b16 %v373
        %v773 = vunpack.c.l.b16 %v374
        %v774 = vunpack.c.h.b16 %v374
        %v775 = vunpack.c.l.b16 %v375
        %v776 = vunpack.c.h.b16 %v375
        %v777 = vunpack.c.l.b16 %v376
        %v778 = vunpack.c.h.b16 %v376
        %v779 = vunpack.c.l.b16 %v377
        %v780 = vunpack.c.h.b16 %v377
        %v781 = vunpack.c.l.b16 %v378
        %v782 = vunpack.c.h.b16 %v378
        %v783 = vunpack.c.l.b16 %v379
        %v784 = vunpack.c.h.b16 %v379
        %v785 = vunpack.c.l.b16 %v380
        %v786 = vunpack.c.h.b16 %v380
        %v787 = vunpack.c.l.b16 %v381
        %v788 = vunpack.c.h.b16 %v381
        %v789 = vunpack.c.l.b16 %v382
        %v790 = vunpack.c.h.b16 %v382
        %v791 = vunpack.c.l.b16 %v383
        %v792 = vunpack.c.h.b16 %v383
        %v793 = vunpack.c.l.b16 %v384
        %v794 = vunpack.c.h.b16 %v384
        %v795 = vunpack.c.l.b16 %v385
        %v796 = vunpack.c.h.b16 %v385
        %v797 = vunpack.c.l.b16 %v386
        %v798 = vunpack.c.h.b16 %v386
        %v799 = vunpack.c.l.b16 %v387
        %v800 = vunpack.c.h.b16 %v387
        %v801 = vunpack.c.l.b16 %v388
        %v802 = vunpack.c.h.b16 %v388
        %v803 = vunpack.c.l.b16 %v389
        %v804 = vunpack.c.h.b16 %v389
        %v805 = vunpack.c.l.b16 %v390
        %v806 = vunpack.c.h.b16 %v390
        %v807 = vunpack.c.l.b16 %v391
        %v808 = vunpack.c.h.b16 %v391
        %v809 = vunpack.c.l.b16 %v392
        %v810 = vunpack.c.h.b16 %v392
        %v811 = vunpack.c.l.b16 %v393
        %v812 = vunpack.c.h.b16 %v393
        %v813 = vunpack.c.l.b16 %v394
        %v814 = vunpack.c.h.b16 %v394
        %v815 = vunpack.c.l.b16 %v395
        %v816 = vunpack.c.h.b16 %v395
        %v817 = vunpack.c.l.b16 %v396
        %v818 = vunpack.c.h.b16 %v396
        %v819 = vunpack.c.l.b16 %v397
        %v820 = vunpack.c.h.b16 %v397
        %v821 = vunpack.c.l.b16 %v398
        %v822 = vunpack.c.h.b16 %v398
        %v823 = vunpack.c.l.b16 %v399
        %v824 = vunpack.c.h.b16 %v399
        %v825 = vunpack.c.l.b16 %v400
        %v826 = vunpack.c.h.b16 %v400
        %v827 = vunpack.c.l.b16 %v401
        %v828 = vunpack.c.h.b16 %v401
        %v829 = vunpack.c.l.b16 %v402
        %v830 = vunpack.c.h.b16 %v402
        %v831 = vunpack.c.l.b16 %v403
        %v832 = vunpack.c.h.b16 %v403
        %v833 = vunpack.c.l.b16 %v404
        %v834 = vunpack.c.h.b16 %v404
        %v835 = vunpack.c.l.b16 %v405
        %v836 = vunpack.c.h.b16 %v405
        %v837 = vunpack.c.l.b16 %v406
        %v838 = vunpack.c.h.b16 %v406
        %v839 = vunpack.c.l.b16 %v407
        %v840 = vunpack.c.h.b16 %v407
        %v841 = vunpack.c.l.b16 %v408
        %v842 = vunpack.c.h.b16 %v408
        %v843 = vunpack.c.l.b16 %v409
        %v844 = vunpack.c.h.b16 %v409
        %v845 = vunpack.c.l.b16 %v410
        %v846 = vunpack.c.h.b16 %v410
        %v847 = vunpack.c.l.b16 %v411
        %v848 = vunpack.c.h.b16 %v411
        %v849 = vunpack.c.l.b16 %v412
        %v850 = vunpack.c.h.b16 %v412
        %v851 = vunpack.c.l.b16 %v413
        %v852 = vunpack.c.h.b16 %v413
        %v853 = vunpack.c.l.b16 %v414
        %v854 = vunpack.c.h.b16 %v414
        %v855 = vunpack.c.l.b16 %v415
        %v856 = vunpack.c.h.b16 %v415
        %v857 = vunpack.c.l.b16 %v416
        %v858 = vunpack.c.h.b16 %v416
        %v859 = vunpack.c.l.b16 %v417
        %v860 = vunpack.c.h.b16 %v417
        %v861 = vunpack.c.l.b16 %v418
        %v862 = vunpack.c.h.b16 %v418
        %v863 = vunpack.c.l.b16 %v419
        %v864 = vunpack.c.h.b16 %v419
        %v865 = vunpack.c.l.b16 %v420
        %v866 = vunpack.c.h.b16 %v420
        %v867 = vunpack.c.l.b16 %v421
        %v868 = vunpack.c.h.b16 %v421
        %v869 = vunpack.c.l.b16 %v422
        %v870 = vunpack.c.h.b16 %v422
        %v871 = vunpack.c.l.b16 %v423
        %v872 = vunpack.c.h.b16 %v423
        %v873 = vunpack.c.l.b16 %v424
        %v874 = vunpack.c.h.b16 %v424
        %v875 = vunpack.c.l.b16 %v425
        %v876 = vunpack.c.h.b16 %v425
        %v877 = vunpack.c.l.b16 %v426
        %v878 = vunpack.c.h.b16 %v426
        %v879 = vunpack.c.l.b16 %v427
        %v880 = vunpack.c.h.b16 %v427
        %v881 = vunpack.c.l.b16 %v428
        %v882 = vunpack.c.h.b16 %v428
        %v883 = vunpack.c.l.b16 %v429
        %v884 = vunpack.c.h.b16 %v429
        %v885 = vunpack.c.l.b16 %v430
        %v886 = vunpack.c.h.b16 %v430
        %v887 = vunpack.c.l.b16 %v431
        %v888 = vunpack.c.h.b16 %v431
        %v889 = vunpack.c.l.b16 %v432
        %v890 = vunpack.c.h.b16 %v432
        %v891 = vunpack.c.l.b16 %v433
        %v892 = vunpack.c.h.b16 %v433
        %v893 = vunpack.c.l.b16 %v434
        %v894 = vunpack.c.h.b16 %v434
        %v895 = vunpack.c.l.b16 %v435
        %v896 = vunpack.c.h.b16 %v435
        %v897 = vunpack.c.l.b16 %v436
        %v898 = vunpack.c.h.b16 %v436
        %v899 = vunpack.c.l.b16 %v437
        %v900 = vunpack.c.h.b16 %v437
        %v901 = vunpack.c.l.b16 %v438
        %v902 = vunpack.c.h.b16 %v438
        %v903 = vpack.c.b16 %v649, %v647
        %v904 = vpack.c.b16 %v650, %v648
        %v905 = vpack.c.b16 %v653, %v651
        %v906 = vpack.c.b16 %v654, %v652
        %v907 = vpack.c.b16 %v657, %v655
        %v908 = vpack.c.b16 %v658, %v656
        %v909 = vpack.c.b16 %v661, %v659
        %v910 = vpack.c.b16 %v662, %v660
        %v911 = vpack.c.b16 %v665, %v663
        %v912 = vpack.c.b16 %v666, %v664
        %v913 = vpack.c.b16 %v669, %v667
        %v914 = vpack.c.b16 %v670, %v668
        %v915 = vpack.c.b16 %v673, %v671
        %v916 = vpack.c.b16 %v674, %v672
        %v917 = vpack.c.b16 %v677, %v675
        %v918 = vpack.c.b16 %v678, %v676
        %v919 = vpack.c.b16 %v681, %v679
        %v920 = vpack.c.b16 %v682, %v680
        %v921 = vpack.c.b16 %v685, %v683
        %v922 = vpack.c.b16 %v686, %v684
        %v923 = vpack.c.b16 %v689, %v687
        %v924 = vpack.c.b16 %v690, %v688
        %v925 = vpack.c.b16 %v693, %v691
        %v926 = vpack.c.b16 %v694, %v692
        %v927 = vpack.c.b16 %v697, %v695
        %v928 = vpack.c.b16 %v698, %v696
        %v929 = vpack.c.b16 %v701, %v699
        %v930 = vpack.c.b16 %v702, %v700
        %v931 = vpack.c.b16 %v705, %v703
        %v932 = vpack.c.b16 %v706, %v704
        %v933 = vpack.c.b16 %v709, %v707
        %v934 = vpack.c.b16 %v710, %v708
        %v935 = vpack.c.b16 %v713, %v711
        %v936 = vpack.c.b16 %v714, %v712
        %v937 = vpack.c.b16 %v717, %v715
        %v938 = vpack.c.b16 %v718, %v716
        %v939 = vpack.c.b16 %v721, %v719
        %v940 = vpack.c.b16 %v722, %v720
        %v941 = vpack.c.b16 %v725, %v723
        %v942 = vpack.c.b16 %v726, %v724
        %v943 = vpack.c.b16 %v729, %v727
        %v944 = vpack.c.b16 %v730, %v728
        %v945 = vpack.c.b16 %v733, %v731
        %v946 = vpack.c.b16 %v734, %v732
        %v947 = vpack.c.b16 %v737, %v735
        %v948 = vpack.c.b16 %v738, %v736
        %v949 = vpack.c.b16 %v741, %v739
        %v950 = vpack.c.b16 %v742, %v740
        %v951 = vpack.c.b16 %v745, %v743
        %v952 = vpack.c.b16 %v746, %v744
        %v953 = vpack.c.b16 %v749, %v747
        %v954 = vpack.c.b16 %v750, %v748
        %v955 = vpack.c.b16 %v753, %v751
        %v956 = vpack.c.b16 %v754, %v752
        %v957 = vpack.c.b16 %v757, %v755
        %v958 = vpack.c.b16 %v758, %v756
        %v959 = vpack.c.b16 %v761, %v759
        %v960 = vpack.c.b16 %v762, %v760
        %v961 = vpack.c.b16 %v765, %v763
        %v962 = vpack.c.b16 %v766, %v764
        %v963 = vpack.c.b16 %v769, %v767
        %v964 = vpack.c.b16 %v770, %v768
        %v965 = vpack.c.b16 %v773, %v771
        %v966 = vpack.c.b16 %v774, %v772
        %v967 = vpack.c.b16 %v777, %v775
        %v968 = vpack.c.b16 %v778, %v776
        %v969 = vpack.c.b16 %v781, %v779
        %v970 = vpack.c.b16 %v782, %v780
        %v971 = vpack.c.b16 %v785, %v783
        %v972 = vpack.c.b16 %v786, %v784
        %v973 = vpack.c.b16 %v789, %v787
        %v974 = vpack.c.b16 %v790, %v788
        %v975 = vpack.c.b16 %v793, %v791
        %v976 = vpack.c.b16 %v794, %v792
        %v977 = vpack.c.b16 %v797, %v795
        %v978 = vpack.c.b16 %v798, %v796
        %v979 = vpack.c.b16 %v801, %v799
        %v980 = vpack.c.b16 %v802, %v800
        %v981 = vpack.c.b16 %v805, %v803
        %v982 = vpack.c.b16 %v806, %v804
        %v983 = vpack.c.b16 %v809, %v807
        %v984 = vpack.c.b16 %v810, %v808
        %v985 = vpack.c.b16 %v813, %v811
        %v986 = vpack.c.b16 %v814, %v812
        %v987 = vpack.c.b16 %v817, %v815
        %v988 = vpack.c.b16 %v818, %v816
        %v989 = vpack.c.b16 %v821, %v819
        %v990 = vpack.c.b16 %v822, %v820
        %v991 = vpack.c.b16 %v825, %v823
        %v992 = vpack.c.b16 %v826, %v824
        %v993 = vpack.c.b16 %v829, %v827
        %v994 = vpack.c.b16 %v830, %v828
        %v995 = vpack.c.b16 %v833, %v831
        %v996 = vpack.c.b16 %v834, %v832
        %v997 = vpack.c.b16 %v837, %v835
        %v998 = vpack.c.b16 %v838, %v836
        %v999 = vpack.c.b16 %v841, %v839
        %v1000 = vpack.c.b16 %v842, %v840
        %v1001 = vpack.c.b16 %v845, %v843
        %v1002 = vpack.c.b16 %v846, %v844
        %v1003 = vpack.c.b16 %v849, %v847
        %v1004 = vpack.c.b16 %v850, %v848
        %v1005 = vpack.c.b16 %v853, %v851
        %v1006 = vpack.c.b16 %v854, %v852
        %v1007 = vpack.c.b16 %v857, %v855
        %v1008 = vpack.c.b16 %v858, %v856
        %v1009 = vpack.c.b16 %v861, %v859
        %v1010 = vpack.c.b16 %v862, %v860
        %v1011 = vpack.c.b16 %v865, %v863
        %v1012 = vpack.c.b16 %v866, %v864
        %v1013 = vpack.c.b16 %v869, %v867
        %v1014 = vpack.c.b16 %v870, %v868
        %v1015 = vpack.c.b16 %v873, %v871
        %v1016 = vpack.c.b16 %v874, %v872
        %v1017 = vpack.c.b16 %v877, %v875
        %v1018 = vpack.c.b16 %v878, %v876
        %v1019 = vpack.c.b16 %v881, %v879
        %v1020 = vpack.c.b16 %v882, %v880
        %v1021 = vpack.c.b16 %v885, %v883
        %v1022 = vpack.c.b16 %v886, %v884
        %v1023 = vpack.c.b16 %v889, %v887
        %v1024 = vpack.c.b16 %v890, %v888
        %v1025 = vpack.c.b16 %v893, %v891
        %v1026 = vpack.c.b16 %v894, %v892
        %v1027 = vpack.c.b16 %v897, %v895
        %v1028 = vpack.c.b16 %v898, %v896
        %v1029 = vpack.c.b16 %v901, %v899
        %v1030 = vpack.c.b16 %v902, %v900
        %1159 = vmatprep.subr.bf16.mxu0 %v904
        %1160 = vmatpush1.bf16.msra.mxu0 %v903
        %1161 = vmatprep.subr.bf16.mxu0 %v906
        %1162 = vmatpush1.bf16.msra.mxu0 %v905
        %1163 = vmatprep.subr.bf16.mxu0 %v908
        %1164 = vmatpush1.bf16.msra.mxu0 %v907
        %1165 = vmatprep.subr.bf16.mxu0 %v910
        %1166 = vmatpush1.bf16.msra.mxu0 %v909
        %1167 = vmatprep.subr.bf16.mxu0 %v912
        %1168 = vmatpush1.bf16.msra.mxu0 %v911
        %1169 = vmatprep.subr.bf16.mxu0 %v914
        %1170 = vmatpush1.bf16.msra.mxu0 %v913
        %1171 = vmatprep.subr.bf16.mxu0 %v916
        %1172 = vmatpush1.bf16.msra.mxu0 %v915
        %1173 = vmatprep.subr.bf16.mxu0 %v918
        %1174 = vmatpush1.bf16.msra.mxu0 %v917
        %1175 = vmatprep.subr.bf16.mxu0 %v920
        %1176 = vmatpush1.bf16.msra.mxu0 %v919
        %1177 = vmatprep.subr.bf16.mxu0 %v922
        %1178 = vmatpush1.bf16.msra.mxu0 %v921
        %1179 = vmatprep.subr.bf16.mxu0 %v924
        %1180 = vmatpush1.bf16.msra.mxu0 %v923
        %1181 = vmatprep.subr.bf16.mxu0 %v926
        %1182 = vmatpush1.bf16.msra.mxu0 %v925
        %1183 = vmatprep.subr.bf16.mxu0 %v928
        %1184 = vmatpush1.bf16.msra.mxu0 %v927
        %1185 = vmatprep.subr.bf16.mxu0 %v930
        %1186 = vmatpush1.bf16.msra.mxu0 %v929
        %1187 = vmatprep.subr.bf16.mxu0 %v932
        %1188 = vmatpush1.bf16.msra.mxu0 %v931
        %1189 = vmatprep.subr.bf16.mxu0 %v934
        %1190 = vmatpush1.bf16.msra.mxu0 %v933
        %1191 = vmatprep.mubr.bf16.mxu0 %v488
        %1192 = vmatmul.mubr.bf16.gmra.mrb[0].mxu0 %v487
        %v1193 = vpop.f32.mrb[0].mxu0
        %v1194 = vadd.f32 0.0, %v1193
        %v1195 = vpop.f32.mrb[0].mxu0
        %v1196 = vadd.f32 0.0, %v1195
        %v1197 = vpop.f32.mrb[0].mxu0
        %v1198 = vadd.f32 0.0, %v1197
        %v1199 = vpop.f32.mrb[0].mxu0
        %v1200 = vadd.f32 0.0, %v1199
        %1201 = vmatprep.mubr.bf16.mxu0 %v496
        %1202 = vmatmul.mubr.bf16.gmra.mrb[0].mxu0 %v495
        %v1203 = vpop.f32.mrb[0].mxu0
        %v1204 = vadd.f32 0.0, %v1203
        %v1205 = vpop.f32.mrb[0].mxu0
        %v1206 = vadd.f32 0.0, %v1205
        %v1207 = vpop.f32.mrb[0].mxu0
        %v1208 = vadd.f32 0.0, %v1207
        %v1209 = vpop.f32.mrb[0].mxu0
        %v1210 = vadd.f32 0.0, %v1209
        %1211 = vdwg.mxu0
        %1212 = vmatprep.subr.bf16.mxu0 %v936
        %1213 = vmatpush1.bf16.msra.mxu0 %v935
        %1214 = vmatprep.subr.bf16.mxu0 %v938
        %1215 = vmatpush1.bf16.msra.mxu0 %v937
        %1216 = vmatprep.subr.bf16.mxu0 %v940
        %1217 = vmatpush1.bf16.msra.mxu0 %v939
        %1218 = vmatprep.subr.bf16.mxu0 %v942
        %1219 = vmatpush1.bf16.msra.mxu0 %v941
        %1220 = vmatprep.subr.bf16.mxu0 %v944
        %1221 = vmatpush1.bf16.msra.mxu0 %v943
        %1222 = vmatprep.subr.bf16.mxu0 %v946
        %1223 = vmatpush1.bf16.msra.mxu0 %v945
        %1224 = vmatprep.subr.bf16.mxu0 %v948
        %1225 = vmatpush1.bf16.msra.mxu0 %v947
        %1226 = vmatprep.subr.bf16.mxu0 %v950
        %1227 = vmatpush1.bf16.msra.mxu0 %v949
        %1228 = vmatprep.subr.bf16.mxu0 %v952
        %1229 = vmatpush1.bf16.msra.mxu0 %v951
        %1230 = vmatprep.subr.bf16.mxu0 %v954
        %1231 = vmatpush1.bf16.msra.mxu0 %v953
        %1232 = vmatprep.subr.bf16.mxu0 %v956
        %1233 = vmatpush1.bf16.msra.mxu0 %v955
        %1234 = vmatprep.subr.bf16.mxu0 %v958
        %1235 = vmatpush1.bf16.msra.mxu0 %v957
        %1236 = vmatprep.subr.bf16.mxu0 %v960
        %1237 = vmatpush1.bf16.msra.mxu0 %v959
        %1238 = vmatprep.subr.bf16.mxu0 %v962
        %1239 = vmatpush1.bf16.msra.mxu0 %v961
        %1240 = vmatprep.subr.bf16.mxu0 %v964
        %1241 = vmatpush1.bf16.msra.mxu0 %v963
        %1242 = vmatprep.subr.bf16.mxu0 %v966
        %1243 = vmatpush1.bf16.msra.mxu0 %v965
        %1244 = vmatprep.mubr.bf16.mxu0 %v490
        %1245 = vmatmul.mubr.bf16.gmra.mrb[0].mxu0 %v489
        %v1246 = vpop.f32.mrb[0].mxu0
        %v1247 = vadd.f32 %v1194, %v1246
        %v1248 = vpop.f32.mrb[0].mxu0
        %v1249 = vadd.f32 %v1196, %v1248
        %v1250 = vpop.f32.mrb[0].mxu0
        %v1251 = vadd.f32 %v1198, %v1250
        %v1252 = vpop.f32.mrb[0].mxu0
        %v1253 = vadd.f32 %v1200, %v1252
        %1254 = vmatprep.mubr.bf16.mxu0 %v498
        %1255 = vmatmul.mubr.bf16.gmra.mrb[0].mxu0 %v497
        %v1256 = vpop.f32.mrb[0].mxu0
        %v1257 = vadd.f32 %v1204, %v1256
        %v1258 = vpop.f32.mrb[0].mxu0
        %v1259 = vadd.f32 %v1206, %v1258
        %v1260 = vpop.f32.mrb[0].mxu0
        %v1261 = vadd.f32 %v1208, %v1260
        %v1262 = vpop.f32.mrb[0].mxu0
        %v1263 = vadd.f32 %v1210, %v1262
        %1264 = vdwg.mxu0
        %1265 = vmatprep.subr.bf16.mxu0 %v968
        %1266 = vmatpush1.bf16.msra.mxu0 %v967
        %1267 = vmatprep.subr.bf16.mxu0 %v970
        %1268 = vmatpush1.bf16.msra.mxu0 %v969
        %1269 = vmatprep.subr.bf16.mxu0 %v972
        %1270 = vmatpush1.bf16.msra.mxu0 %v971
        %1271 = vmatprep.subr.bf16.mxu0 %v974
        %1272 = vmatpush1.bf16.msra.mxu0 %v973
        %1273 = vmatprep.subr.bf16.mxu0 %v976
        %1274 = vmatpush1.bf16.msra.mxu0 %v975
        %1275 = vmatprep.subr.bf16.mxu0 %v978
        %1276 = vmatpush1.bf16.msra.mxu0 %v977
        %1277 = vmatprep.subr.bf16.mxu0 %v980
        %1278 = vmatpush1.bf16.msra.mxu0 %v979
        %1279 = vmatprep.subr.bf16.mxu0 %v982
        %1280 = vmatpush1.bf16.msra.mxu0 %v981
        %1281 = vmatprep.subr.bf16.mxu0 %v984
        %1282 = vmatpush1.bf16.msra.mxu0 %v983
        %1283 = vmatprep.subr.bf16.mxu0 %v986
        %1284 = vmatpush1.bf16.msra.mxu0 %v985
        %1285 = vmatprep.subr.bf16.mxu0 %v988
        %1286 = vmatpush1.bf16.msra.mxu0 %v987
        %1287 = vmatprep.subr.bf16.mxu0 %v990
        %1288 = vmatpush1.bf16.msra.mxu0 %v989
        %1289 = vmatprep.subr.bf16.mxu0 %v992
        %1290 = vmatpush1.bf16.msra.mxu0 %v991
        %1291 = vmatprep.subr.bf16.mxu0 %v994
        %1292 = vmatpush1.bf16.msra.mxu0 %v993
        %1293 = vmatprep.subr.bf16.mxu0 %v996
        %1294 = vmatpush1.bf16.msra.mxu0 %v995
        %1295 = vmatprep.subr.bf16.mxu0 %v998
        %1296 = vmatpush1.bf16.msra.mxu0 %v997
        %1297 = vmatprep.mubr.bf16.mxu0 %v492
        %1298 = vmatmul.mubr.bf16.gmra.mrb[0].mxu0 %v491
        %v1299 = vpop.f32.mrb[0].mxu0
        %v1300 = vadd.f32 %v1247, %v1299
        %v1301 = vpop.f32.mrb[0].mxu0
        %v1302 = vadd.f32 %v1249, %v1301
        %v1303 = vpop.f32.mrb[0].mxu0
        %v1304 = vadd.f32 %v1251, %v1303
        %v1305 = vpop.f32.mrb[0].mxu0
        %v1306 = vadd.f32 %v1253, %v1305
        %1307 = vmatprep.mubr.bf16.mxu0 %v500
        %1308 = vmatmul.mubr.bf16.gmra.mrb[0].mxu0 %v499
        %v1309 = vpop.f32.mrb[0].mxu0
        %v1310 = vadd.f32 %v1257, %v1309
        %v1311 = vpop.f32.mrb[0].mxu0
        %v1312 = vadd.f32 %v1259, %v1311
        %v1313 = vpop.f32.mrb[0].mxu0
        %v1314 = vadd.f32 %v1261, %v1313
        %v1315 = vpop.f32.mrb[0].mxu0
        %v1316 = vadd.f32 %v1263, %v1315
        %1317 = vdwg.mxu0
        %1318 = vmatprep.subr.bf16.mxu0 %v1000
        %1319 = vmatpush1.bf16.msra.mxu0 %v999
        %1320 = vmatprep.subr.bf16.mxu0 %v1002
        %1321 = vmatpush1.bf16.msra.mxu0 %v1001
        %1322 = vmatprep.subr.bf16.mxu0 %v1004
        %1323 = vmatpush1.bf16.msra.mxu0 %v1003
        %1324 = vmatprep.subr.bf16.mxu0 %v1006
        %1325 = vmatpush1.bf16.msra.mxu0 %v1005
        %1326 = vmatprep.subr.bf16.mxu0 %v1008
        %1327 = vmatpush1.bf16.msra.mxu0 %v1007
        %1328 = vmatprep.subr.bf16.mxu0 %v1010
        %1329 = vmatpush1.bf16.msra.mxu0 %v1009
        %1330 = vmatprep.subr.bf16.mxu0 %v1012
        %1331 = vmatpush1.bf16.msra.mxu0 %v1011
        %1332 = vmatprep.subr.bf16.mxu0 %v1014
        %1333 = vmatpush1.bf16.msra.mxu0 %v1013
        %1334 = vmatprep.subr.bf16.mxu0 %v1016
        %1335 = vmatpush1.bf16.msra.mxu0 %v1015
        %1336 = vmatprep.subr.bf16.mxu0 %v1018
        %1337 = vmatpush1.bf16.msra.mxu0 %v1017
        %1338 = vmatprep.subr.bf16.mxu0 %v1020
        %1339 = vmatpush1.bf16.msra.mxu0 %v1019
        %1340 = vmatprep.subr.bf16.mxu0 %v1022
        %1341 = vmatpush1.bf16.msra.mxu0 %v1021
        %1342 = vmatprep.subr.bf16.mxu0 %v1024
        %1343 = vmatpush1.bf16.msra.mxu0 %v1023
        %1344 = vmatprep.subr.bf16.mxu0 %v1026
        %1345 = vmatpush1.bf16.msra.mxu0 %v1025
        %1346 = vmatprep.subr.bf16.mxu0 %v1028
        %1347 = vmatpush1.bf16.msra.mxu0 %v1027
        %1348 = vmatprep.subr.bf16.mxu0 %v1030
        %1349 = vmatpush1.bf16.msra.mxu0 %v1029
        %1350 = vmatprep.mubr.bf16.mxu0 %v494
        %1351 = vmatmul.mubr.bf16.gmra.mrb[0].mxu0 %v493
        %v1352 = vpop.f32.mrb[0].mxu0
        %v1353 = vadd.f32 %v1300, %v1352
        %v1354 = vpop.f32.mrb[0].mxu0
        %v1355 = vadd.f32 %v1302, %v1354
        %v1356 = vpop.f32.mrb[0].mxu0
        %v1357 = vadd.f32 %v1304, %v1356
        %v1358 = vpop.f32.mrb[0].mxu0
        %v1359 = vadd.f32 %v1306, %v1358
        %1360 = vmatprep.mubr.bf16.mxu0 %v502
        %1361 = vmatmul.mubr.bf16.gmra.mrb[0].mxu0 %v501
        %v1362 = vpop.f32.mrb[0].mxu0
        %v1363 = vadd.f32 %v1310, %v1362
        %v1364 = vpop.f32.mrb[0].mxu0
        %v1365 = vadd.f32 %v1312, %v1364
        %v1366 = vpop.f32.mrb[0].mxu0
        %v1367 = vadd.f32 %v1314, %v1366
        %v1368 = vpop.f32.mrb[0].mxu0
        %v1369 = vadd.f32 %v1316, %v1368
        %1370 = vdwg.mxu0
        %v1371 = vadd.f32 %v287, %v1353
        %v1372 = vadd.f32 %v288, %v1355
        %v1373 = vadd.f32 %v289, %v1357
        %v1374 = vadd.f32 %v290, %v1359
        %v1375 = vadd.f32 %v291, %v1363
        %v1376 = vadd.f32 %v292, %v1365
        %v1377 = vadd.f32 %v293, %v1367
        %v1378 = vadd.f32 %v294, %v1369
        %1379 = vst [vmem:[#allocation2] sm:$0xff] %v1371
        %1380 = vst [vmem:[#allocation2 + $0x8] sm:$0xff] %v1372
        %1381 = vst [vmem:[#allocation2 + $0x10] sm:$0xff] %v1373
        %1382 = vst [vmem:[#allocation2 + $0x18] sm:$0xff] %v1374
        %1383 = vst [vmem:[#allocation2 + $0x20] sm:$0xff] %v1375
        %1384 = vst [vmem:[#allocation2 + $0x28] sm:$0xff] %v1376
        %1385 = vst [vmem:[#allocation2 + $0x30] sm:$0xff] %v1377
        %1386 = vst [vmem:[#allocation2 + $0x38] sm:$0xff] %v1378
        %p1387 = scmp.eq.s32.totalorder %s20, 1
        // Predicated region
        $region56: #{discriminator_forward.7} parent=46 // pred_check
          %p1388 = pneg %p1387
        $region57: #{discriminator_forward.7} parent=46 // pred_check_branch
          %1390 = sbr.rel (%p1388) target = $region59
        $region58: #{discriminator_forward.7} parent=46 // pred_region
          %v1391 = vld [vmem:[#allocation2] sm:$0xff]
          %v1392 = vld [vmem:[#allocation2 + $0x8] sm:$0xff]
          %v1393 = vld [vmem:[#allocation2 + $0x10] sm:$0xff]
          %v1394 = vld [vmem:[#allocation2 + $0x18] sm:$0xff]
          %v1395 = vld [vmem:[#allocation2 + $0x20] sm:$0xff]
          %v1396 = vld [vmem:[#allocation2 + $0x28] sm:$0xff]
          %v1397 = vld [vmem:[#allocation2 + $0x30] sm:$0xff]
          %v1398 = vld [vmem:[#allocation2 + $0x38] sm:$0xff]
          %vm1399 = vcmp.ge.f32.partialorder %v1391, 0.0
          %vm1400 = vcmp.ge.f32.partialorder %v1392, 0.0
          %vm1401 = vcmp.ge.f32.partialorder %v1393, 0.0
          %vm1402 = vcmp.ge.f32.partialorder %v1394, 0.0
          %vm1403 = vcmp.ge.f32.partialorder %v1395, 0.0
          %vm1404 = vcmp.ge.f32.partialorder %v1396, 0.0
          %vm1405 = vcmp.ge.f32.partialorder %v1397, 0.0
          %vm1406 = vcmp.ge.f32.partialorder %v1398, 0.0
          %v1407 = vmul.f32 %v1391, 0.2
          %v1408 = vmul.f32 %v1392, 0.2
          %v1409 = vmul.f32 %v1393, 0.2
          %v1410 = vmul.f32 %v1394, 0.2
          %v1411 = vmul.f32 %v1395, 0.2
          %v1412 = vmul.f32 %v1396, 0.2
          %v1413 = vmul.f32 %v1397, 0.2
          %v1414 = vmul.f32 %v1398, 0.2
          %v1415 = vsel %vm1399, %v1391, %v1407
          %v1416 = vsel %vm1400, %v1392, %v1408
          %v1417 = vsel %vm1401, %v1393, %v1409
          %v1418 = vsel %vm1402, %v1394, %v1410
          %v1419 = vsel %vm1403, %v1395, %v1411
          %v1420 = vsel %vm1404, %v1396, %v1412
          %v1421 = vsel %vm1405, %v1397, %v1413
          %v1422 = vsel %vm1406, %v1398, %v1414
          %v1423 = vpack.c.bf16 %v1417, %v1415
          %v1424 = vpack.c.bf16 %v1418, %v1416
          %v1425 = vpack.c.bf16 %v1421, %v1419
          %v1426 = vpack.c.bf16 %v1422, %v1420
          %v1431 = vunpack.c.l.b16 %v1423
          %v1432 = vunpack.c.l.b16 %v1424
          %v1433 = vunpack.c.h.b16 %v1423
          %v1434 = vunpack.c.h.b16 %v1424
          %v1435 = vunpack.c.l.b16 %v1425
          %v1436 = vunpack.c.l.b16 %v1426
          %v1437 = vunpack.c.h.b16 %v1425
          %v1438 = vunpack.c.h.b16 %v1426
          %v1439 = vpack.c.b16 %v1432, %v1431
          %v1440 = vpack.c.b16 %v1434, %v1433
          %v1441 = vpack.c.b16 %v1436, %v1435
          %v1442 = vpack.c.b16 %v1438, %v1437
          %1447 = vst [vmem:[%s272] sm:$0xff] %v1439
          %1448 = vst [vmem:[%s272 + $0x8] sm:$0xff] %v1440
          %1449 = vst [vmem:[%s272 + $0x10] sm:$0xff] %v1441
          %1450 = vst [vmem:[%s272 + $0x18] sm:$0xff] %v1442
        $region59: #{discriminator_forward.7} parent=46 // pred_fallthru
          _
        %s1451 = smul.u32 4, %s18
        %s1452 = smul.u32 2, %s19
        %p1453 = scmp.lt.s32.totalorder %s1451, 3
        %s1454 = scalar_select %p1453, %s1451, 3
        %p1455 = scmp.lt.s32.totalorder %s1452, 1
        %s1456 = scalar_select %p1455, %s1452, 1
        %s1457 = smul.addr %s1454, 2
        %s1458 = sadd.s32 %s1456, %s1457
        %s1459 = smul.addr %s1458, 4
        %s1460 = scalar_lea.vmem %s2, %s1459
        // Predicated region
        $region60: #{discriminator_forward.7} parent=46 // pred_check
          %p1461 = pneg %p108
        $region61: #{discriminator_forward.7} parent=46 // pred_check_branch
          %1463 = sbr.rel (%p1461) target = $region63
        $region62: #{discriminator_forward.7} parent=46 // pred_region
          %s1464 = smul.u32 4, %s18
          %s1465 = smul.u32 2, %s19
        $region63: #{discriminator_forward.7} parent=46 // pred_fallthru
          _
        // Predicated region
        $region64: #{discriminator_forward.7} parent=46 // pred_check
          %p1466 = pneg %p108
        $region65: #{discriminator_forward.7} parent=46 // pred_check_branch
          %1468 = sbr.rel (%p1466) target = $region67
        $region66: #{discriminator_forward.7} parent=46 // pred_region
          %s1469 = smul.u32 4, %s18
          %s1470 = smul.u32 2, %s19
          %p1471 = scmp.lt.s32.totalorder %s1469, 3
          %s1472 = scalar_select %p1471, %s1469, 3
          %p1473 = scmp.lt.s32.totalorder %s1470, 1
          %s1474 = scalar_select %p1473, %s1470, 1
          %s1475 = smul.addr %s1472, 2
          %s1476 = sadd.s32 %s1474, %s1475
          %s1477 = smul.addr %s1476, 4
          %s1478 = scalar_lea.vmem %s2, %s1477
        $region67: #{discriminator_forward.7} parent=46 // pred_fallthru
          _
      $region47: #{discriminator_forward.7} parent=5 // pred_fallthru
        _
      %p1479 = scmp.le.s32.totalorder 2, %s8
      // Predicated region
      $region68: #{discriminator_forward.7} parent=5 // pred_check
        %p1480 = pneg %p1479
      $region69: #{discriminator_forward.7} parent=5 // pred_check_branch
        %1482 = sbr.rel (%p1480) target = $region71
      $region70: #{discriminator_forward.7} parent=5 // pred_region
        %s1483 = ssub.s32 %s8, 2
      $region71: #{discriminator_forward.7} parent=5 // pred_fallthru
        _
    $region6: #{discriminator_forward.7} parent=1 // loop_footer
      %s12 = sadd.s32 1, %s8
    $region7: #{discriminator_forward.7} parent=1 // loop_footer_branch
      %7 = sbr.rel target = $region3
    $region8: #{discriminator_forward.7} parent=1 // loop_exit
      _

// kernel: discriminator_forward.8
$region0: #{discriminator_forward.8}
  #allocation0 [shape = 'u32[]', space=smem, size = 0x4, offset = 0x4, fixed_abs, tag = 'smem constant byte address 0x4 - core index']
  #allocation1 [shape = 'u32[144,128]{1,0:T(1,128)}', space=vmem, size = 0x12000, scoped, tag = 'internal scratch']
  #allocation2 [shape = 'f32[32,256]{1,0:T(8,128)}', space=vmem, size = 0x8000, scoped, tag = 'scratch operand']
  %s0 = inlined_call_operand.vmem [shape: bf16[32,4096], index: 0, kind: input, shape index: {}]
  %s1 = inlined_call_operand.vmem [shape: bf16[4096,512], index: 1, kind: input, shape index: {}]
  %s2 = inlined_call_operand.vmem [shape: bf16[32,512], index: 2, kind: output, shape index: {}]
  %s3 = sld [smem:[#allocation0]]
  $region144: #{discriminator_forward.8} parent=0
    _
  %s5 = ssub.s32 1, %s3
  %s6 = scalar_select 0, %s5, %s3
  $region1: #{discriminator_forward.8} parent=0
    #allocation3 [shape = 'u8[131072]{0}', space=vmem, size = 0x20000, scoped, tag = 'input window, operand 0']
    #allocation4 [shape = 'u8[1048576]{0}', space=vmem, size = 0x100000, scoped, tag = 'input window, operand 1']
    #allocation5 [shape = 'u8[32768]{0}', space=vmem, size = 0x8000, scoped, tag = 'output window, operand 0']
    loop: start=0, step=1, limit=10
    $region2: #{discriminator_forward.8} parent=1 // loop_pre_header
      _
    $region3: #{discriminator_forward.8} parent=1 // loop_header
      %s8 = sphi 0, %s12
      %p9 = scmp.ge.s32.totalorder %s8, 10
      %s15 = sphi 0, %s34
      %s16 = sphi 0, %s30
      %s17 = sphi 0, %s26
      %s18 = sphi 0, %s15
      %s19 = sphi 0, %s16
      %s20 = sphi 0, %s17
      %s21 = sphi 0, %s18
      %s22 = sphi 0, %s19
      %s23 = sphi 0, %s20
      %s39 = sphi 0, %s41
      %s42 = sphi 0, %s39
      %s43 = sphi 0, %s42
      %s59 = sphi 0, %s43
      %s67 = sphi 0, %s69
      %s70 = sphi 0, %s67
      %s71 = sphi 0, %s70
      %s87 = sphi 0, %s71
      %s95 = sphi 0, %s97
      %s98 = sphi 0, %s95
      %s99 = sphi 0, %s98
      %s115 = sphi 0, %s99
    $region4: #{discriminator_forward.8} parent=1 // loop_header_branch
      %11 = sbr.rel (%p9) target = $region8
    $region5: #{discriminator_forward.8} parent=1 // loop_body
      %s13 = ssub.s32 %s8, 1
      %s14 = ssub.s32 %s8, 2
      %s24 = sadd.s32 1, %s17
      %p25 = scmp.ge.s32.totalorder %s24, 4
      %s26 = scalar_select %p25, 0, %s24
      %s27 = sadd.s32 1, %s16
      %s28 = scalar_select %p25, %s27, %s16
      %p29 = scmp.ge.s32.totalorder %s28, 2
      %s30 = scalar_select %p29, 0, %s28
      %s31 = sadd.s32 1, %s15
      %s32 = scalar_select %p29, %s31, %s15
      %p33 = scmp.ge.s32.totalorder %s32, 1
      %s34 = scalar_select %p33, 0, %s32
      %s35 = ssub.s32 %s15, %s34
      %s36 = ssub.s32 %s17, %s26
      %s37 = sor.u32 %s35, %s36
      %p38 = scmp.eq.s32.totalorder %s37, 0
      %s40 = sadd.s32 %s39, 1
      %s41 = scalar_select %p38, %s39, %s40
      %p44 = pneg %p38
      %p45 = scmp.eq.s32.totalorder %s8, 7
      %p46 = por %p44, %p45
      %p47 = scmp.ne.s32.totalorder %s39, %s42
      %p48 = scmp.eq.s32.totalorder %s8, 0
      %p49 = por %p47, %p48
      %p50 = scmp.ne.s32.totalorder %s39, %s42
      %p51 = scmp.eq.s32.totalorder %s13, 7
      %p52 = por %p50, %p51
      %p53 = scmp.ne.s32.totalorder %s42, %s43
      %p54 = scmp.eq.s32.totalorder %s13, 0
      %p55 = por %p53, %p54
      %p56 = scmp.ne.s32.totalorder %s42, %s43
      %p57 = scmp.eq.s32.totalorder %s14, 7
      %p58 = por %p56, %p57
      %p60 = scmp.ne.s32.totalorder %s43, %s59
      %p61 = scmp.eq.s32.totalorder %s14, 0
      %p62 = por %p60, %p61
      %s63 = ssub.s32 %s17, %s26
      %s64 = ssub.s32 %s16, %s30
      %s65 = sor.u32 %s63, %s64
      %p66 = scmp.eq.s32.totalorder %s65, 0
      %s68 = sadd.s32 %s67, 1
      %s69 = scalar_select %p66, %s67, %s68
      %p72 = pneg %p66
      %p73 = scmp.eq.s32.totalorder %s8, 7
      %p74 = por %p72, %p73
      %p75 = scmp.ne.s32.totalorder %s67, %s70
      %p76 = scmp.eq.s32.totalorder %s8, 0
      %p77 = por %p75, %p76
      %p78 = scmp.ne.s32.totalorder %s67, %s70
      %p79 = scmp.eq.s32.totalorder %s13, 7
      %p80 = por %p78, %p79
      %p81 = scmp.ne.s32.totalorder %s70, %s71
      %p82 = scmp.eq.s32.totalorder %s13, 0
      %p83 = por %p81, %p82
      %p84 = scmp.ne.s32.totalorder %s70, %s71
      %p85 = scmp.eq.s32.totalorder %s14, 7
      %p86 = por %p84, %p85
      %p88 = scmp.ne.s32.totalorder %s71, %s87
      %p89 = scmp.eq.s32.totalorder %s14, 0
      %p90 = por %p88, %p89
      %s91 = ssub.s32 %s15, %s34
      %s92 = ssub.s32 %s16, %s30
      %s93 = sor.u32 %s91, %s92
      %p94 = scmp.eq.s32.totalorder %s93, 0
      %s96 = sadd.s32 %s95, 1
      %s97 = scalar_select %p94, %s95, %s96
      %p100 = pneg %p94
      %p101 = scmp.eq.s32.totalorder %s8, 7
      %p102 = por %p100, %p101
      %p103 = scmp.ne.s32.totalorder %s95, %s98
      %p104 = scmp.eq.s32.totalorder %s8, 0
      %p105 = por %p103, %p104
      %p106 = scmp.ne.s32.totalorder %s95, %s98
      %p107 = scmp.eq.s32.totalorder %s13, 7
      %p108 = por %p106, %p107
      %p109 = scmp.ne.s32.totalorder %s98, %s99
      %p110 = scmp.eq.s32.totalorder %s13, 0
      %p111 = por %p109, %p110
      %p112 = scmp.ne.s32.totalorder %s98, %s99
      %p113 = scmp.eq.s32.totalorder %s14, 7
      %p114 = por %p112, %p113
      %p116 = scmp.ne.s32.totalorder %s99, %s115
      %p117 = scmp.eq.s32.totalorder %s14, 0
      %p118 = por %p116, %p117
      %p119 = scmp.le.s32.totalorder 1, %s8
      %p120 = scmp.lt.s32.totalorder %s8, 9
      %p121 = pnand %p119, %p120
      %p122 = pneg %p121
      // Predicated region
      $region9: #{discriminator_forward.8} parent=5 // pred_check
        _
      $region10: #{discriminator_forward.8} parent=5 // pred_check_branch
        %124 = sbr.rel (%p121) target = $region12
      $region11: #{discriminator_forward.8} parent=5 // pred_region
        %s125 = ssub.s32 %s8, 1
      $region12: #{discriminator_forward.8} parent=5 // pred_fallthru
        _
      %p126 = scmp.lt.s32.totalorder %s8, 8
      // Predicated region
      $region13: #{discriminator_forward.8} parent=5 // pred_check
        %p127 = pneg %p126
      $region14: #{discriminator_forward.8} parent=5 // pred_check_branch
        %129 = sbr.rel (%p127) target = $region16
      $region15: #{discriminator_forward.8} parent=5 // pred_region
        // Predicated region
        $region17: #{discriminator_forward.8} parent=15 // pred_check
          %p130 = pneg %p49
        $region18: #{discriminator_forward.8} parent=15 // pred_check_branch
          %132 = sbr.rel (%p130) target = $region20
        $region19: #{discriminator_forward.8} parent=15 // pred_region
          %s133 = sand.u32 %s39, 1
          %s134 = sand.u32 %s39, 1
          %s135 = smul.addr %s134, 128
          %s136 = scalar_lea.vmem [#allocation3], %s135
          %s137 = smul.u32 4, %s15
          %s138 = smul.u32 8, %s17
          %s139 = smul.addr %s137, 32
          %s140 = sadd.s32 %s138, %s139
          %s141 = smul.addr %s140, 4
          %s142 = scalar_lea.vmem %s0, %s141
          // Predicated region
          $region21: #{discriminator_forward.8} parent=19 // pred_check
            _
          $region22: #{discriminator_forward.8} parent=19 // pred_check_branch
            %144 = sbr.rel (0) target = $region24
          $region23: #{discriminator_forward.8} parent=19 // pred_region
            // Predicated region
            $region25: #{discriminator_forward.8} parent=23 // pred_check
              _
            $region26: #{discriminator_forward.8} parent=23 // pred_check_branch
              %146 = sbr.rel (0) target = $region28
            $region27: #{discriminator_forward.8} parent=23 // pred_region
              loop: start=0, step=1, limit=1
              $region29: #{discriminator_forward.8} parent=27 // loop_pre_header
                _
              $region30: #{discriminator_forward.8} parent=27 // loop_header
                %s148 = sphi 0, %s152
                %p149 = scmp.ge.s32.totalorder %s148, 1
                %s153 = sphi %s142, %s142
                %s154 = sphi %s136, %s136
              $region31: #{discriminator_forward.8} parent=27 // loop_header_branch
                %151 = sbr.rel (%p149) target = $region35
              $region32: #{discriminator_forward.8} parent=27 // loop_body
                %v155 = vld [vmem:[%s153] sm:$0xff]
                %156 = vst [vmem:[%s154] sm:$0xff] %v155
                %v157 = vld [vmem:[%s153 + $0x8] sm:$0xff]
                %158 = vst [vmem:[%s154 + $0x8] sm:$0xff] %v157
                %v159 = vld [vmem:[%s153 + $0x10] sm:$0xff]
                %160 = vst [vmem:[%s154 + $0x10] sm:$0xff] %v159
                %v161 = vld [vmem:[%s153 + $0x18] sm:$0xff]
                %162 = vst [vmem:[%s154 + $0x18] sm:$0xff] %v161
                %v163 = vld [vmem:[%s153 + $0x80] sm:$0xff]
                %164 = vst [vmem:[%s154 + $0x20] sm:$0xff] %v163
                %v165 = vld [vmem:[%s153 + $0x88] sm:$0xff]
                %166 = vst [vmem:[%s154 + $0x28] sm:$0xff] %v165
                %v167 = vld [vmem:[%s153 + $0x90] sm:$0xff]
                %168 = vst [vmem:[%s154 + $0x30] sm:$0xff] %v167
                %v169 = vld [vmem:[%s153 + $0x98] sm:$0xff]
                %170 = vst [vmem:[%s154 + $0x38] sm:$0xff] %v169
                %v171 = vld [vmem:[%s153 + $0x100] sm:$0xff]
                %172 = vst [vmem:[%s154 + $0x40] sm:$0xff] %v171
                %v173 = vld [vmem:[%s153 + $0x108] sm:$0xff]
                %174 = vst [vmem:[%s154 + $0x48] sm:$0xff] %v173
                %v175 = vld [vmem:[%s153 + $0x110] sm:$0xff]
                %176 = vst [vmem:[%s154 + $0x50] sm:$0xff] %v175
                %v177 = vld [vmem:[%s153 + $0x118] sm:$0xff]
                %178 = vst [vmem:[%s154 + $0x58] sm:$0xff] %v177
                %v179 = vld [vmem:[%s153 + $0x180] sm:$0xff]
                %180 = vst [vmem:[%s154 + $0x60] sm:$0xff] %v179
                %v181 = vld [vmem:[%s153 + $0x188] sm:$0xff]
                %182 = vst [vmem:[%s154 + $0x68] sm:$0xff] %v181
                %v183 = vld [vmem:[%s153 + $0x190] sm:$0xff]
                %184 = vst [vmem:[%s154 + $0x70] sm:$0xff] %v183
                %v185 = vld [vmem:[%s153 + $0x198] sm:$0xff]
                %186 = vst [vmem:[%s154 + $0x78] sm:$0xff] %v185
              $region33: #{discriminator_forward.8} parent=27 // loop_footer
                %s152 = sadd.s32 1, %s148
              $region34: #{discriminator_forward.8} parent=27 // loop_footer_branch
                %147 = sbr.rel target = $region30
              $region35: #{discriminator_forward.8} parent=27 // loop_exit
                _
            $region28: #{discriminator_forward.8} parent=23 // pred_fallthru
              _
            // Predicated region
            $region36: #{discriminator_forward.8} parent=23 // pred_check
              _
            $region37: #{discriminator_forward.8} parent=23 // pred_check_branch
              %188 = sbr.rel target = $region39
            $region38: #{discriminator_forward.8} parent=23 // pred_region
              _
            $region39: #{discriminator_forward.8} parent=23 // pred_fallthru
              _
          $region24: #{discriminator_forward.8} parent=19 // pred_fallthru
            _
          %189 = vnop
        $region20: #{discriminator_forward.8} parent=15 // pred_fallthru
          _
        // Predicated region
        $region40: #{discriminator_forward.8} parent=15 // pred_check
          %p190 = pneg %p77
        $region41: #{discriminator_forward.8} parent=15 // pred_check_branch
          %192 = sbr.rel (%p190) target = $region43
        $region42: #{discriminator_forward.8} parent=15 // pred_region
          %s193 = sand.u32 %s67, 1
          %s194 = sand.u32 %s67, 1
          %s195 = smul.addr %s194, 1024
          %s196 = scalar_lea.vmem [#allocation4], %s195
          %s197 = smul.u32 128, %s17
          %s198 = smul.u32 2, %s16
          %s199 = smul.addr %s197, 4
          %s200 = sadd.s32 %s198, %s199
          %s201 = smul.addr %s200, 4
          %s202 = scalar_lea.vmem %s1, %s201
          // Predicated region
          $region44: #{discriminator_forward.8} parent=42 // pred_check
            _
          $region45: #{discriminator_forward.8} parent=42 // pred_check_branch
            %204 = sbr.rel (0) target = $region47
          $region46: #{discriminator_forward.8} parent=42 // pred_region
            // Predicated region
            $region48: #{discriminator_forward.8} parent=46 // pred_check
              _
            $region49: #{discriminator_forward.8} parent=46 // pred_check_branch
              %206 = sbr.rel (0) target = $region51
            $region50: #{discriminator_forward.8} parent=46 // pred_region
              // Predicated region
              $region63: #{discriminator_forward.8} parent=50 // pred_check
                _
              $region64: #{discriminator_forward.8} parent=50 // pred_check_branch
                %475 = sbr.rel (0) target = $region66
              $region65: #{discriminator_forward.8} parent=50 // pred_region
                loop: start=0, step=1, limit=1
                $region67: #{discriminator_forward.8} parent=65 // loop_pre_header
                  _
                $region68: #{discriminator_forward.8} parent=65 // loop_header
                  %s477 = sphi 0, %s481
                  %p478 = scmp.ge.s32.totalorder %s477, 1
                  %s482 = sphi %s202, %s202
                  %s483 = sphi %s196, %s196
                $region69: #{discriminator_forward.8} parent=65 // loop_header_branch
                  %480 = sbr.rel (%p478) target = $region73
                $region70: #{discriminator_forward.8} parent=65 // loop_body
                  %v484 = vld [vmem:[%s482] sm:$0xff]
                  %485 = vst [vmem:[%s483] sm:$0xff] %v484
                  %v486 = vld [vmem:[%s482 + $0x10] sm:$0xff]
                  %487 = vst [vmem:[%s483 + $0x8] sm:$0xff] %v486
                  %v488 = vld [vmem:[%s482 + $0x20] sm:$0xff]
                  %489 = vst [vmem:[%s483 + $0x10] sm:$0xff] %v488
                  %v490 = vld [vmem:[%s482 + $0x30] sm:$0xff]
                  %491 = vst [vmem:[%s483 + $0x18] sm:$0xff] %v490
                  %v492 = vld [vmem:[%s482 + $0x40] sm:$0xff]
                  %493 = vst [vmem:[%s483 + $0x20] sm:$0xff] %v492
                  %v494 = vld [vmem:[%s482 + $0x50] sm:$0xff]
                  %495 = vst [vmem:[%s483 + $0x28] sm:$0xff] %v494
                  %v496 = vld [vmem:[%s482 + $0x60] sm:$0xff]
                  %497 = vst [vmem:[%s483 + $0x30] sm:$0xff] %v496
                  %v498 = vld [vmem:[%s482 + $0x70] sm:$0xff]
                  %499 = vst [vmem:[%s483 + $0x38] sm:$0xff] %v498
                  %v500 = vld [vmem:[%s482 + $0x80] sm:$0xff]
                  %501 = vst [vmem:[%s483 + $0x40] sm:$0xff] %v500
                  %v502 = vld [vmem:[%s482 + $0x90] sm:$0xff]
                  %503 = vst [vmem:[%s483 + $0x48] sm:$0xff] %v502
                  %v504 = vld [vmem:[%s482 + $0xa0] sm:$0xff]
                  %505 = vst [vmem:[%s483 + $0x50] sm:$0xff] %v504
                  %v506 = vld [vmem:[%s482 + $0xb0] sm:$0xff]
                  %507 = vst [vmem:[%s483 + $0x58] sm:$0xff] %v506
                  %v508 = vld [vmem:[%s482 + $0xc0] sm:$0xff]
                  %509 = vst [vmem:[%s483 + $0x60] sm:$0xff] %v508
                  %v510 = vld [vmem:[%s482 + $0xd0] sm:$0xff]
                  %511 = vst [vmem:[%s483 + $0x68] sm:$0xff] %v510
                  %v512 = vld [vmem:[%s482 + $0xe0] sm:$0xff]
                  %513 = vst [vmem:[%s483 + $0x70] sm:$0xff] %v512
                  %v514 = vld [vmem:[%s482 + $0xf0] sm:$0xff]
                  %515 = vst [vmem:[%s483 + $0x78] sm:$0xff] %v514
                  %v516 = vld [vmem:[%s482 + $0x100] sm:$0xff]
                  %517 = vst [vmem:[%s483 + $0x80] sm:$0xff] %v516
                  %v518 = vld [vmem:[%s482 + $0x110] sm:$0xff]
                  %519 = vst [vmem:[%s483 + $0x88] sm:$0xff] %v518
                  %v520 = vld [vmem:[%s482 + $0x120] sm:$0xff]
                  %521 = vst [vmem:[%s483 + $0x90] sm:$0xff] %v520
                  %v522 = vld [vmem:[%s482 + $0x130] sm:$0xff]
                  %523 = vst [vmem:[%s483 + $0x98] sm:$0xff] %v522
                  %v524 = vld [vmem:[%s482 + $0x140] sm:$0xff]
                  %525 = vst [vmem:[%s483 + $0xa0] sm:$0xff] %v524
                  %v526 = vld [vmem:[%s482 + $0x150] sm:$0xff]
                  %527 = vst [vmem:[%s483 + $0xa8] sm:$0xff] %v526
                  %v528 = vld [vmem:[%s482 + $0x160] sm:$0xff]
                  %529 = vst [vmem:[%s483 + $0xb0] sm:$0xff] %v528
                  %v530 = vld [vmem:[%s482 + $0x170] sm:$0xff]
                  %531 = vst [vmem:[%s483 + $0xb8] sm:$0xff] %v530
                  %v532 = vld [vmem:[%s482 + $0x180] sm:$0xff]
                  %533 = vst [vmem:[%s483 + $0xc0] sm:$0xff] %v532
                  %v534 = vld [vmem:[%s482 + $0x190] sm:$0xff]
                  %535 = vst [vmem:[%s483 + $0xc8] sm:$0xff] %v534
                  %v536 = vld [vmem:[%s482 + $0x1a0] sm:$0xff]
                  %537 = vst [vmem:[%s483 + $0xd0] sm:$0xff] %v536
                  %v538 = vld [vmem:[%s482 + $0x1b0] sm:$0xff]
                  %539 = vst [vmem:[%s483 + $0xd8] sm:$0xff] %v538
                  %v540 = vld [vmem:[%s482 + $0x1c0] sm:$0xff]
                  %541 = vst [vmem:[%s483 + $0xe0] sm:$0xff] %v540
                  %v542 = vld [vmem:[%s482 + $0x1d0] sm:$0xff]
                  %543 = vst [vmem:[%s483 + $0xe8] sm:$0xff] %v542
                  %v544 = vld [vmem:[%s482 + $0x1e0] sm:$0xff]
                  %545 = vst [vmem:[%s483 + $0xf0] sm:$0xff] %v544
                  %v546 = vld [vmem:[%s482 + $0x1f0] sm:$0xff]
                  %547 = vst [vmem:[%s483 + $0xf8] sm:$0xff] %v546
                  %v548 = vld [vmem:[%s482 + $0x200] sm:$0xff]
                  %549 = vst [vmem:[%s483 + $0x100] sm:$0xff] %v548
                  %v550 = vld [vmem:[%s482 + $0x210] sm:$0xff]
                  %551 = vst [vmem:[%s483 + $0x108] sm:$0xff] %v550
                  %v552 = vld [vmem:[%s482 + $0x220] sm:$0xff]
                  %553 = vst [vmem:[%s483 + $0x110] sm:$0xff] %v552
                  %v554 = vld [vmem:[%s482 + $0x230] sm:$0xff]
                  %555 = vst [vmem:[%s483 + $0x118] sm:$0xff] %v554
                  %v556 = vld [vmem:[%s482 + $0x240] sm:$0xff]
                  %557 = vst [vmem:[%s483 + $0x120] sm:$0xff] %v556
                  %v558 = vld [vmem:[%s482 + $0x250] sm:$0xff]
                  %559 = vst [vmem:[%s483 + $0x128] sm:$0xff] %v558
                  %v560 = vld [vmem:[%s482 + $0x260] sm:$0xff]
                  %561 = vst [vmem:[%s483 + $0x130] sm:$0xff] %v560
                  %v562 = vld [vmem:[%s482 + $0x270] sm:$0xff]
                  %563 = vst [vmem:[%s483 + $0x138] sm:$0xff] %v562
                  %v564 = vld [vmem:[%s482 + $0x280] sm:$0xff]
                  %565 = vst [vmem:[%s483 + $0x140] sm:$0xff] %v564
                  %v566 = vld [vmem:[%s482 + $0x290] sm:$0xff]
                  %567 = vst [vmem:[%s483 + $0x148] sm:$0xff] %v566
                  %v568 = vld [vmem:[%s482 + $0x2a0] sm:$0xff]
                  %569 = vst [vmem:[%s483 + $0x150] sm:$0xff] %v568
                  %v570 = vld [vmem:[%s482 + $0x2b0] sm:$0xff]
                  %571 = vst [vmem:[%s483 + $0x158] sm:$0xff] %v570
                  %v572 = vld [vmem:[%s482 + $0x2c0] sm:$0xff]
                  %573 = vst [vmem:[%s483 + $0x160] sm:$0xff] %v572
                  %v574 = vld [vmem:[%s482 + $0x2d0] sm:$0xff]
                  %575 = vst [vmem:[%s483 + $0x168] sm:$0xff] %v574
                  %v576 = vld [vmem:[%s482 + $0x2e0] sm:$0xff]
                  %577 = vst [vmem:[%s483 + $0x170] sm:$0xff] %v576
                  %v578 = vld [vmem:[%s482 + $0x2f0] sm:$0xff]
                  %579 = vst [vmem:[%s483 + $0x178] sm:$0xff] %v578
                  %v580 = vld [vmem:[%s482 + $0x300] sm:$0xff]
                  %581 = vst [vmem:[%s483 + $0x180] sm:$0xff] %v580
                  %v582 = vld [vmem:[%s482 + $0x310] sm:$0xff]
                  %583 = vst [vmem:[%s483 + $0x188] sm:$0xff] %v582
                  %v584 = vld [vmem:[%s482 + $0x320] sm:$0xff]
                  %585 = vst [vmem:[%s483 + $0x190] sm:$0xff] %v584
                  %v586 = vld [vmem:[%s482 + $0x330] sm:$0xff]
                  %587 = vst [vmem:[%s483 + $0x198] sm:$0xff] %v586
                  %v588 = vld [vmem:[%s482 + $0x340] sm:$0xff]
                  %589 = vst [vmem:[%s483 + $0x1a0] sm:$0xff] %v588
                  %v590 = vld [vmem:[%s482 + $0x350] sm:$0xff]
                  %591 = vst [vmem:[%s483 + $0x1a8] sm:$0xff] %v590
                  %v592 = vld [vmem:[%s482 + $0x360] sm:$0xff]
                  %593 = vst [vmem:[%s483 + $0x1b0] sm:$0xff] %v592
                  %v594 = vld [vmem:[%s482 + $0x370] sm:$0xff]
                  %595 = vst [vmem:[%s483 + $0x1b8] sm:$0xff] %v594
                  %v596 = vld [vmem:[%s482 + $0x380] sm:$0xff]
                  %597 = vst [vmem:[%s483 + $0x1c0] sm:$0xff] %v596
                  %v598 = vld [vmem:[%s482 + $0x390] sm:$0xff]
                  %599 = vst [vmem:[%s483 + $0x1c8] sm:$0xff] %v598
                  %v600 = vld [vmem:[%s482 + $0x3a0] sm:$0xff]
                  %601 = vst [vmem:[%s483 + $0x1d0] sm:$0xff] %v600
                  %v602 = vld [vmem:[%s482 + $0x3b0] sm:$0xff]
                  %603 = vst [vmem:[%s483 + $0x1d8] sm:$0xff] %v602
                  %v604 = vld [vmem:[%s482 + $0x3c0] sm:$0xff]
                  %605 = vst [vmem:[%s483 + $0x1e0] sm:$0xff] %v604
                  %v606 = vld [vmem:[%s482 + $0x3d0] sm:$0xff]
                  %607 = vst [vmem:[%s483 + $0x1e8] sm:$0xff] %v606
                  %v608 = vld [vmem:[%s482 + $0x3e0] sm:$0xff]
                  %609 = vst [vmem:[%s483 + $0x1f0] sm:$0xff] %v608
                  %v610 = vld [vmem:[%s482 + $0x3f0] sm:$0xff]
                  %611 = vst [vmem:[%s483 + $0x1f8] sm:$0xff] %v610
                  %v612 = vld [vmem:[%s482 + $0x400] sm:$0xff]
                  %613 = vst [vmem:[%s483 + $0x200] sm:$0xff] %v612
                  %v614 = vld [vmem:[%s482 + $0x410] sm:$0xff]
                  %615 = vst [vmem:[%s483 + $0x208] sm:$0xff] %v614
                  %v616 = vld [vmem:[%s482 + $0x420] sm:$0xff]
                  %617 = vst [vmem:[%s483 + $0x210] sm:$0xff] %v616
                  %v618 = vld [vmem:[%s482 + $0x430] sm:$0xff]
                  %619 = vst [vmem:[%s483 + $0x218] sm:$0xff] %v618
                  %v620 = vld [vmem:[%s482 + $0x440] sm:$0xff]
                  %621 = vst [vmem:[%s483 + $0x220] sm:$0xff] %v620
                  %v622 = vld [vmem:[%s482 + $0x450] sm:$0xff]
                  %623 = vst [vmem:[%s483 + $0x228] sm:$0xff] %v622
                  %v624 = vld [vmem:[%s482 + $0x460] sm:$0xff]
                  %625 = vst [vmem:[%s483 + $0x230] sm:$0xff] %v624
                  %v626 = vld [vmem:[%s482 + $0x470] sm:$0xff]
                  %627 = vst [vmem:[%s483 + $0x238] sm:$0xff] %v626
                  %v628 = vld [vmem:[%s482 + $0x480] sm:$0xff]
                  %629 = vst [vmem:[%s483 + $0x240] sm:$0xff] %v628
                  %v630 = vld [vmem:[%s482 + $0x490] sm:$0xff]
                  %631 = vst [vmem:[%s483 + $0x248] sm:$0xff] %v630
                  %v632 = vld [vmem:[%s482 + $0x4a0] sm:$0xff]
                  %633 = vst [vmem:[%s483 + $0x250] sm:$0xff] %v632
                  %v634 = vld [vmem:[%s482 + $0x4b0] sm:$0xff]
                  %635 = vst [vmem:[%s483 + $0x258] sm:$0xff] %v634
                  %v636 = vld [vmem:[%s482 + $0x4c0] sm:$0xff]
                  %637 = vst [vmem:[%s483 + $0x260] sm:$0xff] %v636
                  %v638 = vld [vmem:[%s482 + $0x4d0] sm:$0xff]
                  %639 = vst [vmem:[%s483 + $0x268] sm:$0xff] %v638
                  %v640 = vld [vmem:[%s482 + $0x4e0] sm:$0xff]
                  %641 = vst [vmem:[%s483 + $0x270] sm:$0xff] %v640
                  %v642 = vld [vmem:[%s482 + $0x4f0] sm:$0xff]
                  %643 = vst [vmem:[%s483 + $0x278] sm:$0xff] %v642
                  %v644 = vld [vmem:[%s482 + $0x500] sm:$0xff]
                  %645 = vst [vmem:[%s483 + $0x280] sm:$0xff] %v644
                  %v646 = vld [vmem:[%s482 + $0x510] sm:$0xff]
                  %647 = vst [vmem:[%s483 + $0x288] sm:$0xff] %v646
                  %v648 = vld [vmem:[%s482 + $0x520] sm:$0xff]
                  %649 = vst [vmem:[%s483 + $0x290] sm:$0xff] %v648
                  %v650 = vld [vmem:[%s482 + $0x530] sm:$0xff]
                  %651 = vst [vmem:[%s483 + $0x298] sm:$0xff] %v650
                  %v652 = vld [vmem:[%s482 + $0x540] sm:$0xff]
                  %653 = vst [vmem:[%s483 + $0x2a0] sm:$0xff] %v652
                  %v654 = vld [vmem:[%s482 + $0x550] sm:$0xff]
                  %655 = vst [vmem:[%s483 + $0x2a8] sm:$0xff] %v654
                  %v656 = vld [vmem:[%s482 + $0x560] sm:$0xff]
                  %657 = vst [vmem:[%s483 + $0x2b0] sm:$0xff] %v656
                  %v658 = vld [vmem:[%s482 + $0x570] sm:$0xff]
                  %659 = vst [vmem:[%s483 + $0x2b8] sm:$0xff] %v658
                  %v660 = vld [vmem:[%s482 + $0x580] sm:$0xff]
                  %661 = vst [vmem:[%s483 + $0x2c0] sm:$0xff] %v660
                  %v662 = vld [vmem:[%s482 + $0x590] sm:$0xff]
                  %663 = vst [vmem:[%s483 + $0x2c8] sm:$0xff] %v662
                  %v664 = vld [vmem:[%s482 + $0x5a0] sm:$0xff]
                  %665 = vst [vmem:[%s483 + $0x2d0] sm:$0xff] %v664
                  %v666 = vld [vmem:[%s482 + $0x5b0] sm:$0xff]
                  %667 = vst [vmem:[%s483 + $0x2d8] sm:$0xff] %v666
                  %v668 = vld [vmem:[%s482 + $0x5c0] sm:$0xff]
                  %669 = vst [vmem:[%s483 + $0x2e0] sm:$0xff] %v668
                  %v670 = vld [vmem:[%s482 + $0x5d0] sm:$0xff]
                  %671 = vst [vmem:[%s483 + $0x2e8] sm:$0xff] %v670
                  %v672 = vld [vmem:[%s482 + $0x5e0] sm:$0xff]
                  %673 = vst [vmem:[%s483 + $0x2f0] sm:$0xff] %v672
                  %v674 = vld [vmem:[%s482 + $0x5f0] sm:$0xff]
                  %675 = vst [vmem:[%s483 + $0x2f8] sm:$0xff] %v674
                  %v676 = vld [vmem:[%s482 + $0x600] sm:$0xff]
                  %677 = vst [vmem:[%s483 + $0x300] sm:$0xff] %v676
                  %v678 = vld [vmem:[%s482 + $0x610] sm:$0xff]
                  %679 = vst [vmem:[%s483 + $0x308] sm:$0xff] %v678
                  %v680 = vld [vmem:[%s482 + $0x620] sm:$0xff]
                  %681 = vst [vmem:[%s483 + $0x310] sm:$0xff] %v680
                  %v682 = vld [vmem:[%s482 + $0x630] sm:$0xff]
                  %683 = vst [vmem:[%s483 + $0x318] sm:$0xff] %v682
                  %v684 = vld [vmem:[%s482 + $0x640] sm:$0xff]
                  %685 = vst [vmem:[%s483 + $0x320] sm:$0xff] %v684
                  %v686 = vld [vmem:[%s482 + $0x650] sm:$0xff]
                  %687 = vst [vmem:[%s483 + $0x328] sm:$0xff] %v686
                  %v688 = vld [vmem:[%s482 + $0x660] sm:$0xff]
                  %689 = vst [vmem:[%s483 + $0x330] sm:$0xff] %v688
                  %v690 = vld [vmem:[%s482 + $0x670] sm:$0xff]
                  %691 = vst [vmem:[%s483 + $0x338] sm:$0xff] %v690
                  %v692 = vld [vmem:[%s482 + $0x680] sm:$0xff]
                  %693 = vst [vmem:[%s483 + $0x340] sm:$0xff] %v692
                  %v694 = vld [vmem:[%s482 + $0x690] sm:$0xff]
                  %695 = vst [vmem:[%s483 + $0x348] sm:$0xff] %v694
                  %v696 = vld [vmem:[%s482 + $0x6a0] sm:$0xff]
                  %697 = vst [vmem:[%s483 + $0x350] sm:$0xff] %v696
                  %v698 = vld [vmem:[%s482 + $0x6b0] sm:$0xff]
                  %699 = vst [vmem:[%s483 + $0x358] sm:$0xff] %v698
                  %v700 = vld [vmem:[%s482 + $0x6c0] sm:$0xff]
                  %701 = vst [vmem:[%s483 + $0x360] sm:$0xff] %v700
                  %v702 = vld [vmem:[%s482 + $0x6d0] sm:$0xff]
                  %703 = vst [vmem:[%s483 + $0x368] sm:$0xff] %v702
                  %v704 = vld [vmem:[%s482 + $0x6e0] sm:$0xff]
                  %705 = vst [vmem:[%s483 + $0x370] sm:$0xff] %v704
                  %v706 = vld [vmem:[%s482 + $0x6f0] sm:$0xff]
                  %707 = vst [vmem:[%s483 + $0x378] sm:$0xff] %v706
                  %v708 = vld [vmem:[%s482 + $0x700] sm:$0xff]
                  %709 = vst [vmem:[%s483 + $0x380] sm:$0xff] %v708
                  %v710 = vld [vmem:[%s482 + $0x710] sm:$0xff]
                  %711 = vst [vmem:[%s483 + $0x388] sm:$0xff] %v710
                  %v712 = vld [vmem:[%s482 + $0x720] sm:$0xff]
                  %713 = vst [vmem:[%s483 + $0x390] sm:$0xff] %v712
                  %v714 = vld [vmem:[%s482 + $0x730] sm:$0xff]
                  %715 = vst [vmem:[%s483 + $0x398] sm:$0xff] %v714
                  %v716 = vld [vmem:[%s482 + $0x740] sm:$0xff]
                  %717 = vst [vmem:[%s483 + $0x3a0] sm:$0xff] %v716
                  %v718 = vld [vmem:[%s482 + $0x750] sm:$0xff]
                  %719 = vst [vmem:[%s483 + $0x3a8] sm:$0xff] %v718
                  %v720 = vld [vmem:[%s482 + $0x760] sm:$0xff]
                  %721 = vst [vmem:[%s483 + $0x3b0] sm:$0xff] %v720
                  %v722 = vld [vmem:[%s482 + $0x770] sm:$0xff]
                  %723 = vst [vmem:[%s483 + $0x3b8] sm:$0xff] %v722
                  %v724 = vld [vmem:[%s482 + $0x780] sm:$0xff]
                  %725 = vst [vmem:[%s483 + $0x3c0] sm:$0xff] %v724
                  %v726 = vld [vmem:[%s482 + $0x790] sm:$0xff]
                  %727 = vst [vmem:[%s483 + $0x3c8] sm:$0xff] %v726
                  %v728 = vld [vmem:[%s482 + $0x7a0] sm:$0xff]
                  %729 = vst [vmem:[%s483 + $0x3d0] sm:$0xff] %v728
                  %v730 = vld [vmem:[%s482 + $0x7b0] sm:$0xff]
                  %731 = vst [vmem:[%s483 + $0x3d8] sm:$0xff] %v730
                  %v732 = vld [vmem:[%s482 + $0x7c0] sm:$0xff]
                  %733 = vst [vmem:[%s483 + $0x3e0] sm:$0xff] %v732
                  %v734 = vld [vmem:[%s482 + $0x7d0] sm:$0xff]
                  %735 = vst [vmem:[%s483 + $0x3e8] sm:$0xff] %v734
                  %v736 = vld [vmem:[%s482 + $0x7e0] sm:$0xff]
                  %737 = vst [vmem:[%s483 + $0x3f0] sm:$0xff] %v736
                  %v738 = vld [vmem:[%s482 + $0x7f0] sm:$0xff]
                  %739 = vst [vmem:[%s483 + $0x3f8] sm:$0xff] %v738
                $region71: #{discriminator_forward.8} parent=65 // loop_footer
                  %s481 = sadd.s32 1, %s477
                $region72: #{discriminator_forward.8} parent=65 // loop_footer_branch
                  %476 = sbr.rel target = $region68
                $region73: #{discriminator_forward.8} parent=65 // loop_exit
                  _
              $region66: #{discriminator_forward.8} parent=50 // pred_fallthru
                _
              // Predicated region
              $region74: #{discriminator_forward.8} parent=50 // pred_check
                _
              $region75: #{discriminator_forward.8} parent=50 // pred_check_branch
                %741 = sbr.rel target = $region77
              $region76: #{discriminator_forward.8} parent=50 // pred_region
                _
              $region77: #{discriminator_forward.8} parent=50 // pred_fallthru
                _
            $region51: #{discriminator_forward.8} parent=46 // pred_fallthru
              _
            // Predicated region
            $region52: #{discriminator_forward.8} parent=46 // pred_check
              _
            $region53: #{discriminator_forward.8} parent=46 // pred_check_branch
              %208 = sbr.rel target = $region55
            $region54: #{discriminator_forward.8} parent=46 // pred_region
              loop: start=0, step=1, limit=1
              $region56: #{discriminator_forward.8} parent=54 // loop_pre_header
                _
              $region57: #{discriminator_forward.8} parent=54 // loop_header
                %s211 = sphi 0, %s215
                %p212 = scmp.ge.s32.totalorder %s211, 1
                %s216 = sphi %s202, %s202
                %s217 = sphi %s196, %s196
              $region58: #{discriminator_forward.8} parent=54 // loop_header_branch
                %214 = sbr.rel (%p212) target = $region62
              $region59: #{discriminator_forward.8} parent=54 // loop_body
                %v218 = vld [vmem:[%s216] sm:$0xff]
                %219 = vst [vmem:[%s217] sm:$0xff] %v218
                %v220 = vld [vmem:[%s216 + $0x10] sm:$0xff]
                %221 = vst [vmem:[%s217 + $0x8] sm:$0xff] %v220
                %v222 = vld [vmem:[%s216 + $0x20] sm:$0xff]
                %223 = vst [vmem:[%s217 + $0x10] sm:$0xff] %v222
                %v224 = vld [vmem:[%s216 + $0x30] sm:$0xff]
                %225 = vst [vmem:[%s217 + $0x18] sm:$0xff] %v224
                %v226 = vld [vmem:[%s216 + $0x40] sm:$0xff]
                %227 = vst [vmem:[%s217 + $0x20] sm:$0xff] %v226
                %v228 = vld [vmem:[%s216 + $0x50] sm:$0xff]
                %229 = vst [vmem:[%s217 + $0x28] sm:$0xff] %v228
                %v230 = vld [vmem:[%s216 + $0x60] sm:$0xff]
                %231 = vst [vmem:[%s217 + $0x30] sm:$0xff] %v230
                %v232 = vld [vmem:[%s216 + $0x70] sm:$0xff]
                %233 = vst [vmem:[%s217 + $0x38] sm:$0xff] %v232
                %v234 = vld [vmem:[%s216 + $0x80] sm:$0xff]
                %235 = vst [vmem:[%s217 + $0x40] sm:$0xff] %v234
                %v236 = vld [vmem:[%s216 + $0x90] sm:$0xff]
                %237 = vst [vmem:[%s217 + $0x48] sm:$0xff] %v236
                %v238 = vld [vmem:[%s216 + $0xa0] sm:$0xff]
                %239 = vst [vmem:[%s217 + $0x50] sm:$0xff] %v238
                %v240 = vld [vmem:[%s216 + $0xb0] sm:$0xff]
                %241 = vst [vmem:[%s217 + $0x58] sm:$0xff] %v240
                %v242 = vld [vmem:[%s216 + $0xc0] sm:$0xff]
                %243 = vst [vmem:[%s217 + $0x60] sm:$0xff] %v242
                %v244 = vld [vmem:[%s216 + $0xd0] sm:$0xff]
                %245 = vst [vmem:[%s217 + $0x68] sm:$0xff] %v244
                %v246 = vld [vmem:[%s216 + $0xe0] sm:$0xff]
                %247 = vst [vmem:[%s217 + $0x70] sm:$0xff] %v246
                %v248 = vld [vmem:[%s216 + $0xf0] sm:$0xff]
                %249 = vst [vmem:[%s217 + $0x78] sm:$0xff] %v248
                %v250 = vld [vmem:[%s216 + $0x100] sm:$0xff]
                %251 = vst [vmem:[%s217 + $0x80] sm:$0xff] %v250
                %v252 = vld [vmem:[%s216 + $0x110] sm:$0xff]
                %253 = vst [vmem:[%s217 + $0x88] sm:$0xff] %v252
                %v254 = vld [vmem:[%s216 + $0x120] sm:$0xff]
                %255 = vst [vmem:[%s217 + $0x90] sm:$0xff] %v254
                %v256 = vld [vmem:[%s216 + $0x130] sm:$0xff]
                %257 = vst [vmem:[%s217 + $0x98] sm:$0xff] %v256
                %v258 = vld [vmem:[%s216 + $0x140] sm:$0xff]
                %259 = vst [vmem:[%s217 + $0xa0] sm:$0xff] %v258
                %v260 = vld [vmem:[%s216 + $0x150] sm:$0xff]
                %261 = vst [vmem:[%s217 + $0xa8] sm:$0xff] %v260
                %v262 = vld [vmem:[%s216 + $0x160] sm:$0xff]
                %263 = vst [vmem:[%s217 + $0xb0] sm:$0xff] %v262
                %v264 = vld [vmem:[%s216 + $0x170] sm:$0xff]
                %265 = vst [vmem:[%s217 + $0xb8] sm:$0xff] %v264
                %v266 = vld [vmem:[%s216 + $0x180] sm:$0xff]
                %267 = vst [vmem:[%s217 + $0xc0] sm:$0xff] %v266
                %v268 = vld [vmem:[%s216 + $0x190] sm:$0xff]
                %269 = vst [vmem:[%s217 + $0xc8] sm:$0xff] %v268
                %v270 = vld [vmem:[%s216 + $0x1a0] sm:$0xff]
                %271 = vst [vmem:[%s217 + $0xd0] sm:$0xff] %v270
                %v272 = vld [vmem:[%s216 + $0x1b0] sm:$0xff]
                %273 = vst [vmem:[%s217 + $0xd8] sm:$0xff] %v272
                %v274 = vld [vmem:[%s216 + $0x1c0] sm:$0xff]
                %275 = vst [vmem:[%s217 + $0xe0] sm:$0xff] %v274
                %v276 = vld [vmem:[%s216 + $0x1d0] sm:$0xff]
                %277 = vst [vmem:[%s217 + $0xe8] sm:$0xff] %v276
                %v278 = vld [vmem:[%s216 + $0x1e0] sm:$0xff]
                %279 = vst [vmem:[%s217 + $0xf0] sm:$0xff] %v278
                %v280 = vld [vmem:[%s216 + $0x1f0] sm:$0xff]
                %281 = vst [vmem:[%s217 + $0xf8] sm:$0xff] %v280
                %v282 = vld [vmem:[%s216 + $0x200] sm:$0xff]
                %283 = vst [vmem:[%s217 + $0x100] sm:$0xff] %v282
                %v284 = vld [vmem:[%s216 + $0x210] sm:$0xff]
                %285 = vst [vmem:[%s217 + $0x108] sm:$0xff] %v284
                %v286 = vld [vmem:[%s216 + $0x220] sm:$0xff]
                %287 = vst [vmem:[%s217 + $0x110] sm:$0xff] %v286
                %v288 = vld [vmem:[%s216 + $0x230] sm:$0xff]
                %289 = vst [vmem:[%s217 + $0x118] sm:$0xff] %v288
                %v290 = vld [vmem:[%s216 + $0x240] sm:$0xff]
                %291 = vst [vmem:[%s217 + $0x120] sm:$0xff] %v290
                %v292 = vld [vmem:[%s216 + $0x250] sm:$0xff]
                %293 = vst [vmem:[%s217 + $0x128] sm:$0xff] %v292
                %v294 = vld [vmem:[%s216 + $0x260] sm:$0xff]
                %295 = vst [vmem:[%s217 + $0x130] sm:$0xff] %v294
                %v296 = vld [vmem:[%s216 + $0x270] sm:$0xff]
                %297 = vst [vmem:[%s217 + $0x138] sm:$0xff] %v296
                %v298 = vld [vmem:[%s216 + $0x280] sm:$0xff]
                %299 = vst [vmem:[%s217 + $0x140] sm:$0xff] %v298
                %v300 = vld [vmem:[%s216 + $0x290] sm:$0xff]
                %301 = vst [vmem:[%s217 + $0x148] sm:$0xff] %v300
                %v302 = vld [vmem:[%s216 + $0x2a0] sm:$0xff]
                %303 = vst [vmem:[%s217 + $0x150] sm:$0xff] %v302
                %v304 = vld [vmem:[%s216 + $0x2b0] sm:$0xff]
                %305 = vst [vmem:[%s217 + $0x158] sm:$0xff] %v304
                %v306 = vld [vmem:[%s216 + $0x2c0] sm:$0xff]
                %307 = vst [vmem:[%s217 + $0x160] sm:$0xff] %v306
                %v308 = vld [vmem:[%s216 + $0x2d0] sm:$0xff]
                %309 = vst [vmem:[%s217 + $0x168] sm:$0xff] %v308
                %v310 = vld [vmem:[%s216 + $0x2e0] sm:$0xff]
                %311 = vst [vmem:[%s217 + $0x170] sm:$0xff] %v310
                %v312 = vld [vmem:[%s216 + $0x2f0] sm:$0xff]
                %313 = vst [vmem:[%s217 + $0x178] sm:$0xff] %v312
                %v314 = vld [vmem:[%s216 + $0x300] sm:$0xff]
                %315 = vst [vmem:[%s217 + $0x180] sm:$0xff] %v314
                %v316 = vld [vmem:[%s216 + $0x310] sm:$0xff]
                %317 = vst [vmem:[%s217 + $0x188] sm:$0xff] %v316
                %v318 = vld [vmem:[%s216 + $0x320] sm:$0xff]
                %319 = vst [vmem:[%s217 + $0x190] sm:$0xff] %v318
                %v320 = vld [vmem:[%s216 + $0x330] sm:$0xff]
                %321 = vst [vmem:[%s217 + $0x198] sm:$0xff] %v320
                %v322 = vld [vmem:[%s216 + $0x340] sm:$0xff]
                %323 = vst [vmem:[%s217 + $0x1a0] sm:$0xff] %v322
                %v324 = vld [vmem:[%s216 + $0x350] sm:$0xff]
                %325 = vst [vmem:[%s217 + $0x1a8] sm:$0xff] %v324
                %v326 = vld [vmem:[%s216 + $0x360] sm:$0xff]
                %327 = vst [vmem:[%s217 + $0x1b0] sm:$0xff] %v326
                %v328 = vld [vmem:[%s216 + $0x370] sm:$0xff]
                %329 = vst [vmem:[%s217 + $0x1b8] sm:$0xff] %v328
                %v330 = vld [vmem:[%s216 + $0x380] sm:$0xff]
                %331 = vst [vmem:[%s217 + $0x1c0] sm:$0xff] %v330
                %v332 = vld [vmem:[%s216 + $0x390] sm:$0xff]
                %333 = vst [vmem:[%s217 + $0x1c8] sm:$0xff] %v332
                %v334 = vld [vmem:[%s216 + $0x3a0] sm:$0xff]
                %335 = vst [vmem:[%s217 + $0x1d0] sm:$0xff] %v334
                %v336 = vld [vmem:[%s216 + $0x3b0] sm:$0xff]
                %337 = vst [vmem:[%s217 + $0x1d8] sm:$0xff] %v336
                %v338 = vld [vmem:[%s216 + $0x3c0] sm:$0xff]
                %339 = vst [vmem:[%s217 + $0x1e0] sm:$0xff] %v338
                %v340 = vld [vmem:[%s216 + $0x3d0] sm:$0xff]
                %341 = vst [vmem:[%s217 + $0x1e8] sm:$0xff] %v340
                %v342 = vld [vmem:[%s216 + $0x3e0] sm:$0xff]
                %343 = vst [vmem:[%s217 + $0x1f0] sm:$0xff] %v342
                %v344 = vld [vmem:[%s216 + $0x3f0] sm:$0xff]
                %345 = vst [vmem:[%s217 + $0x1f8] sm:$0xff] %v344
                %v346 = vld [vmem:[%s216 + $0x400] sm:$0xff]
                %347 = vst [vmem:[%s217 + $0x200] sm:$0xff] %v346
                %v348 = vld [vmem:[%s216 + $0x410] sm:$0xff]
                %349 = vst [vmem:[%s217 + $0x208] sm:$0xff] %v348
                %v350 = vld [vmem:[%s216 + $0x420] sm:$0xff]
                %351 = vst [vmem:[%s217 + $0x210] sm:$0xff] %v350
                %v352 = vld [vmem:[%s216 + $0x430] sm:$0xff]
                %353 = vst [vmem:[%s217 + $0x218] sm:$0xff] %v352
                %v354 = vld [vmem:[%s216 + $0x440] sm:$0xff]
                %355 = vst [vmem:[%s217 + $0x220] sm:$0xff] %v354
                %v356 = vld [vmem:[%s216 + $0x450] sm:$0xff]
                %357 = vst [vmem:[%s217 + $0x228] sm:$0xff] %v356
                %v358 = vld [vmem:[%s216 + $0x460] sm:$0xff]
                %359 = vst [vmem:[%s217 + $0x230] sm:$0xff] %v358
                %v360 = vld [vmem:[%s216 + $0x470] sm:$0xff]
                %361 = vst [vmem:[%s217 + $0x238] sm:$0xff] %v360
                %v362 = vld [vmem:[%s216 + $0x480] sm:$0xff]
                %363 = vst [vmem:[%s217 + $0x240] sm:$0xff] %v362
                %v364 = vld [vmem:[%s216 + $0x490] sm:$0xff]
                %365 = vst [vmem:[%s217 + $0x248] sm:$0xff] %v364
                %v366 = vld [vmem:[%s216 + $0x4a0] sm:$0xff]
                %367 = vst [vmem:[%s217 + $0x250] sm:$0xff] %v366
                %v368 = vld [vmem:[%s216 + $0x4b0] sm:$0xff]
                %369 = vst [vmem:[%s217 + $0x258] sm:$0xff] %v368
                %v370 = vld [vmem:[%s216 + $0x4c0] sm:$0xff]
                %371 = vst [vmem:[%s217 + $0x260] sm:$0xff] %v370
                %v372 = vld [vmem:[%s216 + $0x4d0] sm:$0xff]
                %373 = vst [vmem:[%s217 + $0x268] sm:$0xff] %v372
                %v374 = vld [vmem:[%s216 + $0x4e0] sm:$0xff]
                %375 = vst [vmem:[%s217 + $0x270] sm:$0xff] %v374
                %v376 = vld [vmem:[%s216 + $0x4f0] sm:$0xff]
                %377 = vst [vmem:[%s217 + $0x278] sm:$0xff] %v376
                %v378 = vld [vmem:[%s216 + $0x500] sm:$0xff]
                %379 = vst [vmem:[%s217 + $0x280] sm:$0xff] %v378
                %v380 = vld [vmem:[%s216 + $0x510] sm:$0xff]
                %381 = vst [vmem:[%s217 + $0x288] sm:$0xff] %v380
                %v382 = vld [vmem:[%s216 + $0x520] sm:$0xff]
                %383 = vst [vmem:[%s217 + $0x290] sm:$0xff] %v382
                %v384 = vld [vmem:[%s216 + $0x530] sm:$0xff]
                %385 = vst [vmem:[%s217 + $0x298] sm:$0xff] %v384
                %v386 = vld [vmem:[%s216 + $0x540] sm:$0xff]
                %387 = vst [vmem:[%s217 + $0x2a0] sm:$0xff] %v386
                %v388 = vld [vmem:[%s216 + $0x550] sm:$0xff]
                %389 = vst [vmem:[%s217 + $0x2a8] sm:$0xff] %v388
                %v390 = vld [vmem:[%s216 + $0x560] sm:$0xff]
                %391 = vst [vmem:[%s217 + $0x2b0] sm:$0xff] %v390
                %v392 = vld [vmem:[%s216 + $0x570] sm:$0xff]
                %393 = vst [vmem:[%s217 + $0x2b8] sm:$0xff] %v392
                %v394 = vld [vmem:[%s216 + $0x580] sm:$0xff]
                %395 = vst [vmem:[%s217 + $0x2c0] sm:$0xff] %v394
                %v396 = vld [vmem:[%s216 + $0x590] sm:$0xff]
                %397 = vst [vmem:[%s217 + $0x2c8] sm:$0xff] %v396
                %v398 = vld [vmem:[%s216 + $0x5a0] sm:$0xff]
                %399 = vst [vmem:[%s217 + $0x2d0] sm:$0xff] %v398
                %v400 = vld [vmem:[%s216 + $0x5b0] sm:$0xff]
                %401 = vst [vmem:[%s217 + $0x2d8] sm:$0xff] %v400
                %v402 = vld [vmem:[%s216 + $0x5c0] sm:$0xff]
                %403 = vst [vmem:[%s217 + $0x2e0] sm:$0xff] %v402
                %v404 = vld [vmem:[%s216 + $0x5d0] sm:$0xff]
                %405 = vst [vmem:[%s217 + $0x2e8] sm:$0xff] %v404
                %v406 = vld [vmem:[%s216 + $0x5e0] sm:$0xff]
                %407 = vst [vmem:[%s217 + $0x2f0] sm:$0xff] %v406
                %v408 = vld [vmem:[%s216 + $0x5f0] sm:$0xff]
                %409 = vst [vmem:[%s217 + $0x2f8] sm:$0xff] %v408
                %v410 = vld [vmem:[%s216 + $0x600] sm:$0xff]
                %411 = vst [vmem:[%s217 + $0x300] sm:$0xff] %v410
                %v412 = vld [vmem:[%s216 + $0x610] sm:$0xff]
                %413 = vst [vmem:[%s217 + $0x308] sm:$0xff] %v412
                %v414 = vld [vmem:[%s216 + $0x620] sm:$0xff]
                %415 = vst [vmem:[%s217 + $0x310] sm:$0xff] %v414
                %v416 = vld [vmem:[%s216 + $0x630] sm:$0xff]
                %417 = vst [vmem:[%s217 + $0x318] sm:$0xff] %v416
                %v418 = vld [vmem:[%s216 + $0x640] sm:$0xff]
                %419 = vst [vmem:[%s217 + $0x320] sm:$0xff] %v418
                %v420 = vld [vmem:[%s216 + $0x650] sm:$0xff]
                %421 = vst [vmem:[%s217 + $0x328] sm:$0xff] %v420
                %v422 = vld [vmem:[%s216 + $0x660] sm:$0xff]
                %423 = vst [vmem:[%s217 + $0x330] sm:$0xff] %v422
                %v424 = vld [vmem:[%s216 + $0x670] sm:$0xff]
                %425 = vst [vmem:[%s217 + $0x338] sm:$0xff] %v424
                %v426 = vld [vmem:[%s216 + $0x680] sm:$0xff]
                %427 = vst [vmem:[%s217 + $0x340] sm:$0xff] %v426
                %v428 = vld [vmem:[%s216 + $0x690] sm:$0xff]
                %429 = vst [vmem:[%s217 + $0x348] sm:$0xff] %v428
                %v430 = vld [vmem:[%s216 + $0x6a0] sm:$0xff]
                %431 = vst [vmem:[%s217 + $0x350] sm:$0xff] %v430
                %v432 = vld [vmem:[%s216 + $0x6b0] sm:$0xff]
                %433 = vst [vmem:[%s217 + $0x358] sm:$0xff] %v432
                %v434 = vld [vmem:[%s216 + $0x6c0] sm:$0xff]
                %435 = vst [vmem:[%s217 + $0x360] sm:$0xff] %v434
                %v436 = vld [vmem:[%s216 + $0x6d0] sm:$0xff]
                %437 = vst [vmem:[%s217 + $0x368] sm:$0xff] %v436
                %v438 = vld [vmem:[%s216 + $0x6e0] sm:$0xff]
                %439 = vst [vmem:[%s217 + $0x370] sm:$0xff] %v438
                %v440 = vld [vmem:[%s216 + $0x6f0] sm:$0xff]
                %441 = vst [vmem:[%s217 + $0x378] sm:$0xff] %v440
                %v442 = vld [vmem:[%s216 + $0x700] sm:$0xff]
                %443 = vst [vmem:[%s217 + $0x380] sm:$0xff] %v442
                %v444 = vld [vmem:[%s216 + $0x710] sm:$0xff]
                %445 = vst [vmem:[%s217 + $0x388] sm:$0xff] %v444
                %v446 = vld [vmem:[%s216 + $0x720] sm:$0xff]
                %447 = vst [vmem:[%s217 + $0x390] sm:$0xff] %v446
                %v448 = vld [vmem:[%s216 + $0x730] sm:$0xff]
                %449 = vst [vmem:[%s217 + $0x398] sm:$0xff] %v448
                %v450 = vld [vmem:[%s216 + $0x740] sm:$0xff]
                %451 = vst [vmem:[%s217 + $0x3a0] sm:$0xff] %v450
                %v452 = vld [vmem:[%s216 + $0x750] sm:$0xff]
                %453 = vst [vmem:[%s217 + $0x3a8] sm:$0xff] %v452
                %v454 = vld [vmem:[%s216 + $0x760] sm:$0xff]
                %455 = vst [vmem:[%s217 + $0x3b0] sm:$0xff] %v454
                %v456 = vld [vmem:[%s216 + $0x770] sm:$0xff]
                %457 = vst [vmem:[%s217 + $0x3b8] sm:$0xff] %v456
                %v458 = vld [vmem:[%s216 + $0x780] sm:$0xff]
                %459 = vst [vmem:[%s217 + $0x3c0] sm:$0xff] %v458
                %v460 = vld [vmem:[%s216 + $0x790] sm:$0xff]
                %461 = vst [vmem:[%s217 + $0x3c8] sm:$0xff] %v460
                %v462 = vld [vmem:[%s216 + $0x7a0] sm:$0xff]
                %463 = vst [vmem:[%s217 + $0x3d0] sm:$0xff] %v462
                %v464 = vld [vmem:[%s216 + $0x7b0] sm:$0xff]
                %465 = vst [vmem:[%s217 + $0x3d8] sm:$0xff] %v464
                %v466 = vld [vmem:[%s216 + $0x7c0] sm:$0xff]
                %467 = vst [vmem:[%s217 + $0x3e0] sm:$0xff] %v466
                %v468 = vld [vmem:[%s216 + $0x7d0] sm:$0xff]
                %469 = vst [vmem:[%s217 + $0x3e8] sm:$0xff] %v468
                %v470 = vld [vmem:[%s216 + $0x7e0] sm:$0xff]
                %471 = vst [vmem:[%s217 + $0x3f0] sm:$0xff] %v470
                %v472 = vld [vmem:[%s216 + $0x7f0] sm:$0xff]
                %473 = vst [vmem:[%s217 + $0x3f8] sm:$0xff] %v472
              $region60: #{discriminator_forward.8} parent=54 // loop_footer
                %s215 = sadd.s32 1, %s211
              $region61: #{discriminator_forward.8} parent=54 // loop_footer_branch
                %210 = sbr.rel target = $region57
              $region62: #{discriminator_forward.8} parent=54 // loop_exit
                _
            $region55: #{discriminator_forward.8} parent=46 // pred_fallthru
              _
          $region47: #{discriminator_forward.8} parent=42 // pred_fallthru
            _
          %742 = vnop
        $region43: #{discriminator_forward.8} parent=15 // pred_fallthru
          _
      $region16: #{discriminator_forward.8} parent=5 // pred_fallthru
        _
      %p743 = scmp.le.s32.totalorder 1, %s8
      %p744 = scmp.lt.s32.totalorder %s8, 9
      %p745 = pnand %p743, %p744
      %p746 = pneg %p745
      // Predicated region
      $region78: #{discriminator_forward.8} parent=5 // pred_check
        _
      $region79: #{discriminator_forward.8} parent=5 // pred_check_branch
        %748 = sbr.rel (%p745) target = $region81
      $region80: #{discriminator_forward.8} parent=5 // pred_region
        %s749 = ssub.s32 %s8, 1
        %s750 = sand.u32 %s42, 1
        %s751 = sand.u32 %s42, 1
        %s752 = smul.addr %s751, 128
        %s753 = scalar_lea.vmem [#allocation3], %s752
        // Predicated region
        $region82: #{discriminator_forward.8} parent=80 // pred_check
          %p754 = pneg %p55
        $region83: #{discriminator_forward.8} parent=80 // pred_check_branch
          %756 = sbr.rel (%p754) target = $region85
        $region84: #{discriminator_forward.8} parent=80 // pred_region
          _
        $region85: #{discriminator_forward.8} parent=80 // pred_fallthru
          _
        %s757 = sand.u32 %s70, 1
        %s758 = sand.u32 %s70, 1
        %s759 = smul.addr %s758, 1024
        %s760 = scalar_lea.vmem [#allocation4], %s759
        // Predicated region
        $region86: #{discriminator_forward.8} parent=80 // pred_check
          %p761 = pneg %p83
        $region87: #{discriminator_forward.8} parent=80 // pred_check_branch
          %763 = sbr.rel (%p761) target = $region89
        $region88: #{discriminator_forward.8} parent=80 // pred_region
          _
        $region89: #{discriminator_forward.8} parent=80 // pred_fallthru
          _
        %s764 = sand.u32 %s42, 1
        %s765 = sand.u32 %s42, 1
        %s766 = smul.addr %s765, 128
        %s767 = scalar_lea.vmem [#allocation3], %s766
        %p768 = pneg %p55
        %p769 = pneg %p52
        %s770 = sand.u32 %s70, 1
        %s771 = sand.u32 %s70, 1
        %s772 = smul.addr %s771, 1024
        %s773 = scalar_lea.vmem [#allocation4], %s772
        %p774 = pneg %p83
        %p775 = pneg %p80
        %p776 = pneg %p111
        %p777 = pneg %p108
        %s778 = sand.u32 %s98, 1
        %s779 = sand.u32 %s98, 1
        %s780 = smul.addr %s779, 32
        %s781 = scalar_lea.vmem [#allocation5], %s780
        %s782 = smul.u32 4, %s18
        %s783 = smul.u32 8, %s20
        %s784 = smul.u32 128, %s20
        %s785 = smul.u32 2, %s19
        %s786 = smul.u32 4, %s18
        %s787 = smul.u32 2, %s19
        %p788 = scmp.eq.s32.totalorder %s20, 0
        // Predicated region
        $region90: #{discriminator_forward.8} parent=80 // pred_check
          %p789 = pneg %p788
        $region91: #{discriminator_forward.8} parent=80 // pred_check_branch
          %791 = sbr.rel (%p789) target = $region93
        $region92: #{discriminator_forward.8} parent=80 // pred_region
          %792 = vst [vmem:[#allocation2] sm:$0xff] 0.0
          %793 = vst [vmem:[#allocation2 + $0x8] sm:$0xff] 0.0
          %794 = vst [vmem:[#allocation2 + $0x10] sm:$0xff] 0.0
          %795 = vst [vmem:[#allocation2 + $0x18] sm:$0xff] 0.0
          %796 = vst [vmem:[#allocation2 + $0x20] sm:$0xff] 0.0
          %797 = vst [vmem:[#allocation2 + $0x28] sm:$0xff] 0.0
          %798 = vst [vmem:[#allocation2 + $0x30] sm:$0xff] 0.0
          %799 = vst [vmem:[#allocation2 + $0x38] sm:$0xff] 0.0
        $region93: #{discriminator_forward.8} parent=80 // pred_fallthru
          _
        %v800 = vld [vmem:[#allocation2] sm:$0xff]
        %v801 = vld [vmem:[#allocation2 + $0x8] sm:$0xff]
        %v802 = vld [vmem:[#allocation2 + $0x10] sm:$0xff]
        %v803 = vld [vmem:[#allocation2 + $0x18] sm:$0xff]
        %v804 = vld [vmem:[#allocation2 + $0x20] sm:$0xff]
        %v805 = vld [vmem:[#allocation2 + $0x28] sm:$0xff]
        %v806 = vld [vmem:[#allocation2 + $0x30] sm:$0xff]
        %v807 = vld [vmem:[#allocation2 + $0x38] sm:$0xff]
        %v808 = vld [vmem:[%s753] sm:$0xff]
        %v809 = vld [vmem:[%s753 + $0x8] sm:$0xff]
        %v810 = vld [vmem:[%s753 + $0x10] sm:$0xff]
        %v811 = vld [vmem:[%s753 + $0x18] sm:$0xff]
        %v812 = vld [vmem:[%s753 + $0x20] sm:$0xff]
        %v813 = vld [vmem:[%s753 + $0x28] sm:$0xff]
        %v814 = vld [vmem:[%s753 + $0x30] sm:$0xff]
        %v815 = vld [vmem:[%s753 + $0x38] sm:$0xff]
        %v816 = vld [vmem:[%s753 + $0x40] sm:$0xff]
        %v817 = vld [vmem:[%s753 + $0x48] sm:$0xff]
        %v818 = vld [vmem:[%s753 + $0x50] sm:$0xff]
        %v819 = vld [vmem:[%s753 + $0x58] sm:$0xff]
        %v820 = vld [vmem:[%s753 + $0x60] sm:$0xff]
        %v821 = vld [vmem:[%s753 + $0x68] sm:$0xff]
        %v822 = vld [vmem:[%s753 + $0x70] sm:$0xff]
        %v823 = vld [vmem:[%s753 + $0x78] sm:$0xff]
        %v824 = vld [vmem:[%s760] sm:$0xff]
        %v825 = vld [vmem:[%s760 + $0x8] sm:$0xff]
        %v826 = vld [vmem:[%s760 + $0x10] sm:$0xff]
        %v827 = vld [vmem:[%s760 + $0x18] sm:$0xff]
        %v828 = vld [vmem:[%s760 + $0x20] sm:$0xff]
        %v829 = vld [vmem:[%s760 + $0x28] sm:$0xff]
        %v830 = vld [vmem:[%s760 + $0x30] sm:$0xff]
        %v831 = vld [vmem:[%s760 + $0x38] sm:$0xff]
        %v832 = vld [vmem:[%s760 + $0x40] sm:$0xff]
        %v833 = vld [vmem:[%s760 + $0x48] sm:$0xff]
        %v834 = vld [vmem:[%s760 + $0x50] sm:$0xff]
        %v835 = vld [vmem:[%s760 + $0x58] sm:$0xff]
        %v836 = vld [vmem:[%s760 + $0x60] sm:$0xff]
        %v837 = vld [vmem:[%s760 + $0x68] sm:$0xff]
        %v838 = vld [vmem:[%s760 + $0x70] sm:$0xff]
        %v839 = vld [vmem:[%s760 + $0x78] sm:$0xff]
        %v840 = vld [vmem:[%s760 + $0x80] sm:$0xff]
        %v841 = vld [vmem:[%s760 + $0x88] sm:$0xff]
        %v842 = vld [vmem:[%s760 + $0x90] sm:$0xff]
        %v843 = vld [vmem:[%s760 + $0x98] sm:$0xff]
        %v844 = vld [vmem:[%s760 + $0xa0] sm:$0xff]
        %v845 = vld [vmem:[%s760 + $0xa8] sm:$0xff]
        %v846 = vld [vmem:[%s760 + $0xb0] sm:$0xff]
        %v847 = vld [vmem:[%s760 + $0xb8] sm:$0xff]
        %v848 = vld [vmem:[%s760 + $0xc0] sm:$0xff]
        %v849 = vld [vmem:[%s760 + $0xc8] sm:$0xff]
        %v850 = vld [vmem:[%s760 + $0xd0] sm:$0xff]
        %v851 = vld [vmem:[%s760 + $0xd8] sm:$0xff]
        %v852 = vld [vmem:[%s760 + $0xe0] sm:$0xff]
        %v853 = vld [vmem:[%s760 + $0xe8] sm:$0xff]
        %v854 = vld [vmem:[%s760 + $0xf0] sm:$0xff]
        %v855 = vld [vmem:[%s760 + $0xf8] sm:$0xff]
        %v856 = vld [vmem:[%s760 + $0x100] sm:$0xff]
        %v857 = vld [vmem:[%s760 + $0x108] sm:$0xff]
        %v858 = vld [vmem:[%s760 + $0x110] sm:$0xff]
        %v859 = vld [vmem:[%s760 + $0x118] sm:$0xff]
        %v860 = vld [vmem:[%s760 + $0x120] sm:$0xff]
        %v861 = vld [vmem:[%s760 + $0x128] sm:$0xff]
        %v862 = vld [vmem:[%s760 + $0x130] sm:$0xff]
        %v863 = vld [vmem:[%s760 + $0x138] sm:$0xff]
        %v864 = vld [vmem:[%s760 + $0x140] sm:$0xff]
        %v865 = vld [vmem:[%s760 + $0x148] sm:$0xff]
        %v866 = vld [vmem:[%s760 + $0x150] sm:$0xff]
        %v867 = vld [vmem:[%s760 + $0x158] sm:$0xff]
        %v868 = vld [vmem:[%s760 + $0x160] sm:$0xff]
        %v869 = vld [vmem:[%s760 + $0x168] sm:$0xff]
        %v870 = vld [vmem:[%s760 + $0x170] sm:$0xff]
        %v871 = vld [vmem:[%s760 + $0x178] sm:$0xff]
        %v872 = vld [vmem:[%s760 + $0x180] sm:$0xff]
        %v873 = vld [vmem:[%s760 + $0x188] sm:$0xff]
        %v874 = vld [vmem:[%s760 + $0x190] sm:$0xff]
        %v875 = vld [vmem:[%s760 + $0x198] sm:$0xff]
        %v876 = vld [vmem:[%s760 + $0x1a0] sm:$0xff]
        %v877 = vld [vmem:[%s760 + $0x1a8] sm:$0xff]
        %v878 = vld [vmem:[%s760 + $0x1b0] sm:$0xff]
        %v879 = vld [vmem:[%s760 + $0x1b8] sm:$0xff]
        %v880 = vld [vmem:[%s760 + $0x1c0] sm:$0xff]
        %v881 = vld [vmem:[%s760 + $0x1c8] sm:$0xff]
        %v882 = vld [vmem:[%s760 + $0x1d0] sm:$0xff]
        %v883 = vld [vmem:[%s760 + $0x1d8] sm:$0xff]
        %v884 = vld [vmem:[%s760 + $0x1e0] sm:$0xff]
        %v885 = vld [vmem:[%s760 + $0x1e8] sm:$0xff]
        %v886 = vld [vmem:[%s760 + $0x1f0] sm:$0xff]
        %v887 = vld [vmem:[%s760 + $0x1f8] sm:$0xff]
        %v888 = vld [vmem:[%s760 + $0x200] sm:$0xff]
        %v889 = vld [vmem:[%s760 + $0x208] sm:$0xff]
        %v890 = vld [vmem:[%s760 + $0x210] sm:$0xff]
        %v891 = vld [vmem:[%s760 + $0x218] sm:$0xff]
        %v892 = vld [vmem:[%s760 + $0x220] sm:$0xff]
        %v893 = vld [vmem:[%s760 + $0x228] sm:$0xff]
        %v894 = vld [vmem:[%s760 + $0x230] sm:$0xff]
        %v895 = vld [vmem:[%s760 + $0x238] sm:$0xff]
        %v896 = vld [vmem:[%s760 + $0x240] sm:$0xff]
        %v897 = vld [vmem:[%s760 + $0x248] sm:$0xff]
        %v898 = vld [vmem:[%s760 + $0x250] sm:$0xff]
        %v899 = vld [vmem:[%s760 + $0x258] sm:$0xff]
        %v900 = vld [vmem:[%s760 + $0x260] sm:$0xff]
        %v901 = vld [vmem:[%s760 + $0x268] sm:$0xff]
        %v902 = vld [vmem:[%s760 + $0x270] sm:$0xff]
        %v903 = vld [vmem:[%s760 + $0x278] sm:$0xff]
        %v904 = vld [vmem:[%s760 + $0x280] sm:$0xff]
        %v905 = vld [vmem:[%s760 + $0x288] sm:$0xff]
        %v906 = vld [vmem:[%s760 + $0x290] sm:$0xff]
        %v907 = vld [vmem:[%s760 + $0x298] sm:$0xff]
        %v908 = vld [vmem:[%s760 + $0x2a0] sm:$0xff]
        %v909 = vld [vmem:[%s760 + $0x2a8] sm:$0xff]
        %v910 = vld [vmem:[%s760 + $0x2b0] sm:$0xff]
        %v911 = vld [vmem:[%s760 + $0x2b8] sm:$0xff]
        %v912 = vld [vmem:[%s760 + $0x2c0] sm:$0xff]
        %v913 = vld [vmem:[%s760 + $0x2c8] sm:$0xff]
        %v914 = vld [vmem:[%s760 + $0x2d0] sm:$0xff]
        %v915 = vld [vmem:[%s760 + $0x2d8] sm:$0xff]
        %v916 = vld [vmem:[%s760 + $0x2e0] sm:$0xff]
        %v917 = vld [vmem:[%s760 + $0x2e8] sm:$0xff]
        %v918 = vld [vmem:[%s760 + $0x2f0] sm:$0xff]
        %v919 = vld [vmem:[%s760 + $0x2f8] sm:$0xff]
        %v920 = vld [vmem:[%s760 + $0x300] sm:$0xff]
        %v921 = vld [vmem:[%s760 + $0x308] sm:$0xff]
        %v922 = vld [vmem:[%s760 + $0x310] sm:$0xff]
        %v923 = vld [vmem:[%s760 + $0x318] sm:$0xff]
        %v924 = vld [vmem:[%s760 + $0x320] sm:$0xff]
        %v925 = vld [vmem:[%s760 + $0x328] sm:$0xff]
        %v926 = vld [vmem:[%s760 + $0x330] sm:$0xff]
        %v927 = vld [vmem:[%s760 + $0x338] sm:$0xff]
        %v928 = vld [vmem:[%s760 + $0x340] sm:$0xff]
        %v929 = vld [vmem:[%s760 + $0x348] sm:$0xff]
        %v930 = vld [vmem:[%s760 + $0x350] sm:$0xff]
        %v931 = vld [vmem:[%s760 + $0x358] sm:$0xff]
        %v932 = vld [vmem:[%s760 + $0x360] sm:$0xff]
        %v933 = vld [vmem:[%s760 + $0x368] sm:$0xff]
        %v934 = vld [vmem:[%s760 + $0x370] sm:$0xff]
        %v935 = vld [vmem:[%s760 + $0x378] sm:$0xff]
        %v936 = vld [vmem:[%s760 + $0x380] sm:$0xff]
        %v937 = vld [vmem:[%s760 + $0x388] sm:$0xff]
        %v938 = vld [vmem:[%s760 + $0x390] sm:$0xff]
        %v939 = vld [vmem:[%s760 + $0x398] sm:$0xff]
        %v940 = vld [vmem:[%s760 + $0x3a0] sm:$0xff]
        %v941 = vld [vmem:[%s760 + $0x3a8] sm:$0xff]
        %v942 = vld [vmem:[%s760 + $0x3b0] sm:$0xff]
        %v943 = vld [vmem:[%s760 + $0x3b8] sm:$0xff]
        %v944 = vld [vmem:[%s760 + $0x3c0] sm:$0xff]
        %v945 = vld [vmem:[%s760 + $0x3c8] sm:$0xff]
        %v946 = vld [vmem:[%s760 + $0x3d0] sm:$0xff]
        %v947 = vld [vmem:[%s760 + $0x3d8] sm:$0xff]
        %v948 = vld [vmem:[%s760 + $0x3e0] sm:$0xff]
        %v949 = vld [vmem:[%s760 + $0x3e8] sm:$0xff]
        %v950 = vld [vmem:[%s760 + $0x3f0] sm:$0xff]
        %v951 = vld [vmem:[%s760 + $0x3f8] sm:$0xff]
        %v968 = vunpack.c.l.b16 %v808
        %v969 = vunpack.c.h.b16 %v808
        %v970 = vunpack.c.l.b16 %v809
        %v971 = vunpack.c.h.b16 %v809
        %v972 = vunpack.c.l.b16 %v810
        %v973 = vunpack.c.h.b16 %v810
        %v974 = vunpack.c.l.b16 %v811
        %v975 = vunpack.c.h.b16 %v811
        %v976 = vunpack.c.l.b16 %v812
        %v977 = vunpack.c.h.b16 %v812
        %v978 = vunpack.c.l.b16 %v813
        %v979 = vunpack.c.h.b16 %v813
        %v980 = vunpack.c.l.b16 %v814
        %v981 = vunpack.c.h.b16 %v814
        %v982 = vunpack.c.l.b16 %v815
        %v983 = vunpack.c.h.b16 %v815
        %v984 = vunpack.c.l.b16 %v816
        %v985 = vunpack.c.h.b16 %v816
        %v986 = vunpack.c.l.b16 %v817
        %v987 = vunpack.c.h.b16 %v817
        %v988 = vunpack.c.l.b16 %v818
        %v989 = vunpack.c.h.b16 %v818
        %v990 = vunpack.c.l.b16 %v819
        %v991 = vunpack.c.h.b16 %v819
        %v992 = vunpack.c.l.b16 %v820
        %v993 = vunpack.c.h.b16 %v820
        %v994 = vunpack.c.l.b16 %v821
        %v995 = vunpack.c.h.b16 %v821
        %v996 = vunpack.c.l.b16 %v822
        %v997 = vunpack.c.h.b16 %v822
        %v998 = vunpack.c.l.b16 %v823
        %v999 = vunpack.c.h.b16 %v823
        %v1000 = vpack.c.b16 %v976, %v968
        %v1001 = vpack.c.b16 %v977, %v969
        %v1002 = vpack.c.b16 %v978, %v970
        %v1003 = vpack.c.b16 %v979, %v971
        %v1004 = vpack.c.b16 %v980, %v972
        %v1005 = vpack.c.b16 %v981, %v973
        %v1006 = vpack.c.b16 %v982, %v974
        %v1007 = vpack.c.b16 %v983, %v975
        %v1008 = vpack.c.b16 %v992, %v984
        %v1009 = vpack.c.b16 %v993, %v985
        %v1010 = vpack.c.b16 %v994, %v986
        %v1011 = vpack.c.b16 %v995, %v987
        %v1012 = vpack.c.b16 %v996, %v988
        %v1013 = vpack.c.b16 %v997, %v989
        %v1014 = vpack.c.b16 %v998, %v990
        %v1015 = vpack.c.b16 %v999, %v991
        %v1160 = vunpack.c.l.b16 %v824
        %v1161 = vunpack.c.h.b16 %v824
        %v1162 = vunpack.c.l.b16 %v825
        %v1163 = vunpack.c.h.b16 %v825
        %v1164 = vunpack.c.l.b16 %v826
        %v1165 = vunpack.c.h.b16 %v826
        %v1166 = vunpack.c.l.b16 %v827
        %v1167 = vunpack.c.h.b16 %v827
        %v1168 = vunpack.c.l.b16 %v828
        %v1169 = vunpack.c.h.b16 %v828
        %v1170 = vunpack.c.l.b16 %v829
        %v1171 = vunpack.c.h.b16 %v829
        %v1172 = vunpack.c.l.b16 %v830
        %v1173 = vunpack.c.h.b16 %v830
        %v1174 = vunpack.c.l.b16 %v831
        %v1175 = vunpack.c.h.b16 %v831
        %v1176 = vunpack.c.l.b16 %v832
        %v1177 = vunpack.c.h.b16 %v832
        %v1178 = vunpack.c.l.b16 %v833
        %v1179 = vunpack.c.h.b16 %v833
        %v1180 = vunpack.c.l.b16 %v834
        %v1181 = vunpack.c.h.b16 %v834
        %v1182 = vunpack.c.l.b16 %v835
        %v1183 = vunpack.c.h.b16 %v835
        %v1184 = vunpack.c.l.b16 %v836
        %v1185 = vunpack.c.h.b16 %v836
        %v1186 = vunpack.c.l.b16 %v837
        %v1187 = vunpack.c.h.b16 %v837
        %v1188 = vunpack.c.l.b16 %v838
        %v1189 = vunpack.c.h.b16 %v838
        %v1190 = vunpack.c.l.b16 %v839
        %v1191 = vunpack.c.h.b16 %v839
        %v1192 = vunpack.c.l.b16 %v840
        %v1193 = vunpack.c.h.b16 %v840
        %v1194 = vunpack.c.l.b16 %v841
        %v1195 = vunpack.c.h.b16 %v841
        %v1196 = vunpack.c.l.b16 %v842
        %v1197 = vunpack.c.h.b16 %v842
        %v1198 = vunpack.c.l.b16 %v843
        %v1199 = vunpack.c.h.b16 %v843
        %v1200 = vunpack.c.l.b16 %v844
        %v1201 = vunpack.c.h.b16 %v844
        %v1202 = vunpack.c.l.b16 %v845
        %v1203 = vunpack.c.h.b16 %v845
        %v1204 = vunpack.c.l.b16 %v846
        %v1205 = vunpack.c.h.b16 %v846
        %v1206 = vunpack.c.l.b16 %v847
        %v1207 = vunpack.c.h.b16 %v847
        %v1208 = vunpack.c.l.b16 %v848
        %v1209 = vunpack.c.h.b16 %v848
        %v1210 = vunpack.c.l.b16 %v849
        %v1211 = vunpack.c.h.b16 %v849
        %v1212 = vunpack.c.l.b16 %v850
        %v1213 = vunpack.c.h.b16 %v850
        %v1214 = vunpack.c.l.b16 %v851
        %v1215 = vunpack.c.h.b16 %v851
        %v1216 = vunpack.c.l.b16 %v852
        %v1217 = vunpack.c.h.b16 %v852
        %v1218 = vunpack.c.l.b16 %v853
        %v1219 = vunpack.c.h.b16 %v853
        %v1220 = vunpack.c.l.b16 %v854
        %v1221 = vunpack.c.h.b16 %v854
        %v1222 = vunpack.c.l.b16 %v855
        %v1223 = vunpack.c.h.b16 %v855
        %v1224 = vunpack.c.l.b16 %v856
        %v1225 = vunpack.c.h.b16 %v856
        %v1226 = vunpack.c.l.b16 %v857
        %v1227 = vunpack.c.h.b16 %v857
        %v1228 = vunpack.c.l.b16 %v858
        %v1229 = vunpack.c.h.b16 %v858
        %v1230 = vunpack.c.l.b16 %v859
        %v1231 = vunpack.c.h.b16 %v859
        %v1232 = vunpack.c.l.b16 %v860
        %v1233 = vunpack.c.h.b16 %v860
        %v1234 = vunpack.c.l.b16 %v861
        %v1235 = vunpack.c.h.b16 %v861
        %v1236 = vunpack.c.l.b16 %v862
        %v1237 = vunpack.c.h.b16 %v862
        %v1238 = vunpack.c.l.b16 %v863
        %v1239 = vunpack.c.h.b16 %v863
        %v1240 = vunpack.c.l.b16 %v864
        %v1241 = vunpack.c.h.b16 %v864
        %v1242 = vunpack.c.l.b16 %v865
        %v1243 = vunpack.c.h.b16 %v865
        %v1244 = vunpack.c.l.b16 %v866
        %v1245 = vunpack.c.h.b16 %v866
        %v1246 = vunpack.c.l.b16 %v867
        %v1247 = vunpack.c.h.b16 %v867
        %v1248 = vunpack.c.l.b16 %v868
        %v1249 = vunpack.c.h.b16 %v868
        %v1250 = vunpack.c.l.b16 %v869
        %v1251 = vunpack.c.h.b16 %v869
        %v1252 = vunpack.c.l.b16 %v870
        %v1253 = vunpack.c.h.b16 %v870
        %v1254 = vunpack.c.l.b16 %v871
        %v1255 = vunpack.c.h.b16 %v871
        %v1256 = vunpack.c.l.b16 %v872
        %v1257 = vunpack.c.h.b16 %v872
        %v1258 = vunpack.c.l.b16 %v873
        %v1259 = vunpack.c.h.b16 %v873
        %v1260 = vunpack.c.l.b16 %v874
        %v1261 = vunpack.c.h.b16 %v874
        %v1262 = vunpack.c.l.b16 %v875
        %v1263 = vunpack.c.h.b16 %v875
        %v1264 = vunpack.c.l.b16 %v876
        %v1265 = vunpack.c.h.b16 %v876
        %v1266 = vunpack.c.l.b16 %v877
        %v1267 = vunpack.c.h.b16 %v877
        %v1268 = vunpack.c.l.b16 %v878
        %v1269 = vunpack.c.h.b16 %v878
        %v1270 = vunpack.c.l.b16 %v879
        %v1271 = vunpack.c.h.b16 %v879
        %v1272 = vunpack.c.l.b16 %v880
        %v1273 = vunpack.c.h.b16 %v880
        %v1274 = vunpack.c.l.b16 %v881
        %v1275 = vunpack.c.h.b16 %v881
        %v1276 = vunpack.c.l.b16 %v882
        %v1277 = vunpack.c.h.b16 %v882
        %v1278 = vunpack.c.l.b16 %v883
        %v1279 = vunpack.c.h.b16 %v883
        %v1280 = vunpack.c.l.b16 %v884
        %v1281 = vunpack.c.h.b16 %v884
        %v1282 = vunpack.c.l.b16 %v885
        %v1283 = vunpack.c.h.b16 %v885
        %v1284 = vunpack.c.l.b16 %v886
        %v1285 = vunpack.c.h.b16 %v886
        %v1286 = vunpack.c.l.b16 %v887
        %v1287 = vunpack.c.h.b16 %v887
        %v1288 = vunpack.c.l.b16 %v888
        %v1289 = vunpack.c.h.b16 %v888
        %v1290 = vunpack.c.l.b16 %v889
        %v1291 = vunpack.c.h.b16 %v889
        %v1292 = vunpack.c.l.b16 %v890
        %v1293 = vunpack.c.h.b16 %v890
        %v1294 = vunpack.c.l.b16 %v891
        %v1295 = vunpack.c.h.b16 %v891
        %v1296 = vunpack.c.l.b16 %v892
        %v1297 = vunpack.c.h.b16 %v892
        %v1298 = vunpack.c.l.b16 %v893
        %v1299 = vunpack.c.h.b16 %v893
        %v1300 = vunpack.c.l.b16 %v894
        %v1301 = vunpack.c.h.b16 %v894
        %v1302 = vunpack.c.l.b16 %v895
        %v1303 = vunpack.c.h.b16 %v895
        %v1304 = vunpack.c.l.b16 %v896
        %v1305 = vunpack.c.h.b16 %v896
        %v1306 = vunpack.c.l.b16 %v897
        %v1307 = vunpack.c.h.b16 %v897
        %v1308 = vunpack.c.l.b16 %v898
        %v1309 = vunpack.c.h.b16 %v898
        %v1310 = vunpack.c.l.b16 %v899
        %v1311 = vunpack.c.h.b16 %v899
        %v1312 = vunpack.c.l.b16 %v900
        %v1313 = vunpack.c.h.b16 %v900
        %v1314 = vunpack.c.l.b16 %v901
        %v1315 = vunpack.c.h.b16 %v901
        %v1316 = vunpack.c.l.b16 %v902
        %v1317 = vunpack.c.h.b16 %v902
        %v1318 = vunpack.c.l.b16 %v903
        %v1319 = vunpack.c.h.b16 %v903
        %v1320 = vunpack.c.l.b16 %v904
        %v1321 = vunpack.c.h.b16 %v904
        %v1322 = vunpack.c.l.b16 %v905
        %v1323 = vunpack.c.h.b16 %v905
        %v1324 = vunpack.c.l.b16 %v906
        %v1325 = vunpack.c.h.b16 %v906
        %v1326 = vunpack.c.l.b16 %v907
        %v1327 = vunpack.c.h.b16 %v907
        %v1328 = vunpack.c.l.b16 %v908
        %v1329 = vunpack.c.h.b16 %v908
        %v1330 = vunpack.c.l.b16 %v909
        %v1331 = vunpack.c.h.b16 %v909
        %v1332 = vunpack.c.l.b16 %v910
        %v1333 = vunpack.c.h.b16 %v910
        %v1334 = vunpack.c.l.b16 %v911
        %v1335 = vunpack.c.h.b16 %v911
        %v1336 = vunpack.c.l.b16 %v912
        %v1337 = vunpack.c.h.b16 %v912
        %v1338 = vunpack.c.l.b16 %v913
        %v1339 = vunpack.c.h.b16 %v913
        %v1340 = vunpack.c.l.b16 %v914
        %v1341 = vunpack.c.h.b16 %v914
        %v1342 = vunpack.c.l.b16 %v915
        %v1343 = vunpack.c.h.b16 %v915
        %v1344 = vunpack.c.l.b16 %v916
        %v1345 = vunpack.c.h.b16 %v916
        %v1346 = vunpack.c.l.b16 %v917
        %v1347 = vunpack.c.h.b16 %v917
        %v1348 = vunpack.c.l.b16 %v918
        %v1349 = vunpack.c.h.b16 %v918
        %v1350 = vunpack.c.l.b16 %v919
        %v1351 = vunpack.c.h.b16 %v919
        %v1352 = vunpack.c.l.b16 %v920
        %v1353 = vunpack.c.h.b16 %v920
        %v1354 = vunpack.c.l.b16 %v921
        %v1355 = vunpack.c.h.b16 %v921
        %v1356 = vunpack.c.l.b16 %v922
        %v1357 = vunpack.c.h.b16 %v922
        %v1358 = vunpack.c.l.b16 %v923
        %v1359 = vunpack.c.h.b16 %v923
        %v1360 = vunpack.c.l.b16 %v924
        %v1361 = vunpack.c.h.b16 %v924
        %v1362 = vunpack.c.l.b16 %v925
        %v1363 = vunpack.c.h.b16 %v925
        %v1364 = vunpack.c.l.b16 %v926
        %v1365 = vunpack.c.h.b16 %v926
        %v1366 = vunpack.c.l.b16 %v927
        %v1367 = vunpack.c.h.b16 %v927
        %v1368 = vunpack.c.l.b16 %v928
        %v1369 = vunpack.c.h.b16 %v928
        %v1370 = vunpack.c.l.b16 %v929
        %v1371 = vunpack.c.h.b16 %v929
        %v1372 = vunpack.c.l.b16 %v930
        %v1373 = vunpack.c.h.b16 %v930
        %v1374 = vunpack.c.l.b16 %v931
        %v1375 = vunpack.c.h.b16 %v931
        %v1376 = vunpack.c.l.b16 %v932
        %v1377 = vunpack.c.h.b16 %v932
        %v1378 = vunpack.c.l.b16 %v933
        %v1379 = vunpack.c.h.b16 %v933
        %v1380 = vunpack.c.l.b16 %v934
        %v1381 = vunpack.c.h.b16 %v934
        %v1382 = vunpack.c.l.b16 %v935
        %v1383 = vunpack.c.h.b16 %v935
        %v1384 = vunpack.c.l.b16 %v936
        %v1385 = vunpack.c.h.b16 %v936
        %v1386 = vunpack.c.l.b16 %v937
        %v1387 = vunpack.c.h.b16 %v937
        %v1388 = vunpack.c.l.b16 %v938
        %v1389 = vunpack.c.h.b16 %v938
        %v1390 = vunpack.c.l.b16 %v939
        %v1391 = vunpack.c.h.b16 %v939
        %v1392 = vunpack.c.l.b16 %v940
        %v1393 = vunpack.c.h.b16 %v940
        %v1394 = vunpack.c.l.b16 %v941
        %v1395 = vunpack.c.h.b16 %v941
        %v1396 = vunpack.c.l.b16 %v942
        %v1397 = vunpack.c.h.b16 %v942
        %v1398 = vunpack.c.l.b16 %v943
        %v1399 = vunpack.c.h.b16 %v943
        %v1400 = vunpack.c.l.b16 %v944
        %v1401 = vunpack.c.h.b16 %v944
        %v1402 = vunpack.c.l.b16 %v945
        %v1403 = vunpack.c.h.b16 %v945
        %v1404 = vunpack.c.l.b16 %v946
        %v1405 = vunpack.c.h.b16 %v946
        %v1406 = vunpack.c.l.b16 %v947
        %v1407 = vunpack.c.h.b16 %v947
        %v1408 = vunpack.c.l.b16 %v948
        %v1409 = vunpack.c.h.b16 %v948
        %v1410 = vunpack.c.l.b16 %v949
        %v1411 = vunpack.c.h.b16 %v949
        %v1412 = vunpack.c.l.b16 %v950
        %v1413 = vunpack.c.h.b16 %v950
        %v1414 = vunpack.c.l.b16 %v951
        %v1415 = vunpack.c.h.b16 %v951
        %v1416 = vpack.c.b16 %v1162, %v1160
        %v1417 = vpack.c.b16 %v1163, %v1161
        %v1418 = vpack.c.b16 %v1166, %v1164
        %v1419 = vpack.c.b16 %v1167, %v1165
        %v1420 = vpack.c.b16 %v1170, %v1168
        %v1421 = vpack.c.b16 %v1171, %v1169
        %v1422 = vpack.c.b16 %v1174, %v1172
        %v1423 = vpack.c.b16 %v1175, %v1173
        %v1424 = vpack.c.b16 %v1178, %v1176
        %v1425 = vpack.c.b16 %v1179, %v1177
        %v1426 = vpack.c.b16 %v1182, %v1180
        %v1427 = vpack.c.b16 %v1183, %v1181
        %v1428 = vpack.c.b16 %v1186, %v1184
        %v1429 = vpack.c.b16 %v1187, %v1185
        %v1430 = vpack.c.b16 %v1190, %v1188
        %v1431 = vpack.c.b16 %v1191, %v1189
        %v1432 = vpack.c.b16 %v1194, %v1192
        %v1433 = vpack.c.b16 %v1195, %v1193
        %v1434 = vpack.c.b16 %v1198, %v1196
        %v1435 = vpack.c.b16 %v1199, %v1197
        %v1436 = vpack.c.b16 %v1202, %v1200
        %v1437 = vpack.c.b16 %v1203, %v1201
        %v1438 = vpack.c.b16 %v1206, %v1204
        %v1439 = vpack.c.b16 %v1207, %v1205
        %v1440 = vpack.c.b16 %v1210, %v1208
        %v1441 = vpack.c.b16 %v1211, %v1209
        %v1442 = vpack.c.b16 %v1214, %v1212
        %v1443 = vpack.c.b16 %v1215, %v1213
        %v1444 = vpack.c.b16 %v1218, %v1216
        %v1445 = vpack.c.b16 %v1219, %v1217
        %v1446 = vpack.c.b16 %v1222, %v1220
        %v1447 = vpack.c.b16 %v1223, %v1221
        %v1448 = vpack.c.b16 %v1226, %v1224
        %v1449 = vpack.c.b16 %v1227, %v1225
        %v1450 = vpack.c.b16 %v1230, %v1228
        %v1451 = vpack.c.b16 %v1231, %v1229
        %v1452 = vpack.c.b16 %v1234, %v1232
        %v1453 = vpack.c.b16 %v1235, %v1233
        %v1454 = vpack.c.b16 %v1238, %v1236
        %v1455 = vpack.c.b16 %v1239, %v1237
        %v1456 = vpack.c.b16 %v1242, %v1240
        %v1457 = vpack.c.b16 %v1243, %v1241
        %v1458 = vpack.c.b16 %v1246, %v1244
        %v1459 = vpack.c.b16 %v1247, %v1245
        %v1460 = vpack.c.b16 %v1250, %v1248
        %v1461 = vpack.c.b16 %v1251, %v1249
        %v1462 = vpack.c.b16 %v1254, %v1252
        %v1463 = vpack.c.b16 %v1255, %v1253
        %v1464 = vpack.c.b16 %v1258, %v1256
        %v1465 = vpack.c.b16 %v1259, %v1257
        %v1466 = vpack.c.b16 %v1262, %v1260
        %v1467 = vpack.c.b16 %v1263, %v1261
        %v1468 = vpack.c.b16 %v1266, %v1264
        %v1469 = vpack.c.b16 %v1267, %v1265
        %v1470 = vpack.c.b16 %v1270, %v1268
        %v1471 = vpack.c.b16 %v1271, %v1269
        %v1472 = vpack.c.b16 %v1274, %v1272
        %v1473 = vpack.c.b16 %v1275, %v1273
        %v1474 = vpack.c.b16 %v1278, %v1276
        %v1475 = vpack.c.b16 %v1279, %v1277
        %v1476 = vpack.c.b16 %v1282, %v1280
        %v1477 = vpack.c.b16 %v1283, %v1281
        %v1478 = vpack.c.b16 %v1286, %v1284
        %v1479 = vpack.c.b16 %v1287, %v1285
        %v1480 = vpack.c.b16 %v1290, %v1288
        %v1481 = vpack.c.b16 %v1291, %v1289
        %v1482 = vpack.c.b16 %v1294, %v1292
        %v1483 = vpack.c.b16 %v1295, %v1293
        %v1484 = vpack.c.b16 %v1298, %v1296
        %v1485 = vpack.c.b16 %v1299, %v1297
        %v1486 = vpack.c.b16 %v1302, %v1300
        %v1487 = vpack.c.b16 %v1303, %v1301
        %v1488 = vpack.c.b16 %v1306, %v1304
        %v1489 = vpack.c.b16 %v1307, %v1305
        %v1490 = vpack.c.b16 %v1310, %v1308
        %v1491 = vpack.c.b16 %v1311, %v1309
        %v1492 = vpack.c.b16 %v1314, %v1312
        %v1493 = vpack.c.b16 %v1315, %v1313
        %v1494 = vpack.c.b16 %v1318, %v1316
        %v1495 = vpack.c.b16 %v1319, %v1317
        %v1496 = vpack.c.b16 %v1322, %v1320
        %v1497 = vpack.c.b16 %v1323, %v1321
        %v1498 = vpack.c.b16 %v1326, %v1324
        %v1499 = vpack.c.b16 %v1327, %v1325
        %v1500 = vpack.c.b16 %v1330, %v1328
        %v1501 = vpack.c.b16 %v1331, %v1329
        %v1502 = vpack.c.b16 %v1334, %v1332
        %v1503 = vpack.c.b16 %v1335, %v1333
        %v1504 = vpack.c.b16 %v1338, %v1336
        %v1505 = vpack.c.b16 %v1339, %v1337
        %v1506 = vpack.c.b16 %v1342, %v1340
        %v1507 = vpack.c.b16 %v1343, %v1341
        %v1508 = vpack.c.b16 %v1346, %v1344
        %v1509 = vpack.c.b16 %v1347, %v1345
        %v1510 = vpack.c.b16 %v1350, %v1348
        %v1511 = vpack.c.b16 %v1351, %v1349
        %v1512 = vpack.c.b16 %v1354, %v1352
        %v1513 = vpack.c.b16 %v1355, %v1353
        %v1514 = vpack.c.b16 %v1358, %v1356
        %v1515 = vpack.c.b16 %v1359, %v1357
        %v1516 = vpack.c.b16 %v1362, %v1360
        %v1517 = vpack.c.b16 %v1363, %v1361
        %v1518 = vpack.c.b16 %v1366, %v1364
        %v1519 = vpack.c.b16 %v1367, %v1365
        %v1520 = vpack.c.b16 %v1370, %v1368
        %v1521 = vpack.c.b16 %v1371, %v1369
        %v1522 = vpack.c.b16 %v1374, %v1372
        %v1523 = vpack.c.b16 %v1375, %v1373
        %v1524 = vpack.c.b16 %v1378, %v1376
        %v1525 = vpack.c.b16 %v1379, %v1377
        %v1526 = vpack.c.b16 %v1382, %v1380
        %v1527 = vpack.c.b16 %v1383, %v1381
        %v1528 = vpack.c.b16 %v1386, %v1384
        %v1529 = vpack.c.b16 %v1387, %v1385
        %v1530 = vpack.c.b16 %v1390, %v1388
        %v1531 = vpack.c.b16 %v1391, %v1389
        %v1532 = vpack.c.b16 %v1394, %v1392
        %v1533 = vpack.c.b16 %v1395, %v1393
        %v1534 = vpack.c.b16 %v1398, %v1396
        %v1535 = vpack.c.b16 %v1399, %v1397
        %v1536 = vpack.c.b16 %v1402, %v1400
        %v1537 = vpack.c.b16 %v1403, %v1401
        %v1538 = vpack.c.b16 %v1406, %v1404
        %v1539 = vpack.c.b16 %v1407, %v1405
        %v1540 = vpack.c.b16 %v1410, %v1408
        %v1541 = vpack.c.b16 %v1411, %v1409
        %v1542 = vpack.c.b16 %v1414, %v1412
        %v1543 = vpack.c.b16 %v1415, %v1413
        %1672 = vmatprep.subr.bf16.mxu0 %v1417
        %1673 = vmatpush1.bf16.msra.mxu0 %v1416
        %1674 = vmatprep.subr.bf16.mxu0 %v1419
        %1675 = vmatpush1.bf16.msra.mxu0 %v1418
        %1676 = vmatprep.subr.bf16.mxu0 %v1421
        %1677 = vmatpush1.bf16.msra.mxu0 %v1420
        %1678 = vmatprep.subr.bf16.mxu0 %v1423
        %1679 = vmatpush1.bf16.msra.mxu0 %v1422
        %1680 = vmatprep.subr.bf16.mxu0 %v1425
        %1681 = vmatpush1.bf16.msra.mxu0 %v1424
        %1682 = vmatprep.subr.bf16.mxu0 %v1427
        %1683 = vmatpush1.bf16.msra.mxu0 %v1426
        %1684 = vmatprep.subr.bf16.mxu0 %v1429
        %1685 = vmatpush1.bf16.msra.mxu0 %v1428
        %1686 = vmatprep.subr.bf16.mxu0 %v1431
        %1687 = vmatpush1.bf16.msra.mxu0 %v1430
        %1688 = vmatprep.subr.bf16.mxu0 %v1433
        %1689 = vmatpush1.bf16.msra.mxu0 %v1432
        %1690 = vmatprep.subr.bf16.mxu0 %v1435
        %1691 = vmatpush1.bf16.msra.mxu0 %v1434
        %1692 = vmatprep.subr.bf16.mxu0 %v1437
        %1693 = vmatpush1.bf16.msra.mxu0 %v1436
        %1694 = vmatprep.subr.bf16.mxu0 %v1439
        %1695 = vmatpush1.bf16.msra.mxu0 %v1438
        %1696 = vmatprep.subr.bf16.mxu0 %v1441
        %1697 = vmatpush1.bf16.msra.mxu0 %v1440
        %1698 = vmatprep.subr.bf16.mxu0 %v1443
        %1699 = vmatpush1.bf16.msra.mxu0 %v1442
        %1700 = vmatprep.subr.bf16.mxu0 %v1445
        %1701 = vmatpush1.bf16.msra.mxu0 %v1444
        %1702 = vmatprep.subr.bf16.mxu0 %v1447
        %1703 = vmatpush1.bf16.msra.mxu0 %v1446
        %1704 = vmatprep.mubr.bf16.mxu0 %v1001
        %1705 = vmatmul.mubr.bf16.gmra.mrb[0].mxu0 %v1000
        %v1706 = vpop.f32.mrb[0].mxu0
        %v1707 = vadd.f32 0.0, %v1706
        %v1708 = vpop.f32.mrb[0].mxu0
        %v1709 = vadd.f32 0.0, %v1708
        %v1710 = vpop.f32.mrb[0].mxu0
        %v1711 = vadd.f32 0.0, %v1710
        %v1712 = vpop.f32.mrb[0].mxu0
        %v1713 = vadd.f32 0.0, %v1712
        %1714 = vmatprep.mubr.bf16.mxu0 %v1009
        %1715 = vmatmul.mubr.bf16.gmra.mrb[0].mxu0 %v1008
        %v1716 = vpop.f32.mrb[0].mxu0
        %v1717 = vadd.f32 0.0, %v1716
        %v1718 = vpop.f32.mrb[0].mxu0
        %v1719 = vadd.f32 0.0, %v1718
        %v1720 = vpop.f32.mrb[0].mxu0
        %v1721 = vadd.f32 0.0, %v1720
        %v1722 = vpop.f32.mrb[0].mxu0
        %v1723 = vadd.f32 0.0, %v1722
        %1724 = vdwg.mxu0
        %1725 = vmatprep.subr.bf16.mxu0 %v1449
        %1726 = vmatpush1.bf16.msra.mxu0 %v1448
        %1727 = vmatprep.subr.bf16.mxu0 %v1451
        %1728 = vmatpush1.bf16.msra.mxu0 %v1450
        %1729 = vmatprep.subr.bf16.mxu0 %v1453
        %1730 = vmatpush1.bf16.msra.mxu0 %v1452
        %1731 = vmatprep.subr.bf16.mxu0 %v1455
        %1732 = vmatpush1.bf16.msra.mxu0 %v1454
        %1733 = vmatprep.subr.bf16.mxu0 %v1457
        %1734 = vmatpush1.bf16.msra.mxu0 %v1456
        %1735 = vmatprep.subr.bf16.mxu0 %v1459
        %1736 = vmatpush1.bf16.msra.mxu0 %v1458
        %1737 = vmatprep.subr.bf16.mxu0 %v1461
        %1738 = vmatpush1.bf16.msra.mxu0 %v1460
        %1739 = vmatprep.subr.bf16.mxu0 %v1463
        %1740 = vmatpush1.bf16.msra.mxu0 %v1462
        %1741 = vmatprep.subr.bf16.mxu0 %v1465
        %1742 = vmatpush1.bf16.msra.mxu0 %v1464
        %1743 = vmatprep.subr.bf16.mxu0 %v1467
        %1744 = vmatpush1.bf16.msra.mxu0 %v1466
        %1745 = vmatprep.subr.bf16.mxu0 %v1469
        %1746 = vmatpush1.bf16.msra.mxu0 %v1468
        %1747 = vmatprep.subr.bf16.mxu0 %v1471
        %1748 = vmatpush1.bf16.msra.mxu0 %v1470
        %1749 = vmatprep.subr.bf16.mxu0 %v1473
        %1750 = vmatpush1.bf16.msra.mxu0 %v1472
        %1751 = vmatprep.subr.bf16.mxu0 %v1475
        %1752 = vmatpush1.bf16.msra.mxu0 %v1474
        %1753 = vmatprep.subr.bf16.mxu0 %v1477
        %1754 = vmatpush1.bf16.msra.mxu0 %v1476
        %1755 = vmatprep.subr.bf16.mxu0 %v1479
        %1756 = vmatpush1.bf16.msra.mxu0 %v1478
        %1757 = vmatprep.mubr.bf16.mxu0 %v1003
        %1758 = vmatmul.mubr.bf16.gmra.mrb[0].mxu0 %v1002
        %v1759 = vpop.f32.mrb[0].mxu0
        %v1760 = vadd.f32 %v1707, %v1759
        %v1761 = vpop.f32.mrb[0].mxu0
        %v1762 = vadd.f32 %v1709, %v1761
        %v1763 = vpop.f32.mrb[0].mxu0
        %v1764 = vadd.f32 %v1711, %v1763
        %v1765 = vpop.f32.mrb[0].mxu0
        %v1766 = vadd.f32 %v1713, %v1765
        %1767 = vmatprep.mubr.bf16.mxu0 %v1011
        %1768 = vmatmul.mubr.bf16.gmra.mrb[0].mxu0 %v1010
        %v1769 = vpop.f32.mrb[0].mxu0
        %v1770 = vadd.f32 %v1717, %v1769
        %v1771 = vpop.f32.mrb[0].mxu0
        %v1772 = vadd.f32 %v1719, %v1771
        %v1773 = vpop.f32.mrb[0].mxu0
        %v1774 = vadd.f32 %v1721, %v1773
        %v1775 = vpop.f32.mrb[0].mxu0
        %v1776 = vadd.f32 %v1723, %v1775
        %1777 = vdwg.mxu0
        %1778 = vmatprep.subr.bf16.mxu0 %v1481
        %1779 = vmatpush1.bf16.msra.mxu0 %v1480
        %1780 = vmatprep.subr.bf16.mxu0 %v1483
        %1781 = vmatpush1.bf16.msra.mxu0 %v1482
        %1782 = vmatprep.subr.bf16.mxu0 %v1485
        %1783 = vmatpush1.bf16.msra.mxu0 %v1484
        %1784 = vmatprep.subr.bf16.mxu0 %v1487
        %1785 = vmatpush1.bf16.msra.mxu0 %v1486
        %1786 = vmatprep.subr.bf16.mxu0 %v1489
        %1787 = vmatpush1.bf16.msra.mxu0 %v1488
        %1788 = vmatprep.subr.bf16.mxu0 %v1491
        %1789 = vmatpush1.bf16.msra.mxu0 %v1490
        %1790 = vmatprep.subr.bf16.mxu0 %v1493
        %1791 = vmatpush1.bf16.msra.mxu0 %v1492
        %1792 = vmatprep.subr.bf16.mxu0 %v1495
        %1793 = vmatpush1.bf16.msra.mxu0 %v1494
        %1794 = vmatprep.subr.bf16.mxu0 %v1497
        %1795 = vmatpush1.bf16.msra.mxu0 %v1496
        %1796 = vmatprep.subr.bf16.mxu0 %v1499
        %1797 = vmatpush1.bf16.msra.mxu0 %v1498
        %1798 = vmatprep.subr.bf16.mxu0 %v1501
        %1799 = vmatpush1.bf16.msra.mxu0 %v1500
        %1800 = vmatprep.subr.bf16.mxu0 %v1503
        %1801 = vmatpush1.bf16.msra.mxu0 %v1502
        %1802 = vmatprep.subr.bf16.mxu0 %v1505
        %1803 = vmatpush1.bf16.msra.mxu0 %v1504
        %1804 = vmatprep.subr.bf16.mxu0 %v1507
        %1805 = vmatpush1.bf16.msra.mxu0 %v1506
        %1806 = vmatprep.subr.bf16.mxu0 %v1509
        %1807 = vmatpush1.bf16.msra.mxu0 %v1508
        %1808 = vmatprep.subr.bf16.mxu0 %v1511
        %1809 = vmatpush1.bf16.msra.mxu0 %v1510
        %1810 = vmatprep.mubr.bf16.mxu0 %v1005
        %1811 = vmatmul.mubr.bf16.gmra.mrb[0].mxu0 %v1004
        %v1812 = vpop.f32.mrb[0].mxu0
        %v1813 = vadd.f32 %v1760, %v1812
        %v1814 = vpop.f32.mrb[0].mxu0
        %v1815 = vadd.f32 %v1762, %v1814
        %v1816 = vpop.f32.mrb[0].mxu0
        %v1817 = vadd.f32 %v1764, %v1816
        %v1818 = vpop.f32.mrb[0].mxu0
        %v1819 = vadd.f32 %v1766, %v1818
        %1820 = vmatprep.mubr.bf16.mxu0 %v1013
        %1821 = vmatmul.mubr.bf16.gmra.mrb[0].mxu0 %v1012
        %v1822 = vpop.f32.mrb[0].mxu0
        %v1823 = vadd.f32 %v1770, %v1822
        %v1824 = vpop.f32.mrb[0].mxu0
        %v1825 = vadd.f32 %v1772, %v1824
        %v1826 = vpop.f32.mrb[0].mxu0
        %v1827 = vadd.f32 %v1774, %v1826
        %v1828 = vpop.f32.mrb[0].mxu0
        %v1829 = vadd.f32 %v1776, %v1828
        %1830 = vdwg.mxu0
        %1831 = vmatprep.subr.bf16.mxu0 %v1513
        %1832 = vmatpush1.bf16.msra.mxu0 %v1512
        %1833 = vmatprep.subr.bf16.mxu0 %v1515
        %1834 = vmatpush1.bf16.msra.mxu0 %v1514
        %1835 = vmatprep.subr.bf16.mxu0 %v1517
        %1836 = vmatpush1.bf16.msra.mxu0 %v1516
        %1837 = vmatprep.subr.bf16.mxu0 %v1519
        %1838 = vmatpush1.bf16.msra.mxu0 %v1518
        %1839 = vmatprep.subr.bf16.mxu0 %v1521
        %1840 = vmatpush1.bf16.msra.mxu0 %v1520
        %1841 = vmatprep.subr.bf16.mxu0 %v1523
        %1842 = vmatpush1.bf16.msra.mxu0 %v1522
        %1843 = vmatprep.subr.bf16.mxu0 %v1525
        %1844 = vmatpush1.bf16.msra.mxu0 %v1524
        %1845 = vmatprep.subr.bf16.mxu0 %v1527
        %1846 = vmatpush1.bf16.msra.mxu0 %v1526
        %1847 = vmatprep.subr.bf16.mxu0 %v1529
        %1848 = vmatpush1.bf16.msra.mxu0 %v1528
        %1849 = vmatprep.subr.bf16.mxu0 %v1531
        %1850 = vmatpush1.bf16.msra.mxu0 %v1530
        %1851 = vmatprep.subr.bf16.mxu0 %v1533
        %1852 = vmatpush1.bf16.msra.mxu0 %v1532
        %1853 = vmatprep.subr.bf16.mxu0 %v1535
        %1854 = vmatpush1.bf16.msra.mxu0 %v1534
        %1855 = vmatprep.subr.bf16.mxu0 %v1537
        %1856 = vmatpush1.bf16.msra.mxu0 %v1536
        %1857 = vmatprep.subr.bf16.mxu0 %v1539
        %1858 = vmatpush1.bf16.msra.mxu0 %v1538
        %1859 = vmatprep.subr.bf16.mxu0 %v1541
        %1860 = vmatpush1.bf16.msra.mxu0 %v1540
        %1861 = vmatprep.subr.bf16.mxu0 %v1543
        %1862 = vmatpush1.bf16.msra.mxu0 %v1542
        %1863 = vmatprep.mubr.bf16.mxu0 %v1007
        %1864 = vmatmul.mubr.bf16.gmra.mrb[0].mxu0 %v1006
        %v1865 = vpop.f32.mrb[0].mxu0
        %v1866 = vadd.f32 %v1813, %v1865
        %v1867 = vpop.f32.mrb[0].mxu0
        %v1868 = vadd.f32 %v1815, %v1867
        %v1869 = vpop.f32.mrb[0].mxu0
        %v1870 = vadd.f32 %v1817, %v1869
        %v1871 = vpop.f32.mrb[0].mxu0
        %v1872 = vadd.f32 %v1819, %v1871
        %1873 = vmatprep.mubr.bf16.mxu0 %v1015
        %1874 = vmatmul.mubr.bf16.gmra.mrb[0].mxu0 %v1014
        %v1875 = vpop.f32.mrb[0].mxu0
        %v1876 = vadd.f32 %v1823, %v1875
        %v1877 = vpop.f32.mrb[0].mxu0
        %v1878 = vadd.f32 %v1825, %v1877
        %v1879 = vpop.f32.mrb[0].mxu0
        %v1880 = vadd.f32 %v1827, %v1879
        %v1881 = vpop.f32.mrb[0].mxu0
        %v1882 = vadd.f32 %v1829, %v1881
        %1883 = vdwg.mxu0
        %v1884 = vadd.f32 %v800, %v1866
        %v1885 = vadd.f32 %v801, %v1868
        %v1886 = vadd.f32 %v802, %v1870
        %v1887 = vadd.f32 %v803, %v1872
        %v1888 = vadd.f32 %v804, %v1876
        %v1889 = vadd.f32 %v805, %v1878
        %v1890 = vadd.f32 %v806, %v1880
        %v1891 = vadd.f32 %v807, %v1882
        %1892 = vst [vmem:[#allocation2] sm:$0xff] %v1884
        %1893 = vst [vmem:[#allocation2 + $0x8] sm:$0xff] %v1885
        %1894 = vst [vmem:[#allocation2 + $0x10] sm:$0xff] %v1886
        %1895 = vst [vmem:[#allocation2 + $0x18] sm:$0xff] %v1887
        %1896 = vst [vmem:[#allocation2 + $0x20] sm:$0xff] %v1888
        %1897 = vst [vmem:[#allocation2 + $0x28] sm:$0xff] %v1889
        %1898 = vst [vmem:[#allocation2 + $0x30] sm:$0xff] %v1890
        %1899 = vst [vmem:[#allocation2 + $0x38] sm:$0xff] %v1891
        %p1900 = scmp.eq.s32.totalorder %s20, 3
        // Predicated region
        $region94: #{discriminator_forward.8} parent=80 // pred_check
          %p1901 = pneg %p1900
        $region95: #{discriminator_forward.8} parent=80 // pred_check_branch
          %1903 = sbr.rel (%p1901) target = $region97
        $region96: #{discriminator_forward.8} parent=80 // pred_region
          %v1904 = vld [vmem:[#allocation2] sm:$0xff]
          %v1905 = vld [vmem:[#allocation2 + $0x8] sm:$0xff]
          %v1906 = vld [vmem:[#allocation2 + $0x10] sm:$0xff]
          %v1907 = vld [vmem:[#allocation2 + $0x18] sm:$0xff]
          %v1908 = vld [vmem:[#allocation2 + $0x20] sm:$0xff]
          %v1909 = vld [vmem:[#allocation2 + $0x28] sm:$0xff]
          %v1910 = vld [vmem:[#allocation2 + $0x30] sm:$0xff]
          %v1911 = vld [vmem:[#allocation2 + $0x38] sm:$0xff]
          %vm1912 = vcmp.ge.f32.partialorder %v1904, 0.0
          %vm1913 = vcmp.ge.f32.partialorder %v1905, 0.0
          %vm1914 = vcmp.ge.f32.partialorder %v1906, 0.0
          %vm1915 = vcmp.ge.f32.partialorder %v1907, 0.0
          %vm1916 = vcmp.ge.f32.partialorder %v1908, 0.0
          %vm1917 = vcmp.ge.f32.partialorder %v1909, 0.0
          %vm1918 = vcmp.ge.f32.partialorder %v1910, 0.0
          %vm1919 = vcmp.ge.f32.partialorder %v1911, 0.0
          %v1920 = vmul.f32 %v1904, 0.2
          %v1921 = vmul.f32 %v1905, 0.2
          %v1922 = vmul.f32 %v1906, 0.2
          %v1923 = vmul.f32 %v1907, 0.2
          %v1924 = vmul.f32 %v1908, 0.2
          %v1925 = vmul.f32 %v1909, 0.2
          %v1926 = vmul.f32 %v1910, 0.2
          %v1927 = vmul.f32 %v1911, 0.2
          %v1928 = vsel %vm1912, %v1904, %v1920
          %v1929 = vsel %vm1913, %v1905, %v1921
          %v1930 = vsel %vm1914, %v1906, %v1922
          %v1931 = vsel %vm1915, %v1907, %v1923
          %v1932 = vsel %vm1916, %v1908, %v1924
          %v1933 = vsel %vm1917, %v1909, %v1925
          %v1934 = vsel %vm1918, %v1910, %v1926
          %v1935 = vsel %vm1919, %v1911, %v1927
          %v1936 = vpack.c.bf16 %v1930, %v1928
          %v1937 = vpack.c.bf16 %v1931, %v1929
          %v1938 = vpack.c.bf16 %v1934, %v1932
          %v1939 = vpack.c.bf16 %v1935, %v1933
          %v1944 = vunpack.c.l.b16 %v1936
          %v1945 = vunpack.c.l.b16 %v1937
          %v1946 = vunpack.c.h.b16 %v1936
          %v1947 = vunpack.c.h.b16 %v1937
          %v1948 = vunpack.c.l.b16 %v1938
          %v1949 = vunpack.c.l.b16 %v1939
          %v1950 = vunpack.c.h.b16 %v1938
          %v1951 = vunpack.c.h.b16 %v1939
          %v1952 = vpack.c.b16 %v1945, %v1944
          %v1953 = vpack.c.b16 %v1947, %v1946
          %v1954 = vpack.c.b16 %v1949, %v1948
          %v1955 = vpack.c.b16 %v1951, %v1950
          %1960 = vst [vmem:[%s781] sm:$0xff] %v1952
          %1961 = vst [vmem:[%s781 + $0x8] sm:$0xff] %v1953
          %1962 = vst [vmem:[%s781 + $0x10] sm:$0xff] %v1954
          %1963 = vst [vmem:[%s781 + $0x18] sm:$0xff] %v1955
        $region97: #{discriminator_forward.8} parent=80 // pred_fallthru
          _
        %s1964 = sand.u32 %s98, 1
        %s1965 = sand.u32 %s98, 1
        %s1966 = smul.addr %s1965, 32
        %s1967 = scalar_lea.vmem [#allocation5], %s1966
        // Predicated region
        $region98: #{discriminator_forward.8} parent=80 // pred_check
          %p1968 = pneg %p108
        $region99: #{discriminator_forward.8} parent=80 // pred_check_branch
          %1970 = sbr.rel (%p1968) target = $region101
        $region100: #{discriminator_forward.8} parent=80 // pred_region
          %s1971 = smul.u32 4, %s18
          %s1972 = smul.u32 2, %s19
          %s1973 = smul.addr %s1971, 4
          %s1974 = sadd.s32 %s1972, %s1973
          %s1975 = smul.addr %s1974, 4
          %s1976 = scalar_lea.vmem %s2, %s1975
          // Predicated region
          $region102: #{discriminator_forward.8} parent=100 // pred_check
            _
          $region103: #{discriminator_forward.8} parent=100 // pred_check_branch
            %1978 = sbr.rel (0) target = $region105
          $region104: #{discriminator_forward.8} parent=100 // pred_region
            // Predicated region
            $region106: #{discriminator_forward.8} parent=104 // pred_check
              _
            $region107: #{discriminator_forward.8} parent=104 // pred_check_branch
              %1980 = sbr.rel (0) target = $region109
            $region108: #{discriminator_forward.8} parent=104 // pred_region
              // Predicated region
              $region121: #{discriminator_forward.8} parent=108 // pred_check
                _
              $region122: #{discriminator_forward.8} parent=108 // pred_check_branch
                %2001 = sbr.rel (0) target = $region124
              $region123: #{discriminator_forward.8} parent=108 // pred_region
                loop: start=0, step=1, limit=1
                $region125: #{discriminator_forward.8} parent=123 // loop_pre_header
                  _
                $region126: #{discriminator_forward.8} parent=123 // loop_header
                  %s2003 = sphi 0, %s2007
                  %p2004 = scmp.ge.s32.totalorder %s2003, 1
                  %s2008 = sphi %s1967, %s1967
                  %s2009 = sphi %s1976, %s1976
                $region127: #{discriminator_forward.8} parent=123 // loop_header_branch
                  %2006 = sbr.rel (%p2004) target = $region131
                $region128: #{discriminator_forward.8} parent=123 // loop_body
                  %v2010 = vld [vmem:[%s2008] sm:$0xff]
                  %2011 = vst [vmem:[%s2009] sm:$0xff] %v2010
                  %v2012 = vld [vmem:[%s2008 + $0x8] sm:$0xff]
                  %2013 = vst [vmem:[%s2009 + $0x10] sm:$0xff] %v2012
                  %v2014 = vld [vmem:[%s2008 + $0x10] sm:$0xff]
                  %2015 = vst [vmem:[%s2009 + $0x20] sm:$0xff] %v2014
                  %v2016 = vld [vmem:[%s2008 + $0x18] sm:$0xff]
                  %2017 = vst [vmem:[%s2009 + $0x30] sm:$0xff] %v2016
                $region129: #{discriminator_forward.8} parent=123 // loop_footer
                  %s2007 = sadd.s32 1, %s2003
                $region130: #{discriminator_forward.8} parent=123 // loop_footer_branch
                  %2002 = sbr.rel target = $region126
                $region131: #{discriminator_forward.8} parent=123 // loop_exit
                  _
              $region124: #{discriminator_forward.8} parent=108 // pred_fallthru
                _
              // Predicated region
              $region132: #{discriminator_forward.8} parent=108 // pred_check
                _
              $region133: #{discriminator_forward.8} parent=108 // pred_check_branch
                %2019 = sbr.rel target = $region135
              $region134: #{discriminator_forward.8} parent=108 // pred_region
                _
              $region135: #{discriminator_forward.8} parent=108 // pred_fallthru
                _
            $region109: #{discriminator_forward.8} parent=104 // pred_fallthru
              _
            // Predicated region
            $region110: #{discriminator_forward.8} parent=104 // pred_check
              _
            $region111: #{discriminator_forward.8} parent=104 // pred_check_branch
              %1982 = sbr.rel target = $region113
            $region112: #{discriminator_forward.8} parent=104 // pred_region
              loop: start=0, step=1, limit=1
              $region114: #{discriminator_forward.8} parent=112 // loop_pre_header
                _
              $region115: #{discriminator_forward.8} parent=112 // loop_header
                %s1985 = sphi 0, %s1989
                %p1986 = scmp.ge.s32.totalorder %s1985, 1
                %s1990 = sphi %s1967, %s1967
                %s1991 = sphi %s1976, %s1976
              $region116: #{discriminator_forward.8} parent=112 // loop_header_branch
                %1988 = sbr.rel (%p1986) target = $region120
              $region117: #{discriminator_forward.8} parent=112 // loop_body
                %v1992 = vld [vmem:[%s1990] sm:$0xff]
                %1993 = vst [vmem:[%s1991] sm:$0xff] %v1992
                %v1994 = vld [vmem:[%s1990 + $0x8] sm:$0xff]
                %1995 = vst [vmem:[%s1991 + $0x10] sm:$0xff] %v1994
                %v1996 = vld [vmem:[%s1990 + $0x10] sm:$0xff]
                %1997 = vst [vmem:[%s1991 + $0x20] sm:$0xff] %v1996
                %v1998 = vld [vmem:[%s1990 + $0x18] sm:$0xff]
                %1999 = vst [vmem:[%s1991 + $0x30] sm:$0xff] %v1998
              $region118: #{discriminator_forward.8} parent=112 // loop_footer
                %s1989 = sadd.s32 1, %s1985
              $region119: #{discriminator_forward.8} parent=112 // loop_footer_branch
                %1984 = sbr.rel target = $region115
              $region120: #{discriminator_forward.8} parent=112 // loop_exit
                _
            $region113: #{discriminator_forward.8} parent=104 // pred_fallthru
              _
          $region105: #{discriminator_forward.8} parent=100 // pred_fallthru
            _
          %2020 = vnop
        $region101: #{discriminator_forward.8} parent=80 // pred_fallthru
          _
      $region81: #{discriminator_forward.8} parent=5 // pred_fallthru
        _
      %p2021 = scmp.le.s32.totalorder 2, %s8
      // Predicated region
      $region136: #{discriminator_forward.8} parent=5 // pred_check
        %p2022 = pneg %p2021
      $region137: #{discriminator_forward.8} parent=5 // pred_check_branch
        %2024 = sbr.rel (%p2022) target = $region139
      $region138: #{discriminator_forward.8} parent=5 // pred_region
        %s2025 = ssub.s32 %s8, 2
        // Predicated region
        $region140: #{discriminator_forward.8} parent=138 // pred_check
          %p2026 = pneg %p114
        $region141: #{discriminator_forward.8} parent=138 // pred_check_branch
          %2028 = sbr.rel (%p2026) target = $region143
        $region142: #{discriminator_forward.8} parent=138 // pred_region
          %s2029 = sand.u32 %s99, 1
          %s2030 = sand.u32 %s99, 1
          %s2031 = smul.addr %s2030, 32
          %s2032 = scalar_lea.vmem [#allocation5], %s2031
        $region143: #{discriminator_forward.8} parent=138 // pred_fallthru
          _
      $region139: #{discriminator_forward.8} parent=5 // pred_fallthru
        _
    $region6: #{discriminator_forward.8} parent=1 // loop_footer
      %s12 = sadd.s32 1, %s8
    $region7: #{discriminator_forward.8} parent=1 // loop_footer_branch
      %7 = sbr.rel target = $region3
    $region8: #{discriminator_forward.8} parent=1 // loop_exit
      _

// kernel: discriminator_forward.9
$region0: #{discriminator_forward.9}
  #allocation0 [shape = 'u32[]', space=smem, size = 0x4, offset = 0x4, fixed_abs, tag = 'smem constant byte address 0x4 - core index']
  #allocation1 [shape = 'u32[144,128]{1,0:T(1,128)}', space=vmem, size = 0x12000, scoped, tag = 'internal scratch']
  #allocation2 [shape = 'f32[16,128]{1,0:T(8,128)}', space=vmem, size = 0x2000, scoped, tag = 'scratch operand']
  %s0 = inlined_call_operand.vmem [shape: bf16[16,8192], index: 0, kind: input, shape index: {}]
  %s1 = inlined_call_operand.vmem [shape: bf16[8192,128], index: 1, kind: input, shape index: {}]
  %s2 = inlined_call_operand.vmem [shape: f32[16,128], index: 2, kind: output, shape index: {}]
  %s3 = sld [smem:[#allocation0]]
  $region72: #{discriminator_forward.9} parent=0
    _
  %s5 = ssub.s32 1, %s3
  %s6 = scalar_select 0, %s5, %s3
  $region1: #{discriminator_forward.9} parent=0
    #allocation3 [shape = 'u8[65536]{0}', space=vmem, size = 0x10000, scoped, tag = 'input window, operand 0']
    loop: start=0, step=1, limit=10
    $region2: #{discriminator_forward.9} parent=1 // loop_pre_header
      _
    $region3: #{discriminator_forward.9} parent=1 // loop_header
      %s8 = sphi 0, %s12
      %p9 = scmp.ge.s32.totalorder %s8, 10
      %s15 = sphi 0, %s34
      %s16 = sphi 0, %s30
      %s17 = sphi 0, %s26
      %s18 = sphi 0, %s15
      %s19 = sphi 0, %s16
      %s20 = sphi 0, %s17
      %s21 = sphi 0, %s18
      %s22 = sphi 0, %s19
      %s23 = sphi 0, %s20
      %s39 = sphi 0, %s41
      %s42 = sphi 0, %s39
      %s43 = sphi 0, %s42
      %s59 = sphi 0, %s43
      %s67 = sphi 0, %s69
      %s70 = sphi 0, %s67
      %s71 = sphi 0, %s70
      %s87 = sphi 0, %s71
      %s95 = sphi 0, %s97
      %s98 = sphi 0, %s95
      %s99 = sphi 0, %s98
      %s115 = sphi 0, %s99
    $region4: #{discriminator_forward.9} parent=1 // loop_header_branch
      %11 = sbr.rel (%p9) target = $region8
    $region5: #{discriminator_forward.9} parent=1 // loop_body
      %s13 = ssub.s32 %s8, 1
      %s14 = ssub.s32 %s8, 2
      %s24 = sadd.s32 1, %s17
      %p25 = scmp.ge.s32.totalorder %s24, 8
      %s26 = scalar_select %p25, 0, %s24
      %s27 = sadd.s32 1, %s16
      %s28 = scalar_select %p25, %s27, %s16
      %p29 = scmp.ge.s32.totalorder %s28, 1
      %s30 = scalar_select %p29, 0, %s28
      %s31 = sadd.s32 1, %s15
      %s32 = scalar_select %p29, %s31, %s15
      %p33 = scmp.ge.s32.totalorder %s32, 1
      %s34 = scalar_select %p33, 0, %s32
      %s35 = ssub.s32 %s15, %s34
      %s36 = ssub.s32 %s17, %s26
      %s37 = sor.u32 %s35, %s36
      %p38 = scmp.eq.s32.totalorder %s37, 0
      %s40 = sadd.s32 %s39, 1
      %s41 = scalar_select %p38, %s39, %s40
      %p44 = pneg %p38
      %p45 = scmp.eq.s32.totalorder %s8, 7
      %p46 = por %p44, %p45
      %p47 = scmp.ne.s32.totalorder %s39, %s42
      %p48 = scmp.eq.s32.totalorder %s8, 0
      %p49 = por %p47, %p48
      %p50 = scmp.ne.s32.totalorder %s39, %s42
      %p51 = scmp.eq.s32.totalorder %s13, 7
      %p52 = por %p50, %p51
      %p53 = scmp.ne.s32.totalorder %s42, %s43
      %p54 = scmp.eq.s32.totalorder %s13, 0
      %p55 = por %p53, %p54
      %p56 = scmp.ne.s32.totalorder %s42, %s43
      %p57 = scmp.eq.s32.totalorder %s14, 7
      %p58 = por %p56, %p57
      %p60 = scmp.ne.s32.totalorder %s43, %s59
      %p61 = scmp.eq.s32.totalorder %s14, 0
      %p62 = por %p60, %p61
      %s63 = ssub.s32 %s17, %s26
      %s64 = ssub.s32 %s16, %s30
      %s65 = sor.u32 %s63, %s64
      %p66 = scmp.eq.s32.totalorder %s65, 0
      %s68 = sadd.s32 %s67, 1
      %s69 = scalar_select %p66, %s67, %s68
      %p72 = pneg %p66
      %p73 = scmp.eq.s32.totalorder %s8, 7
      %p74 = por %p72, %p73
      %p75 = scmp.ne.s32.totalorder %s67, %s70
      %p76 = scmp.eq.s32.totalorder %s8, 0
      %p77 = por %p75, %p76
      %p78 = scmp.ne.s32.totalorder %s67, %s70
      %p79 = scmp.eq.s32.totalorder %s13, 7
      %p80 = por %p78, %p79
      %p81 = scmp.ne.s32.totalorder %s70, %s71
      %p82 = scmp.eq.s32.totalorder %s13, 0
      %p83 = por %p81, %p82
      %p84 = scmp.ne.s32.totalorder %s70, %s71
      %p85 = scmp.eq.s32.totalorder %s14, 7
      %p86 = por %p84, %p85
      %p88 = scmp.ne.s32.totalorder %s71, %s87
      %p89 = scmp.eq.s32.totalorder %s14, 0
      %p90 = por %p88, %p89
      %s91 = ssub.s32 %s15, %s34
      %s92 = ssub.s32 %s16, %s30
      %s93 = sor.u32 %s91, %s92
      %p94 = scmp.eq.s32.totalorder %s93, 0
      %s96 = sadd.s32 %s95, 1
      %s97 = scalar_select %p94, %s95, %s96
      %p100 = pneg %p94
      %p101 = scmp.eq.s32.totalorder %s8, 7
      %p102 = por %p100, %p101
      %p103 = scmp.ne.s32.totalorder %s95, %s98
      %p104 = scmp.eq.s32.totalorder %s8, 0
      %p105 = por %p103, %p104
      %p106 = scmp.ne.s32.totalorder %s95, %s98
      %p107 = scmp.eq.s32.totalorder %s13, 7
      %p108 = por %p106, %p107
      %p109 = scmp.ne.s32.totalorder %s98, %s99
      %p110 = scmp.eq.s32.totalorder %s13, 0
      %p111 = por %p109, %p110
      %p112 = scmp.ne.s32.totalorder %s98, %s99
      %p113 = scmp.eq.s32.totalorder %s14, 7
      %p114 = por %p112, %p113
      %p116 = scmp.ne.s32.totalorder %s99, %s115
      %p117 = scmp.eq.s32.totalorder %s14, 0
      %p118 = por %p116, %p117
      %p119 = scmp.le.s32.totalorder 1, %s8
      %p120 = scmp.lt.s32.totalorder %s8, 9
      %p121 = pnand %p119, %p120
      %p122 = pneg %p121
      // Predicated region
      $region9: #{discriminator_forward.9} parent=5 // pred_check
        _
      $region10: #{discriminator_forward.9} parent=5 // pred_check_branch
        %124 = sbr.rel (%p121) target = $region12
      $region11: #{discriminator_forward.9} parent=5 // pred_region
        %s125 = ssub.s32 %s8, 1
      $region12: #{discriminator_forward.9} parent=5 // pred_fallthru
        _
      %p126 = scmp.lt.s32.totalorder %s8, 8
      // Predicated region
      $region13: #{discriminator_forward.9} parent=5 // pred_check
        %p127 = pneg %p126
      $region14: #{discriminator_forward.9} parent=5 // pred_check_branch
        %129 = sbr.rel (%p127) target = $region16
      $region15: #{discriminator_forward.9} parent=5 // pred_region
        // Predicated region
        $region17: #{discriminator_forward.9} parent=15 // pred_check
          %p130 = pneg %p49
        $region18: #{discriminator_forward.9} parent=15 // pred_check_branch
          %132 = sbr.rel (%p130) target = $region20
        $region19: #{discriminator_forward.9} parent=15 // pred_region
          %s133 = sand.u32 %s39, 1
          %s134 = sand.u32 %s39, 1
          %s135 = smul.addr %s134, 64
          %s136 = scalar_lea.vmem [#allocation3], %s135
          %s137 = smul.u32 2, %s15
          %s138 = smul.u32 8, %s17
          %s139 = smul.addr %s137, 64
          %s140 = sadd.s32 %s138, %s139
          %s141 = smul.addr %s140, 4
          %s142 = scalar_lea.vmem %s0, %s141
          // Predicated region
          $region21: #{discriminator_forward.9} parent=19 // pred_check
            _
          $region22: #{discriminator_forward.9} parent=19 // pred_check_branch
            %144 = sbr.rel (0) target = $region24
          $region23: #{discriminator_forward.9} parent=19 // pred_region
            // Predicated region
            $region25: #{discriminator_forward.9} parent=23 // pred_check
              _
            $region26: #{discriminator_forward.9} parent=23 // pred_check_branch
              %146 = sbr.rel (0) target = $region28
            $region27: #{discriminator_forward.9} parent=23 // pred_region
              loop: start=0, step=1, limit=1
              $region29: #{discriminator_forward.9} parent=27 // loop_pre_header
                _
              $region30: #{discriminator_forward.9} parent=27 // loop_header
                %s148 = sphi 0, %s152
                %p149 = scmp.ge.s32.totalorder %s148, 1
                %s153 = sphi %s142, %s142
                %s154 = sphi %s136, %s136
              $region31: #{discriminator_forward.9} parent=27 // loop_header_branch
                %151 = sbr.rel (%p149) target = $region35
              $region32: #{discriminator_forward.9} parent=27 // loop_body
                %v155 = vld [vmem:[%s153] sm:$0xff]
                %156 = vst [vmem:[%s154] sm:$0xff] %v155
                %v157 = vld [vmem:[%s153 + $0x8] sm:$0xff]
                %158 = vst [vmem:[%s154 + $0x8] sm:$0xff] %v157
                %v159 = vld [vmem:[%s153 + $0x10] sm:$0xff]
                %160 = vst [vmem:[%s154 + $0x10] sm:$0xff] %v159
                %v161 = vld [vmem:[%s153 + $0x18] sm:$0xff]
                %162 = vst [vmem:[%s154 + $0x18] sm:$0xff] %v161
                %v163 = vld [vmem:[%s153 + $0x100] sm:$0xff]
                %164 = vst [vmem:[%s154 + $0x20] sm:$0xff] %v163
                %v165 = vld [vmem:[%s153 + $0x108] sm:$0xff]
                %166 = vst [vmem:[%s154 + $0x28] sm:$0xff] %v165
                %v167 = vld [vmem:[%s153 + $0x110] sm:$0xff]
                %168 = vst [vmem:[%s154 + $0x30] sm:$0xff] %v167
                %v169 = vld [vmem:[%s153 + $0x118] sm:$0xff]
                %170 = vst [vmem:[%s154 + $0x38] sm:$0xff] %v169
              $region33: #{discriminator_forward.9} parent=27 // loop_footer
                %s152 = sadd.s32 1, %s148
              $region34: #{discriminator_forward.9} parent=27 // loop_footer_branch
                %147 = sbr.rel target = $region30
              $region35: #{discriminator_forward.9} parent=27 // loop_exit
                _
            $region28: #{discriminator_forward.9} parent=23 // pred_fallthru
              _
            // Predicated region
            $region36: #{discriminator_forward.9} parent=23 // pred_check
              _
            $region37: #{discriminator_forward.9} parent=23 // pred_check_branch
              %172 = sbr.rel target = $region39
            $region38: #{discriminator_forward.9} parent=23 // pred_region
              _
            $region39: #{discriminator_forward.9} parent=23 // pred_fallthru
              _
          $region24: #{discriminator_forward.9} parent=19 // pred_fallthru
            _
          %173 = vnop
        $region20: #{discriminator_forward.9} parent=15 // pred_fallthru
          _
        // Predicated region
        $region40: #{discriminator_forward.9} parent=15 // pred_check
          %p174 = pneg %p77
        $region41: #{discriminator_forward.9} parent=15 // pred_check_branch
          %176 = sbr.rel (%p174) target = $region43
        $region42: #{discriminator_forward.9} parent=15 // pred_region
          %s177 = smul.u32 128, %s17
          %p178 = scmp.lt.s32.totalorder %s177, 1023
          %s179 = scalar_select %p178, %s177, 1023
          %p180 = scmp.lt.s32.totalorder %s16, 0
          %s181 = scalar_select %p180, %s16, 0
          %s182 = sadd.s32 %s181, %s179
          %s183 = smul.addr %s182, 4
          %s184 = scalar_lea.vmem %s1, %s183
          %s185 = smul.u32 128, %s17
        $region43: #{discriminator_forward.9} parent=15 // pred_fallthru
          _
      $region16: #{discriminator_forward.9} parent=5 // pred_fallthru
        _
      %p186 = scmp.le.s32.totalorder 1, %s8
      %p187 = scmp.lt.s32.totalorder %s8, 9
      %p188 = pnand %p186, %p187
      %p189 = pneg %p188
      // Predicated region
      $region44: #{discriminator_forward.9} parent=5 // pred_check
        _
      $region45: #{discriminator_forward.9} parent=5 // pred_check_branch
        %191 = sbr.rel (%p188) target = $region47
      $region46: #{discriminator_forward.9} parent=5 // pred_region
        %s192 = ssub.s32 %s8, 1
        %s193 = sand.u32 %s42, 1
        %s194 = sand.u32 %s42, 1
        %s195 = smul.addr %s194, 64
        %s196 = scalar_lea.vmem [#allocation3], %s195
        // Predicated region
        $region48: #{discriminator_forward.9} parent=46 // pred_check
          %p197 = pneg %p55
        $region49: #{discriminator_forward.9} parent=46 // pred_check_branch
          %199 = sbr.rel (%p197) target = $region51
        $region50: #{discriminator_forward.9} parent=46 // pred_region
          _
        $region51: #{discriminator_forward.9} parent=46 // pred_fallthru
          _
        %s200 = sand.u32 %s42, 1
        %s201 = sand.u32 %s42, 1
        %s202 = smul.addr %s201, 64
        %s203 = scalar_lea.vmem [#allocation3], %s202
        %p204 = pneg %p55
        %p205 = pneg %p52
        %s206 = smul.u32 128, %s20
        %p207 = scmp.lt.s32.totalorder %s206, 1023
        %s208 = scalar_select %p207, %s206, 1023
        %p209 = scmp.lt.s32.totalorder %s19, 0
        %s210 = scalar_select %p209, %s19, 0
        %s211 = sadd.s32 %s210, %s208
        %s212 = smul.addr %s211, 4
        %s213 = scalar_lea.vmem %s1, %s212
        %p214 = pneg %p83
        %p215 = pneg %p80
        %p216 = pneg %p111
        %p217 = pneg %p108
        %s218 = smul.u32 2, %s18
        %p219 = scmp.lt.s32.totalorder %s218, 1
        %s220 = scalar_select %p219, %s218, 1
        %p221 = scmp.lt.s32.totalorder %s19, 0
        %s222 = scalar_select %p221, %s19, 0
        %s223 = sadd.s32 %s222, %s220
        %s224 = smul.addr %s223, 8
        %s225 = scalar_lea.vmem %s2, %s224
        %s226 = smul.u32 2, %s18
        %s227 = smul.u32 8, %s20
        %s228 = smul.u32 128, %s20
        %p229 = scmp.lt.s32.totalorder %s228, 1023
        %s230 = scalar_select %p229, %s228, 1023
        %p231 = scmp.lt.s32.totalorder %s19, 0
        %s232 = scalar_select %p231, %s19, 0
        %s233 = sadd.s32 %s232, %s230
        %s234 = smul.addr %s233, 4
        %s235 = scalar_lea.vmem %s1, %s234
        %s236 = smul.u32 128, %s20
        %s237 = smul.u32 2, %s18
        %p238 = scmp.lt.s32.totalorder %s237, 1
        %s239 = scalar_select %p238, %s237, 1
        %p240 = scmp.lt.s32.totalorder %s19, 0
        %s241 = scalar_select %p240, %s19, 0
        %s242 = sadd.s32 %s241, %s239
        %s243 = smul.addr %s242, 8
        %s244 = scalar_lea.vmem %s2, %s243
        %s245 = smul.u32 2, %s18
        %p247 = scmp.eq.s32.totalorder %s20, 0
        // Predicated region
        $region52: #{discriminator_forward.9} parent=46 // pred_check
          %p248 = pneg %p247
        $region53: #{discriminator_forward.9} parent=46 // pred_check_branch
          %250 = sbr.rel (%p248) target = $region55
        $region54: #{discriminator_forward.9} parent=46 // pred_region
          %251 = vst [vmem:[#allocation2] sm:$0xff] 0.0
          %252 = vst [vmem:[#allocation2 + $0x8] sm:$0xff] 0.0
        $region55: #{discriminator_forward.9} parent=46 // pred_fallthru
          _
        %v253 = vld [vmem:[#allocation2] sm:$0xff]
        %v254 = vld [vmem:[#allocation2 + $0x8] sm:$0xff]
        %v255 = vld [vmem:[%s196] sm:$0xff]
        %v256 = vld [vmem:[%s196 + $0x8] sm:$0xff]
        %v257 = vld [vmem:[%s196 + $0x10] sm:$0xff]
        %v258 = vld [vmem:[%s196 + $0x18] sm:$0xff]
        %v259 = vld [vmem:[%s196 + $0x20] sm:$0xff]
        %v260 = vld [vmem:[%s196 + $0x28] sm:$0xff]
        %v261 = vld [vmem:[%s196 + $0x30] sm:$0xff]
        %v262 = vld [vmem:[%s196 + $0x38] sm:$0xff]
        %v263 = vld [vmem:[%s235] sm:$0xf]
        %v264 = vld [vmem:[%s235 + $0x4] sm:$0xf]
        %v265 = vld [vmem:[%s235 + $0x8] sm:$0xf]
        %v266 = vld [vmem:[%s235 + $0xc] sm:$0xf]
        %v267 = vld [vmem:[%s235 + $0x10] sm:$0xf]
        %v268 = vld [vmem:[%s235 + $0x14] sm:$0xf]
        %v269 = vld [vmem:[%s235 + $0x18] sm:$0xf]
        %v270 = vld [vmem:[%s235 + $0x1c] sm:$0xf]
        %v271 = vld [vmem:[%s235 + $0x20] sm:$0xf]
        %v272 = vld [vmem:[%s235 + $0x24] sm:$0xf]
        %v273 = vld [vmem:[%s235 + $0x28] sm:$0xf]
        %v274 = vld [vmem:[%s235 + $0x2c] sm:$0xf]
        %v275 = vld [vmem:[%s235 + $0x30] sm:$0xf]
        %v276 = vld [vmem:[%s235 + $0x34] sm:$0xf]
        %v277 = vld [vmem:[%s235 + $0x38] sm:$0xf]
        %v278 = vld [vmem:[%s235 + $0x3c] sm:$0xf]
        %v279 = vld [vmem:[%s235 + $0x40] sm:$0xf]
        %v280 = vld [vmem:[%s235 + $0x44] sm:$0xf]
        %v281 = vld [vmem:[%s235 + $0x48] sm:$0xf]
        %v282 = vld [vmem:[%s235 + $0x4c] sm:$0xf]
        %v283 = vld [vmem:[%s235 + $0x50] sm:$0xf]
        %v284 = vld [vmem:[%s235 + $0x54] sm:$0xf]
        %v285 = vld [vmem:[%s235 + $0x58] sm:$0xf]
        %v286 = vld [vmem:[%s235 + $0x5c] sm:$0xf]
        %v287 = vld [vmem:[%s235 + $0x60] sm:$0xf]
        %v288 = vld [vmem:[%s235 + $0x64] sm:$0xf]
        %v289 = vld [vmem:[%s235 + $0x68] sm:$0xf]
        %v290 = vld [vmem:[%s235 + $0x6c] sm:$0xf]
        %v291 = vld [vmem:[%s235 + $0x70] sm:$0xf]
        %v292 = vld [vmem:[%s235 + $0x74] sm:$0xf]
        %v293 = vld [vmem:[%s235 + $0x78] sm:$0xf]
        %v294 = vld [vmem:[%s235 + $0x7c] sm:$0xf]
        %v295 = vld [vmem:[%s235 + $0x80] sm:$0xf]
        %v296 = vld [vmem:[%s235 + $0x84] sm:$0xf]
        %v297 = vld [vmem:[%s235 + $0x88] sm:$0xf]
        %v298 = vld [vmem:[%s235 + $0x8c] sm:$0xf]
        %v299 = vld [vmem:[%s235 + $0x90] sm:$0xf]
        %v300 = vld [vmem:[%s235 + $0x94] sm:$0xf]
        %v301 = vld [vmem:[%s235 + $0x98] sm:$0xf]
        %v302 = vld [vmem:[%s235 + $0x9c] sm:$0xf]
        %v303 = vld [vmem:[%s235 + $0xa0] sm:$0xf]
        %v304 = vld [vmem:[%s235 + $0xa4] sm:$0xf]
        %v305 = vld [vmem:[%s235 + $0xa8] sm:$0xf]
        %v306 = vld [vmem:[%s235 + $0xac] sm:$0xf]
        %v307 = vld [vmem:[%s235 + $0xb0] sm:$0xf]
        %v308 = vld [vmem:[%s235 + $0xb4] sm:$0xf]
        %v309 = vld [vmem:[%s235 + $0xb8] sm:$0xf]
        %v310 = vld [vmem:[%s235 + $0xbc] sm:$0xf]
        %v311 = vld [vmem:[%s235 + $0xc0] sm:$0xf]
        %v312 = vld [vmem:[%s235 + $0xc4] sm:$0xf]
        %v313 = vld [vmem:[%s235 + $0xc8] sm:$0xf]
        %v314 = vld [vmem:[%s235 + $0xcc] sm:$0xf]
        %v315 = vld [vmem:[%s235 + $0xd0] sm:$0xf]
        %v316 = vld [vmem:[%s235 + $0xd4] sm:$0xf]
        %v317 = vld [vmem:[%s235 + $0xd8] sm:$0xf]
        %v318 = vld [vmem:[%s235 + $0xdc] sm:$0xf]
        %v319 = vld [vmem:[%s235 + $0xe0] sm:$0xf]
        %v320 = vld [vmem:[%s235 + $0xe4] sm:$0xf]
        %v321 = vld [vmem:[%s235 + $0xe8] sm:$0xf]
        %v322 = vld [vmem:[%s235 + $0xec] sm:$0xf]
        %v323 = vld [vmem:[%s235 + $0xf0] sm:$0xf]
        %v324 = vld [vmem:[%s235 + $0xf4] sm:$0xf]
        %v325 = vld [vmem:[%s235 + $0xf8] sm:$0xf]
        %v326 = vld [vmem:[%s235 + $0xfc] sm:$0xf]
        %v327 = vld [vmem:[%s235 + $0x100] sm:$0xf]
        %v328 = vld [vmem:[%s235 + $0x104] sm:$0xf]
        %v329 = vld [vmem:[%s235 + $0x108] sm:$0xf]
        %v330 = vld [vmem:[%s235 + $0x10c] sm:$0xf]
        %v331 = vld [vmem:[%s235 + $0x110] sm:$0xf]
        %v332 = vld [vmem:[%s235 + $0x114] sm:$0xf]
        %v333 = vld [vmem:[%s235 + $0x118] sm:$0xf]
        %v334 = vld [vmem:[%s235 + $0x11c] sm:$0xf]
        %v335 = vld [vmem:[%s235 + $0x120] sm:$0xf]
        %v336 = vld [vmem:[%s235 + $0x124] sm:$0xf]
        %v337 = vld [vmem:[%s235 + $0x128] sm:$0xf]
        %v338 = vld [vmem:[%s235 + $0x12c] sm:$0xf]
        %v339 = vld [vmem:[%s235 + $0x130] sm:$0xf]
        %v340 = vld [vmem:[%s235 + $0x134] sm:$0xf]
        %v341 = vld [vmem:[%s235 + $0x138] sm:$0xf]
        %v342 = vld [vmem:[%s235 + $0x13c] sm:$0xf]
        %v343 = vld [vmem:[%s235 + $0x140] sm:$0xf]
        %v344 = vld [vmem:[%s235 + $0x144] sm:$0xf]
        %v345 = vld [vmem:[%s235 + $0x148] sm:$0xf]
        %v346 = vld [vmem:[%s235 + $0x14c] sm:$0xf]
        %v347 = vld [vmem:[%s235 + $0x150] sm:$0xf]
        %v348 = vld [vmem:[%s235 + $0x154] sm:$0xf]
        %v349 = vld [vmem:[%s235 + $0x158] sm:$0xf]
        %v350 = vld [vmem:[%s235 + $0x15c] sm:$0xf]
        %v351 = vld [vmem:[%s235 + $0x160] sm:$0xf]
        %v352 = vld [vmem:[%s235 + $0x164] sm:$0xf]
        %v353 = vld [vmem:[%s235 + $0x168] sm:$0xf]
        %v354 = vld [vmem:[%s235 + $0x16c] sm:$0xf]
        %v355 = vld [vmem:[%s235 + $0x170] sm:$0xf]
        %v356 = vld [vmem:[%s235 + $0x174] sm:$0xf]
        %v357 = vld [vmem:[%s235 + $0x178] sm:$0xf]
        %v358 = vld [vmem:[%s235 + $0x17c] sm:$0xf]
        %v359 = vld [vmem:[%s235 + $0x180] sm:$0xf]
        %v360 = vld [vmem:[%s235 + $0x184] sm:$0xf]
        %v361 = vld [vmem:[%s235 + $0x188] sm:$0xf]
        %v362 = vld [vmem:[%s235 + $0x18c] sm:$0xf]
        %v363 = vld [vmem:[%s235 + $0x190] sm:$0xf]
        %v364 = vld [vmem:[%s235 + $0x194] sm:$0xf]
        %v365 = vld [vmem:[%s235 + $0x198] sm:$0xf]
        %v366 = vld [vmem:[%s235 + $0x19c] sm:$0xf]
        %v367 = vld [vmem:[%s235 + $0x1a0] sm:$0xf]
        %v368 = vld [vmem:[%s235 + $0x1a4] sm:$0xf]
        %v369 = vld [vmem:[%s235 + $0x1a8] sm:$0xf]
        %v370 = vld [vmem:[%s235 + $0x1ac] sm:$0xf]
        %v371 = vld [vmem:[%s235 + $0x1b0] sm:$0xf]
        %v372 = vld [vmem:[%s235 + $0x1b4] sm:$0xf]
        %v373 = vld [vmem:[%s235 + $0x1b8] sm:$0xf]
        %v374 = vld [vmem:[%s235 + $0x1bc] sm:$0xf]
        %v375 = vld [vmem:[%s235 + $0x1c0] sm:$0xf]
        %v376 = vld [vmem:[%s235 + $0x1c4] sm:$0xf]
        %v377 = vld [vmem:[%s235 + $0x1c8] sm:$0xf]
        %v378 = vld [vmem:[%s235 + $0x1cc] sm:$0xf]
        %v379 = vld [vmem:[%s235 + $0x1d0] sm:$0xf]
        %v380 = vld [vmem:[%s235 + $0x1d4] sm:$0xf]
        %v381 = vld [vmem:[%s235 + $0x1d8] sm:$0xf]
        %v382 = vld [vmem:[%s235 + $0x1dc] sm:$0xf]
        %v383 = vld [vmem:[%s235 + $0x1e0] sm:$0xf]
        %v384 = vld [vmem:[%s235 + $0x1e4] sm:$0xf]
        %v385 = vld [vmem:[%s235 + $0x1e8] sm:$0xf]
        %v386 = vld [vmem:[%s235 + $0x1ec] sm:$0xf]
        %v387 = vld [vmem:[%s235 + $0x1f0] sm:$0xf]
        %v388 = vld [vmem:[%s235 + $0x1f4] sm:$0xf]
        %v389 = vld [vmem:[%s235 + $0x1f8] sm:$0xf]
        %v390 = vld [vmem:[%s235 + $0x1fc] sm:$0xf]
        %v399 = vunpack.c.l.b16 %v255
        %v400 = vunpack.c.h.b16 %v255
        %v401 = vunpack.c.l.b16 %v256
        %v402 = vunpack.c.h.b16 %v256
        %v403 = vunpack.c.l.b16 %v257
        %v404 = vunpack.c.h.b16 %v257
        %v405 = vunpack.c.l.b16 %v258
        %v406 = vunpack.c.h.b16 %v258
        %v407 = vunpack.c.l.b16 %v259
        %v408 = vunpack.c.h.b16 %v259
        %v409 = vunpack.c.l.b16 %v260
        %v410 = vunpack.c.h.b16 %v260
        %v411 = vunpack.c.l.b16 %v261
        %v412 = vunpack.c.h.b16 %v261
        %v413 = vunpack.c.l.b16 %v262
        %v414 = vunpack.c.h.b16 %v262
        %v415 = vpack.c.b16 %v407, %v399
        %v416 = vpack.c.b16 %v408, %v400
        %v417 = vpack.c.b16 %v409, %v401
        %v418 = vpack.c.b16 %v410, %v402
        %v419 = vpack.c.b16 %v411, %v403
        %v420 = vpack.c.b16 %v412, %v404
        %v421 = vpack.c.b16 %v413, %v405
        %v422 = vpack.c.b16 %v414, %v406
        %v559 = vunpack.c.l.b16 %v263
        %v560 = vunpack.c.l.b16 %v264
        %v561 = vunpack.c.l.b16 %v265
        %v562 = vunpack.c.l.b16 %v266
        %v563 = vunpack.c.l.b16 %v267
        %v564 = vunpack.c.l.b16 %v268
        %v565 = vunpack.c.l.b16 %v269
        %v566 = vunpack.c.l.b16 %v270
        %v567 = vunpack.c.l.b16 %v271
        %v568 = vunpack.c.l.b16 %v272
        %v569 = vunpack.c.l.b16 %v273
        %v570 = vunpack.c.l.b16 %v274
        %v571 = vunpack.c.l.b16 %v275
        %v572 = vunpack.c.l.b16 %v276
        %v573 = vunpack.c.l.b16 %v277
        %v574 = vunpack.c.l.b16 %v278
        %v575 = vunpack.c.l.b16 %v279
        %v576 = vunpack.c.l.b16 %v280
        %v577 = vunpack.c.l.b16 %v281
        %v578 = vunpack.c.l.b16 %v282
        %v579 = vunpack.c.l.b16 %v283
        %v580 = vunpack.c.l.b16 %v284
        %v581 = vunpack.c.l.b16 %v285
        %v582 = vunpack.c.l.b16 %v286
        %v583 = vunpack.c.l.b16 %v287
        %v584 = vunpack.c.l.b16 %v288
        %v585 = vunpack.c.l.b16 %v289
        %v586 = vunpack.c.l.b16 %v290
        %v587 = vunpack.c.l.b16 %v291
        %v588 = vunpack.c.l.b16 %v292
        %v589 = vunpack.c.l.b16 %v293
        %v590 = vunpack.c.l.b16 %v294
        %v591 = vunpack.c.l.b16 %v295
        %v592 = vunpack.c.l.b16 %v296
        %v593 = vunpack.c.l.b16 %v297
        %v594 = vunpack.c.l.b16 %v298
        %v595 = vunpack.c.l.b16 %v299
        %v596 = vunpack.c.l.b16 %v300
        %v597 = vunpack.c.l.b16 %v301
        %v598 = vunpack.c.l.b16 %v302
        %v599 = vunpack.c.l.b16 %v303
        %v600 = vunpack.c.l.b16 %v304
        %v601 = vunpack.c.l.b16 %v305
        %v602 = vunpack.c.l.b16 %v306
        %v603 = vunpack.c.l.b16 %v307
        %v604 = vunpack.c.l.b16 %v308
        %v605 = vunpack.c.l.b16 %v309
        %v606 = vunpack.c.l.b16 %v310
        %v607 = vunpack.c.l.b16 %v311
        %v608 = vunpack.c.l.b16 %v312
        %v609 = vunpack.c.l.b16 %v313
        %v610 = vunpack.c.l.b16 %v314
        %v611 = vunpack.c.l.b16 %v315
        %v612 = vunpack.c.l.b16 %v316
        %v613 = vunpack.c.l.b16 %v317
        %v614 = vunpack.c.l.b16 %v318
        %v615 = vunpack.c.l.b16 %v319
        %v616 = vunpack.c.l.b16 %v320
        %v617 = vunpack.c.l.b16 %v321
        %v618 = vunpack.c.l.b16 %v322
        %v619 = vunpack.c.l.b16 %v323
        %v620 = vunpack.c.l.b16 %v324
        %v621 = vunpack.c.l.b16 %v325
        %v622 = vunpack.c.l.b16 %v326
        %v623 = vunpack.c.l.b16 %v327
        %v624 = vunpack.c.l.b16 %v328
        %v625 = vunpack.c.l.b16 %v329
        %v626 = vunpack.c.l.b16 %v330
        %v627 = vunpack.c.l.b16 %v331
        %v628 = vunpack.c.l.b16 %v332
        %v629 = vunpack.c.l.b16 %v333
        %v630 = vunpack.c.l.b16 %v334
        %v631 = vunpack.c.l.b16 %v335
        %v632 = vunpack.c.l.b16 %v336
        %v633 = vunpack.c.l.b16 %v337
        %v634 = vunpack.c.l.b16 %v338
        %v635 = vunpack.c.l.b16 %v339
        %v636 = vunpack.c.l.b16 %v340
        %v637 = vunpack.c.l.b16 %v341
        %v638 = vunpack.c.l.b16 %v342
        %v639 = vunpack.c.l.b16 %v343
        %v640 = vunpack.c.l.b16 %v344
        %v641 = vunpack.c.l.b16 %v345
        %v642 = vunpack.c.l.b16 %v346
        %v643 = vunpack.c.l.b16 %v347
        %v644 = vunpack.c.l.b16 %v348
        %v645 = vunpack.c.l.b16 %v349
        %v646 = vunpack.c.l.b16 %v350
        %v647 = vunpack.c.l.b16 %v351
        %v648 = vunpack.c.l.b16 %v352
        %v649 = vunpack.c.l.b16 %v353
        %v650 = vunpack.c.l.b16 %v354
        %v651 = vunpack.c.l.b16 %v355
        %v652 = vunpack.c.l.b16 %v356
        %v653 = vunpack.c.l.b16 %v357
        %v654 = vunpack.c.l.b16 %v358
        %v655 = vunpack.c.l.b16 %v359
        %v656 = vunpack.c.l.b16 %v360
        %v657 = vunpack.c.l.b16 %v361
        %v658 = vunpack.c.l.b16 %v362
        %v659 = vunpack.c.l.b16 %v363
        %v660 = vunpack.c.l.b16 %v364
        %v661 = vunpack.c.l.b16 %v365
        %v662 = vunpack.c.l.b16 %v366
        %v663 = vunpack.c.l.b16 %v367
        %v664 = vunpack.c.l.b16 %v368
        %v665 = vunpack.c.l.b16 %v369
        %v666 = vunpack.c.l.b16 %v370
        %v667 = vunpack.c.l.b16 %v371
        %v668 = vunpack.c.l.b16 %v372
        %v669 = vunpack.c.l.b16 %v373
        %v670 = vunpack.c.l.b16 %v374
        %v671 = vunpack.c.l.b16 %v375
        %v672 = vunpack.c.l.b16 %v376
        %v673 = vunpack.c.l.b16 %v377
        %v674 = vunpack.c.l.b16 %v378
        %v675 = vunpack.c.l.b16 %v379
        %v676 = vunpack.c.l.b16 %v380
        %v677 = vunpack.c.l.b16 %v381
        %v678 = vunpack.c.l.b16 %v382
        %v679 = vunpack.c.l.b16 %v383
        %v680 = vunpack.c.l.b16 %v384
        %v681 = vunpack.c.l.b16 %v385
        %v682 = vunpack.c.l.b16 %v386
        %v683 = vunpack.c.l.b16 %v387
        %v684 = vunpack.c.l.b16 %v388
        %v685 = vunpack.c.l.b16 %v389
        %v686 = vunpack.c.l.b16 %v390
        %v687 = vpack.c.b16 %v560, %v559
        %v688 = vpack.c.b16 %v562, %v561
        %v689 = vpack.c.b16 %v564, %v563
        %v690 = vpack.c.b16 %v566, %v565
        %v691 = vpack.c.b16 %v568, %v567
        %v692 = vpack.c.b16 %v570, %v569
        %v693 = vpack.c.b16 %v572, %v571
        %v694 = vpack.c.b16 %v574, %v573
        %v695 = vpack.c.b16 %v576, %v575
        %v696 = vpack.c.b16 %v578, %v577
        %v697 = vpack.c.b16 %v580, %v579
        %v698 = vpack.c.b16 %v582, %v581
        %v699 = vpack.c.b16 %v584, %v583
        %v700 = vpack.c.b16 %v586, %v585
        %v701 = vpack.c.b16 %v588, %v587
        %v702 = vpack.c.b16 %v590, %v589
        %v703 = vpack.c.b16 %v592, %v591
        %v704 = vpack.c.b16 %v594, %v593
        %v705 = vpack.c.b16 %v596, %v595
        %v706 = vpack.c.b16 %v598, %v597
        %v707 = vpack.c.b16 %v600, %v599
        %v708 = vpack.c.b16 %v602, %v601
        %v709 = vpack.c.b16 %v604, %v603
        %v710 = vpack.c.b16 %v606, %v605
        %v711 = vpack.c.b16 %v608, %v607
        %v712 = vpack.c.b16 %v610, %v609
        %v713 = vpack.c.b16 %v612, %v611
        %v714 = vpack.c.b16 %v614, %v613
        %v715 = vpack.c.b16 %v616, %v615
        %v716 = vpack.c.b16 %v618, %v617
        %v717 = vpack.c.b16 %v620, %v619
        %v718 = vpack.c.b16 %v622, %v621
        %v719 = vpack.c.b16 %v624, %v623
        %v720 = vpack.c.b16 %v626, %v625
        %v721 = vpack.c.b16 %v628, %v627
        %v722 = vpack.c.b16 %v630, %v629
        %v723 = vpack.c.b16 %v632, %v631
        %v724 = vpack.c.b16 %v634, %v633
        %v725 = vpack.c.b16 %v636, %v635
        %v726 = vpack.c.b16 %v638, %v637
        %v727 = vpack.c.b16 %v640, %v639
        %v728 = vpack.c.b16 %v642, %v641
        %v729 = vpack.c.b16 %v644, %v643
        %v730 = vpack.c.b16 %v646, %v645
        %v731 = vpack.c.b16 %v648, %v647
        %v732 = vpack.c.b16 %v650, %v649
        %v733 = vpack.c.b16 %v652, %v651
        %v734 = vpack.c.b16 %v654, %v653
        %v735 = vpack.c.b16 %v656, %v655
        %v736 = vpack.c.b16 %v658, %v657
        %v737 = vpack.c.b16 %v660, %v659
        %v738 = vpack.c.b16 %v662, %v661
        %v739 = vpack.c.b16 %v664, %v663
        %v740 = vpack.c.b16 %v666, %v665
        %v741 = vpack.c.b16 %v668, %v667
        %v742 = vpack.c.b16 %v670, %v669
        %v743 = vpack.c.b16 %v672, %v671
        %v744 = vpack.c.b16 %v674, %v673
        %v745 = vpack.c.b16 %v676, %v675
        %v746 = vpack.c.b16 %v678, %v677
        %v747 = vpack.c.b16 %v680, %v679
        %v748 = vpack.c.b16 %v682, %v681
        %v749 = vpack.c.b16 %v684, %v683
        %v750 = vpack.c.b16 %v686, %v685
        %815 = vmatprep.subr.bf16.mxu0 0
        %816 = vmatpush1.bf16.msra.mxu0 %v687
        %817 = vmatprep.subr.bf16.mxu0 0
        %818 = vmatpush1.bf16.msra.mxu0 %v688
        %819 = vmatprep.subr.bf16.mxu0 0
        %820 = vmatpush1.bf16.msra.mxu0 %v689
        %821 = vmatprep.subr.bf16.mxu0 0
        %822 = vmatpush1.bf16.msra.mxu0 %v690
        %823 = vmatprep.subr.bf16.mxu0 0
        %824 = vmatpush1.bf16.msra.mxu0 %v691
        %825 = vmatprep.subr.bf16.mxu0 0
        %826 = vmatpush1.bf16.msra.mxu0 %v692
        %827 = vmatprep.subr.bf16.mxu0 0
        %828 = vmatpush1.bf16.msra.mxu0 %v693
        %829 = vmatprep.subr.bf16.mxu0 0
        %830 = vmatpush1.bf16.msra.mxu0 %v694
        %831 = vmatprep.subr.bf16.mxu0 0
        %832 = vmatpush1.bf16.msra.mxu0 %v695
        %833 = vmatprep.subr.bf16.mxu0 0
        %834 = vmatpush1.bf16.msra.mxu0 %v696
        %835 = vmatprep.subr.bf16.mxu0 0
        %836 = vmatpush1.bf16.msra.mxu0 %v697
        %837 = vmatprep.subr.bf16.mxu0 0
        %838 = vmatpush1.bf16.msra.mxu0 %v698
        %839 = vmatprep.subr.bf16.mxu0 0
        %840 = vmatpush1.bf16.msra.mxu0 %v699
        %841 = vmatprep.subr.bf16.mxu0 0
        %842 = vmatpush1.bf16.msra.mxu0 %v700
        %843 = vmatprep.subr.bf16.mxu0 0
        %844 = vmatpush1.bf16.msra.mxu0 %v701
        %845 = vmatprep.subr.bf16.mxu0 0
        %846 = vmatpush1.bf16.msra.mxu0 %v702
        %847 = vmatprep.mubr.bf16.mxu0 %v416
        %848 = vmatmul.mubr.bf16.gmra.mrb[0].mxu0 %v415
        %v849 = vpop.f32.mrb[0].mxu0
        %v850 = vadd.f32 0.0, %v849
        %v851 = vpop.f32.mrb[0].mxu0
        %v852 = vpop.f32.mrb[0].mxu0
        %v853 = vadd.f32 0.0, %v852
        %v854 = vpop.f32.mrb[0].mxu0
        %855 = vdwg.mxu0
        %856 = vmatprep.subr.bf16.mxu0 0
        %857 = vmatpush1.bf16.msra.mxu0 %v703
        %858 = vmatprep.subr.bf16.mxu0 0
        %859 = vmatpush1.bf16.msra.mxu0 %v704
        %860 = vmatprep.subr.bf16.mxu0 0
        %861 = vmatpush1.bf16.msra.mxu0 %v705
        %862 = vmatprep.subr.bf16.mxu0 0
        %863 = vmatpush1.bf16.msra.mxu0 %v706
        %864 = vmatprep.subr.bf16.mxu0 0
        %865 = vmatpush1.bf16.msra.mxu0 %v707
        %866 = vmatprep.subr.bf16.mxu0 0
        %867 = vmatpush1.bf16.msra.mxu0 %v708
        %868 = vmatprep.subr.bf16.mxu0 0
        %869 = vmatpush1.bf16.msra.mxu0 %v709
        %870 = vmatprep.subr.bf16.mxu0 0
        %871 = vmatpush1.bf16.msra.mxu0 %v710
        %872 = vmatprep.subr.bf16.mxu0 0
        %873 = vmatpush1.bf16.msra.mxu0 %v711
        %874 = vmatprep.subr.bf16.mxu0 0
        %875 = vmatpush1.bf16.msra.mxu0 %v712
        %876 = vmatprep.subr.bf16.mxu0 0
        %877 = vmatpush1.bf16.msra.mxu0 %v713
        %878 = vmatprep.subr.bf16.mxu0 0
        %879 = vmatpush1.bf16.msra.mxu0 %v714
        %880 = vmatprep.subr.bf16.mxu0 0
        %881 = vmatpush1.bf16.msra.mxu0 %v715
        %882 = vmatprep.subr.bf16.mxu0 0
        %883 = vmatpush1.bf16.msra.mxu0 %v716
        %884 = vmatprep.subr.bf16.mxu0 0
        %885 = vmatpush1.bf16.msra.mxu0 %v717
        %886 = vmatprep.subr.bf16.mxu0 0
        %887 = vmatpush1.bf16.msra.mxu0 %v718
        %888 = vmatprep.mubr.bf16.mxu0 %v418
        %889 = vmatmul.mubr.bf16.gmra.mrb[0].mxu0 %v417
        %v890 = vpop.f32.mrb[0].mxu0
        %v891 = vadd.f32 %v850, %v890
        %v892 = vpop.f32.mrb[0].mxu0
        %v893 = vpop.f32.mrb[0].mxu0
        %v894 = vadd.f32 %v853, %v893
        %v895 = vpop.f32.mrb[0].mxu0
        %896 = vdwg.mxu0
        %897 = vmatprep.subr.bf16.mxu0 0
        %898 = vmatpush1.bf16.msra.mxu0 %v719
        %899 = vmatprep.subr.bf16.mxu0 0
        %900 = vmatpush1.bf16.msra.mxu0 %v720
        %901 = vmatprep.subr.bf16.mxu0 0
        %902 = vmatpush1.bf16.msra.mxu0 %v721
        %903 = vmatprep.subr.bf16.mxu0 0
        %904 = vmatpush1.bf16.msra.mxu0 %v722
        %905 = vmatprep.subr.bf16.mxu0 0
        %906 = vmatpush1.bf16.msra.mxu0 %v723
        %907 = vmatprep.subr.bf16.mxu0 0
        %908 = vmatpush1.bf16.msra.mxu0 %v724
        %909 = vmatprep.subr.bf16.mxu0 0
        %910 = vmatpush1.bf16.msra.mxu0 %v725
        %911 = vmatprep.subr.bf16.mxu0 0
        %912 = vmatpush1.bf16.msra.mxu0 %v726
        %913 = vmatprep.subr.bf16.mxu0 0
        %914 = vmatpush1.bf16.msra.mxu0 %v727
        %915 = vmatprep.subr.bf16.mxu0 0
        %916 = vmatpush1.bf16.msra.mxu0 %v728
        %917 = vmatprep.subr.bf16.mxu0 0
        %918 = vmatpush1.bf16.msra.mxu0 %v729
        %919 = vmatprep.subr.bf16.mxu0 0
        %920 = vmatpush1.bf16.msra.mxu0 %v730
        %921 = vmatprep.subr.bf16.mxu0 0
        %922 = vmatpush1.bf16.msra.mxu0 %v731
        %923 = vmatprep.subr.bf16.mxu0 0
        %924 = vmatpush1.bf16.msra.mxu0 %v732
        %925 = vmatprep.subr.bf16.mxu0 0
        %926 = vmatpush1.bf16.msra.mxu0 %v733
        %927 = vmatprep.subr.bf16.mxu0 0
        %928 = vmatpush1.bf16.msra.mxu0 %v734
        %929 = vmatprep.mubr.bf16.mxu0 %v420
        %930 = vmatmul.mubr.bf16.gmra.mrb[0].mxu0 %v419
        %v931 = vpop.f32.mrb[0].mxu0
        %v932 = vadd.f32 %v891, %v931
        %v933 = vpop.f32.mrb[0].mxu0
        %v934 = vpop.f32.mrb[0].mxu0
        %v935 = vadd.f32 %v894, %v934
        %v936 = vpop.f32.mrb[0].mxu0
        %937 = vdwg.mxu0
        %938 = vmatprep.subr.bf16.mxu0 0
        %939 = vmatpush1.bf16.msra.mxu0 %v735
        %940 = vmatprep.subr.bf16.mxu0 0
        %941 = vmatpush1.bf16.msra.mxu0 %v736
        %942 = vmatprep.subr.bf16.mxu0 0
        %943 = vmatpush1.bf16.msra.mxu0 %v737
        %944 = vmatprep.subr.bf16.mxu0 0
        %945 = vmatpush1.bf16.msra.mxu0 %v738
        %946 = vmatprep.subr.bf16.mxu0 0
        %947 = vmatpush1.bf16.msra.mxu0 %v739
        %948 = vmatprep.subr.bf16.mxu0 0
        %949 = vmatpush1.bf16.msra.mxu0 %v740
        %950 = vmatprep.subr.bf16.mxu0 0
        %951 = vmatpush1.bf16.msra.mxu0 %v741
        %952 = vmatprep.subr.bf16.mxu0 0
        %953 = vmatpush1.bf16.msra.mxu0 %v742
        %954 = vmatprep.subr.bf16.mxu0 0
        %955 = vmatpush1.bf16.msra.mxu0 %v743
        %956 = vmatprep.subr.bf16.mxu0 0
        %957 = vmatpush1.bf16.msra.mxu0 %v744
        %958 = vmatprep.subr.bf16.mxu0 0
        %959 = vmatpush1.bf16.msra.mxu0 %v745
        %960 = vmatprep.subr.bf16.mxu0 0
        %961 = vmatpush1.bf16.msra.mxu0 %v746
        %962 = vmatprep.subr.bf16.mxu0 0
        %963 = vmatpush1.bf16.msra.mxu0 %v747
        %964 = vmatprep.subr.bf16.mxu0 0
        %965 = vmatpush1.bf16.msra.mxu0 %v748
        %966 = vmatprep.subr.bf16.mxu0 0
        %967 = vmatpush1.bf16.msra.mxu0 %v749
        %968 = vmatprep.subr.bf16.mxu0 0
        %969 = vmatpush1.bf16.msra.mxu0 %v750
        %970 = vmatprep.mubr.bf16.mxu0 %v422
        %971 = vmatmul.mubr.bf16.gmra.mrb[0].mxu0 %v421
        %v972 = vpop.f32.mrb[0].mxu0
        %v973 = vadd.f32 %v932, %v972
        %v974 = vpop.f32.mrb[0].mxu0
        %v975 = vpop.f32.mrb[0].mxu0
        %v976 = vadd.f32 %v935, %v975
        %v977 = vpop.f32.mrb[0].mxu0
        %978 = vdwg.mxu0
        %v979 = vadd.f32 %v253, %v973
        %v980 = vadd.f32 %v254, %v976
        %981 = vst [vmem:[#allocation2] sm:$0xff] %v979
        %982 = vst [vmem:[#allocation2 + $0x8] sm:$0xff] %v980
        %p983 = scmp.eq.s32.totalorder %s20, 7
        // Predicated region
        $region56: #{discriminator_forward.9} parent=46 // pred_check
          %p984 = pneg %p983
        $region57: #{discriminator_forward.9} parent=46 // pred_check_branch
          %986 = sbr.rel (%p984) target = $region59
        $region58: #{discriminator_forward.9} parent=46 // pred_region
          %v987 = vld [vmem:[#allocation2] sm:$0xff]
          %v988 = vld [vmem:[#allocation2 + $0x8] sm:$0xff]
          %989 = vst [vmem:[%s244] sm:$0xff] %v987
          %990 = vst [vmem:[%s244 + $0x8] sm:$0xff] %v988
        $region59: #{discriminator_forward.9} parent=46 // pred_fallthru
          _
        %s991 = smul.u32 2, %s18
        %p992 = scmp.lt.s32.totalorder %s991, 1
        %s993 = scalar_select %p992, %s991, 1
        %p994 = scmp.lt.s32.totalorder %s19, 0
        %s995 = scalar_select %p994, %s19, 0
        %s996 = sadd.s32 %s995, %s993
        %s997 = smul.addr %s996, 8
        %s998 = scalar_lea.vmem %s2, %s997
        // Predicated region
        $region60: #{discriminator_forward.9} parent=46 // pred_check
          %p999 = pneg %p108
        $region61: #{discriminator_forward.9} parent=46 // pred_check_branch
          %1001 = sbr.rel (%p999) target = $region63
        $region62: #{discriminator_forward.9} parent=46 // pred_region
          %s1002 = smul.u32 2, %s18
        $region63: #{discriminator_forward.9} parent=46 // pred_fallthru
          _
        // Predicated region
        $region64: #{discriminator_forward.9} parent=46 // pred_check
          %p1003 = pneg %p108
        $region65: #{discriminator_forward.9} parent=46 // pred_check_branch
          %1005 = sbr.rel (%p1003) target = $region67
        $region66: #{discriminator_forward.9} parent=46 // pred_region
          %s1006 = smul.u32 2, %s18
          %p1007 = scmp.lt.s32.totalorder %s1006, 1
          %s1008 = scalar_select %p1007, %s1006, 1
          %p1009 = scmp.lt.s32.totalorder %s19, 0
          %s1010 = scalar_select %p1009, %s19, 0
          %s1011 = sadd.s32 %s1010, %s1008
          %s1012 = smul.addr %s1011, 8
          %s1013 = scalar_lea.vmem %s2, %s1012
        $region67: #{discriminator_forward.9} parent=46 // pred_fallthru
          _
      $region47: #{discriminator_forward.9} parent=5 // pred_fallthru
        _
      %p1014 = scmp.le.s32.totalorder 2, %s8
      // Predicated region
      $region68: #{discriminator_forward.9} parent=5 // pred_check
        %p1015 = pneg %p1014
      $region69: #{discriminator_forward.9} parent=5 // pred_check_branch
        %1017 = sbr.rel (%p1015) target = $region71
      $region70: #{discriminator_forward.9} parent=5 // pred_region
        %s1018 = ssub.s32 %s8, 2
      $region71: #{discriminator_forward.9} parent=5 // pred_fallthru
        _
    $region6: #{discriminator_forward.9} parent=1 // loop_footer
      %s12 = sadd.s32 1, %s8
    $region7: #{discriminator_forward.9} parent=1 // loop_footer_branch
      %7 = sbr.rel target = $region3
    $region8: #{discriminator_forward.9} parent=1 // loop_exit
      _

</llo_original>
